<compile_context>
chip_gen: v7x
topology: tpu7x:2x2x1
jax: 0.10.0
libtpu: 0.0.40
codegen_flags: <defaults>
</compile_context>

<pallas_src>
import math
import functools

import jax
import jax.numpy as jnp
from jax.experimental import pallas as pl
from jax.experimental.pallas import tpu as pltpu


# ---------------------------------------------------------------------------
# Patch embedding: Conv2d(kernel=P, stride=P) == per-patch flatten + matmul.
# The kernel projects the extracted patches and adds the patch positional
# embeddings; the cls row is prepended in the wrapper (pure layout).
# ---------------------------------------------------------------------------
def patch_embed_kernel(p_ref, w_ref, b_ref, pos_ref, out_ref):
    patches = p_ref[0].astype(jnp.bfloat16)                       # (N, C*P*P)
    proj = jnp.dot(patches, w_ref[...],
                   preferred_element_type=jnp.float32)            # (N, H) f32
    out_ref[0] = (proj + b_ref[...] + pos_ref[...]).astype(out_ref.dtype)


def patch_embed(patches, w, b, pos_patches):
    B, N, PPC = patches.shape
    H = w.shape[1]

    def const_spec(arr):
        nd = arr.ndim
        # Constant block index across the grid -> fetched once; single buffer.
        return pl.BlockSpec(arr.shape, lambda i: (0,) * nd,
                            pipeline_mode=pl.Buffered(1))

    return pl.pallas_call(
        patch_embed_kernel,
        out_shape=jax.ShapeDtypeStruct((B, N, H), jnp.float32),
        grid_spec=pltpu.PrefetchScalarGridSpec(
            num_scalar_prefetch=0,
            grid=(B,),
            in_specs=[pl.BlockSpec((1, N, PPC), lambda i: (i, 0, 0)),
                      const_spec(w), const_spec(b), const_spec(pos_patches)],
            out_specs=pl.BlockSpec((1, N, H), lambda i: (i, 0, 0)),
        ),
        compiler_params=pltpu.CompilerParams(
            dimension_semantics=("parallel",)),
    )(patches, w, b, pos_patches)


# ---------------------------------------------------------------------------
# One fused transformer encoder block:
#   LN1 -> fused QKV -> multi-head attention -> +residual -> LN2 -> MLP -> +residual
# The block operates on a (batch_block * S, H) slab of flattened tokens.
# ---------------------------------------------------------------------------
def encoder_block_kernel(x_ref,
                         ln1_g_ref, ln1_b_ref,
                         wqkv_ref, bqkv_ref,
                         woh_ref, bo_ref,
                         ln2_g_ref, ln2_b_ref,
                         w1_ref, b1_ref, w2_ref, b2_ref,
                         out_ref,
                         attn_sc,
                         *, batch_block, seq_len, hidden, num_heads, head_dim,
                         eps):
    bt, S, H, nh, hd = batch_block, seq_len, hidden, num_heads, head_dim

    x = x_ref[...].astype(jnp.float32)                            # (bt*S, H)

    def layernorm(v, g_ref, b_ref):                               # f32 vector math
        mu = jnp.mean(v, axis=-1, keepdims=True)
        var = jnp.mean((v - mu) ** 2, axis=-1, keepdims=True)
        return (v - mu) * jax.lax.rsqrt(var + eps) * g_ref[...] + b_ref[...]

    # ---- LayerNorm 1 + fused QKV projection (one (H, 3H) bf16 matmul) ------
    ln1 = layernorm(x, ln1_g_ref, ln1_b_ref)
    qkv = jnp.dot(ln1.astype(jnp.bfloat16), wqkv_ref[...],
                  preferred_element_type=jnp.float32) + bqkv_ref[...]
    q = qkv[:, 0 * H:1 * H].astype(jnp.bfloat16)
    k = qkv[:, 1 * H:2 * H].astype(jnp.bfloat16)
    v = qkv[:, 2 * H:3 * H].astype(jnp.bfloat16)

    # ---- multi-head self attention: heads batched into one einsum pair -----
    scale = 1.0 / math.sqrt(hd)
    for b in range(bt):                                           # static, small
        r0 = b * S

        def split_heads(m):                                       # -> (nh, S, hd)
            return jnp.stack(
                [m[r0:r0 + S, h * hd:(h + 1) * hd] for h in range(nh)], axis=0)

        qh, kh, vh = split_heads(q), split_heads(k), split_heads(v)
        s = jnp.einsum('hqd,hkd->hqk', qh, kh,
                       preferred_element_type=jnp.float32) * scale      # (nh,S,S)
        s = s - jnp.max(s, axis=-1, keepdims=True)
        p = jnp.exp(s)
        p = p * pl.reciprocal(jnp.sum(p, axis=-1, keepdims=True), approx=True)
        # TODO(synk): dropout on attention probs is identity (inference mode).
        ctx = jnp.einsum('hqk,hkd->hqd', p.astype(jnp.bfloat16), vh,
                         preferred_element_type=jnp.float32)            # (nh,S,hd)

        # Output projection folded per head (== concat(heads) @ Wo):
        # avoids the lane-axis concatenate / relayout of the previous version.
        acc = jnp.zeros((S, H), jnp.float32)
        for h in range(nh):
            acc = acc + jnp.dot(ctx[h].astype(jnp.bfloat16), woh_ref[h],
                                preferred_element_type=jnp.float32)
        attn_sc[pl.ds(r0, S), :] = acc

    x = x + attn_sc[...] + bo_ref[...]                            # residual 1

    # ---- LayerNorm 2 + MLP --------------------------------------------------
    ln2 = layernorm(x, ln2_g_ref, ln2_b_ref)
    h1 = jnp.dot(ln2.astype(jnp.bfloat16), w1_ref[...],
                 preferred_element_type=jnp.float32) + b1_ref[...]
    h1 = jax.nn.gelu(h1, approximate=True)                        # tanh GELU (EUP)
    mlp = jnp.dot(h1.astype(jnp.bfloat16), w2_ref[...],
                  preferred_element_type=jnp.float32) + b2_ref[...]

    out_ref[...] = (x + mlp).astype(out_ref.dtype)                # residual 2


def encoder_block(tokens, blk, *, seq_len, num_heads, batch_block, eps=1e-5):
    T, H = tokens.shape
    S = seq_len
    B = T // S
    bt = batch_block
    assert B % bt == 0, "batch_block must divide the batch size"
    rows = bt * S
    assert rows % 8 == 0 or rows == T, (
        "pick batch_block so that batch_block * seq_len is a multiple of 8")

    order = ["ln1_g", "ln1_b", "wqkv", "bqkv", "wo_heads", "bo",
             "ln2_g", "ln2_b", "w1", "b1", "w2", "b2"]
    weights = [blk[k] for k in order]

    def const_spec(arr):
        nd = arr.ndim
        # Constant block index across the grid -> fetched once; single buffer
        # keeps real ViT-B weights from being double-buffered in VMEM.
        return pl.BlockSpec(arr.shape, lambda i: (0,) * nd,
                            pipeline_mode=pl.Buffered(1))

    kernel = functools.partial(
        encoder_block_kernel,
        batch_block=bt, seq_len=S, hidden=H,
        num_heads=num_heads, head_dim=H // num_heads, eps=eps)

    return pl.pallas_call(
        kernel,
        out_shape=jax.ShapeDtypeStruct((T, H), tokens.dtype),
        grid_spec=pltpu.PrefetchScalarGridSpec(
            num_scalar_prefetch=0,
            grid=(B // bt,),
            in_specs=[pl.BlockSpec((rows, H), lambda i: (i, 0))]
                     + [const_spec(a) for a in weights],
            out_specs=pl.BlockSpec((rows, H), lambda i: (i, 0)),
            scratch_shapes=[pltpu.VMEM((rows, H), jnp.float32)],
        ),
        compiler_params=pltpu.CompilerParams(
            dimension_semantics=("parallel",),
            # explicit VMEM budget: above v5e's 16 MiB default scoped limit,
            # below v7x's 64 MiB physical capacity.
            vmem_limit_bytes=48 * 1024 * 1024),
    )(tokens, *weights)


# ---------------------------------------------------------------------------
# Classifier head on the cls token.
# ---------------------------------------------------------------------------
def classifier_kernel(x_ref, w_ref, b_ref, o_ref):
    o_ref[...] = (jnp.dot(x_ref[...].astype(jnp.bfloat16), w_ref[...],
                          preferred_element_type=jnp.float32)
                  + b_ref[...]).astype(o_ref.dtype)


def classifier(cls_tokens, w, b):
    B = cls_tokens.shape[0]
    num_classes = w.shape[1]
    return pl.pallas_call(
        classifier_kernel,
        out_shape=jax.ShapeDtypeStruct((B, num_classes), jnp.float32),
    )(cls_tokens, w, b)


# ---------------------------------------------------------------------------
# Full ViT forward (inference).  Returns (logits, None), matching the PyTorch
# reference with output_attention=False.
# ---------------------------------------------------------------------------
def vit_forward(images, params, *, patch_size, num_heads, batch_block):
    B, C, IMG, _ = images.shape
    P = patch_size
    nP = IMG // P
    N = nP * nP
    H = params["pos"].shape[-1]
    S = N + 1

    # Conv2d(kernel=P, stride=P) -> flatten(2) -> transpose(1, 2): the patch
    # rearrangement is wrapper-side layout plumbing, the matmul runs in Pallas.
    patches = images.reshape(B, C, nP, P, nP, P)
    patches = patches.transpose(0, 2, 4, 1, 3, 5).reshape(B, N, C * P * P)

    patch_tokens = patch_embed(patches, params["w_patch"], params["b_patch"],
                               params["pos"][1:])                  # (B, N, H)
    cls_row = (params["cls"] + params["pos"][0:1]).astype(jnp.float32)
    cls_rows = jnp.broadcast_to(cls_row[None], (B, 1, H))
    tokens = jnp.concatenate([cls_rows, patch_tokens], axis=1)     # (B, S, H)
    # TODO(synk): embedding dropout is identity (inference mode).

    x = tokens.reshape(B * S, H)         # flatten batch into the matmul M dim
    for blk in params["blocks"]:
        x = encoder_block(x, blk, seq_len=S, num_heads=num_heads,
                          batch_block=batch_block)

    enc = x.reshape(B, S, H)
    logits = classifier(enc[:, 0, :], params["w_cls"], params["b_cls"])
    # TODO(synk): output_attention=True branch (stacked attention probs) not returned.
    return logits, None


# ---------------------------------------------------------------------------
# Deterministic synthetic parameters (matmul weights in bf16, f32 elsewhere).
# ---------------------------------------------------------------------------
def init_params(key, *, in_channels, img_size, patch_size, hidden_dim,
                num_heads, interm_dim, num_blocks, num_classes):
    nP = img_size // patch_size
    N = nP * nP
    PPC = in_channels * patch_size * patch_size
    hd = hidden_dim // num_heads
    scale = 0.05

    def dense(k, din, dout):
        kw, kb = jax.random.split(k)
        w = jax.random.normal(kw, (din, dout), jnp.float32) * scale
        b = jax.random.normal(kb, (1, dout), jnp.float32) * scale
        return w, b

    keys = jax.random.split(key, num_blocks + 4)
    w_patch, b_patch = dense(keys[0], PPC, hidden_dim)
    cls = jax.random.normal(keys[1], (1, hidden_dim), jnp.float32)
    pos = jax.random.normal(keys[2], (N + 1, hidden_dim), jnp.float32)
    w_cls, b_cls = dense(keys[3], hidden_dim, num_classes)

    blocks = []
    for i in range(num_blocks):
        kq, kk, kv, ko, k1, k2 = jax.random.split(keys[4 + i], 6)
        q_w, q_b = dense(kq, hidden_dim, hidden_dim)
        k_w, k_b = dense(kk, hidden_dim, hidden_dim)
        v_w, v_b = dense(kv, hidden_dim, hidden_dim)
        o_w, o_b = dense(ko, hidden_dim, hidden_dim)
        m1_w, m1_b = dense(k1, hidden_dim, interm_dim)
        m2_w, m2_b = dense(k2, interm_dim, hidden_dim)
        blocks.append({
            "ln1_g": jnp.ones((1, hidden_dim), jnp.float32),
            "ln1_b": jnp.zeros((1, hidden_dim), jnp.float32),
            # fused QKV weight (H, 3H), bf16 for the MXU
            "wqkv": jnp.concatenate([q_w, k_w, v_w], axis=1).astype(jnp.bfloat16),
            "bqkv": jnp.concatenate([q_b, k_b, v_b], axis=1),
            # output projection reshaped per head: rows ordered (head, head_dim)
            "wo_heads": o_w.reshape(num_heads, hd, hidden_dim).astype(jnp.bfloat16),
            "bo": o_b,
            "ln2_g": jnp.ones((1, hidden_dim), jnp.float32),
            "ln2_b": jnp.zeros((1, hidden_dim), jnp.float32),
            "w1": m1_w.astype(jnp.bfloat16), "b1": m1_b,
            "w2": m2_w.astype(jnp.bfloat16), "b2": m2_b,
        })

    return {
        "w_patch": w_patch.astype(jnp.bfloat16), "b_patch": b_patch,
        "cls": cls, "pos": pos,
        "blocks": blocks,
        "w_cls": w_cls.astype(jnp.bfloat16), "b_cls": b_cls,
    }


if __name__ == "__main__":
    # Small ViT: 16x16 RGB images, 4x4 patches -> 16 patches + cls = 17 tokens,
    # hidden 32, 4 heads (head_dim 8), MLP 64, 2 blocks, 10 classes.
    # batch=16 with batch_block=8 -> encoder block rows = 8*17 = 136 (sublane
    # aligned) and an even, "parallel" 2-step grid.
    B, C_IN, IMG, P = 16, 3, 16, 4
    HIDDEN, HEADS, INTERM, BLOCKS, CLASSES = 32, 4, 64, 2, 10
    BATCH_BLOCK = 8

    key = jax.random.PRNGKey(0)
    kx, kp = jax.random.split(key)
    images = jax.random.normal(kx, (B, C_IN, IMG, IMG), jnp.float32)
    params = init_params(kp, in_channels=C_IN, img_size=IMG, patch_size=P,
                         hidden_dim=HIDDEN, num_heads=HEADS,
                         interm_dim=INTERM, num_blocks=BLOCKS,
                         num_classes=CLASSES)

    fwd = jax.jit(functools.partial(vit_forward, patch_size=P,
                                    num_heads=HEADS,
                                    batch_block=BATCH_BLOCK))
    logits, attn_probs = fwd(images, params)
    logits = jax.block_until_ready(logits)

    assert logits.shape == (B, CLASSES)
    assert attn_probs is None                      # output_attention=False path
    assert bool(jnp.all(jnp.isfinite(logits)))
    print("KERNEL_OK")
</pallas_src>

<mosaic_0001>
module attributes {stable_mosaic.version = 11 : i64} {
  func.func @patch_embed_kernel(%arg0: i32, %arg1: memref<1x16x48xf32, #tpu.memory_space<vmem>>, %arg2: memref<48x32xbf16, #tpu.memory_space<vmem>>, %arg3: memref<1x32xf32, #tpu.memory_space<vmem>>, %arg4: memref<16x32xf32, #tpu.memory_space<vmem>>, %arg5: memref<1x16x32xf32, #tpu.memory_space<vmem>>) attributes {dimension_semantics = [#tpu.dimension_semantics<parallel>], iteration_bounds = array<i64: 16>, scalar_prefetch = 0 : i64, scratch_operands = 0 : i64, tpu.core_type = #tpu.core_type<tc>, window_params = [{transform_indices = @transform_0, window_bounds = array<i64: 1, 16, 48>}, {pipeline_mode = #tpu.pipeline_mode<synchronous>, transform_indices = @transform_1, window_bounds = array<i64: 48, 32>}, {pipeline_mode = #tpu.pipeline_mode<synchronous>, transform_indices = @transform_2, window_bounds = array<i64: 1, 32>}, {pipeline_mode = #tpu.pipeline_mode<synchronous>, transform_indices = @transform_3, window_bounds = array<i64: 16, 32>}, {transform_indices = @transform_4, window_bounds = array<i64: 1, 16, 32>}]} {
    %c0 = arith.constant 0 : index
    %c0_0 = arith.constant 0 : index
    %c0_1 = arith.constant 0 : index
    %0 = vector.load %arg1[%c0, %c0_0, %c0_1] : memref<1x16x48xf32, #tpu.memory_space<vmem>>, vector<1x16x48xf32>
    %1 = vector.shape_cast %0 : vector<1x16x48xf32> to vector<16x48xf32>
    %2 = arith.truncf %1 : vector<16x48xf32> to vector<16x48xbf16>
    %c0_2 = arith.constant 0 : index
    %c0_3 = arith.constant 0 : index
    %3 = vector.load %arg2[%c0_2, %c0_3] : memref<48x32xbf16, #tpu.memory_space<vmem>>, vector<48x32xbf16>
    %cst = arith.constant dense<0.000000e+00> : vector<16x32xf32>
    %4 = tpu.matmul %2, %3, %cst {dimension_numbers = #tpu.dot_dimension_numbers<[1], [0], [0], [1], [0, 0, 1, 1], [], []>} : vector<16x48xbf16>, vector<48x32xbf16>, vector<16x32xf32> -> vector<16x32xf32>
    %c0_4 = arith.constant 0 : index
    %c0_5 = arith.constant 0 : index
    %5 = vector.load %arg3[%c0_4, %c0_5] : memref<1x32xf32, #tpu.memory_space<vmem>>, vector<1x32xf32>
    %6 = vector.broadcast %5 : vector<1x32xf32> to vector<16x32xf32>
    %7 = arith.addf %4, %6 : vector<16x32xf32>
    %c0_6 = arith.constant 0 : index
    %c0_7 = arith.constant 0 : index
    %8 = vector.load %arg4[%c0_6, %c0_7] : memref<16x32xf32, #tpu.memory_space<vmem>>, vector<16x32xf32>
    %9 = arith.addf %7, %8 : vector<16x32xf32>
    %c0_8 = arith.constant 0 : index
    %c0_9 = arith.constant 0 : index
    %c0_10 = arith.constant 0 : index
    %10 = vector.load %arg5[%c0_8, %c0_9, %c0_10] : memref<1x16x32xf32, #tpu.memory_space<vmem>>, vector<1x16x32xf32>
    %11 = vector.shape_cast %10 : vector<1x16x32xf32> to vector<16x32xf32>
    %12 = vector.shape_cast %9 : vector<16x32xf32> to vector<1x16x32xf32>
    tpu.vector_store %arg5[%c0_8, %c0_9, %c0_10], %12 {strides = array<i32>} : memref<1x16x32xf32, #tpu.memory_space<vmem>>, vector<1x16x32xf32>,
    return
  }
  func.func @transform_0(%arg0: i32) -> (i32, i32, i32) {
    %c0_i32 = arith.constant 0 : i32
    %c0_i32_0 = arith.constant 0 : i32
    %c0_i32_1 = arith.constant 0 : i32
    return %arg0, %c0_i32, %c0_i32_0 : i32, i32, i32
  }
  func.func @transform_1(%arg0: i32) -> (i32, i32) {
    %c0_i32 = arith.constant 0 : i32
    %c0_i32_0 = arith.constant 0 : i32
    %c0_i32_1 = arith.constant 0 : i32
    return %c0_i32, %c0_i32_0 : i32, i32
  }
  func.func @transform_2(%arg0: i32) -> (i32, i32) {
    %c0_i32 = arith.constant 0 : i32
    %c0_i32_0 = arith.constant 0 : i32
    %c0_i32_1 = arith.constant 0 : i32
    return %c0_i32, %c0_i32_0 : i32, i32
  }
  func.func @transform_3(%arg0: i32) -> (i32, i32) {
    %c0_i32 = arith.constant 0 : i32
    %c0_i32_0 = arith.constant 0 : i32
    %c0_i32_1 = arith.constant 0 : i32
    return %c0_i32, %c0_i32_0 : i32, i32
  }
  func.func @transform_4(%arg0: i32) -> (i32, i32, i32) {
    %c0_i32 = arith.constant 0 : i32
    %c0_i32_0 = arith.constant 0 : i32
    %c0_i32_1 = arith.constant 0 : i32
    return %arg0, %c0_i32, %c0_i32_0 : i32, i32, i32
  }
}

module attributes {stable_mosaic.version = 11 : i64} {
  func.func @classifier_kernel(%arg0: memref<16x32xf32, #tpu.memory_space<vmem>>, %arg1: memref<32x10xbf16, #tpu.memory_space<vmem>>, %arg2: memref<1x10xf32, #tpu.memory_space<vmem>>, %arg3: memref<16x10xf32, #tpu.memory_space<vmem>>) attributes {dimension_semantics = [], scalar_prefetch = 0 : i64, scratch_operands = 0 : i64, tpu.core_type = #tpu.core_type<tc>} {
    %c0 = arith.constant 0 : index
    %c0_0 = arith.constant 0 : index
    %0 = vector.load %arg0[%c0, %c0_0] : memref<16x32xf32, #tpu.memory_space<vmem>>, vector<16x32xf32>
    %1 = arith.truncf %0 : vector<16x32xf32> to vector<16x32xbf16>
    %c0_1 = arith.constant 0 : index
    %c0_2 = arith.constant 0 : index
    %2 = vector.load %arg1[%c0_1, %c0_2] : memref<32x10xbf16, #tpu.memory_space<vmem>>, vector<32x10xbf16>
    %cst = arith.constant dense<0.000000e+00> : vector<16x10xf32>
    %3 = tpu.matmul %1, %2, %cst {dimension_numbers = #tpu.dot_dimension_numbers<[1], [0], [0], [1], [0, 0, 1, 1], [], []>} : vector<16x32xbf16>, vector<32x10xbf16>, vector<16x10xf32> -> vector<16x10xf32>
    %c0_3 = arith.constant 0 : index
    %c0_4 = arith.constant 0 : index
    %4 = vector.load %arg2[%c0_3, %c0_4] : memref<1x10xf32, #tpu.memory_space<vmem>>, vector<1x10xf32>
    %5 = vector.broadcast %4 : vector<1x10xf32> to vector<16x10xf32>
    %6 = arith.addf %3, %5 : vector<16x10xf32>
    %c0_5 = arith.constant 0 : index
    %c0_6 = arith.constant 0 : index
    %7 = vector.load %arg3[%c0_5, %c0_6] : memref<16x10xf32, #tpu.memory_space<vmem>>, vector<16x10xf32>
    tpu.vector_store %arg3[%c0_5, %c0_6], %6 {strides = array<i32>} : memref<16x10xf32, #tpu.memory_space<vmem>>, vector<16x10xf32>,
    return
  }
}

module attributes {stable_mosaic.version = 11 : i64} {
  func.func @encoder_block_kernel(%arg0: i32, %arg1: memref<136x32xf32, #tpu.memory_space<vmem>>, %arg2: memref<1x32xf32, #tpu.memory_space<vmem>>, %arg3: memref<1x32xf32, #tpu.memory_space<vmem>>, %arg4: memref<32x96xbf16, #tpu.memory_space<vmem>>, %arg5: memref<1x96xf32, #tpu.memory_space<vmem>>, %arg6: memref<4x8x32xbf16, #tpu.memory_space<vmem>>, %arg7: memref<1x32xf32, #tpu.memory_space<vmem>>, %arg8: memref<1x32xf32, #tpu.memory_space<vmem>>, %arg9: memref<1x32xf32, #tpu.memory_space<vmem>>, %arg10: memref<32x64xbf16, #tpu.memory_space<vmem>>, %arg11: memref<1x64xf32, #tpu.memory_space<vmem>>, %arg12: memref<64x32xbf16, #tpu.memory_space<vmem>>, %arg13: memref<1x32xf32, #tpu.memory_space<vmem>>, %arg14: memref<136x32xf32, #tpu.memory_space<vmem>>, %arg15: memref<136x32xf32, #tpu.memory_space<vmem>>) attributes {dimension_semantics = [#tpu.dimension_semantics<parallel>], iteration_bounds = array<i64: 2>, scalar_prefetch = 0 : i64, scratch_operands = 1 : i64, tpu.core_type = #tpu.core_type<tc>, window_params = [{transform_indices = @transform_0, window_bounds = array<i64: 136, 32>}, {pipeline_mode = #tpu.pipeline_mode<synchronous>, transform_indices = @transform_1, window_bounds = array<i64: 1, 32>}, {pipeline_mode = #tpu.pipeline_mode<synchronous>, transform_indices = @transform_2, window_bounds = array<i64: 1, 32>}, {pipeline_mode = #tpu.pipeline_mode<synchronous>, transform_indices = @transform_3, window_bounds = array<i64: 32, 96>}, {pipeline_mode = #tpu.pipeline_mode<synchronous>, transform_indices = @transform_4, window_bounds = array<i64: 1, 96>}, {pipeline_mode = #tpu.pipeline_mode<synchronous>, transform_indices = @transform_5, window_bounds = array<i64: 4, 8, 32>}, {pipeline_mode = #tpu.pipeline_mode<synchronous>, transform_indices = @transform_6, window_bounds = array<i64: 1, 32>}, {pipeline_mode = #tpu.pipeline_mode<synchronous>, transform_indices = @transform_7, window_bounds = array<i64: 1, 32>}, {pipeline_mode = #tpu.pipeline_mode<synchronous>, transform_indices = @transform_8, window_bounds = array<i64: 1, 32>}, {pipeline_mode = #tpu.pipeline_mode<synchronous>, transform_indices = @transform_9, window_bounds = array<i64: 32, 64>}, {pipeline_mode = #tpu.pipeline_mode<synchronous>, transform_indices = @transform_10, window_bounds = array<i64: 1, 64>}, {pipeline_mode = #tpu.pipeline_mode<synchronous>, transform_indices = @transform_11, window_bounds = array<i64: 64, 32>}, {pipeline_mode = #tpu.pipeline_mode<synchronous>, transform_indices = @transform_12, window_bounds = array<i64: 1, 32>}, {transform_indices = @transform_13, window_bounds = array<i64: 136, 32>}]} {
    %c0 = arith.constant 0 : index
    %c0_0 = arith.constant 0 : index
    %0 = vector.load %arg1[%c0, %c0_0] : memref<136x32xf32, #tpu.memory_space<vmem>>, vector<136x32xf32>
    %cst = arith.constant dense<0.000000e+00> : vector<136xf32>
    %1 = vector.multi_reduction <add>, %0, %cst [1] : vector<136x32xf32> to vector<136xf32>
    %2 = vector.shape_cast %1 : vector<136xf32> to vector<136x1xf32>
    %cst_1 = arith.constant 3.200000e+01 : f32
    %3 = vector.broadcast %cst_1 : f32 to vector<136x1xf32>
    %4 = arith.divf %2, %3 : vector<136x1xf32>
    %5 = vector.broadcast %4 : vector<136x1xf32> to vector<136x32xf32>
    %6 = arith.subf %0, %5 : vector<136x32xf32>
    %7 = arith.mulf %6, %6 : vector<136x32xf32>
    %cst_2 = arith.constant dense<0.000000e+00> : vector<136xf32>
    %8 = vector.multi_reduction <add>, %7, %cst_2 [1] : vector<136x32xf32> to vector<136xf32>
    %9 = vector.shape_cast %8 : vector<136xf32> to vector<136x1xf32>
    %cst_3 = arith.constant 3.200000e+01 : f32
    %10 = vector.broadcast %cst_3 : f32 to vector<136x1xf32>
    %11 = arith.divf %9, %10 : vector<136x1xf32>
    %12 = vector.broadcast %4 : vector<136x1xf32> to vector<136x32xf32>
    %13 = arith.subf %0, %12 : vector<136x32xf32>
    %cst_4 = arith.constant 9.99999974E-6 : f32
    %14 = vector.broadcast %cst_4 : f32 to vector<136x1xf32>
    %15 = arith.addf %11, %14 : vector<136x1xf32>
    %16 = math.rsqrt %15 : vector<136x1xf32>
    %17 = vector.broadcast %16 : vector<136x1xf32> to vector<136x32xf32>
    %18 = arith.mulf %13, %17 : vector<136x32xf32>
    %c0_5 = arith.constant 0 : index
    %c0_6 = arith.constant 0 : index
    %19 = vector.load %arg2[%c0_5, %c0_6] : memref<1x32xf32, #tpu.memory_space<vmem>>, vector<1x32xf32>
    %20 = vector.broadcast %19 : vector<1x32xf32> to vector<136x32xf32>
    %21 = arith.mulf %18, %20 : vector<136x32xf32>
    %c0_7 = arith.constant 0 : index
    %c0_8 = arith.constant 0 : index
    %22 = vector.load %arg3[%c0_7, %c0_8] : memref<1x32xf32, #tpu.memory_space<vmem>>, vector<1x32xf32>
    %23 = vector.broadcast %22 : vector<1x32xf32> to vector<136x32xf32>
    %24 = arith.addf %21, %23 : vector<136x32xf32>
    %25 = arith.truncf %24 : vector<136x32xf32> to vector<136x32xbf16>
    %c0_9 = arith.constant 0 : index
    %c0_10 = arith.constant 0 : index
    %26 = vector.load %arg4[%c0_9, %c0_10] : memref<32x96xbf16, #tpu.memory_space<vmem>>, vector<32x96xbf16>
    %cst_11 = arith.constant dense<0.000000e+00> : vector<136x96xf32>
    %27 = tpu.matmul %25, %26, %cst_11 {dimension_numbers = #tpu.dot_dimension_numbers<[1], [0], [0], [1], [0, 0, 1, 1], [], []>} : vector<136x32xbf16>, vector<32x96xbf16>, vector<136x96xf32> -> vector<136x96xf32>
    %c0_12 = arith.constant 0 : index
    %c0_13 = arith.constant 0 : index
    %28 = vector.load %arg5[%c0_12, %c0_13] : memref<1x96xf32, #tpu.memory_space<vmem>>, vector<1x96xf32>
    %29 = vector.broadcast %28 : vector<1x96xf32> to vector<136x96xf32>
    %30 = arith.addf %27, %29 : vector<136x96xf32>
    %31 = vector.extract_strided_slice %30 {offsets = [0, 0], sizes = [136, 32], strides = [1, 1]} : vector<136x96xf32> to vector<136x32xf32>
    %32 = arith.truncf %31 : vector<136x32xf32> to vector<136x32xbf16>
    %33 = vector.extract_strided_slice %30 {offsets = [0, 32], sizes = [136, 32], strides = [1, 1]} : vector<136x96xf32> to vector<136x32xf32>
    %34 = arith.truncf %33 : vector<136x32xf32> to vector<136x32xbf16>
    %35 = vector.extract_strided_slice %30 {offsets = [0, 64], sizes = [136, 32], strides = [1, 1]} : vector<136x96xf32> to vector<136x32xf32>
    %36 = arith.truncf %35 : vector<136x32xf32> to vector<136x32xbf16>
    %37 = vector.extract_strided_slice %32 {offsets = [0, 0], sizes = [17, 8], strides = [1, 1]} : vector<136x32xbf16> to vector<17x8xbf16>
    %38 = vector.extract_strided_slice %32 {offsets = [0, 8], sizes = [17, 8], strides = [1, 1]} : vector<136x32xbf16> to vector<17x8xbf16>
    %39 = vector.extract_strided_slice %32 {offsets = [0, 16], sizes = [17, 8], strides = [1, 1]} : vector<136x32xbf16> to vector<17x8xbf16>
    %40 = vector.extract_strided_slice %32 {offsets = [0, 24], sizes = [17, 8], strides = [1, 1]} : vector<136x32xbf16> to vector<17x8xbf16>
    %41 = vector.shape_cast %37 : vector<17x8xbf16> to vector<1x17x8xbf16>
    %42 = vector.shape_cast %38 : vector<17x8xbf16> to vector<1x17x8xbf16>
    %43 = vector.shape_cast %39 : vector<17x8xbf16> to vector<1x17x8xbf16>
    %44 = vector.shape_cast %40 : vector<17x8xbf16> to vector<1x17x8xbf16>
    %45 = tpu.concatenate %41, %42, %43, %44 in 0 : vector<1x17x8xbf16>, vector<1x17x8xbf16>, vector<1x17x8xbf16>, vector<1x17x8xbf16> -> vector<4x17x8xbf16>
    %46 = vector.extract_strided_slice %34 {offsets = [0, 0], sizes = [17, 8], strides = [1, 1]} : vector<136x32xbf16> to vector<17x8xbf16>
    %47 = vector.extract_strided_slice %34 {offsets = [0, 8], sizes = [17, 8], strides = [1, 1]} : vector<136x32xbf16> to vector<17x8xbf16>
    %48 = vector.extract_strided_slice %34 {offsets = [0, 16], sizes = [17, 8], strides = [1, 1]} : vector<136x32xbf16> to vector<17x8xbf16>
    %49 = vector.extract_strided_slice %34 {offsets = [0, 24], sizes = [17, 8], strides = [1, 1]} : vector<136x32xbf16> to vector<17x8xbf16>
    %50 = vector.shape_cast %46 : vector<17x8xbf16> to vector<1x17x8xbf16>
    %51 = vector.shape_cast %47 : vector<17x8xbf16> to vector<1x17x8xbf16>
    %52 = vector.shape_cast %48 : vector<17x8xbf16> to vector<1x17x8xbf16>
    %53 = vector.shape_cast %49 : vector<17x8xbf16> to vector<1x17x8xbf16>
    %54 = tpu.concatenate %50, %51, %52, %53 in 0 : vector<1x17x8xbf16>, vector<1x17x8xbf16>, vector<1x17x8xbf16>, vector<1x17x8xbf16> -> vector<4x17x8xbf16>
    %55 = vector.extract_strided_slice %36 {offsets = [0, 0], sizes = [17, 8], strides = [1, 1]} : vector<136x32xbf16> to vector<17x8xbf16>
    %56 = vector.extract_strided_slice %36 {offsets = [0, 8], sizes = [17, 8], strides = [1, 1]} : vector<136x32xbf16> to vector<17x8xbf16>
    %57 = vector.extract_strided_slice %36 {offsets = [0, 16], sizes = [17, 8], strides = [1, 1]} : vector<136x32xbf16> to vector<17x8xbf16>
    %58 = vector.extract_strided_slice %36 {offsets = [0, 24], sizes = [17, 8], strides = [1, 1]} : vector<136x32xbf16> to vector<17x8xbf16>
    %59 = vector.shape_cast %55 : vector<17x8xbf16> to vector<1x17x8xbf16>
    %60 = vector.shape_cast %56 : vector<17x8xbf16> to vector<1x17x8xbf16>
    %61 = vector.shape_cast %57 : vector<17x8xbf16> to vector<1x17x8xbf16>
    %62 = vector.shape_cast %58 : vector<17x8xbf16> to vector<1x17x8xbf16>
    %63 = tpu.concatenate %59, %60, %61, %62 in 0 : vector<1x17x8xbf16>, vector<1x17x8xbf16>, vector<1x17x8xbf16>, vector<1x17x8xbf16> -> vector<4x17x8xbf16>
    "tpu.trace_start"() <{level = 10 : i32, message = "hqd,hkd->hqk"}> : () -> ()
    %cst_14 = arith.constant dense<0.000000e+00> : vector<4x17x17xf32>
    %64 = tpu.matmul %45, %54, %cst_14 {dimension_numbers = #tpu.dot_dimension_numbers<[2], [2], [1], [1], [0, 0, 0, 1, 1, 1], [0], [0]>} : vector<4x17x8xbf16>, vector<4x17x8xbf16>, vector<4x17x17xf32> -> vector<4x17x17xf32>
    "tpu.trace_stop"() : () -> ()
    %cst_15 = arith.constant 0.353553385 : f32
    %65 = vector.broadcast %cst_15 : f32 to vector<4x17x17xf32>
    %66 = arith.mulf %64, %65 : vector<4x17x17xf32>
    %cst_16 = arith.constant dense<0xFF800000> : vector<4x17xf32>
    %67 = vector.multi_reduction <maximumf>, %66, %cst_16 [2] : vector<4x17x17xf32> to vector<4x17xf32>
    %68 = vector.shape_cast %67 : vector<4x17xf32> to vector<4x17x1xf32>
    %69 = vector.broadcast %68 : vector<4x17x1xf32> to vector<4x17x17xf32>
    %70 = arith.subf %66, %69 : vector<4x17x17xf32>
    %71 = math.exp %70 : vector<4x17x17xf32>
    %cst_17 = arith.constant dense<0.000000e+00> : vector<4x17xf32>
    %72 = vector.multi_reduction <add>, %71, %cst_17 [2] : vector<4x17x17xf32> to vector<4x17xf32>
    %73 = vector.shape_cast %72 : vector<4x17xf32> to vector<4x17x1xf32>
    %74 = tpu.reciprocal %73 {approx = true} : vector<4x17x1xf32> -> vector<4x17x1xf32>
    %75 = vector.broadcast %74 : vector<4x17x1xf32> to vector<4x17x17xf32>
    %76 = arith.mulf %71, %75 : vector<4x17x17xf32>
    %77 = arith.truncf %76 : vector<4x17x17xf32> to vector<4x17x17xbf16>
    "tpu.trace_start"() <{level = 10 : i32, message = "hqk,hkd->hqd"}> : () -> ()
    %cst_18 = arith.constant dense<0.000000e+00> : vector<4x17x8xf32>
    %78 = tpu.matmul %77, %63, %cst_18 {dimension_numbers = #tpu.dot_dimension_numbers<[2], [1], [1], [2], [0, 0, 0, 1, 1, 2], [0], [0]>} : vector<4x17x17xbf16>, vector<4x17x8xbf16>, vector<4x17x8xf32> -> vector<4x17x8xf32>
    %cst_19 = arith.constant 0.000000e+00 : f32
    "tpu.trace_stop"() : () -> ()
    %79 = vector.broadcast %cst_19 : f32 to vector<17x32xf32>
    %80 = vector.extract_strided_slice %78 {offsets = [0, 0, 0], sizes = [1, 17, 8], strides = [1, 1, 1]} : vector<4x17x8xf32> to vector<1x17x8xf32>
    %81 = vector.shape_cast %80 : vector<1x17x8xf32> to vector<17x8xf32>
    %82 = arith.truncf %81 : vector<17x8xf32> to vector<17x8xbf16>
    %c0_20 = arith.constant 0 : index
    %c0_21 = arith.constant 0 : index
    %c0_22 = arith.constant 0 : index
    %83 = vector.load %arg6[%c0_20, %c0_21, %c0_22] : memref<4x8x32xbf16, #tpu.memory_space<vmem>>, vector<1x8x32xbf16>
    %84 = vector.shape_cast %83 : vector<1x8x32xbf16> to vector<8x32xbf16>
    %cst_23 = arith.constant dense<0.000000e+00> : vector<17x32xf32>
    %85 = tpu.matmul %82, %84, %cst_23 {dimension_numbers = #tpu.dot_dimension_numbers<[1], [0], [0], [1], [0, 0, 1, 1], [], []>} : vector<17x8xbf16>, vector<8x32xbf16>, vector<17x32xf32> -> vector<17x32xf32>
    %86 = arith.addf %79, %85 : vector<17x32xf32>
    %87 = vector.extract_strided_slice %78 {offsets = [1, 0, 0], sizes = [1, 17, 8], strides = [1, 1, 1]} : vector<4x17x8xf32> to vector<1x17x8xf32>
    %88 = vector.shape_cast %87 : vector<1x17x8xf32> to vector<17x8xf32>
    %89 = arith.truncf %88 : vector<17x8xf32> to vector<17x8xbf16>
    %c1 = arith.constant 1 : index
    %c0_24 = arith.constant 0 : index
    %c0_25 = arith.constant 0 : index
    %90 = vector.load %arg6[%c1, %c0_24, %c0_25] : memref<4x8x32xbf16, #tpu.memory_space<vmem>>, vector<1x8x32xbf16>
    %91 = vector.shape_cast %90 : vector<1x8x32xbf16> to vector<8x32xbf16>
    %cst_26 = arith.constant dense<0.000000e+00> : vector<17x32xf32>
    %92 = tpu.matmul %89, %91, %cst_26 {dimension_numbers = #tpu.dot_dimension_numbers<[1], [0], [0], [1], [0, 0, 1, 1], [], []>} : vector<17x8xbf16>, vector<8x32xbf16>, vector<17x32xf32> -> vector<17x32xf32>
    %93 = arith.addf %86, %92 : vector<17x32xf32>
    %94 = vector.extract_strided_slice %78 {offsets = [2, 0, 0], sizes = [1, 17, 8], strides = [1, 1, 1]} : vector<4x17x8xf32> to vector<1x17x8xf32>
    %95 = vector.shape_cast %94 : vector<1x17x8xf32> to vector<17x8xf32>
    %96 = arith.truncf %95 : vector<17x8xf32> to vector<17x8xbf16>
    %c2 = arith.constant 2 : index
    %c0_27 = arith.constant 0 : index
    %c0_28 = arith.constant 0 : index
    %97 = vector.load %arg6[%c2, %c0_27, %c0_28] : memref<4x8x32xbf16, #tpu.memory_space<vmem>>, vector<1x8x32xbf16>
    %98 = vector.shape_cast %97 : vector<1x8x32xbf16> to vector<8x32xbf16>
    %cst_29 = arith.constant dense<0.000000e+00> : vector<17x32xf32>
    %99 = tpu.matmul %96, %98, %cst_29 {dimension_numbers = #tpu.dot_dimension_numbers<[1], [0], [0], [1], [0, 0, 1, 1], [], []>} : vector<17x8xbf16>, vector<8x32xbf16>, vector<17x32xf32> -> vector<17x32xf32>
    %100 = arith.addf %93, %99 : vector<17x32xf32>
    %101 = vector.extract_strided_slice %78 {offsets = [3, 0, 0], sizes = [1, 17, 8], strides = [1, 1, 1]} : vector<4x17x8xf32> to vector<1x17x8xf32>
    %102 = vector.shape_cast %101 : vector<1x17x8xf32> to vector<17x8xf32>
    %103 = arith.truncf %102 : vector<17x8xf32> to vector<17x8xbf16>
    %c3 = arith.constant 3 : index
    %c0_30 = arith.constant 0 : index
    %c0_31 = arith.constant 0 : index
    %104 = vector.load %arg6[%c3, %c0_30, %c0_31] : memref<4x8x32xbf16, #tpu.memory_space<vmem>>, vector<1x8x32xbf16>
    %105 = vector.shape_cast %104 : vector<1x8x32xbf16> to vector<8x32xbf16>
    %cst_32 = arith.constant dense<0.000000e+00> : vector<17x32xf32>
    %106 = tpu.matmul %103, %105, %cst_32 {dimension_numbers = #tpu.dot_dimension_numbers<[1], [0], [0], [1], [0, 0, 1, 1], [], []>} : vector<17x8xbf16>, vector<8x32xbf16>, vector<17x32xf32> -> vector<17x32xf32>
    %107 = arith.addf %100, %106 : vector<17x32xf32>
    %c0_33 = arith.constant 0 : index
    %c0_34 = arith.constant 0 : index
    %108 = vector.load %arg15[%c0_33, %c0_34] : memref<136x32xf32, #tpu.memory_space<vmem>>, vector<17x32xf32>
    tpu.vector_store %arg15[%c0_33, %c0_34], %107 {strides = array<i32>} : memref<136x32xf32, #tpu.memory_space<vmem>>, vector<17x32xf32>,
    %109 = vector.extract_strided_slice %32 {offsets = [17, 0], sizes = [17, 8], strides = [1, 1]} : vector<136x32xbf16> to vector<17x8xbf16>
    %110 = vector.extract_strided_slice %32 {offsets = [17, 8], sizes = [17, 8], strides = [1, 1]} : vector<136x32xbf16> to vector<17x8xbf16>
    %111 = vector.extract_strided_slice %32 {offsets = [17, 16], sizes = [17, 8], strides = [1, 1]} : vector<136x32xbf16> to vector<17x8xbf16>
    %112 = vector.extract_strided_slice %32 {offsets = [17, 24], sizes = [17, 8], strides = [1, 1]} : vector<136x32xbf16> to vector<17x8xbf16>
    %113 = vector.shape_cast %109 : vector<17x8xbf16> to vector<1x17x8xbf16>
    %114 = vector.shape_cast %110 : vector<17x8xbf16> to vector<1x17x8xbf16>
    %115 = vector.shape_cast %111 : vector<17x8xbf16> to vector<1x17x8xbf16>
    %116 = vector.shape_cast %112 : vector<17x8xbf16> to vector<1x17x8xbf16>
    %117 = tpu.concatenate %113, %114, %115, %116 in 0 : vector<1x17x8xbf16>, vector<1x17x8xbf16>, vector<1x17x8xbf16>, vector<1x17x8xbf16> -> vector<4x17x8xbf16>
    %118 = vector.extract_strided_slice %34 {offsets = [17, 0], sizes = [17, 8], strides = [1, 1]} : vector<136x32xbf16> to vector<17x8xbf16>
    %119 = vector.extract_strided_slice %34 {offsets = [17, 8], sizes = [17, 8], strides = [1, 1]} : vector<136x32xbf16> to vector<17x8xbf16>
    %120 = vector.extract_strided_slice %34 {offsets = [17, 16], sizes = [17, 8], strides = [1, 1]} : vector<136x32xbf16> to vector<17x8xbf16>
    %121 = vector.extract_strided_slice %34 {offsets = [17, 24], sizes = [17, 8], strides = [1, 1]} : vector<136x32xbf16> to vector<17x8xbf16>
    %122 = vector.shape_cast %118 : vector<17x8xbf16> to vector<1x17x8xbf16>
    %123 = vector.shape_cast %119 : vector<17x8xbf16> to vector<1x17x8xbf16>
    %124 = vector.shape_cast %120 : vector<17x8xbf16> to vector<1x17x8xbf16>
    %125 = vector.shape_cast %121 : vector<17x8xbf16> to vector<1x17x8xbf16>
    %126 = tpu.concatenate %122, %123, %124, %125 in 0 : vector<1x17x8xbf16>, vector<1x17x8xbf16>, vector<1x17x8xbf16>, vector<1x17x8xbf16> -> vector<4x17x8xbf16>
    %127 = vector.extract_strided_slice %36 {offsets = [17, 0], sizes = [17, 8], strides = [1, 1]} : vector<136x32xbf16> to vector<17x8xbf16>
    %128 = vector.extract_strided_slice %36 {offsets = [17, 8], sizes = [17, 8], strides = [1, 1]} : vector<136x32xbf16> to vector<17x8xbf16>
    %129 = vector.extract_strided_slice %36 {offsets = [17, 16], sizes = [17, 8], strides = [1, 1]} : vector<136x32xbf16> to vector<17x8xbf16>
    %130 = vector.extract_strided_slice %36 {offsets = [17, 24], sizes = [17, 8], strides = [1, 1]} : vector<136x32xbf16> to vector<17x8xbf16>
    %131 = vector.shape_cast %127 : vector<17x8xbf16> to vector<1x17x8xbf16>
    %132 = vector.shape_cast %128 : vector<17x8xbf16> to vector<1x17x8xbf16>
    %133 = vector.shape_cast %129 : vector<17x8xbf16> to vector<1x17x8xbf16>
    %134 = vector.shape_cast %130 : vector<17x8xbf16> to vector<1x17x8xbf16>
    %135 = tpu.concatenate %131, %132, %133, %134 in 0 : vector<1x17x8xbf16>, vector<1x17x8xbf16>, vector<1x17x8xbf16>, vector<1x17x8xbf16> -> vector<4x17x8xbf16>
    "tpu.trace_start"() <{level = 10 : i32, message = "hqd,hkd->hqk"}> : () -> ()
    %cst_35 = arith.constant dense<0.000000e+00> : vector<4x17x17xf32>
    %136 = tpu.matmul %117, %126, %cst_35 {dimension_numbers = #tpu.dot_dimension_numbers<[2], [2], [1], [1], [0, 0, 0, 1, 1, 1], [0], [0]>} : vector<4x17x8xbf16>, vector<4x17x8xbf16>, vector<4x17x17xf32> -> vector<4x17x17xf32>
    "tpu.trace_stop"() : () -> ()
    %cst_36 = arith.constant 0.353553385 : f32
    %137 = vector.broadcast %cst_36 : f32 to vector<4x17x17xf32>
    %138 = arith.mulf %136, %137 : vector<4x17x17xf32>
    %cst_37 = arith.constant dense<0xFF800000> : vector<4x17xf32>
    %139 = vector.multi_reduction <maximumf>, %138, %cst_37 [2] : vector<4x17x17xf32> to vector<4x17xf32>
    %140 = vector.shape_cast %139 : vector<4x17xf32> to vector<4x17x1xf32>
    %141 = vector.broadcast %140 : vector<4x17x1xf32> to vector<4x17x17xf32>
    %142 = arith.subf %138, %141 : vector<4x17x17xf32>
    %143 = math.exp %142 : vector<4x17x17xf32>
    %cst_38 = arith.constant dense<0.000000e+00> : vector<4x17xf32>
    %144 = vector.multi_reduction <add>, %143, %cst_38 [2] : vector<4x17x17xf32> to vector<4x17xf32>
    %145 = vector.shape_cast %144 : vector<4x17xf32> to vector<4x17x1xf32>
    %146 = tpu.reciprocal %145 {approx = true} : vector<4x17x1xf32> -> vector<4x17x1xf32>
    %147 = vector.broadcast %146 : vector<4x17x1xf32> to vector<4x17x17xf32>
    %148 = arith.mulf %143, %147 : vector<4x17x17xf32>
    %149 = arith.truncf %148 : vector<4x17x17xf32> to vector<4x17x17xbf16>
    "tpu.trace_start"() <{level = 10 : i32, message = "hqk,hkd->hqd"}> : () -> ()
    %cst_39 = arith.constant dense<0.000000e+00> : vector<4x17x8xf32>
    %150 = tpu.matmul %149, %135, %cst_39 {dimension_numbers = #tpu.dot_dimension_numbers<[2], [1], [1], [2], [0, 0, 0, 1, 1, 2], [0], [0]>} : vector<4x17x17xbf16>, vector<4x17x8xbf16>, vector<4x17x8xf32> -> vector<4x17x8xf32>
    %cst_40 = arith.constant 0.000000e+00 : f32
    "tpu.trace_stop"() : () -> ()
    %151 = vector.broadcast %cst_40 : f32 to vector<17x32xf32>
    %152 = vector.extract_strided_slice %150 {offsets = [0, 0, 0], sizes = [1, 17, 8], strides = [1, 1, 1]} : vector<4x17x8xf32> to vector<1x17x8xf32>
    %153 = vector.shape_cast %152 : vector<1x17x8xf32> to vector<17x8xf32>
    %154 = arith.truncf %153 : vector<17x8xf32> to vector<17x8xbf16>
    %c0_41 = arith.constant 0 : index
    %c0_42 = arith.constant 0 : index
    %c0_43 = arith.constant 0 : index
    %155 = vector.load %arg6[%c0_41, %c0_42, %c0_43] : memref<4x8x32xbf16, #tpu.memory_space<vmem>>, vector<1x8x32xbf16>
    %156 = vector.shape_cast %155 : vector<1x8x32xbf16> to vector<8x32xbf16>
    %cst_44 = arith.constant dense<0.000000e+00> : vector<17x32xf32>
    %157 = tpu.matmul %154, %156, %cst_44 {dimension_numbers = #tpu.dot_dimension_numbers<[1], [0], [0], [1], [0, 0, 1, 1], [], []>} : vector<17x8xbf16>, vector<8x32xbf16>, vector<17x32xf32> -> vector<17x32xf32>
    %158 = arith.addf %151, %157 : vector<17x32xf32>
    %159 = vector.extract_strided_slice %150 {offsets = [1, 0, 0], sizes = [1, 17, 8], strides = [1, 1, 1]} : vector<4x17x8xf32> to vector<1x17x8xf32>
    %160 = vector.shape_cast %159 : vector<1x17x8xf32> to vector<17x8xf32>
    %161 = arith.truncf %160 : vector<17x8xf32> to vector<17x8xbf16>
    %c1_45 = arith.constant 1 : index
    %c0_46 = arith.constant 0 : index
    %c0_47 = arith.constant 0 : index
    %162 = vector.load %arg6[%c1_45, %c0_46, %c0_47] : memref<4x8x32xbf16, #tpu.memory_space<vmem>>, vector<1x8x32xbf16>
    %163 = vector.shape_cast %162 : vector<1x8x32xbf16> to vector<8x32xbf16>
    %cst_48 = arith.constant dense<0.000000e+00> : vector<17x32xf32>
    %164 = tpu.matmul %161, %163, %cst_48 {dimension_numbers = #tpu.dot_dimension_numbers<[1], [0], [0], [1], [0, 0, 1, 1], [], []>} : vector<17x8xbf16>, vector<8x32xbf16>, vector<17x32xf32> -> vector<17x32xf32>
    %165 = arith.addf %158, %164 : vector<17x32xf32>
    %166 = vector.extract_strided_slice %150 {offsets = [2, 0, 0], sizes = [1, 17, 8], strides = [1, 1, 1]} : vector<4x17x8xf32> to vector<1x17x8xf32>
    %167 = vector.shape_cast %166 : vector<1x17x8xf32> to vector<17x8xf32>
    %168 = arith.truncf %167 : vector<17x8xf32> to vector<17x8xbf16>
    %c2_49 = arith.constant 2 : index
    %c0_50 = arith.constant 0 : index
    %c0_51 = arith.constant 0 : index
    %169 = vector.load %arg6[%c2_49, %c0_50, %c0_51] : memref<4x8x32xbf16, #tpu.memory_space<vmem>>, vector<1x8x32xbf16>
    %170 = vector.shape_cast %169 : vector<1x8x32xbf16> to vector<8x32xbf16>
    %cst_52 = arith.constant dense<0.000000e+00> : vector<17x32xf32>
    %171 = tpu.matmul %168, %170, %cst_52 {dimension_numbers = #tpu.dot_dimension_numbers<[1], [0], [0], [1], [0, 0, 1, 1], [], []>} : vector<17x8xbf16>, vector<8x32xbf16>, vector<17x32xf32> -> vector<17x32xf32>
    %172 = arith.addf %165, %171 : vector<17x32xf32>
    %173 = vector.extract_strided_slice %150 {offsets = [3, 0, 0], sizes = [1, 17, 8], strides = [1, 1, 1]} : vector<4x17x8xf32> to vector<1x17x8xf32>
    %174 = vector.shape_cast %173 : vector<1x17x8xf32> to vector<17x8xf32>
    %175 = arith.truncf %174 : vector<17x8xf32> to vector<17x8xbf16>
    %c3_53 = arith.constant 3 : index
    %c0_54 = arith.constant 0 : index
    %c0_55 = arith.constant 0 : index
    %176 = vector.load %arg6[%c3_53, %c0_54, %c0_55] : memref<4x8x32xbf16, #tpu.memory_space<vmem>>, vector<1x8x32xbf16>
    %177 = vector.shape_cast %176 : vector<1x8x32xbf16> to vector<8x32xbf16>
    %cst_56 = arith.constant dense<0.000000e+00> : vector<17x32xf32>
    %178 = tpu.matmul %175, %177, %cst_56 {dimension_numbers = #tpu.dot_dimension_numbers<[1], [0], [0], [1], [0, 0, 1, 1], [], []>} : vector<17x8xbf16>, vector<8x32xbf16>, vector<17x32xf32> -> vector<17x32xf32>
    %179 = arith.addf %172, %178 : vector<17x32xf32>
    %c17 = arith.constant 17 : index
    %c0_57 = arith.constant 0 : index
    %180 = vector.load %arg15[%c17, %c0_57] : memref<136x32xf32, #tpu.memory_space<vmem>>, vector<17x32xf32>
    tpu.vector_store %arg15[%c17, %c0_57], %179 {strides = array<i32>} : memref<136x32xf32, #tpu.memory_space<vmem>>, vector<17x32xf32>,
    %181 = vector.extract_strided_slice %32 {offsets = [34, 0], sizes = [17, 8], strides = [1, 1]} : vector<136x32xbf16> to vector<17x8xbf16>
    %182 = vector.extract_strided_slice %32 {offsets = [34, 8], sizes = [17, 8], strides = [1, 1]} : vector<136x32xbf16> to vector<17x8xbf16>
    %183 = vector.extract_strided_slice %32 {offsets = [34, 16], sizes = [17, 8], strides = [1, 1]} : vector<136x32xbf16> to vector<17x8xbf16>
    %184 = vector.extract_strided_slice %32 {offsets = [34, 24], sizes = [17, 8], strides = [1, 1]} : vector<136x32xbf16> to vector<17x8xbf16>
    %185 = vector.shape_cast %181 : vector<17x8xbf16> to vector<1x17x8xbf16>
    %186 = vector.shape_cast %182 : vector<17x8xbf16> to vector<1x17x8xbf16>
    %187 = vector.shape_cast %183 : vector<17x8xbf16> to vector<1x17x8xbf16>
    %188 = vector.shape_cast %184 : vector<17x8xbf16> to vector<1x17x8xbf16>
    %189 = tpu.concatenate %185, %186, %187, %188 in 0 : vector<1x17x8xbf16>, vector<1x17x8xbf16>, vector<1x17x8xbf16>, vector<1x17x8xbf16> -> vector<4x17x8xbf16>
    %190 = vector.extract_strided_slice %34 {offsets = [34, 0], sizes = [17, 8], strides = [1, 1]} : vector<136x32xbf16> to vector<17x8xbf16>
    %191 = vector.extract_strided_slice %34 {offsets = [34, 8], sizes = [17, 8], strides = [1, 1]} : vector<136x32xbf16> to vector<17x8xbf16>
    %192 = vector.extract_strided_slice %34 {offsets = [34, 16], sizes = [17, 8], strides = [1, 1]} : vector<136x32xbf16> to vector<17x8xbf16>
    %193 = vector.extract_strided_slice %34 {offsets = [34, 24], sizes = [17, 8], strides = [1, 1]} : vector<136x32xbf16> to vector<17x8xbf16>
    %194 = vector.shape_cast %190 : vector<17x8xbf16> to vector<1x17x8xbf16>
    %195 = vector.shape_cast %191 : vector<17x8xbf16> to vector<1x17x8xbf16>
    %196 = vector.shape_cast %192 : vector<17x8xbf16> to vector<1x17x8xbf16>
    %197 = vector.shape_cast %193 : vector<17x8xbf16> to vector<1x17x8xbf16>
    %198 = tpu.concatenate %194, %195, %196, %197 in 0 : vector<1x17x8xbf16>, vector<1x17x8xbf16>, vector<1x17x8xbf16>, vector<1x17x8xbf16> -> vector<4x17x8xbf16>
    %199 = vector.extract_strided_slice %36 {offsets = [34, 0], sizes = [17, 8], strides = [1, 1]} : vector<136x32xbf16> to vector<17x8xbf16>
    %200 = vector.extract_strided_slice %36 {offsets = [34, 8], sizes = [17, 8], strides = [1, 1]} : vector<136x32xbf16> to vector<17x8xbf16>
    %201 = vector.extract_strided_slice %36 {offsets = [34, 16], sizes = [17, 8], strides = [1, 1]} : vector<136x32xbf16> to vector<17x8xbf16>
    %202 = vector.extract_strided_slice %36 {offsets = [34, 24], sizes = [17, 8], strides = [1, 1]} : vector<136x32xbf16> to vector<17x8xbf16>
    %203 = vector.shape_cast %199 : vector<17x8xbf16> to vector<1x17x8xbf16>
    %204 = vector.shape_cast %200 : vector<17x8xbf16> to vector<1x17x8xbf16>
    %205 = vector.shape_cast %201 : vector<17x8xbf16> to vector<1x17x8xbf16>
    %206 = vector.shape_cast %202 : vector<17x8xbf16> to vector<1x17x8xbf16>
    %207 = tpu.concatenate %203, %204, %205, %206 in 0 : vector<1x17x8xbf16>, vector<1x17x8xbf16>, vector<1x17x8xbf16>, vector<1x17x8xbf16> -> vector<4x17x8xbf16>
    "tpu.trace_start"() <{level = 10 : i32, message = "hqd,hkd->hqk"}> : () -> ()
    %cst_58 = arith.constant dense<0.000000e+00> : vector<4x17x17xf32>
    %208 = tpu.matmul %189, %198, %cst_58 {dimension_numbers = #tpu.dot_dimension_numbers<[2], [2], [1], [1], [0, 0, 0, 1, 1, 1], [0], [0]>} : vector<4x17x8xbf16>, vector<4x17x8xbf16>, vector<4x17x17xf32> -> vector<4x17x17xf32>
    "tpu.trace_stop"() : () -> ()
    %cst_59 = arith.constant 0.353553385 : f32
    %209 = vector.broadcast %cst_59 : f32 to vector<4x17x17xf32>
    %210 = arith.mulf %208, %209 : vector<4x17x17xf32>
    %cst_60 = arith.constant dense<0xFF800000> : vector<4x17xf32>
    %211 = vector.multi_reduction <maximumf>, %210, %cst_60 [2] : vector<4x17x17xf32> to vector<4x17xf32>
    %212 = vector.shape_cast %211 : vector<4x17xf32> to vector<4x17x1xf32>
    %213 = vector.broadcast %212 : vector<4x17x1xf32> to vector<4x17x17xf32>
    %214 = arith.subf %210, %213 : vector<4x17x17xf32>
    %215 = math.exp %214 : vector<4x17x17xf32>
    %cst_61 = arith.constant dense<0.000000e+00> : vector<4x17xf32>
    %216 = vector.multi_reduction <add>, %215, %cst_61 [2] : vector<4x17x17xf32> to vector<4x17xf32>
    %217 = vector.shape_cast %216 : vector<4x17xf32> to vector<4x17x1xf32>
    %218 = tpu.reciprocal %217 {approx = true} : vector<4x17x1xf32> -> vector<4x17x1xf32>
    %219 = vector.broadcast %218 : vector<4x17x1xf32> to vector<4x17x17xf32>
    %220 = arith.mulf %215, %219 : vector<4x17x17xf32>
    %221 = arith.truncf %220 : vector<4x17x17xf32> to vector<4x17x17xbf16>
    "tpu.trace_start"() <{level = 10 : i32, message = "hqk,hkd->hqd"}> : () -> ()
    %cst_62 = arith.constant dense<0.000000e+00> : vector<4x17x8xf32>
    %222 = tpu.matmul %221, %207, %cst_62 {dimension_numbers = #tpu.dot_dimension_numbers<[2], [1], [1], [2], [0, 0, 0, 1, 1, 2], [0], [0]>} : vector<4x17x17xbf16>, vector<4x17x8xbf16>, vector<4x17x8xf32> -> vector<4x17x8xf32>
    %cst_63 = arith.constant 0.000000e+00 : f32
    "tpu.trace_stop"() : () -> ()
    %223 = vector.broadcast %cst_63 : f32 to vector<17x32xf32>
    %224 = vector.extract_strided_slice %222 {offsets = [0, 0, 0], sizes = [1, 17, 8], strides = [1, 1, 1]} : vector<4x17x8xf32> to vector<1x17x8xf32>
    %225 = vector.shape_cast %224 : vector<1x17x8xf32> to vector<17x8xf32>
    %226 = arith.truncf %225 : vector<17x8xf32> to vector<17x8xbf16>
    %c0_64 = arith.constant 0 : index
    %c0_65 = arith.constant 0 : index
    %c0_66 = arith.constant 0 : index
    %227 = vector.load %arg6[%c0_64, %c0_65, %c0_66] : memref<4x8x32xbf16, #tpu.memory_space<vmem>>, vector<1x8x32xbf16>
    %228 = vector.shape_cast %227 : vector<1x8x32xbf16> to vector<8x32xbf16>
    %cst_67 = arith.constant dense<0.000000e+00> : vector<17x32xf32>
    %229 = tpu.matmul %226, %228, %cst_67 {dimension_numbers = #tpu.dot_dimension_numbers<[1], [0], [0], [1], [0, 0, 1, 1], [], []>} : vector<17x8xbf16>, vector<8x32xbf16>, vector<17x32xf32> -> vector<17x32xf32>
    %230 = arith.addf %223, %229 : vector<17x32xf32>
    %231 = vector.extract_strided_slice %222 {offsets = [1, 0, 0], sizes = [1, 17, 8], strides = [1, 1, 1]} : vector<4x17x8xf32> to vector<1x17x8xf32>
    %232 = vector.shape_cast %231 : vector<1x17x8xf32> to vector<17x8xf32>
    %233 = arith.truncf %232 : vector<17x8xf32> to vector<17x8xbf16>
    %c1_68 = arith.constant 1 : index
    %c0_69 = arith.constant 0 : index
    %c0_70 = arith.constant 0 : index
    %234 = vector.load %arg6[%c1_68, %c0_69, %c0_70] : memref<4x8x32xbf16, #tpu.memory_space<vmem>>, vector<1x8x32xbf16>
    %235 = vector.shape_cast %234 : vector<1x8x32xbf16> to vector<8x32xbf16>
    %cst_71 = arith.constant dense<0.000000e+00> : vector<17x32xf32>
    %236 = tpu.matmul %233, %235, %cst_71 {dimension_numbers = #tpu.dot_dimension_numbers<[1], [0], [0], [1], [0, 0, 1, 1], [], []>} : vector<17x8xbf16>, vector<8x32xbf16>, vector<17x32xf32> -> vector<17x32xf32>
    %237 = arith.addf %230, %236 : vector<17x32xf32>
    %238 = vector.extract_strided_slice %222 {offsets = [2, 0, 0], sizes = [1, 17, 8], strides = [1, 1, 1]} : vector<4x17x8xf32> to vector<1x17x8xf32>
    %239 = vector.shape_cast %238 : vector<1x17x8xf32> to vector<17x8xf32>
    %240 = arith.truncf %239 : vector<17x8xf32> to vector<17x8xbf16>
    %c2_72 = arith.constant 2 : index
    %c0_73 = arith.constant 0 : index
    %c0_74 = arith.constant 0 : index
    %241 = vector.load %arg6[%c2_72, %c0_73, %c0_74] : memref<4x8x32xbf16, #tpu.memory_space<vmem>>, vector<1x8x32xbf16>
    %242 = vector.shape_cast %241 : vector<1x8x32xbf16> to vector<8x32xbf16>
    %cst_75 = arith.constant dense<0.000000e+00> : vector<17x32xf32>
    %243 = tpu.matmul %240, %242, %cst_75 {dimension_numbers = #tpu.dot_dimension_numbers<[1], [0], [0], [1], [0, 0, 1, 1], [], []>} : vector<17x8xbf16>, vector<8x32xbf16>, vector<17x32xf32> -> vector<17x32xf32>
    %244 = arith.addf %237, %243 : vector<17x32xf32>
    %245 = vector.extract_strided_slice %222 {offsets = [3, 0, 0], sizes = [1, 17, 8], strides = [1, 1, 1]} : vector<4x17x8xf32> to vector<1x17x8xf32>
    %246 = vector.shape_cast %245 : vector<1x17x8xf32> to vector<17x8xf32>
    %247 = arith.truncf %246 : vector<17x8xf32> to vector<17x8xbf16>
    %c3_76 = arith.constant 3 : index
    %c0_77 = arith.constant 0 : index
    %c0_78 = arith.constant 0 : index
    %248 = vector.load %arg6[%c3_76, %c0_77, %c0_78] : memref<4x8x32xbf16, #tpu.memory_space<vmem>>, vector<1x8x32xbf16>
    %249 = vector.shape_cast %248 : vector<1x8x32xbf16> to vector<8x32xbf16>
    %cst_79 = arith.constant dense<0.000000e+00> : vector<17x32xf32>
    %250 = tpu.matmul %247, %249, %cst_79 {dimension_numbers = #tpu.dot_dimension_numbers<[1], [0], [0], [1], [0, 0, 1, 1], [], []>} : vector<17x8xbf16>, vector<8x32xbf16>, vector<17x32xf32> -> vector<17x32xf32>
    %251 = arith.addf %244, %250 : vector<17x32xf32>
    %c34 = arith.constant 34 : index
    %c0_80 = arith.constant 0 : index
    %252 = vector.load %arg15[%c34, %c0_80] : memref<136x32xf32, #tpu.memory_space<vmem>>, vector<17x32xf32>
    tpu.vector_store %arg15[%c34, %c0_80], %251 {strides = array<i32>} : memref<136x32xf32, #tpu.memory_space<vmem>>, vector<17x32xf32>,
    %253 = vector.extract_strided_slice %32 {offsets = [51, 0], sizes = [17, 8], strides = [1, 1]} : vector<136x32xbf16> to vector<17x8xbf16>
    %254 = vector.extract_strided_slice %32 {offsets = [51, 8], sizes = [17, 8], strides = [1, 1]} : vector<136x32xbf16> to vector<17x8xbf16>
    %255 = vector.extract_strided_slice %32 {offsets = [51, 16], sizes = [17, 8], strides = [1, 1]} : vector<136x32xbf16> to vector<17x8xbf16>
    %256 = vector.extract_strided_slice %32 {offsets = [51, 24], sizes = [17, 8], strides = [1, 1]} : vector<136x32xbf16> to vector<17x8xbf16>
    %257 = vector.shape_cast %253 : vector<17x8xbf16> to vector<1x17x8xbf16>
    %258 = vector.shape_cast %254 : vector<17x8xbf16> to vector<1x17x8xbf16>
    %259 = vector.shape_cast %255 : vector<17x8xbf16> to vector<1x17x8xbf16>
    %260 = vector.shape_cast %256 : vector<17x8xbf16> to vector<1x17x8xbf16>
    %261 = tpu.concatenate %257, %258, %259, %260 in 0 : vector<1x17x8xbf16>, vector<1x17x8xbf16>, vector<1x17x8xbf16>, vector<1x17x8xbf16> -> vector<4x17x8xbf16>
    %262 = vector.extract_strided_slice %34 {offsets = [51, 0], sizes = [17, 8], strides = [1, 1]} : vector<136x32xbf16> to vector<17x8xbf16>
    %263 = vector.extract_strided_slice %34 {offsets = [51, 8], sizes = [17, 8], strides = [1, 1]} : vector<136x32xbf16> to vector<17x8xbf16>
    %264 = vector.extract_strided_slice %34 {offsets = [51, 16], sizes = [17, 8], strides = [1, 1]} : vector<136x32xbf16> to vector<17x8xbf16>
    %265 = vector.extract_strided_slice %34 {offsets = [51, 24], sizes = [17, 8], strides = [1, 1]} : vector<136x32xbf16> to vector<17x8xbf16>
    %266 = vector.shape_cast %262 : vector<17x8xbf16> to vector<1x17x8xbf16>
    %267 = vector.shape_cast %263 : vector<17x8xbf16> to vector<1x17x8xbf16>
    %268 = vector.shape_cast %264 : vector<17x8xbf16> to vector<1x17x8xbf16>
    %269 = vector.shape_cast %265 : vector<17x8xbf16> to vector<1x17x8xbf16>
    %270 = tpu.concatenate %266, %267, %268, %269 in 0 : vector<1x17x8xbf16>, vector<1x17x8xbf16>, vector<1x17x8xbf16>, vector<1x17x8xbf16> -> vector<4x17x8xbf16>
    %271 = vector.extract_strided_slice %36 {offsets = [51, 0], sizes = [17, 8], strides = [1, 1]} : vector<136x32xbf16> to vector<17x8xbf16>
    %272 = vector.extract_strided_slice %36 {offsets = [51, 8], sizes = [17, 8], strides = [1, 1]} : vector<136x32xbf16> to vector<17x8xbf16>
    %273 = vector.extract_strided_slice %36 {offsets = [51, 16], sizes = [17, 8], strides = [1, 1]} : vector<136x32xbf16> to vector<17x8xbf16>
    %274 = vector.extract_strided_slice %36 {offsets = [51, 24], sizes = [17, 8], strides = [1, 1]} : vector<136x32xbf16> to vector<17x8xbf16>
    %275 = vector.shape_cast %271 : vector<17x8xbf16> to vector<1x17x8xbf16>
    %276 = vector.shape_cast %272 : vector<17x8xbf16> to vector<1x17x8xbf16>
    %277 = vector.shape_cast %273 : vector<17x8xbf16> to vector<1x17x8xbf16>
    %278 = vector.shape_cast %274 : vector<17x8xbf16> to vector<1x17x8xbf16>
    %279 = tpu.concatenate %275, %276, %277, %278 in 0 : vector<1x17x8xbf16>, vector<1x17x8xbf16>, vector<1x17x8xbf16>, vector<1x17x8xbf16> -> vector<4x17x8xbf16>
    "tpu.trace_start"() <{level = 10 : i32, message = "hqd,hkd->hqk"}> : () -> ()
    %cst_81 = arith.constant dense<0.000000e+00> : vector<4x17x17xf32>
    %280 = tpu.matmul %261, %270, %cst_81 {dimension_numbers = #tpu.dot_dimension_numbers<[2], [2], [1], [1], [0, 0, 0, 1, 1, 1], [0], [0]>} : vector<4x17x8xbf16>, vector<4x17x8xbf16>, vector<4x17x17xf32> -> vector<4x17x17xf32>
    "tpu.trace_stop"() : () -> ()
    %cst_82 = arith.constant 0.353553385 : f32
    %281 = vector.broadcast %cst_82 : f32 to vector<4x17x17xf32>
    %282 = arith.mulf %280, %281 : vector<4x17x17xf32>
    %cst_83 = arith.constant dense<0xFF800000> : vector<4x17xf32>
    %283 = vector.multi_reduction <maximumf>, %282, %cst_83 [2] : vector<4x17x17xf32> to vector<4x17xf32>
    %284 = vector.shape_cast %283 : vector<4x17xf32> to vector<4x17x1xf32>
    %285 = vector.broadcast %284 : vector<4x17x1xf32> to vector<4x17x17xf32>
    %286 = arith.subf %282, %285 : vector<4x17x17xf32>
    %287 = math.exp %286 : vector<4x17x17xf32>
    %cst_84 = arith.constant dense<0.000000e+00> : vector<4x17xf32>
    %288 = vector.multi_reduction <add>, %287, %cst_84 [2] : vector<4x17x17xf32> to vector<4x17xf32>
    %289 = vector.shape_cast %288 : vector<4x17xf32> to vector<4x17x1xf32>
    %290 = tpu.reciprocal %289 {approx = true} : vector<4x17x1xf32> -> vector<4x17x1xf32>
    %291 = vector.broadcast %290 : vector<4x17x1xf32> to vector<4x17x17xf32>
    %292 = arith.mulf %287, %291 : vector<4x17x17xf32>
    %293 = arith.truncf %292 : vector<4x17x17xf32> to vector<4x17x17xbf16>
    "tpu.trace_start"() <{level = 10 : i32, message = "hqk,hkd->hqd"}> : () -> ()
    %cst_85 = arith.constant dense<0.000000e+00> : vector<4x17x8xf32>
    %294 = tpu.matmul %293, %279, %cst_85 {dimension_numbers = #tpu.dot_dimension_numbers<[2], [1], [1], [2], [0, 0, 0, 1, 1, 2], [0], [0]>} : vector<4x17x17xbf16>, vector<4x17x8xbf16>, vector<4x17x8xf32> -> vector<4x17x8xf32>
    %cst_86 = arith.constant 0.000000e+00 : f32
    "tpu.trace_stop"() : () -> ()
    %295 = vector.broadcast %cst_86 : f32 to vector<17x32xf32>
    %296 = vector.extract_strided_slice %294 {offsets = [0, 0, 0], sizes = [1, 17, 8], strides = [1, 1, 1]} : vector<4x17x8xf32> to vector<1x17x8xf32>
    %297 = vector.shape_cast %296 : vector<1x17x8xf32> to vector<17x8xf32>
    %298 = arith.truncf %297 : vector<17x8xf32> to vector<17x8xbf16>
    %c0_87 = arith.constant 0 : index
    %c0_88 = arith.constant 0 : index
    %c0_89 = arith.constant 0 : index
    %299 = vector.load %arg6[%c0_87, %c0_88, %c0_89] : memref<4x8x32xbf16, #tpu.memory_space<vmem>>, vector<1x8x32xbf16>
    %300 = vector.shape_cast %299 : vector<1x8x32xbf16> to vector<8x32xbf16>
    %cst_90 = arith.constant dense<0.000000e+00> : vector<17x32xf32>
    %301 = tpu.matmul %298, %300, %cst_90 {dimension_numbers = #tpu.dot_dimension_numbers<[1], [0], [0], [1], [0, 0, 1, 1], [], []>} : vector<17x8xbf16>, vector<8x32xbf16>, vector<17x32xf32> -> vector<17x32xf32>
    %302 = arith.addf %295, %301 : vector<17x32xf32>
    %303 = vector.extract_strided_slice %294 {offsets = [1, 0, 0], sizes = [1, 17, 8], strides = [1, 1, 1]} : vector<4x17x8xf32> to vector<1x17x8xf32>
    %304 = vector.shape_cast %303 : vector<1x17x8xf32> to vector<17x8xf32>
    %305 = arith.truncf %304 : vector<17x8xf32> to vector<17x8xbf16>
    %c1_91 = arith.constant 1 : index
    %c0_92 = arith.constant 0 : index
    %c0_93 = arith.constant 0 : index
    %306 = vector.load %arg6[%c1_91, %c0_92, %c0_93] : memref<4x8x32xbf16, #tpu.memory_space<vmem>>, vector<1x8x32xbf16>
    %307 = vector.shape_cast %306 : vector<1x8x32xbf16> to vector<8x32xbf16>
    %cst_94 = arith.constant dense<0.000000e+00> : vector<17x32xf32>
    %308 = tpu.matmul %305, %307, %cst_94 {dimension_numbers = #tpu.dot_dimension_numbers<[1], [0], [0], [1], [0, 0, 1, 1], [], []>} : vector<17x8xbf16>, vector<8x32xbf16>, vector<17x32xf32> -> vector<17x32xf32>
    %309 = arith.addf %302, %308 : vector<17x32xf32>
    %310 = vector.extract_strided_slice %294 {offsets = [2, 0, 0], sizes = [1, 17, 8], strides = [1, 1, 1]} : vector<4x17x8xf32> to vector<1x17x8xf32>
    %311 = vector.shape_cast %310 : vector<1x17x8xf32> to vector<17x8xf32>
    %312 = arith.truncf %311 : vector<17x8xf32> to vector<17x8xbf16>
    %c2_95 = arith.constant 2 : index
    %c0_96 = arith.constant 0 : index
    %c0_97 = arith.constant 0 : index
    %313 = vector.load %arg6[%c2_95, %c0_96, %c0_97] : memref<4x8x32xbf16, #tpu.memory_space<vmem>>, vector<1x8x32xbf16>
    %314 = vector.shape_cast %313 : vector<1x8x32xbf16> to vector<8x32xbf16>
    %cst_98 = arith.constant dense<0.000000e+00> : vector<17x32xf32>
    %315 = tpu.matmul %312, %314, %cst_98 {dimension_numbers = #tpu.dot_dimension_numbers<[1], [0], [0], [1], [0, 0, 1, 1], [], []>} : vector<17x8xbf16>, vector<8x32xbf16>, vector<17x32xf32> -> vector<17x32xf32>
    %316 = arith.addf %309, %315 : vector<17x32xf32>
    %317 = vector.extract_strided_slice %294 {offsets = [3, 0, 0], sizes = [1, 17, 8], strides = [1, 1, 1]} : vector<4x17x8xf32> to vector<1x17x8xf32>
    %318 = vector.shape_cast %317 : vector<1x17x8xf32> to vector<17x8xf32>
    %319 = arith.truncf %318 : vector<17x8xf32> to vector<17x8xbf16>
    %c3_99 = arith.constant 3 : index
    %c0_100 = arith.constant 0 : index
    %c0_101 = arith.constant 0 : index
    %320 = vector.load %arg6[%c3_99, %c0_100, %c0_101] : memref<4x8x32xbf16, #tpu.memory_space<vmem>>, vector<1x8x32xbf16>
    %321 = vector.shape_cast %320 : vector<1x8x32xbf16> to vector<8x32xbf16>
    %cst_102 = arith.constant dense<0.000000e+00> : vector<17x32xf32>
    %322 = tpu.matmul %319, %321, %cst_102 {dimension_numbers = #tpu.dot_dimension_numbers<[1], [0], [0], [1], [0, 0, 1, 1], [], []>} : vector<17x8xbf16>, vector<8x32xbf16>, vector<17x32xf32> -> vector<17x32xf32>
    %323 = arith.addf %316, %322 : vector<17x32xf32>
    %c51 = arith.constant 51 : index
    %c0_103 = arith.constant 0 : index
    %324 = vector.load %arg15[%c51, %c0_103] : memref<136x32xf32, #tpu.memory_space<vmem>>, vector<17x32xf32>
    tpu.vector_store %arg15[%c51, %c0_103], %323 {strides = array<i32>} : memref<136x32xf32, #tpu.memory_space<vmem>>, vector<17x32xf32>,
    %325 = vector.extract_strided_slice %32 {offsets = [68, 0], sizes = [17, 8], strides = [1, 1]} : vector<136x32xbf16> to vector<17x8xbf16>
    %326 = vector.extract_strided_slice %32 {offsets = [68, 8], sizes = [17, 8], strides = [1, 1]} : vector<136x32xbf16> to vector<17x8xbf16>
    %327 = vector.extract_strided_slice %32 {offsets = [68, 16], sizes = [17, 8], strides = [1, 1]} : vector<136x32xbf16> to vector<17x8xbf16>
    %328 = vector.extract_strided_slice %32 {offsets = [68, 24], sizes = [17, 8], strides = [1, 1]} : vector<136x32xbf16> to vector<17x8xbf16>
    %329 = vector.shape_cast %325 : vector<17x8xbf16> to vector<1x17x8xbf16>
    %330 = vector.shape_cast %326 : vector<17x8xbf16> to vector<1x17x8xbf16>
    %331 = vector.shape_cast %327 : vector<17x8xbf16> to vector<1x17x8xbf16>
    %332 = vector.shape_cast %328 : vector<17x8xbf16> to vector<1x17x8xbf16>
    %333 = tpu.concatenate %329, %330, %331, %332 in 0 : vector<1x17x8xbf16>, vector<1x17x8xbf16>, vector<1x17x8xbf16>, vector<1x17x8xbf16> -> vector<4x17x8xbf16>
    %334 = vector.extract_strided_slice %34 {offsets = [68, 0], sizes = [17, 8], strides = [1, 1]} : vector<136x32xbf16> to vector<17x8xbf16>
    %335 = vector.extract_strided_slice %34 {offsets = [68, 8], sizes = [17, 8], strides = [1, 1]} : vector<136x32xbf16> to vector<17x8xbf16>
    %336 = vector.extract_strided_slice %34 {offsets = [68, 16], sizes = [17, 8], strides = [1, 1]} : vector<136x32xbf16> to vector<17x8xbf16>
    %337 = vector.extract_strided_slice %34 {offsets = [68, 24], sizes = [17, 8], strides = [1, 1]} : vector<136x32xbf16> to vector<17x8xbf16>
    %338 = vector.shape_cast %334 : vector<17x8xbf16> to vector<1x17x8xbf16>
    %339 = vector.shape_cast %335 : vector<17x8xbf16> to vector<1x17x8xbf16>
    %340 = vector.shape_cast %336 : vector<17x8xbf16> to vector<1x17x8xbf16>
    %341 = vector.shape_cast %337 : vector<17x8xbf16> to vector<1x17x8xbf16>
    %342 = tpu.concatenate %338, %339, %340, %341 in 0 : vector<1x17x8xbf16>, vector<1x17x8xbf16>, vector<1x17x8xbf16>, vector<1x17x8xbf16> -> vector<4x17x8xbf16>
    %343 = vector.extract_strided_slice %36 {offsets = [68, 0], sizes = [17, 8], strides = [1, 1]} : vector<136x32xbf16> to vector<17x8xbf16>
    %344 = vector.extract_strided_slice %36 {offsets = [68, 8], sizes = [17, 8], strides = [1, 1]} : vector<136x32xbf16> to vector<17x8xbf16>
    %345 = vector.extract_strided_slice %36 {offsets = [68, 16], sizes = [17, 8], strides = [1, 1]} : vector<136x32xbf16> to vector<17x8xbf16>
    %346 = vector.extract_strided_slice %36 {offsets = [68, 24], sizes = [17, 8], strides = [1, 1]} : vector<136x32xbf16> to vector<17x8xbf16>
    %347 = vector.shape_cast %343 : vector<17x8xbf16> to vector<1x17x8xbf16>
    %348 = vector.shape_cast %344 : vector<17x8xbf16> to vector<1x17x8xbf16>
    %349 = vector.shape_cast %345 : vector<17x8xbf16> to vector<1x17x8xbf16>
    %350 = vector.shape_cast %346 : vector<17x8xbf16> to vector<1x17x8xbf16>
    %351 = tpu.concatenate %347, %348, %349, %350 in 0 : vector<1x17x8xbf16>, vector<1x17x8xbf16>, vector<1x17x8xbf16>, vector<1x17x8xbf16> -> vector<4x17x8xbf16>
    "tpu.trace_start"() <{level = 10 : i32, message = "hqd,hkd->hqk"}> : () -> ()
    %cst_104 = arith.constant dense<0.000000e+00> : vector<4x17x17xf32>
    %352 = tpu.matmul %333, %342, %cst_104 {dimension_numbers = #tpu.dot_dimension_numbers<[2], [2], [1], [1], [0, 0, 0, 1, 1, 1], [0], [0]>} : vector<4x17x8xbf16>, vector<4x17x8xbf16>, vector<4x17x17xf32> -> vector<4x17x17xf32>
    "tpu.trace_stop"() : () -> ()
    %cst_105 = arith.constant 0.353553385 : f32
    %353 = vector.broadcast %cst_105 : f32 to vector<4x17x17xf32>
    %354 = arith.mulf %352, %353 : vector<4x17x17xf32>
    %cst_106 = arith.constant dense<0xFF800000> : vector<4x17xf32>
    %355 = vector.multi_reduction <maximumf>, %354, %cst_106 [2] : vector<4x17x17xf32> to vector<4x17xf32>
    %356 = vector.shape_cast %355 : vector<4x17xf32> to vector<4x17x1xf32>
    %357 = vector.broadcast %356 : vector<4x17x1xf32> to vector<4x17x17xf32>
    %358 = arith.subf %354, %357 : vector<4x17x17xf32>
    %359 = math.exp %358 : vector<4x17x17xf32>
    %cst_107 = arith.constant dense<0.000000e+00> : vector<4x17xf32>
    %360 = vector.multi_reduction <add>, %359, %cst_107 [2] : vector<4x17x17xf32> to vector<4x17xf32>
    %361 = vector.shape_cast %360 : vector<4x17xf32> to vector<4x17x1xf32>
    %362 = tpu.reciprocal %361 {approx = true} : vector<4x17x1xf32> -> vector<4x17x1xf32>
    %363 = vector.broadcast %362 : vector<4x17x1xf32> to vector<4x17x17xf32>
    %364 = arith.mulf %359, %363 : vector<4x17x17xf32>
    %365 = arith.truncf %364 : vector<4x17x17xf32> to vector<4x17x17xbf16>
    "tpu.trace_start"() <{level = 10 : i32, message = "hqk,hkd->hqd"}> : () -> ()
    %cst_108 = arith.constant dense<0.000000e+00> : vector<4x17x8xf32>
    %366 = tpu.matmul %365, %351, %cst_108 {dimension_numbers = #tpu.dot_dimension_numbers<[2], [1], [1], [2], [0, 0, 0, 1, 1, 2], [0], [0]>} : vector<4x17x17xbf16>, vector<4x17x8xbf16>, vector<4x17x8xf32> -> vector<4x17x8xf32>
    %cst_109 = arith.constant 0.000000e+00 : f32
    "tpu.trace_stop"() : () -> ()
    %367 = vector.broadcast %cst_109 : f32 to vector<17x32xf32>
    %368 = vector.extract_strided_slice %366 {offsets = [0, 0, 0], sizes = [1, 17, 8], strides = [1, 1, 1]} : vector<4x17x8xf32> to vector<1x17x8xf32>
    %369 = vector.shape_cast %368 : vector<1x17x8xf32> to vector<17x8xf32>
    %370 = arith.truncf %369 : vector<17x8xf32> to vector<17x8xbf16>
    %c0_110 = arith.constant 0 : index
    %c0_111 = arith.constant 0 : index
    %c0_112 = arith.constant 0 : index
    %371 = vector.load %arg6[%c0_110, %c0_111, %c0_112] : memref<4x8x32xbf16, #tpu.memory_space<vmem>>, vector<1x8x32xbf16>
    %372 = vector.shape_cast %371 : vector<1x8x32xbf16> to vector<8x32xbf16>
    %cst_113 = arith.constant dense<0.000000e+00> : vector<17x32xf32>
    %373 = tpu.matmul %370, %372, %cst_113 {dimension_numbers = #tpu.dot_dimension_numbers<[1], [0], [0], [1], [0, 0, 1, 1], [], []>} : vector<17x8xbf16>, vector<8x32xbf16>, vector<17x32xf32> -> vector<17x32xf32>
    %374 = arith.addf %367, %373 : vector<17x32xf32>
    %375 = vector.extract_strided_slice %366 {offsets = [1, 0, 0], sizes = [1, 17, 8], strides = [1, 1, 1]} : vector<4x17x8xf32> to vector<1x17x8xf32>
    %376 = vector.shape_cast %375 : vector<1x17x8xf32> to vector<17x8xf32>
    %377 = arith.truncf %376 : vector<17x8xf32> to vector<17x8xbf16>
    %c1_114 = arith.constant 1 : index
    %c0_115 = arith.constant 0 : index
    %c0_116 = arith.constant 0 : index
    %378 = vector.load %arg6[%c1_114, %c0_115, %c0_116] : memref<4x8x32xbf16, #tpu.memory_space<vmem>>, vector<1x8x32xbf16>
    %379 = vector.shape_cast %378 : vector<1x8x32xbf16> to vector<8x32xbf16>
    %cst_117 = arith.constant dense<0.000000e+00> : vector<17x32xf32>
    %380 = tpu.matmul %377, %379, %cst_117 {dimension_numbers = #tpu.dot_dimension_numbers<[1], [0], [0], [1], [0, 0, 1, 1], [], []>} : vector<17x8xbf16>, vector<8x32xbf16>, vector<17x32xf32> -> vector<17x32xf32>
    %381 = arith.addf %374, %380 : vector<17x32xf32>
    %382 = vector.extract_strided_slice %366 {offsets = [2, 0, 0], sizes = [1, 17, 8], strides = [1, 1, 1]} : vector<4x17x8xf32> to vector<1x17x8xf32>
    %383 = vector.shape_cast %382 : vector<1x17x8xf32> to vector<17x8xf32>
    %384 = arith.truncf %383 : vector<17x8xf32> to vector<17x8xbf16>
    %c2_118 = arith.constant 2 : index
    %c0_119 = arith.constant 0 : index
    %c0_120 = arith.constant 0 : index
    %385 = vector.load %arg6[%c2_118, %c0_119, %c0_120] : memref<4x8x32xbf16, #tpu.memory_space<vmem>>, vector<1x8x32xbf16>
    %386 = vector.shape_cast %385 : vector<1x8x32xbf16> to vector<8x32xbf16>
    %cst_121 = arith.constant dense<0.000000e+00> : vector<17x32xf32>
    %387 = tpu.matmul %384, %386, %cst_121 {dimension_numbers = #tpu.dot_dimension_numbers<[1], [0], [0], [1], [0, 0, 1, 1], [], []>} : vector<17x8xbf16>, vector<8x32xbf16>, vector<17x32xf32> -> vector<17x32xf32>
    %388 = arith.addf %381, %387 : vector<17x32xf32>
    %389 = vector.extract_strided_slice %366 {offsets = [3, 0, 0], sizes = [1, 17, 8], strides = [1, 1, 1]} : vector<4x17x8xf32> to vector<1x17x8xf32>
    %390 = vector.shape_cast %389 : vector<1x17x8xf32> to vector<17x8xf32>
    %391 = arith.truncf %390 : vector<17x8xf32> to vector<17x8xbf16>
    %c3_122 = arith.constant 3 : index
    %c0_123 = arith.constant 0 : index
    %c0_124 = arith.constant 0 : index
    %392 = vector.load %arg6[%c3_122, %c0_123, %c0_124] : memref<4x8x32xbf16, #tpu.memory_space<vmem>>, vector<1x8x32xbf16>
    %393 = vector.shape_cast %392 : vector<1x8x32xbf16> to vector<8x32xbf16>
    %cst_125 = arith.constant dense<0.000000e+00> : vector<17x32xf32>
    %394 = tpu.matmul %391, %393, %cst_125 {dimension_numbers = #tpu.dot_dimension_numbers<[1], [0], [0], [1], [0, 0, 1, 1], [], []>} : vector<17x8xbf16>, vector<8x32xbf16>, vector<17x32xf32> -> vector<17x32xf32>
    %395 = arith.addf %388, %394 : vector<17x32xf32>
    %c68 = arith.constant 68 : index
    %c0_126 = arith.constant 0 : index
    %396 = vector.load %arg15[%c68, %c0_126] : memref<136x32xf32, #tpu.memory_space<vmem>>, vector<17x32xf32>
    tpu.vector_store %arg15[%c68, %c0_126], %395 {strides = array<i32>} : memref<136x32xf32, #tpu.memory_space<vmem>>, vector<17x32xf32>,
    %397 = vector.extract_strided_slice %32 {offsets = [85, 0], sizes = [17, 8], strides = [1, 1]} : vector<136x32xbf16> to vector<17x8xbf16>
    %398 = vector.extract_strided_slice %32 {offsets = [85, 8], sizes = [17, 8], strides = [1, 1]} : vector<136x32xbf16> to vector<17x8xbf16>
    %399 = vector.extract_strided_slice %32 {offsets = [85, 16], sizes = [17, 8], strides = [1, 1]} : vector<136x32xbf16> to vector<17x8xbf16>
    %400 = vector.extract_strided_slice %32 {offsets = [85, 24], sizes = [17, 8], strides = [1, 1]} : vector<136x32xbf16> to vector<17x8xbf16>
    %401 = vector.shape_cast %397 : vector<17x8xbf16> to vector<1x17x8xbf16>
    %402 = vector.shape_cast %398 : vector<17x8xbf16> to vector<1x17x8xbf16>
    %403 = vector.shape_cast %399 : vector<17x8xbf16> to vector<1x17x8xbf16>
    %404 = vector.shape_cast %400 : vector<17x8xbf16> to vector<1x17x8xbf16>
    %405 = tpu.concatenate %401, %402, %403, %404 in 0 : vector<1x17x8xbf16>, vector<1x17x8xbf16>, vector<1x17x8xbf16>, vector<1x17x8xbf16> -> vector<4x17x8xbf16>
    %406 = vector.extract_strided_slice %34 {offsets = [85, 0], sizes = [17, 8], strides = [1, 1]} : vector<136x32xbf16> to vector<17x8xbf16>
    %407 = vector.extract_strided_slice %34 {offsets = [85, 8], sizes = [17, 8], strides = [1, 1]} : vector<136x32xbf16> to vector<17x8xbf16>
    %408 = vector.extract_strided_slice %34 {offsets = [85, 16], sizes = [17, 8], strides = [1, 1]} : vector<136x32xbf16> to vector<17x8xbf16>
    %409 = vector.extract_strided_slice %34 {offsets = [85, 24], sizes = [17, 8], strides = [1, 1]} : vector<136x32xbf16> to vector<17x8xbf16>
    %410 = vector.shape_cast %406 : vector<17x8xbf16> to vector<1x17x8xbf16>
    %411 = vector.shape_cast %407 : vector<17x8xbf16> to vector<1x17x8xbf16>
    %412 = vector.shape_cast %408 : vector<17x8xbf16> to vector<1x17x8xbf16>
    %413 = vector.shape_cast %409 : vector<17x8xbf16> to vector<1x17x8xbf16>
    %414 = tpu.concatenate %410, %411, %412, %413 in 0 : vector<1x17x8xbf16>, vector<1x17x8xbf16>, vector<1x17x8xbf16>, vector<1x17x8xbf16> -> vector<4x17x8xbf16>
    %415 = vector.extract_strided_slice %36 {offsets = [85, 0], sizes = [17, 8], strides = [1, 1]} : vector<136x32xbf16> to vector<17x8xbf16>
    %416 = vector.extract_strided_slice %36 {offsets = [85, 8], sizes = [17, 8], strides = [1, 1]} : vector<136x32xbf16> to vector<17x8xbf16>
    %417 = vector.extract_strided_slice %36 {offsets = [85, 16], sizes = [17, 8], strides = [1, 1]} : vector<136x32xbf16> to vector<17x8xbf16>
    %418 = vector.extract_strided_slice %36 {offsets = [85, 24], sizes = [17, 8], strides = [1, 1]} : vector<136x32xbf16> to vector<17x8xbf16>
    %419 = vector.shape_cast %415 : vector<17x8xbf16> to vector<1x17x8xbf16>
    %420 = vector.shape_cast %416 : vector<17x8xbf16> to vector<1x17x8xbf16>
    %421 = vector.shape_cast %417 : vector<17x8xbf16> to vector<1x17x8xbf16>
    %422 = vector.shape_cast %418 : vector<17x8xbf16> to vector<1x17x8xbf16>
    %423 = tpu.concatenate %419, %420, %421, %422 in 0 : vector<1x17x8xbf16>, vector<1x17x8xbf16>, vector<1x17x8xbf16>, vector<1x17x8xbf16> -> vector<4x17x8xbf16>
    "tpu.trace_start"() <{level = 10 : i32, message = "hqd,hkd->hqk"}> : () -> ()
    %cst_127 = arith.constant dense<0.000000e+00> : vector<4x17x17xf32>
    %424 = tpu.matmul %405, %414, %cst_127 {dimension_numbers = #tpu.dot_dimension_numbers<[2], [2], [1], [1], [0, 0, 0, 1, 1, 1], [0], [0]>} : vector<4x17x8xbf16>, vector<4x17x8xbf16>, vector<4x17x17xf32> -> vector<4x17x17xf32>
    "tpu.trace_stop"() : () -> ()
    %cst_128 = arith.constant 0.353553385 : f32
    %425 = vector.broadcast %cst_128 : f32 to vector<4x17x17xf32>
    %426 = arith.mulf %424, %425 : vector<4x17x17xf32>
    %cst_129 = arith.constant dense<0xFF800000> : vector<4x17xf32>
    %427 = vector.multi_reduction <maximumf>, %426, %cst_129 [2] : vector<4x17x17xf32> to vector<4x17xf32>
    %428 = vector.shape_cast %427 : vector<4x17xf32> to vector<4x17x1xf32>
    %429 = vector.broadcast %428 : vector<4x17x1xf32> to vector<4x17x17xf32>
    %430 = arith.subf %426, %429 : vector<4x17x17xf32>
    %431 = math.exp %430 : vector<4x17x17xf32>
    %cst_130 = arith.constant dense<0.000000e+00> : vector<4x17xf32>
    %432 = vector.multi_reduction <add>, %431, %cst_130 [2] : vector<4x17x17xf32> to vector<4x17xf32>
    %433 = vector.shape_cast %432 : vector<4x17xf32> to vector<4x17x1xf32>
    %434 = tpu.reciprocal %433 {approx = true} : vector<4x17x1xf32> -> vector<4x17x1xf32>
    %435 = vector.broadcast %434 : vector<4x17x1xf32> to vector<4x17x17xf32>
    %436 = arith.mulf %431, %435 : vector<4x17x17xf32>
    %437 = arith.truncf %436 : vector<4x17x17xf32> to vector<4x17x17xbf16>
    "tpu.trace_start"() <{level = 10 : i32, message = "hqk,hkd->hqd"}> : () -> ()
    %cst_131 = arith.constant dense<0.000000e+00> : vector<4x17x8xf32>
    %438 = tpu.matmul %437, %423, %cst_131 {dimension_numbers = #tpu.dot_dimension_numbers<[2], [1], [1], [2], [0, 0, 0, 1, 1, 2], [0], [0]>} : vector<4x17x17xbf16>, vector<4x17x8xbf16>, vector<4x17x8xf32> -> vector<4x17x8xf32>
    %cst_132 = arith.constant 0.000000e+00 : f32
    "tpu.trace_stop"() : () -> ()
    %439 = vector.broadcast %cst_132 : f32 to vector<17x32xf32>
    %440 = vector.extract_strided_slice %438 {offsets = [0, 0, 0], sizes = [1, 17, 8], strides = [1, 1, 1]} : vector<4x17x8xf32> to vector<1x17x8xf32>
    %441 = vector.shape_cast %440 : vector<1x17x8xf32> to vector<17x8xf32>
    %442 = arith.truncf %441 : vector<17x8xf32> to vector<17x8xbf16>
    %c0_133 = arith.constant 0 : index
    %c0_134 = arith.constant 0 : index
    %c0_135 = arith.constant 0 : index
    %443 = vector.load %arg6[%c0_133, %c0_134, %c0_135] : memref<4x8x32xbf16, #tpu.memory_space<vmem>>, vector<1x8x32xbf16>
    %444 = vector.shape_cast %443 : vector<1x8x32xbf16> to vector<8x32xbf16>
    %cst_136 = arith.constant dense<0.000000e+00> : vector<17x32xf32>
    %445 = tpu.matmul %442, %444, %cst_136 {dimension_numbers = #tpu.dot_dimension_numbers<[1], [0], [0], [1], [0, 0, 1, 1], [], []>} : vector<17x8xbf16>, vector<8x32xbf16>, vector<17x32xf32> -> vector<17x32xf32>
    %446 = arith.addf %439, %445 : vector<17x32xf32>
    %447 = vector.extract_strided_slice %438 {offsets = [1, 0, 0], sizes = [1, 17, 8], strides = [1, 1, 1]} : vector<4x17x8xf32> to vector<1x17x8xf32>
    %448 = vector.shape_cast %447 : vector<1x17x8xf32> to vector<17x8xf32>
    %449 = arith.truncf %448 : vector<17x8xf32> to vector<17x8xbf16>
    %c1_137 = arith.constant 1 : index
    %c0_138 = arith.constant 0 : index
    %c0_139 = arith.constant 0 : index
    %450 = vector.load %arg6[%c1_137, %c0_138, %c0_139] : memref<4x8x32xbf16, #tpu.memory_space<vmem>>, vector<1x8x32xbf16>
    %451 = vector.shape_cast %450 : vector<1x8x32xbf16> to vector<8x32xbf16>
    %cst_140 = arith.constant dense<0.000000e+00> : vector<17x32xf32>
    %452 = tpu.matmul %449, %451, %cst_140 {dimension_numbers = #tpu.dot_dimension_numbers<[1], [0], [0], [1], [0, 0, 1, 1], [], []>} : vector<17x8xbf16>, vector<8x32xbf16>, vector<17x32xf32> -> vector<17x32xf32>
    %453 = arith.addf %446, %452 : vector<17x32xf32>
    %454 = vector.extract_strided_slice %438 {offsets = [2, 0, 0], sizes = [1, 17, 8], strides = [1, 1, 1]} : vector<4x17x8xf32> to vector<1x17x8xf32>
    %455 = vector.shape_cast %454 : vector<1x17x8xf32> to vector<17x8xf32>
    %456 = arith.truncf %455 : vector<17x8xf32> to vector<17x8xbf16>
    %c2_141 = arith.constant 2 : index
    %c0_142 = arith.constant 0 : index
    %c0_143 = arith.constant 0 : index
    %457 = vector.load %arg6[%c2_141, %c0_142, %c0_143] : memref<4x8x32xbf16, #tpu.memory_space<vmem>>, vector<1x8x32xbf16>
    %458 = vector.shape_cast %457 : vector<1x8x32xbf16> to vector<8x32xbf16>
    %cst_144 = arith.constant dense<0.000000e+00> : vector<17x32xf32>
    %459 = tpu.matmul %456, %458, %cst_144 {dimension_numbers = #tpu.dot_dimension_numbers<[1], [0], [0], [1], [0, 0, 1, 1], [], []>} : vector<17x8xbf16>, vector<8x32xbf16>, vector<17x32xf32> -> vector<17x32xf32>
    %460 = arith.addf %453, %459 : vector<17x32xf32>
    %461 = vector.extract_strided_slice %438 {offsets = [3, 0, 0], sizes = [1, 17, 8], strides = [1, 1, 1]} : vector<4x17x8xf32> to vector<1x17x8xf32>
    %462 = vector.shape_cast %461 : vector<1x17x8xf32> to vector<17x8xf32>
    %463 = arith.truncf %462 : vector<17x8xf32> to vector<17x8xbf16>
    %c3_145 = arith.constant 3 : index
    %c0_146 = arith.constant 0 : index
    %c0_147 = arith.constant 0 : index
    %464 = vector.load %arg6[%c3_145, %c0_146, %c0_147] : memref<4x8x32xbf16, #tpu.memory_space<vmem>>, vector<1x8x32xbf16>
    %465 = vector.shape_cast %464 : vector<1x8x32xbf16> to vector<8x32xbf16>
    %cst_148 = arith.constant dense<0.000000e+00> : vector<17x32xf32>
    %466 = tpu.matmul %463, %465, %cst_148 {dimension_numbers = #tpu.dot_dimension_numbers<[1], [0], [0], [1], [0, 0, 1, 1], [], []>} : vector<17x8xbf16>, vector<8x32xbf16>, vector<17x32xf32> -> vector<17x32xf32>
    %467 = arith.addf %460, %466 : vector<17x32xf32>
    %c85 = arith.constant 85 : index
    %c0_149 = arith.constant 0 : index
    %468 = vector.load %arg15[%c85, %c0_149] : memref<136x32xf32, #tpu.memory_space<vmem>>, vector<17x32xf32>
    tpu.vector_store %arg15[%c85, %c0_149], %467 {strides = array<i32>} : memref<136x32xf32, #tpu.memory_space<vmem>>, vector<17x32xf32>,
    %469 = vector.extract_strided_slice %32 {offsets = [102, 0], sizes = [17, 8], strides = [1, 1]} : vector<136x32xbf16> to vector<17x8xbf16>
    %470 = vector.extract_strided_slice %32 {offsets = [102, 8], sizes = [17, 8], strides = [1, 1]} : vector<136x32xbf16> to vector<17x8xbf16>
    %471 = vector.extract_strided_slice %32 {offsets = [102, 16], sizes = [17, 8], strides = [1, 1]} : vector<136x32xbf16> to vector<17x8xbf16>
    %472 = vector.extract_strided_slice %32 {offsets = [102, 24], sizes = [17, 8], strides = [1, 1]} : vector<136x32xbf16> to vector<17x8xbf16>
    %473 = vector.shape_cast %469 : vector<17x8xbf16> to vector<1x17x8xbf16>
    %474 = vector.shape_cast %470 : vector<17x8xbf16> to vector<1x17x8xbf16>
    %475 = vector.shape_cast %471 : vector<17x8xbf16> to vector<1x17x8xbf16>
    %476 = vector.shape_cast %472 : vector<17x8xbf16> to vector<1x17x8xbf16>
    %477 = tpu.concatenate %473, %474, %475, %476 in 0 : vector<1x17x8xbf16>, vector<1x17x8xbf16>, vector<1x17x8xbf16>, vector<1x17x8xbf16> -> vector<4x17x8xbf16>
    %478 = vector.extract_strided_slice %34 {offsets = [102, 0], sizes = [17, 8], strides = [1, 1]} : vector<136x32xbf16> to vector<17x8xbf16>
    %479 = vector.extract_strided_slice %34 {offsets = [102, 8], sizes = [17, 8], strides = [1, 1]} : vector<136x32xbf16> to vector<17x8xbf16>
    %480 = vector.extract_strided_slice %34 {offsets = [102, 16], sizes = [17, 8], strides = [1, 1]} : vector<136x32xbf16> to vector<17x8xbf16>
    %481 = vector.extract_strided_slice %34 {offsets = [102, 24], sizes = [17, 8], strides = [1, 1]} : vector<136x32xbf16> to vector<17x8xbf16>
    %482 = vector.shape_cast %478 : vector<17x8xbf16> to vector<1x17x8xbf16>
    %483 = vector.shape_cast %479 : vector<17x8xbf16> to vector<1x17x8xbf16>
    %484 = vector.shape_cast %480 : vector<17x8xbf16> to vector<1x17x8xbf16>
    %485 = vector.shape_cast %481 : vector<17x8xbf16> to vector<1x17x8xbf16>
    %486 = tpu.concatenate %482, %483, %484, %485 in 0 : vector<1x17x8xbf16>, vector<1x17x8xbf16>, vector<1x17x8xbf16>, vector<1x17x8xbf16> -> vector<4x17x8xbf16>
    %487 = vector.extract_strided_slice %36 {offsets = [102, 0], sizes = [17, 8], strides = [1, 1]} : vector<136x32xbf16> to vector<17x8xbf16>
    %488 = vector.extract_strided_slice %36 {offsets = [102, 8], sizes = [17, 8], strides = [1, 1]} : vector<136x32xbf16> to vector<17x8xbf16>
    %489 = vector.extract_strided_slice %36 {offsets = [102, 16], sizes = [17, 8], strides = [1, 1]} : vector<136x32xbf16> to vector<17x8xbf16>
    %490 = vector.extract_strided_slice %36 {offsets = [102, 24], sizes = [17, 8], strides = [1, 1]} : vector<136x32xbf16> to vector<17x8xbf16>
    %491 = vector.shape_cast %487 : vector<17x8xbf16> to vector<1x17x8xbf16>
    %492 = vector.shape_cast %488 : vector<17x8xbf16> to vector<1x17x8xbf16>
    %493 = vector.shape_cast %489 : vector<17x8xbf16> to vector<1x17x8xbf16>
    %494 = vector.shape_cast %490 : vector<17x8xbf16> to vector<1x17x8xbf16>
    %495 = tpu.concatenate %491, %492, %493, %494 in 0 : vector<1x17x8xbf16>, vector<1x17x8xbf16>, vector<1x17x8xbf16>, vector<1x17x8xbf16> -> vector<4x17x8xbf16>
    "tpu.trace_start"() <{level = 10 : i32, message = "hqd,hkd->hqk"}> : () -> ()
    %cst_150 = arith.constant dense<0.000000e+00> : vector<4x17x17xf32>
    %496 = tpu.matmul %477, %486, %cst_150 {dimension_numbers = #tpu.dot_dimension_numbers<[2], [2], [1], [1], [0, 0, 0, 1, 1, 1], [0], [0]>} : vector<4x17x8xbf16>, vector<4x17x8xbf16>, vector<4x17x17xf32> -> vector<4x17x17xf32>
    "tpu.trace_stop"() : () -> ()
    %cst_151 = arith.constant 0.353553385 : f32
    %497 = vector.broadcast %cst_151 : f32 to vector<4x17x17xf32>
    %498 = arith.mulf %496, %497 : vector<4x17x17xf32>
    %cst_152 = arith.constant dense<0xFF800000> : vector<4x17xf32>
    %499 = vector.multi_reduction <maximumf>, %498, %cst_152 [2] : vector<4x17x17xf32> to vector<4x17xf32>
    %500 = vector.shape_cast %499 : vector<4x17xf32> to vector<4x17x1xf32>
    %501 = vector.broadcast %500 : vector<4x17x1xf32> to vector<4x17x17xf32>
    %502 = arith.subf %498, %501 : vector<4x17x17xf32>
    %503 = math.exp %502 : vector<4x17x17xf32>
    %cst_153 = arith.constant dense<0.000000e+00> : vector<4x17xf32>
    %504 = vector.multi_reduction <add>, %503, %cst_153 [2] : vector<4x17x17xf32> to vector<4x17xf32>
    %505 = vector.shape_cast %504 : vector<4x17xf32> to vector<4x17x1xf32>
    %506 = tpu.reciprocal %505 {approx = true} : vector<4x17x1xf32> -> vector<4x17x1xf32>
    %507 = vector.broadcast %506 : vector<4x17x1xf32> to vector<4x17x17xf32>
    %508 = arith.mulf %503, %507 : vector<4x17x17xf32>
    %509 = arith.truncf %508 : vector<4x17x17xf32> to vector<4x17x17xbf16>
    "tpu.trace_start"() <{level = 10 : i32, message = "hqk,hkd->hqd"}> : () -> ()
    %cst_154 = arith.constant dense<0.000000e+00> : vector<4x17x8xf32>
    %510 = tpu.matmul %509, %495, %cst_154 {dimension_numbers = #tpu.dot_dimension_numbers<[2], [1], [1], [2], [0, 0, 0, 1, 1, 2], [0], [0]>} : vector<4x17x17xbf16>, vector<4x17x8xbf16>, vector<4x17x8xf32> -> vector<4x17x8xf32>
    %cst_155 = arith.constant 0.000000e+00 : f32
    "tpu.trace_stop"() : () -> ()
    %511 = vector.broadcast %cst_155 : f32 to vector<17x32xf32>
    %512 = vector.extract_strided_slice %510 {offsets = [0, 0, 0], sizes = [1, 17, 8], strides = [1, 1, 1]} : vector<4x17x8xf32> to vector<1x17x8xf32>
    %513 = vector.shape_cast %512 : vector<1x17x8xf32> to vector<17x8xf32>
    %514 = arith.truncf %513 : vector<17x8xf32> to vector<17x8xbf16>
    %c0_156 = arith.constant 0 : index
    %c0_157 = arith.constant 0 : index
    %c0_158 = arith.constant 0 : index
    %515 = vector.load %arg6[%c0_156, %c0_157, %c0_158] : memref<4x8x32xbf16, #tpu.memory_space<vmem>>, vector<1x8x32xbf16>
    %516 = vector.shape_cast %515 : vector<1x8x32xbf16> to vector<8x32xbf16>
    %cst_159 = arith.constant dense<0.000000e+00> : vector<17x32xf32>
    %517 = tpu.matmul %514, %516, %cst_159 {dimension_numbers = #tpu.dot_dimension_numbers<[1], [0], [0], [1], [0, 0, 1, 1], [], []>} : vector<17x8xbf16>, vector<8x32xbf16>, vector<17x32xf32> -> vector<17x32xf32>
    %518 = arith.addf %511, %517 : vector<17x32xf32>
    %519 = vector.extract_strided_slice %510 {offsets = [1, 0, 0], sizes = [1, 17, 8], strides = [1, 1, 1]} : vector<4x17x8xf32> to vector<1x17x8xf32>
    %520 = vector.shape_cast %519 : vector<1x17x8xf32> to vector<17x8xf32>
    %521 = arith.truncf %520 : vector<17x8xf32> to vector<17x8xbf16>
    %c1_160 = arith.constant 1 : index
    %c0_161 = arith.constant 0 : index
    %c0_162 = arith.constant 0 : index
    %522 = vector.load %arg6[%c1_160, %c0_161, %c0_162] : memref<4x8x32xbf16, #tpu.memory_space<vmem>>, vector<1x8x32xbf16>
    %523 = vector.shape_cast %522 : vector<1x8x32xbf16> to vector<8x32xbf16>
    %cst_163 = arith.constant dense<0.000000e+00> : vector<17x32xf32>
    %524 = tpu.matmul %521, %523, %cst_163 {dimension_numbers = #tpu.dot_dimension_numbers<[1], [0], [0], [1], [0, 0, 1, 1], [], []>} : vector<17x8xbf16>, vector<8x32xbf16>, vector<17x32xf32> -> vector<17x32xf32>
    %525 = arith.addf %518, %524 : vector<17x32xf32>
    %526 = vector.extract_strided_slice %510 {offsets = [2, 0, 0], sizes = [1, 17, 8], strides = [1, 1, 1]} : vector<4x17x8xf32> to vector<1x17x8xf32>
    %527 = vector.shape_cast %526 : vector<1x17x8xf32> to vector<17x8xf32>
    %528 = arith.truncf %527 : vector<17x8xf32> to vector<17x8xbf16>
    %c2_164 = arith.constant 2 : index
    %c0_165 = arith.constant 0 : index
    %c0_166 = arith.constant 0 : index
    %529 = vector.load %arg6[%c2_164, %c0_165, %c0_166] : memref<4x8x32xbf16, #tpu.memory_space<vmem>>, vector<1x8x32xbf16>
    %530 = vector.shape_cast %529 : vector<1x8x32xbf16> to vector<8x32xbf16>
    %cst_167 = arith.constant dense<0.000000e+00> : vector<17x32xf32>
    %531 = tpu.matmul %528, %530, %cst_167 {dimension_numbers = #tpu.dot_dimension_numbers<[1], [0], [0], [1], [0, 0, 1, 1], [], []>} : vector<17x8xbf16>, vector<8x32xbf16>, vector<17x32xf32> -> vector<17x32xf32>
    %532 = arith.addf %525, %531 : vector<17x32xf32>
    %533 = vector.extract_strided_slice %510 {offsets = [3, 0, 0], sizes = [1, 17, 8], strides = [1, 1, 1]} : vector<4x17x8xf32> to vector<1x17x8xf32>
    %534 = vector.shape_cast %533 : vector<1x17x8xf32> to vector<17x8xf32>
    %535 = arith.truncf %534 : vector<17x8xf32> to vector<17x8xbf16>
    %c3_168 = arith.constant 3 : index
    %c0_169 = arith.constant 0 : index
    %c0_170 = arith.constant 0 : index
    %536 = vector.load %arg6[%c3_168, %c0_169, %c0_170] : memref<4x8x32xbf16, #tpu.memory_space<vmem>>, vector<1x8x32xbf16>
    %537 = vector.shape_cast %536 : vector<1x8x32xbf16> to vector<8x32xbf16>
    %cst_171 = arith.constant dense<0.000000e+00> : vector<17x32xf32>
    %538 = tpu.matmul %535, %537, %cst_171 {dimension_numbers = #tpu.dot_dimension_numbers<[1], [0], [0], [1], [0, 0, 1, 1], [], []>} : vector<17x8xbf16>, vector<8x32xbf16>, vector<17x32xf32> -> vector<17x32xf32>
    %539 = arith.addf %532, %538 : vector<17x32xf32>
    %c102 = arith.constant 102 : index
    %c0_172 = arith.constant 0 : index
    %540 = vector.load %arg15[%c102, %c0_172] : memref<136x32xf32, #tpu.memory_space<vmem>>, vector<17x32xf32>
    tpu.vector_store %arg15[%c102, %c0_172], %539 {strides = array<i32>} : memref<136x32xf32, #tpu.memory_space<vmem>>, vector<17x32xf32>,
    %541 = vector.extract_strided_slice %32 {offsets = [119, 0], sizes = [17, 8], strides = [1, 1]} : vector<136x32xbf16> to vector<17x8xbf16>
    %542 = vector.extract_strided_slice %32 {offsets = [119, 8], sizes = [17, 8], strides = [1, 1]} : vector<136x32xbf16> to vector<17x8xbf16>
    %543 = vector.extract_strided_slice %32 {offsets = [119, 16], sizes = [17, 8], strides = [1, 1]} : vector<136x32xbf16> to vector<17x8xbf16>
    %544 = vector.extract_strided_slice %32 {offsets = [119, 24], sizes = [17, 8], strides = [1, 1]} : vector<136x32xbf16> to vector<17x8xbf16>
    %545 = vector.shape_cast %541 : vector<17x8xbf16> to vector<1x17x8xbf16>
    %546 = vector.shape_cast %542 : vector<17x8xbf16> to vector<1x17x8xbf16>
    %547 = vector.shape_cast %543 : vector<17x8xbf16> to vector<1x17x8xbf16>
    %548 = vector.shape_cast %544 : vector<17x8xbf16> to vector<1x17x8xbf16>
    %549 = tpu.concatenate %545, %546, %547, %548 in 0 : vector<1x17x8xbf16>, vector<1x17x8xbf16>, vector<1x17x8xbf16>, vector<1x17x8xbf16> -> vector<4x17x8xbf16>
    %550 = vector.extract_strided_slice %34 {offsets = [119, 0], sizes = [17, 8], strides = [1, 1]} : vector<136x32xbf16> to vector<17x8xbf16>
    %551 = vector.extract_strided_slice %34 {offsets = [119, 8], sizes = [17, 8], strides = [1, 1]} : vector<136x32xbf16> to vector<17x8xbf16>
    %552 = vector.extract_strided_slice %34 {offsets = [119, 16], sizes = [17, 8], strides = [1, 1]} : vector<136x32xbf16> to vector<17x8xbf16>
    %553 = vector.extract_strided_slice %34 {offsets = [119, 24], sizes = [17, 8], strides = [1, 1]} : vector<136x32xbf16> to vector<17x8xbf16>
    %554 = vector.shape_cast %550 : vector<17x8xbf16> to vector<1x17x8xbf16>
    %555 = vector.shape_cast %551 : vector<17x8xbf16> to vector<1x17x8xbf16>
    %556 = vector.shape_cast %552 : vector<17x8xbf16> to vector<1x17x8xbf16>
    %557 = vector.shape_cast %553 : vector<17x8xbf16> to vector<1x17x8xbf16>
    %558 = tpu.concatenate %554, %555, %556, %557 in 0 : vector<1x17x8xbf16>, vector<1x17x8xbf16>, vector<1x17x8xbf16>, vector<1x17x8xbf16> -> vector<4x17x8xbf16>
    %559 = vector.extract_strided_slice %36 {offsets = [119, 0], sizes = [17, 8], strides = [1, 1]} : vector<136x32xbf16> to vector<17x8xbf16>
    %560 = vector.extract_strided_slice %36 {offsets = [119, 8], sizes = [17, 8], strides = [1, 1]} : vector<136x32xbf16> to vector<17x8xbf16>
    %561 = vector.extract_strided_slice %36 {offsets = [119, 16], sizes = [17, 8], strides = [1, 1]} : vector<136x32xbf16> to vector<17x8xbf16>
    %562 = vector.extract_strided_slice %36 {offsets = [119, 24], sizes = [17, 8], strides = [1, 1]} : vector<136x32xbf16> to vector<17x8xbf16>
    %563 = vector.shape_cast %559 : vector<17x8xbf16> to vector<1x17x8xbf16>
    %564 = vector.shape_cast %560 : vector<17x8xbf16> to vector<1x17x8xbf16>
    %565 = vector.shape_cast %561 : vector<17x8xbf16> to vector<1x17x8xbf16>
    %566 = vector.shape_cast %562 : vector<17x8xbf16> to vector<1x17x8xbf16>
    %567 = tpu.concatenate %563, %564, %565, %566 in 0 : vector<1x17x8xbf16>, vector<1x17x8xbf16>, vector<1x17x8xbf16>, vector<1x17x8xbf16> -> vector<4x17x8xbf16>
    "tpu.trace_start"() <{level = 10 : i32, message = "hqd,hkd->hqk"}> : () -> ()
    %cst_173 = arith.constant dense<0.000000e+00> : vector<4x17x17xf32>
    %568 = tpu.matmul %549, %558, %cst_173 {dimension_numbers = #tpu.dot_dimension_numbers<[2], [2], [1], [1], [0, 0, 0, 1, 1, 1], [0], [0]>} : vector<4x17x8xbf16>, vector<4x17x8xbf16>, vector<4x17x17xf32> -> vector<4x17x17xf32>
    "tpu.trace_stop"() : () -> ()
    %cst_174 = arith.constant 0.353553385 : f32
    %569 = vector.broadcast %cst_174 : f32 to vector<4x17x17xf32>
    %570 = arith.mulf %568, %569 : vector<4x17x17xf32>
    %cst_175 = arith.constant dense<0xFF800000> : vector<4x17xf32>
    %571 = vector.multi_reduction <maximumf>, %570, %cst_175 [2] : vector<4x17x17xf32> to vector<4x17xf32>
    %572 = vector.shape_cast %571 : vector<4x17xf32> to vector<4x17x1xf32>
    %573 = vector.broadcast %572 : vector<4x17x1xf32> to vector<4x17x17xf32>
    %574 = arith.subf %570, %573 : vector<4x17x17xf32>
    %575 = math.exp %574 : vector<4x17x17xf32>
    %cst_176 = arith.constant dense<0.000000e+00> : vector<4x17xf32>
    %576 = vector.multi_reduction <add>, %575, %cst_176 [2] : vector<4x17x17xf32> to vector<4x17xf32>
    %577 = vector.shape_cast %576 : vector<4x17xf32> to vector<4x17x1xf32>
    %578 = tpu.reciprocal %577 {approx = true} : vector<4x17x1xf32> -> vector<4x17x1xf32>
    %579 = vector.broadcast %578 : vector<4x17x1xf32> to vector<4x17x17xf32>
    %580 = arith.mulf %575, %579 : vector<4x17x17xf32>
    %581 = arith.truncf %580 : vector<4x17x17xf32> to vector<4x17x17xbf16>
    "tpu.trace_start"() <{level = 10 : i32, message = "hqk,hkd->hqd"}> : () -> ()
    %cst_177 = arith.constant dense<0.000000e+00> : vector<4x17x8xf32>
    %582 = tpu.matmul %581, %567, %cst_177 {dimension_numbers = #tpu.dot_dimension_numbers<[2], [1], [1], [2], [0, 0, 0, 1, 1, 2], [0], [0]>} : vector<4x17x17xbf16>, vector<4x17x8xbf16>, vector<4x17x8xf32> -> vector<4x17x8xf32>
    %cst_178 = arith.constant 0.000000e+00 : f32
    "tpu.trace_stop"() : () -> ()
    %583 = vector.broadcast %cst_178 : f32 to vector<17x32xf32>
    %584 = vector.extract_strided_slice %582 {offsets = [0, 0, 0], sizes = [1, 17, 8], strides = [1, 1, 1]} : vector<4x17x8xf32> to vector<1x17x8xf32>
    %585 = vector.shape_cast %584 : vector<1x17x8xf32> to vector<17x8xf32>
    %586 = arith.truncf %585 : vector<17x8xf32> to vector<17x8xbf16>
    %c0_179 = arith.constant 0 : index
    %c0_180 = arith.constant 0 : index
    %c0_181 = arith.constant 0 : index
    %587 = vector.load %arg6[%c0_179, %c0_180, %c0_181] : memref<4x8x32xbf16, #tpu.memory_space<vmem>>, vector<1x8x32xbf16>
    %588 = vector.shape_cast %587 : vector<1x8x32xbf16> to vector<8x32xbf16>
    %cst_182 = arith.constant dense<0.000000e+00> : vector<17x32xf32>
    %589 = tpu.matmul %586, %588, %cst_182 {dimension_numbers = #tpu.dot_dimension_numbers<[1], [0], [0], [1], [0, 0, 1, 1], [], []>} : vector<17x8xbf16>, vector<8x32xbf16>, vector<17x32xf32> -> vector<17x32xf32>
    %590 = arith.addf %583, %589 : vector<17x32xf32>
    %591 = vector.extract_strided_slice %582 {offsets = [1, 0, 0], sizes = [1, 17, 8], strides = [1, 1, 1]} : vector<4x17x8xf32> to vector<1x17x8xf32>
    %592 = vector.shape_cast %591 : vector<1x17x8xf32> to vector<17x8xf32>
    %593 = arith.truncf %592 : vector<17x8xf32> to vector<17x8xbf16>
    %c1_183 = arith.constant 1 : index
    %c0_184 = arith.constant 0 : index
    %c0_185 = arith.constant 0 : index
    %594 = vector.load %arg6[%c1_183, %c0_184, %c0_185] : memref<4x8x32xbf16, #tpu.memory_space<vmem>>, vector<1x8x32xbf16>
    %595 = vector.shape_cast %594 : vector<1x8x32xbf16> to vector<8x32xbf16>
    %cst_186 = arith.constant dense<0.000000e+00> : vector<17x32xf32>
    %596 = tpu.matmul %593, %595, %cst_186 {dimension_numbers = #tpu.dot_dimension_numbers<[1], [0], [0], [1], [0, 0, 1, 1], [], []>} : vector<17x8xbf16>, vector<8x32xbf16>, vector<17x32xf32> -> vector<17x32xf32>
    %597 = arith.addf %590, %596 : vector<17x32xf32>
    %598 = vector.extract_strided_slice %582 {offsets = [2, 0, 0], sizes = [1, 17, 8], strides = [1, 1, 1]} : vector<4x17x8xf32> to vector<1x17x8xf32>
    %599 = vector.shape_cast %598 : vector<1x17x8xf32> to vector<17x8xf32>
    %600 = arith.truncf %599 : vector<17x8xf32> to vector<17x8xbf16>
    %c2_187 = arith.constant 2 : index
    %c0_188 = arith.constant 0 : index
    %c0_189 = arith.constant 0 : index
    %601 = vector.load %arg6[%c2_187, %c0_188, %c0_189] : memref<4x8x32xbf16, #tpu.memory_space<vmem>>, vector<1x8x32xbf16>
    %602 = vector.shape_cast %601 : vector<1x8x32xbf16> to vector<8x32xbf16>
    %cst_190 = arith.constant dense<0.000000e+00> : vector<17x32xf32>
    %603 = tpu.matmul %600, %602, %cst_190 {dimension_numbers = #tpu.dot_dimension_numbers<[1], [0], [0], [1], [0, 0, 1, 1], [], []>} : vector<17x8xbf16>, vector<8x32xbf16>, vector<17x32xf32> -> vector<17x32xf32>
    %604 = arith.addf %597, %603 : vector<17x32xf32>
    %605 = vector.extract_strided_slice %582 {offsets = [3, 0, 0], sizes = [1, 17, 8], strides = [1, 1, 1]} : vector<4x17x8xf32> to vector<1x17x8xf32>
    %606 = vector.shape_cast %605 : vector<1x17x8xf32> to vector<17x8xf32>
    %607 = arith.truncf %606 : vector<17x8xf32> to vector<17x8xbf16>
    %c3_191 = arith.constant 3 : index
    %c0_192 = arith.constant 0 : index
    %c0_193 = arith.constant 0 : index
    %608 = vector.load %arg6[%c3_191, %c0_192, %c0_193] : memref<4x8x32xbf16, #tpu.memory_space<vmem>>, vector<1x8x32xbf16>
    %609 = vector.shape_cast %608 : vector<1x8x32xbf16> to vector<8x32xbf16>
    %cst_194 = arith.constant dense<0.000000e+00> : vector<17x32xf32>
    %610 = tpu.matmul %607, %609, %cst_194 {dimension_numbers = #tpu.dot_dimension_numbers<[1], [0], [0], [1], [0, 0, 1, 1], [], []>} : vector<17x8xbf16>, vector<8x32xbf16>, vector<17x32xf32> -> vector<17x32xf32>
    %611 = arith.addf %604, %610 : vector<17x32xf32>
    %c119 = arith.constant 119 : index
    %c0_195 = arith.constant 0 : index
    %612 = vector.load %arg15[%c119, %c0_195] : memref<136x32xf32, #tpu.memory_space<vmem>>, vector<17x32xf32>
    tpu.vector_store %arg15[%c119, %c0_195], %611 {strides = array<i32>} : memref<136x32xf32, #tpu.memory_space<vmem>>, vector<17x32xf32>,
    %c0_196 = arith.constant 0 : index
    %c0_197 = arith.constant 0 : index
    %613 = vector.load %arg15[%c0_196, %c0_197] : memref<136x32xf32, #tpu.memory_space<vmem>>, vector<136x32xf32>
    %614 = arith.addf %0, %613 : vector<136x32xf32>
    %c0_198 = arith.constant 0 : index
    %c0_199 = arith.constant 0 : index
    %615 = vector.load %arg7[%c0_198, %c0_199] : memref<1x32xf32, #tpu.memory_space<vmem>>, vector<1x32xf32>
    %616 = vector.broadcast %615 : vector<1x32xf32> to vector<136x32xf32>
    %617 = arith.addf %614, %616 : vector<136x32xf32>
    %cst_200 = arith.constant dense<0.000000e+00> : vector<136xf32>
    %618 = vector.multi_reduction <add>, %617, %cst_200 [1] : vector<136x32xf32> to vector<136xf32>
    %619 = vector.shape_cast %618 : vector<136xf32> to vector<136x1xf32>
    %cst_201 = arith.constant 3.200000e+01 : f32
    %620 = vector.broadcast %cst_201 : f32 to vector<136x1xf32>
    %621 = arith.divf %619, %620 : vector<136x1xf32>
    %622 = vector.broadcast %621 : vector<136x1xf32> to vector<136x32xf32>
    %623 = arith.subf %617, %622 : vector<136x32xf32>
    %624 = arith.mulf %623, %623 : vector<136x32xf32>
    %cst_202 = arith.constant dense<0.000000e+00> : vector<136xf32>
    %625 = vector.multi_reduction <add>, %624, %cst_202 [1] : vector<136x32xf32> to vector<136xf32>
    %626 = vector.shape_cast %625 : vector<136xf32> to vector<136x1xf32>
    %cst_203 = arith.constant 3.200000e+01 : f32
    %627 = vector.broadcast %cst_203 : f32 to vector<136x1xf32>
    %628 = arith.divf %626, %627 : vector<136x1xf32>
    %629 = vector.broadcast %621 : vector<136x1xf32> to vector<136x32xf32>
    %630 = arith.subf %617, %629 : vector<136x32xf32>
    %cst_204 = arith.constant 9.99999974E-6 : f32
    %631 = vector.broadcast %cst_204 : f32 to vector<136x1xf32>
    %632 = arith.addf %628, %631 : vector<136x1xf32>
    %633 = math.rsqrt %632 : vector<136x1xf32>
    %634 = vector.broadcast %633 : vector<136x1xf32> to vector<136x32xf32>
    %635 = arith.mulf %630, %634 : vector<136x32xf32>
    %c0_205 = arith.constant 0 : index
    %c0_206 = arith.constant 0 : index
    %636 = vector.load %arg8[%c0_205, %c0_206] : memref<1x32xf32, #tpu.memory_space<vmem>>, vector<1x32xf32>
    %637 = vector.broadcast %636 : vector<1x32xf32> to vector<136x32xf32>
    %638 = arith.mulf %635, %637 : vector<136x32xf32>
    %c0_207 = arith.constant 0 : index
    %c0_208 = arith.constant 0 : index
    %639 = vector.load %arg9[%c0_207, %c0_208] : memref<1x32xf32, #tpu.memory_space<vmem>>, vector<1x32xf32>
    %640 = vector.broadcast %639 : vector<1x32xf32> to vector<136x32xf32>
    %641 = arith.addf %638, %640 : vector<136x32xf32>
    %642 = arith.truncf %641 : vector<136x32xf32> to vector<136x32xbf16>
    %c0_209 = arith.constant 0 : index
    %c0_210 = arith.constant 0 : index
    %643 = vector.load %arg10[%c0_209, %c0_210] : memref<32x64xbf16, #tpu.memory_space<vmem>>, vector<32x64xbf16>
    %cst_211 = arith.constant dense<0.000000e+00> : vector<136x64xf32>
    %644 = tpu.matmul %642, %643, %cst_211 {dimension_numbers = #tpu.dot_dimension_numbers<[1], [0], [0], [1], [0, 0, 1, 1], [], []>} : vector<136x32xbf16>, vector<32x64xbf16>, vector<136x64xf32> -> vector<136x64xf32>
    %c0_212 = arith.constant 0 : index
    %c0_213 = arith.constant 0 : index
    %645 = vector.load %arg11[%c0_212, %c0_213] : memref<1x64xf32, #tpu.memory_space<vmem>>, vector<1x64xf32>
    %646 = vector.broadcast %645 : vector<1x64xf32> to vector<136x64xf32>
    %647 = arith.addf %644, %646 : vector<136x64xf32>
    %648 = arith.mulf %647, %647 : vector<136x64xf32>
    %649 = arith.mulf %647, %648 : vector<136x64xf32>
    %cst_214 = arith.constant 4.471500e-02 : f32
    %650 = vector.broadcast %cst_214 : f32 to vector<136x64xf32>
    %651 = arith.mulf %650, %649 : vector<136x64xf32>
    %652 = arith.addf %647, %651 : vector<136x64xf32>
    %cst_215 = arith.constant 0.797884583 : f32
    %653 = vector.broadcast %cst_215 : f32 to vector<136x64xf32>
    %654 = arith.mulf %653, %652 : vector<136x64xf32>
    %655 = math.tanh %654 : vector<136x64xf32>
    %cst_216 = arith.constant 1.000000e+00 : f32
    %656 = vector.broadcast %cst_216 : f32 to vector<136x64xf32>
    %657 = arith.addf %656, %655 : vector<136x64xf32>
    %cst_217 = arith.constant 5.000000e-01 : f32
    %658 = vector.broadcast %cst_217 : f32 to vector<136x64xf32>
    %659 = arith.mulf %658, %657 : vector<136x64xf32>
    %660 = arith.mulf %647, %659 : vector<136x64xf32>
    %661 = arith.truncf %660 : vector<136x64xf32> to vector<136x64xbf16>
    %c0_218 = arith.constant 0 : index
    %c0_219 = arith.constant 0 : index
    %662 = vector.load %arg12[%c0_218, %c0_219] : memref<64x32xbf16, #tpu.memory_space<vmem>>, vector<64x32xbf16>
    %cst_220 = arith.constant dense<0.000000e+00> : vector<136x32xf32>
    %663 = tpu.matmul %661, %662, %cst_220 {dimension_numbers = #tpu.dot_dimension_numbers<[1], [0], [0], [1], [0, 0, 1, 1], [], []>} : vector<136x64xbf16>, vector<64x32xbf16>, vector<136x32xf32> -> vector<136x32xf32>
    %c0_221 = arith.constant 0 : index
    %c0_222 = arith.constant 0 : index
    %664 = vector.load %arg13[%c0_221, %c0_222] : memref<1x32xf32, #tpu.memory_space<vmem>>, vector<1x32xf32>
    %665 = vector.broadcast %664 : vector<1x32xf32> to vector<136x32xf32>
    %666 = arith.addf %663, %665 : vector<136x32xf32>
    %667 = arith.addf %617, %666 : vector<136x32xf32>
    %c0_223 = arith.constant 0 : index
    %c0_224 = arith.constant 0 : index
    %668 = vector.load %arg14[%c0_223, %c0_224] : memref<136x32xf32, #tpu.memory_space<vmem>>, vector<136x32xf32>
    tpu.vector_store %arg14[%c0_223, %c0_224], %667 {strides = array<i32>} : memref<136x32xf32, #tpu.memory_space<vmem>>, vector<136x32xf32>,
    return
  }
  func.func @transform_0(%arg0: i32) -> (i32, i32) {
    %c0_i32 = arith.constant 0 : i32
    %c0_i32_0 = arith.constant 0 : i32
    return %arg0, %c0_i32 : i32, i32
  }
  func.func @transform_1(%arg0: i32) -> (i32, i32) {
    %c0_i32 = arith.constant 0 : i32
    %c0_i32_0 = arith.constant 0 : i32
    %c0_i32_1 = arith.constant 0 : i32
    return %c0_i32, %c0_i32_0 : i32, i32
  }
  func.func @transform_2(%arg0: i32) -> (i32, i32) {
    %c0_i32 = arith.constant 0 : i32
    %c0_i32_0 = arith.constant 0 : i32
    %c0_i32_1 = arith.constant 0 : i32
    return %c0_i32, %c0_i32_0 : i32, i32
  }
  func.func @transform_3(%arg0: i32) -> (i32, i32) {
    %c0_i32 = arith.constant 0 : i32
    %c0_i32_0 = arith.constant 0 : i32
    %c0_i32_1 = arith.constant 0 : i32
    return %c0_i32, %c0_i32_0 : i32, i32
  }
  func.func @transform_4(%arg0: i32) -> (i32, i32) {
    %c0_i32 = arith.constant 0 : i32
    %c0_i32_0 = arith.constant 0 : i32
    %c0_i32_1 = arith.constant 0 : i32
    return %c0_i32, %c0_i32_0 : i32, i32
  }
  func.func @transform_5(%arg0: i32) -> (i32, i32, i32) {
    %c0_i32 = arith.constant 0 : i32
    %c0_i32_0 = arith.constant 0 : i32
    %c0_i32_1 = arith.constant 0 : i32
    %c0_i32_2 = arith.constant 0 : i32
    return %c0_i32, %c0_i32_0, %c0_i32_1 : i32, i32, i32
  }
  func.func @transform_6(%arg0: i32) -> (i32, i32) {
    %c0_i32 = arith.constant 0 : i32
    %c0_i32_0 = arith.constant 0 : i32
    %c0_i32_1 = arith.constant 0 : i32
    return %c0_i32, %c0_i32_0 : i32, i32
  }
  func.func @transform_7(%arg0: i32) -> (i32, i32) {
    %c0_i32 = arith.constant 0 : i32
    %c0_i32_0 = arith.constant 0 : i32
    %c0_i32_1 = arith.constant 0 : i32
    return %c0_i32, %c0_i32_0 : i32, i32
  }
  func.func @transform_8(%arg0: i32) -> (i32, i32) {
    %c0_i32 = arith.constant 0 : i32
    %c0_i32_0 = arith.constant 0 : i32
    %c0_i32_1 = arith.constant 0 : i32
    return %c0_i32, %c0_i32_0 : i32, i32
  }
  func.func @transform_9(%arg0: i32) -> (i32, i32) {
    %c0_i32 = arith.constant 0 : i32
    %c0_i32_0 = arith.constant 0 : i32
    %c0_i32_1 = arith.constant 0 : i32
    return %c0_i32, %c0_i32_0 : i32, i32
  }
  func.func @transform_10(%arg0: i32) -> (i32, i32) {
    %c0_i32 = arith.constant 0 : i32
    %c0_i32_0 = arith.constant 0 : i32
    %c0_i32_1 = arith.constant 0 : i32
    return %c0_i32, %c0_i32_0 : i32, i32
  }
  func.func @transform_11(%arg0: i32) -> (i32, i32) {
    %c0_i32 = arith.constant 0 : i32
    %c0_i32_0 = arith.constant 0 : i32
    %c0_i32_1 = arith.constant 0 : i32
    return %c0_i32, %c0_i32_0 : i32, i32
  }
  func.func @transform_12(%arg0: i32) -> (i32, i32) {
    %c0_i32 = arith.constant 0 : i32
    %c0_i32_0 = arith.constant 0 : i32
    %c0_i32_1 = arith.constant 0 : i32
    return %c0_i32, %c0_i32_0 : i32, i32
  }
  func.func @transform_13(%arg0: i32) -> (i32, i32) {
    %c0_i32 = arith.constant 0 : i32
    %c0_i32_0 = arith.constant 0 : i32
    return %arg0, %c0_i32 : i32, i32
  }
}

</mosaic_0001>

<llo_original>
// kernel: vit_forward.4
$region0: #{vit_forward.4}
  #allocation0 [shape = 'u32[]', space=smem, size = 0x4, offset = 0x4, fixed_abs, tag = 'smem constant byte address 0x4 - core index']
  #allocation1 [shape = 'u32[144,128]{1,0:T(1,128)}', space=vmem, size = 0x12000, scoped, tag = 'internal scratch']
  %s0 = inlined_call_operand.vmem [shape: f32[16,16,48], index: 0, kind: input, shape index: {}]
  %s1 = inlined_call_operand.vmem [shape: bf16[48,32], index: 1, kind: input, shape index: {}]
  %s2 = inlined_call_operand.vmem [shape: f32[1,32], index: 2, kind: input, shape index: {}]
  %s3 = inlined_call_operand.vmem [shape: f32[16,32], index: 3, kind: input, shape index: {}]
  %s4 = inlined_call_operand.vmem [shape: f32[16,16,32], index: 4, kind: output, shape index: {}]
  %s5 = sld [smem:[#allocation0]]
  $region49: #{vit_forward.4} parent=0
    _
  %s7 = ssub.s32 1, %s5
  %s8 = scalar_select 0, %s7, %s5
  loop: start=0, step=1, limit=18
  $region2: #{vit_forward.4} parent=0 // loop_pre_header
    _
  $region3: #{vit_forward.4} parent=0 // loop_header
    %s10 = sphi 0, %s14
    %p11 = scmp.ge.s32.totalorder %s10, 18
    %s20 = sphi 0, %s22
    %s23 = sphi 0, %s20
    %s24 = sphi 0, %s23
    %s40 = sphi 0, %s24
    %s44 = sphi 0, %s44
    %s46 = sphi 0, %s44
    %s47 = sphi 0, %s46
    %s61 = sphi 0, %s47
    %s65 = sphi 0, %s65
    %s67 = sphi 0, %s65
    %s68 = sphi 0, %s67
    %s82 = sphi 0, %s68
    %s86 = sphi 0, %s86
    %s88 = sphi 0, %s86
    %s89 = sphi 0, %s88
    %s103 = sphi 0, %s89
    %s109 = sphi 0, %s111
    %s112 = sphi 0, %s109
    %s113 = sphi 0, %s112
    %s129 = sphi 0, %s113
  $region4: #{vit_forward.4} parent=0 // loop_header_branch
    %13 = sbr.rel (%p11) target = $region8
  $region5: #{vit_forward.4} parent=0 // loop_body
    %s15 = ssub.s32 %s10, 1
    %s16 = ssub.s32 %s10, 2
    %s17 = sadd.s32 %s10, 1
    %s18 = ssub.s32 %s10, %s17
    %p19 = scmp.eq.s32.totalorder %s18, 0
    %s21 = sadd.s32 %s20, 1
    %s22 = scalar_select %p19, %s20, %s21
    %p25 = pneg %p19
    %p26 = scmp.eq.s32.totalorder %s10, 15
    %p27 = por %p25, %p26
    %p28 = scmp.ne.s32.totalorder %s20, %s23
    %p29 = scmp.eq.s32.totalorder %s10, 0
    %p30 = por %p28, %p29
    %p31 = scmp.ne.s32.totalorder %s20, %s23
    %p32 = scmp.eq.s32.totalorder %s15, 15
    %p33 = por %p31, %p32
    %p34 = scmp.ne.s32.totalorder %s23, %s24
    %p35 = scmp.eq.s32.totalorder %s15, 0
    %p36 = por %p34, %p35
    %p37 = scmp.ne.s32.totalorder %s23, %s24
    %p38 = scmp.eq.s32.totalorder %s16, 15
    %p39 = por %p37, %p38
    %p41 = scmp.ne.s32.totalorder %s24, %s40
    %p42 = scmp.eq.s32.totalorder %s16, 0
    %p43 = por %p41, %p42
    %s45 = sadd.s32 %s44, 1
    %p48 = scmp.eq.s32.totalorder %s10, 15
    %p49 = scmp.ne.s32.totalorder %s44, %s46
    %p50 = scmp.eq.s32.totalorder %s10, 0
    %p51 = por %p49, %p50
    %p52 = scmp.ne.s32.totalorder %s44, %s46
    %p53 = scmp.eq.s32.totalorder %s15, 15
    %p54 = por %p52, %p53
    %p55 = scmp.ne.s32.totalorder %s46, %s47
    %p56 = scmp.eq.s32.totalorder %s15, 0
    %p57 = por %p55, %p56
    %p58 = scmp.ne.s32.totalorder %s46, %s47
    %p59 = scmp.eq.s32.totalorder %s16, 15
    %p60 = por %p58, %p59
    %p62 = scmp.ne.s32.totalorder %s47, %s61
    %p63 = scmp.eq.s32.totalorder %s16, 0
    %p64 = por %p62, %p63
    %s66 = sadd.s32 %s65, 1
    %p69 = scmp.eq.s32.totalorder %s10, 15
    %p70 = scmp.ne.s32.totalorder %s65, %s67
    %p71 = scmp.eq.s32.totalorder %s10, 0
    %p72 = por %p70, %p71
    %p73 = scmp.ne.s32.totalorder %s65, %s67
    %p74 = scmp.eq.s32.totalorder %s15, 15
    %p75 = por %p73, %p74
    %p76 = scmp.ne.s32.totalorder %s67, %s68
    %p77 = scmp.eq.s32.totalorder %s15, 0
    %p78 = por %p76, %p77
    %p79 = scmp.ne.s32.totalorder %s67, %s68
    %p80 = scmp.eq.s32.totalorder %s16, 15
    %p81 = por %p79, %p80
    %p83 = scmp.ne.s32.totalorder %s68, %s82
    %p84 = scmp.eq.s32.totalorder %s16, 0
    %p85 = por %p83, %p84
    %s87 = sadd.s32 %s86, 1
    %p90 = scmp.eq.s32.totalorder %s10, 15
    %p91 = scmp.ne.s32.totalorder %s86, %s88
    %p92 = scmp.eq.s32.totalorder %s10, 0
    %p93 = por %p91, %p92
    %p94 = scmp.ne.s32.totalorder %s86, %s88
    %p95 = scmp.eq.s32.totalorder %s15, 15
    %p96 = por %p94, %p95
    %p97 = scmp.ne.s32.totalorder %s88, %s89
    %p98 = scmp.eq.s32.totalorder %s15, 0
    %p99 = por %p97, %p98
    %p100 = scmp.ne.s32.totalorder %s88, %s89
    %p101 = scmp.eq.s32.totalorder %s16, 15
    %p102 = por %p100, %p101
    %p104 = scmp.ne.s32.totalorder %s89, %s103
    %p105 = scmp.eq.s32.totalorder %s16, 0
    %p106 = por %p104, %p105
    %s107 = ssub.s32 %s10, %s17
    %p108 = scmp.eq.s32.totalorder %s107, 0
    %s110 = sadd.s32 %s109, 1
    %s111 = scalar_select %p108, %s109, %s110
    %p114 = pneg %p108
    %p115 = scmp.eq.s32.totalorder %s10, 15
    %p116 = por %p114, %p115
    %p117 = scmp.ne.s32.totalorder %s109, %s112
    %p118 = scmp.eq.s32.totalorder %s10, 0
    %p119 = por %p117, %p118
    %p120 = scmp.ne.s32.totalorder %s109, %s112
    %p121 = scmp.eq.s32.totalorder %s15, 15
    %p122 = por %p120, %p121
    %p123 = scmp.ne.s32.totalorder %s112, %s113
    %p124 = scmp.eq.s32.totalorder %s15, 0
    %p125 = por %p123, %p124
    %p126 = scmp.ne.s32.totalorder %s112, %s113
    %p127 = scmp.eq.s32.totalorder %s16, 15
    %p128 = por %p126, %p127
    %p130 = scmp.ne.s32.totalorder %s113, %s129
    %p131 = scmp.eq.s32.totalorder %s16, 0
    %p132 = por %p130, %p131
    %p133 = scmp.le.s32.totalorder 1, %s10
    %p134 = scmp.lt.s32.totalorder %s10, 17
    %p135 = pnand %p133, %p134
    %p136 = pneg %p135
    // Predicated region
    $region9: #{vit_forward.4} parent=5 // pred_check
      _
    $region10: #{vit_forward.4} parent=5 // pred_check_branch
      %138 = sbr.rel (%p135) target = $region12
    $region11: #{vit_forward.4} parent=5 // pred_region
      %s139 = ssub.s32 %s10, 1
      // Predicated region
      $region13: #{vit_forward.4} parent=11 // pred_check
        %p140 = pneg %p57
      $region14: #{vit_forward.4} parent=11 // pred_check_branch
        %142 = sbr.rel (%p140) target = $region16
      $region15: #{vit_forward.4} parent=11 // pred_region
        _
      $region16: #{vit_forward.4} parent=11 // pred_fallthru
        _
      // Predicated region
      $region17: #{vit_forward.4} parent=11 // pred_check
        %p143 = pneg %p78
      $region18: #{vit_forward.4} parent=11 // pred_check_branch
        %145 = sbr.rel (%p143) target = $region20
      $region19: #{vit_forward.4} parent=11 // pred_region
        _
      $region20: #{vit_forward.4} parent=11 // pred_fallthru
        _
      // Predicated region
      $region21: #{vit_forward.4} parent=11 // pred_check
        %p146 = pneg %p99
      $region22: #{vit_forward.4} parent=11 // pred_check_branch
        %148 = sbr.rel (%p146) target = $region24
      $region23: #{vit_forward.4} parent=11 // pred_region
        _
      $region24: #{vit_forward.4} parent=11 // pred_fallthru
        _
    $region12: #{vit_forward.4} parent=5 // pred_fallthru
      _
    %p149 = scmp.lt.s32.totalorder %s10, 16
    // Predicated region
    $region25: #{vit_forward.4} parent=5 // pred_check
      %p150 = pneg %p149
    $region26: #{vit_forward.4} parent=5 // pred_check_branch
      %152 = sbr.rel (%p150) target = $region28
    $region27: #{vit_forward.4} parent=5 // pred_region
      // Predicated region
      $region29: #{vit_forward.4} parent=27 // pred_check
        %p153 = pneg %p30
      $region30: #{vit_forward.4} parent=27 // pred_check_branch
        %155 = sbr.rel (%p153) target = $region32
      $region31: #{vit_forward.4} parent=27 // pred_region
        %p156 = scmp.lt.s32.totalorder %s10, 15
        %s157 = scalar_select %p156, %s10, 15
        %s158 = smul.addr %s157, 2
        %s159 = smul.addr %s158, 8
        %s160 = scalar_lea.vmem %s0, %s159
      $region32: #{vit_forward.4} parent=27 // pred_fallthru
        _
    $region28: #{vit_forward.4} parent=5 // pred_fallthru
      _
    %p161 = scmp.le.s32.totalorder 1, %s10
    %p162 = scmp.lt.s32.totalorder %s10, 17
    %p163 = pnand %p161, %p162
    %p164 = pneg %p163
    // Predicated region
    $region33: #{vit_forward.4} parent=5 // pred_check
      _
    $region34: #{vit_forward.4} parent=5 // pred_check_branch
      %166 = sbr.rel (%p163) target = $region36
    $region35: #{vit_forward.4} parent=5 // pred_region
      %s167 = ssub.s32 %s10, 1
      %p168 = scmp.lt.s32.totalorder %s15, 15
      %s169 = scalar_select %p168, %s15, 15
      %s170 = smul.addr %s169, 2
      %s171 = smul.addr %s170, 8
      %s172 = scalar_lea.vmem %s0, %s171
      %p173 = pneg %p36
      %p174 = pneg %p33
      %p175 = pneg %p57
      %p176 = pneg %p54
      %p177 = pneg %p78
      %p178 = pneg %p75
      %p179 = pneg %p99
      %p180 = pneg %p96
      %p181 = pneg %p125
      %p182 = pneg %p122
      %p183 = scmp.lt.s32.totalorder %s15, 15
      %s184 = scalar_select %p183, %s15, 15
      %s185 = smul.addr %s184, 2
      %s186 = smul.addr %s185, 8
      %s187 = scalar_lea.vmem %s4, %s186
      %p188 = scmp.lt.s32.totalorder %s15, 15
      %s189 = scalar_select %p188, %s15, 15
      %s190 = smul.addr %s189, 2
      %s191 = smul.addr %s190, 8
      %s192 = scalar_lea.vmem %s0, %s191
      %p193 = scmp.lt.s32.totalorder %s15, 15
      %s194 = scalar_select %p193, %s15, 15
      %s195 = smul.addr %s194, 2
      %s196 = smul.addr %s195, 8
      %s197 = scalar_lea.vmem %s4, %s196
      %v199 = vld [vmem:[%s192] sm:$0xff]
      %v200 = vld [vmem:[%s192 + $0x8] sm:$0xff]
      %v201 = vpack.c.bf16 %v200, %v199
      %v202 = vld [vmem:[%s1] sm:$0xf]
      %v203 = vld [vmem:[%s1 + $0x4] sm:$0xf]
      %v204 = vld [vmem:[%s1 + $0x8] sm:$0xf]
      %v205 = vld [vmem:[%s1 + $0xc] sm:$0xf]
      %v206 = vld [vmem:[%s1 + $0x10] sm:$0xf]
      %v207 = vld [vmem:[%s1 + $0x14] sm:$0xf]
      %v208 = vld [vmem:[%s2] sm:$0x1]
      %v210 = vlaneseq
      %v211 = vshrl.u32 %v210, 7
      %v212 = vsub.s32 0, %v211
      %v213 = vrot.slane %v208, %v212
      %v221 = vunpack.c.l.b16 %v202
      %v222 = vunpack.c.l.b16 %v203
      %v223 = vunpack.c.l.b16 %v204
      %v224 = vunpack.c.l.b16 %v205
      %v225 = vunpack.c.l.b16 %v206
      %v226 = vunpack.c.l.b16 %v207
      %v227 = vpack.c.b16 %v222, %v221
      %v228 = vpack.c.b16 %v224, %v223
      %v229 = vpack.c.b16 %v226, %v225
      %vm233 = vcmask 392192
      %v235 = vsel %vm233, %v201, 0
      %237 = vmatprep.subr.bf16.mxu0 0
      %238 = vmatpush1.bf16.msra.mxu0 %v227
      %239 = vmatprep.subr.bf16.mxu0 0
      %240 = vmatpush1.bf16.msra.mxu0 %v228
      %241 = vmatprep.subr.bf16.mxu0 0
      %242 = vmatpush1.bf16.msra.mxu0 %v229
      %243 = vmatprep.subr.bf16.mxu0 0
      %244 = vmatpush1.bf16.msra.mxu0 0
      %245 = vmatprep.subr.bf16.mxu0 0
      %246 = vmatpush1.bf16.msra.mxu0 0
      %247 = vmatprep.subr.bf16.mxu0 0
      %248 = vmatpush1.bf16.msra.mxu0 0
      %249 = vmatprep.subr.bf16.mxu0 0
      %250 = vmatpush1.bf16.msra.mxu0 0
      %251 = vmatprep.subr.bf16.mxu0 0
      %252 = vmatpush1.bf16.msra.mxu0 0
      %253 = vmatprep.subr.bf16.mxu0 0
      %254 = vmatpush1.bf16.msra.mxu0 0
      %255 = vmatprep.subr.bf16.mxu0 0
      %256 = vmatpush1.bf16.msra.mxu0 0
      %257 = vmatprep.subr.bf16.mxu0 0
      %258 = vmatpush1.bf16.msra.mxu0 0
      %259 = vmatprep.subr.bf16.mxu0 0
      %260 = vmatpush1.bf16.msra.mxu0 0
      %261 = vmatprep.subr.bf16.mxu0 0
      %262 = vmatpush1.bf16.msra.mxu0 0
      %263 = vmatprep.subr.bf16.mxu0 0
      %264 = vmatpush1.bf16.msra.mxu0 0
      %265 = vmatprep.subr.bf16.mxu0 0
      %266 = vmatpush1.bf16.msra.mxu0 0
      %267 = vmatprep.subr.bf16.mxu0 0
      %268 = vmatpush1.bf16.msra.mxu0 0
      %269 = vmatprep.mubr.bf16.mxu0 0
      %270 = vmatmul.mubr.bf16.gmra.mrb[0].mxu0 %v235
      %v271 = vpop.f32.mrb[0].mxu0
      %v272 = vadd.f32 %v213, %v271
      %v273 = vpop.f32.mrb[0].mxu0
      %v274 = vpop.f32.mrb[0].mxu0
      %v275 = vadd.f32 %v213, %v274
      %v276 = vpop.f32.mrb[0].mxu0
      %277 = vdwg.mxu0
      %v278 = vld [vmem:[%s3] sm:$0xff]
      %v279 = vld [vmem:[%s3 + $0x8] sm:$0xff]
      %v280 = vadd.f32 %v272, %v278
      %v281 = vadd.f32 %v275, %v279
      %vm282 = vcmask 261120
      %283 = vst.msk [vmem:[%s197] sm:$0xff] %vm282, %v280
      %284 = vst.msk [vmem:[%s197 + $0x8] sm:$0xff] %vm282, %v281
      %p285 = scmp.lt.s32.totalorder %s15, 15
      %s286 = scalar_select %p285, %s15, 15
      %s287 = smul.addr %s286, 2
      %s288 = smul.addr %s287, 8
      %s289 = scalar_lea.vmem %s4, %s288
      // Predicated region
      $region37: #{vit_forward.4} parent=35 // pred_check
        %p290 = pneg %p122
      $region38: #{vit_forward.4} parent=35 // pred_check_branch
        %292 = sbr.rel (%p290) target = $region40
      $region39: #{vit_forward.4} parent=35 // pred_region
        _
      $region40: #{vit_forward.4} parent=35 // pred_fallthru
        _
    $region36: #{vit_forward.4} parent=5 // pred_fallthru
      _
    %p293 = scmp.le.s32.totalorder 2, %s10
    // Predicated region
    $region41: #{vit_forward.4} parent=5 // pred_check
      %p294 = pneg %p293
    $region42: #{vit_forward.4} parent=5 // pred_check_branch
      %296 = sbr.rel (%p294) target = $region44
    $region43: #{vit_forward.4} parent=5 // pred_region
      %s297 = ssub.s32 %s10, 2
      // Predicated region
      $region45: #{vit_forward.4} parent=43 // pred_check
        %p298 = pneg %p128
      $region46: #{vit_forward.4} parent=43 // pred_check_branch
        %300 = sbr.rel (%p298) target = $region48
      $region47: #{vit_forward.4} parent=43 // pred_region
        %p301 = scmp.lt.s32.totalorder %s16, 15
        %s302 = scalar_select %p301, %s16, 15
        %s303 = smul.addr %s302, 2
        %s304 = smul.addr %s303, 8
        %s305 = scalar_lea.vmem %s4, %s304
      $region48: #{vit_forward.4} parent=43 // pred_fallthru
        _
    $region44: #{vit_forward.4} parent=5 // pred_fallthru
      _
  $region6: #{vit_forward.4} parent=0 // loop_footer
    %s14 = sadd.s32 1, %s10
  $region7: #{vit_forward.4} parent=0 // loop_footer_branch
    %9 = sbr.rel target = $region3
  $region8: #{vit_forward.4} parent=0 // loop_exit
    _

// kernel: vit_forward.7
$region0: #{vit_forward.7}
  #allocation0 [shape = 'u32[]', space=smem, size = 0x4, offset = 0x4, fixed_abs, tag = 'smem constant byte address 0x4 - core index']
  #allocation1 [shape = 'u32[144,128]{1,0:T(1,128)}', space=vmem, size = 0x12000, scoped, tag = 'internal scratch']
  %s0 = inlined_call_operand.vmem [shape: f32[16,32], index: 0, kind: input, shape index: {}]
  %s1 = inlined_call_operand.vmem [shape: bf16[32,10], index: 1, kind: input, shape index: {}]
  %s2 = inlined_call_operand.vmem [shape: f32[1,10], index: 2, kind: input, shape index: {}]
  %s3 = inlined_call_operand.hbm [shape: f32[16,10], index: 3, kind: output, shape index: {}]
  %s4 = sld [smem:[#allocation0]]
  $region22: #{vit_forward.7} parent=0
    _
  %s6 = ssub.s32 1, %s4
  %s7 = scalar_select 0, %s6, %s4
  $region1: #{vit_forward.7} parent=0
    #allocation2 [shape = 'u8[8192]{0}', space=vmem, size = 0x2000, scoped, tag = 'output window, operand 0, single buffered']
    #allocation3 [shape = 's32[1]{0}', space=sflag, size = 0x4, scoped, tag = 'scoped memory for vit_forward.7']
    %8 = vsyncpa [#allocation3], 0
    // Predicated region
    $region2: #{vit_forward.7} parent=1 // pred_check
      _
    $region3: #{vit_forward.7} parent=1 // pred_check_branch
      %10 = sbr.rel (0) target = $region5
    $region4: #{vit_forward.7} parent=1 // pred_region
      _
    $region5: #{vit_forward.7} parent=1 // pred_fallthru
      _
    // Predicated region
    $region6: #{vit_forward.7} parent=1 // pred_check
      _
    $region7: #{vit_forward.7} parent=1 // pred_check_branch
      %12 = sbr.rel (0) target = $region9
    $region8: #{vit_forward.7} parent=1 // pred_region
      _
    $region9: #{vit_forward.7} parent=1 // pred_fallthru
      _
    // Predicated region
    $region10: #{vit_forward.7} parent=1 // pred_check
      _
    $region11: #{vit_forward.7} parent=1 // pred_check_branch
      %14 = sbr.rel (0) target = $region13
    $region12: #{vit_forward.7} parent=1 // pred_region
      _
    $region13: #{vit_forward.7} parent=1 // pred_fallthru
      _
    %v16 = vld [vmem:[%s0] sm:$0xff]
    %v17 = vld [vmem:[%s0 + $0x8] sm:$0xff]
    %v18 = vpack.c.bf16 %v17, %v16
    %v19 = vld [vmem:[%s1] sm:$0xf]
    %v20 = vld [vmem:[%s1 + $0x4] sm:$0xf]
    %v21 = vld [vmem:[%s1 + $0x8] sm:$0xf]
    %v22 = vld [vmem:[%s1 + $0xc] sm:$0xf]
    %v23 = vld [vmem:[%s2] sm:$0x1]
    %v25 = vlaneseq
    %v26 = vshrl.u32 %v25, 7
    %v27 = vsub.s32 0, %v26
    %v28 = vrot.slane %v23, %v27
    %v34 = vunpack.c.l.b16 %v19
    %v35 = vunpack.c.l.b16 %v20
    %v36 = vunpack.c.l.b16 %v21
    %v37 = vunpack.c.l.b16 %v22
    %v38 = vpack.c.b16 %v35, %v34
    %v39 = vpack.c.b16 %v37, %v36
    %vm42 = vcmask 261120
    %v44 = vsel %vm42, %v18, 0
    %46 = vmatprep.subr.bf16.mxu0 0
    %47 = vmatpush1.bf16.msra.mxu0 %v38
    %48 = vmatprep.subr.bf16.mxu0 0
    %49 = vmatpush1.bf16.msra.mxu0 %v39
    %50 = vmatprep.subr.bf16.mxu0 0
    %51 = vmatpush1.bf16.msra.mxu0 0
    %52 = vmatprep.subr.bf16.mxu0 0
    %53 = vmatpush1.bf16.msra.mxu0 0
    %54 = vmatprep.subr.bf16.mxu0 0
    %55 = vmatpush1.bf16.msra.mxu0 0
    %56 = vmatprep.subr.bf16.mxu0 0
    %57 = vmatpush1.bf16.msra.mxu0 0
    %58 = vmatprep.subr.bf16.mxu0 0
    %59 = vmatpush1.bf16.msra.mxu0 0
    %60 = vmatprep.subr.bf16.mxu0 0
    %61 = vmatpush1.bf16.msra.mxu0 0
    %62 = vmatprep.subr.bf16.mxu0 0
    %63 = vmatpush1.bf16.msra.mxu0 0
    %64 = vmatprep.subr.bf16.mxu0 0
    %65 = vmatpush1.bf16.msra.mxu0 0
    %66 = vmatprep.subr.bf16.mxu0 0
    %67 = vmatpush1.bf16.msra.mxu0 0
    %68 = vmatprep.subr.bf16.mxu0 0
    %69 = vmatpush1.bf16.msra.mxu0 0
    %70 = vmatprep.subr.bf16.mxu0 0
    %71 = vmatpush1.bf16.msra.mxu0 0
    %72 = vmatprep.subr.bf16.mxu0 0
    %73 = vmatpush1.bf16.msra.mxu0 0
    %74 = vmatprep.subr.bf16.mxu0 0
    %75 = vmatpush1.bf16.msra.mxu0 0
    %76 = vmatprep.subr.bf16.mxu0 0
    %77 = vmatpush1.bf16.msra.mxu0 0
    %78 = vmatprep.mubr.bf16.mxu0 0
    %79 = vmatmul.mubr.bf16.gmra.mrb[0].mxu0 %v44
    %v80 = vpop.f32.mrb[0].mxu0
    %v81 = vadd.f32 %v28, %v80
    %v82 = vpop.f32.mrb[0].mxu0
    %v83 = vpop.f32.mrb[0].mxu0
    %v84 = vadd.f32 %v28, %v83
    %v85 = vpop.f32.mrb[0].mxu0
    %86 = vdwg.mxu0
    %vm87 = vcmask 80896
    %88 = vst.msk [vmem:[#allocation2] sm:$0xff] %vm87, %v81
    %89 = vst.msk [vmem:[#allocation2 + $0x8] sm:$0xff] %vm87, %v84
    // Predicated region
    $region14: #{vit_forward.7} parent=1 // pred_check
      _
    $region15: #{vit_forward.7} parent=1 // pred_check_branch
      %91 = sbr.rel (0) target = $region17
    $region16: #{vit_forward.7} parent=1 // pred_region
      %s93 = ssub.s32 256, 256
      %94 = vsyncadd [#allocation3], %s93
      %s95 = sshll.u32 [#allocation2], 4
      %s96 = int_to_ptr.vmem [resolvable:$true] %s95
      %101 = dma.vmem_to_hbm [thread:$0]  %s96, 256, %s3, [#allocation3], 128, 128, 8
    $region17: #{vit_forward.7} parent=1 // pred_fallthru
      _
    // Predicated region
    $region18: #{vit_forward.7} parent=1 // pred_check
      _
    $region19: #{vit_forward.7} parent=1 // pred_check_branch
      %103 = sbr.rel (0) target = $region21
    $region20: #{vit_forward.7} parent=1 // pred_region
      %104 = dma.done [#allocation3], 256
    $region21: #{vit_forward.7} parent=1 // pred_fallthru
      _
    %105 = vsyncpa [#allocation3], 1

// kernel: vit_forward.5
$region0: #{vit_forward.5}
  #allocation0 [shape = 'u32[]', space=smem, size = 0x4, offset = 0x4, fixed_abs, tag = 'smem constant byte address 0x4 - core index']
  #allocation1 [shape = 'u32[144,128]{1,0:T(1,128)}', space=vmem, size = 0x12000, scoped, tag = 'internal scratch']
  #allocation2 [shape = 'f32[136,32]{1,0:T(8,128)}', space=vmem, size = 0x11000, scoped, tag = 'scratch operand']
  %s0 = inlined_call_operand.vmem [shape: f32[272,32], index: 0, kind: input, shape index: {}]
  %s1 = inlined_call_operand.vmem [shape: f32[1,32], index: 1, kind: input, shape index: {}]
  %s2 = inlined_call_operand.vmem [shape: f32[1,32], index: 2, kind: input, shape index: {}]
  %s3 = inlined_call_operand.vmem [shape: bf16[32,96], index: 3, kind: input, shape index: {}]
  %s4 = inlined_call_operand.vmem [shape: f32[1,96], index: 4, kind: input, shape index: {}]
  %s5 = inlined_call_operand.vmem [shape: bf16[4,8,32], index: 5, kind: input, shape index: {}]
  %s6 = inlined_call_operand.vmem [shape: f32[1,32], index: 6, kind: input, shape index: {}]
  %s7 = inlined_call_operand.vmem [shape: f32[1,32], index: 7, kind: input, shape index: {}]
  %s8 = inlined_call_operand.vmem [shape: f32[1,32], index: 8, kind: input, shape index: {}]
  %s9 = inlined_call_operand.vmem [shape: bf16[32,64], index: 9, kind: input, shape index: {}]
  %s10 = inlined_call_operand.vmem [shape: f32[1,64], index: 10, kind: input, shape index: {}]
  %s11 = inlined_call_operand.vmem [shape: bf16[64,32], index: 11, kind: input, shape index: {}]
  %s12 = inlined_call_operand.vmem [shape: f32[1,32], index: 12, kind: input, shape index: {}]
  %s13 = inlined_call_operand.vmem [shape: f32[272,32], index: 13, kind: output, shape index: {}]
  %s14 = sld [smem:[#allocation0]]
  $region85: #{vit_forward.5} parent=0
    _
  %s16 = ssub.s32 1, %s14
  %s17 = scalar_select 0, %s16, %s14
  loop: start=0, step=1, limit=4
  $region2: #{vit_forward.5} parent=0 // loop_pre_header
    _
  $region3: #{vit_forward.5} parent=0 // loop_header
    %s19 = sphi 0, %s23
    %p20 = scmp.ge.s32.totalorder %s19, 4
    %s29 = sphi 0, %s31
    %s32 = sphi 0, %s29
    %s33 = sphi 0, %s32
    %s49 = sphi 0, %s33
    %s53 = sphi 0, %s53
    %s55 = sphi 0, %s53
    %s56 = sphi 0, %s55
    %s70 = sphi 0, %s56
    %s74 = sphi 0, %s74
    %s76 = sphi 0, %s74
    %s77 = sphi 0, %s76
    %s91 = sphi 0, %s77
    %s95 = sphi 0, %s95
    %s97 = sphi 0, %s95
    %s98 = sphi 0, %s97
    %s112 = sphi 0, %s98
    %s116 = sphi 0, %s116
    %s118 = sphi 0, %s116
    %s119 = sphi 0, %s118
    %s133 = sphi 0, %s119
    %s137 = sphi 0, %s137
    %s139 = sphi 0, %s137
    %s140 = sphi 0, %s139
    %s154 = sphi 0, %s140
    %s158 = sphi 0, %s158
    %s160 = sphi 0, %s158
    %s161 = sphi 0, %s160
    %s175 = sphi 0, %s161
    %s179 = sphi 0, %s179
    %s181 = sphi 0, %s179
    %s182 = sphi 0, %s181
    %s196 = sphi 0, %s182
    %s200 = sphi 0, %s200
    %s202 = sphi 0, %s200
    %s203 = sphi 0, %s202
    %s217 = sphi 0, %s203
    %s221 = sphi 0, %s221
    %s223 = sphi 0, %s221
    %s224 = sphi 0, %s223
    %s238 = sphi 0, %s224
    %s242 = sphi 0, %s242
    %s244 = sphi 0, %s242
    %s245 = sphi 0, %s244
    %s259 = sphi 0, %s245
    %s263 = sphi 0, %s263
    %s265 = sphi 0, %s263
    %s266 = sphi 0, %s265
    %s280 = sphi 0, %s266
    %s284 = sphi 0, %s284
    %s286 = sphi 0, %s284
    %s287 = sphi 0, %s286
    %s301 = sphi 0, %s287
    %s307 = sphi 0, %s309
    %s310 = sphi 0, %s307
    %s311 = sphi 0, %s310
    %s327 = sphi 0, %s311
  $region4: #{vit_forward.5} parent=0 // loop_header_branch
    %22 = sbr.rel (%p20) target = $region8
  $region5: #{vit_forward.5} parent=0 // loop_body
    %s24 = ssub.s32 %s19, 1
    %s25 = ssub.s32 %s19, 2
    %s26 = sadd.s32 %s19, 1
    %s27 = ssub.s32 %s19, %s26
    %p28 = scmp.eq.s32.totalorder %s27, 0
    %s30 = sadd.s32 %s29, 1
    %s31 = scalar_select %p28, %s29, %s30
    %p34 = pneg %p28
    %p35 = scmp.eq.s32.totalorder %s19, 1
    %p36 = por %p34, %p35
    %p37 = scmp.ne.s32.totalorder %s29, %s32
    %p38 = scmp.eq.s32.totalorder %s19, 0
    %p39 = por %p37, %p38
    %p40 = scmp.ne.s32.totalorder %s29, %s32
    %p41 = scmp.eq.s32.totalorder %s24, 1
    %p42 = por %p40, %p41
    %p43 = scmp.ne.s32.totalorder %s32, %s33
    %p44 = scmp.eq.s32.totalorder %s24, 0
    %p45 = por %p43, %p44
    %p46 = scmp.ne.s32.totalorder %s32, %s33
    %p47 = scmp.eq.s32.totalorder %s25, 1
    %p48 = por %p46, %p47
    %p50 = scmp.ne.s32.totalorder %s33, %s49
    %p51 = scmp.eq.s32.totalorder %s25, 0
    %p52 = por %p50, %p51
    %s54 = sadd.s32 %s53, 1
    %p57 = scmp.eq.s32.totalorder %s19, 1
    %p58 = scmp.ne.s32.totalorder %s53, %s55
    %p59 = scmp.eq.s32.totalorder %s19, 0
    %p60 = por %p58, %p59
    %p61 = scmp.ne.s32.totalorder %s53, %s55
    %p62 = scmp.eq.s32.totalorder %s24, 1
    %p63 = por %p61, %p62
    %p64 = scmp.ne.s32.totalorder %s55, %s56
    %p65 = scmp.eq.s32.totalorder %s24, 0
    %p66 = por %p64, %p65
    %p67 = scmp.ne.s32.totalorder %s55, %s56
    %p68 = scmp.eq.s32.totalorder %s25, 1
    %p69 = por %p67, %p68
    %p71 = scmp.ne.s32.totalorder %s56, %s70
    %p72 = scmp.eq.s32.totalorder %s25, 0
    %p73 = por %p71, %p72
    %s75 = sadd.s32 %s74, 1
    %p78 = scmp.eq.s32.totalorder %s19, 1
    %p79 = scmp.ne.s32.totalorder %s74, %s76
    %p80 = scmp.eq.s32.totalorder %s19, 0
    %p81 = por %p79, %p80
    %p82 = scmp.ne.s32.totalorder %s74, %s76
    %p83 = scmp.eq.s32.totalorder %s24, 1
    %p84 = por %p82, %p83
    %p85 = scmp.ne.s32.totalorder %s76, %s77
    %p86 = scmp.eq.s32.totalorder %s24, 0
    %p87 = por %p85, %p86
    %p88 = scmp.ne.s32.totalorder %s76, %s77
    %p89 = scmp.eq.s32.totalorder %s25, 1
    %p90 = por %p88, %p89
    %p92 = scmp.ne.s32.totalorder %s77, %s91
    %p93 = scmp.eq.s32.totalorder %s25, 0
    %p94 = por %p92, %p93
    %s96 = sadd.s32 %s95, 1
    %p99 = scmp.eq.s32.totalorder %s19, 1
    %p100 = scmp.ne.s32.totalorder %s95, %s97
    %p101 = scmp.eq.s32.totalorder %s19, 0
    %p102 = por %p100, %p101
    %p103 = scmp.ne.s32.totalorder %s95, %s97
    %p104 = scmp.eq.s32.totalorder %s24, 1
    %p105 = por %p103, %p104
    %p106 = scmp.ne.s32.totalorder %s97, %s98
    %p107 = scmp.eq.s32.totalorder %s24, 0
    %p108 = por %p106, %p107
    %p109 = scmp.ne.s32.totalorder %s97, %s98
    %p110 = scmp.eq.s32.totalorder %s25, 1
    %p111 = por %p109, %p110
    %p113 = scmp.ne.s32.totalorder %s98, %s112
    %p114 = scmp.eq.s32.totalorder %s25, 0
    %p115 = por %p113, %p114
    %s117 = sadd.s32 %s116, 1
    %p120 = scmp.eq.s32.totalorder %s19, 1
    %p121 = scmp.ne.s32.totalorder %s116, %s118
    %p122 = scmp.eq.s32.totalorder %s19, 0
    %p123 = por %p121, %p122
    %p124 = scmp.ne.s32.totalorder %s116, %s118
    %p125 = scmp.eq.s32.totalorder %s24, 1
    %p126 = por %p124, %p125
    %p127 = scmp.ne.s32.totalorder %s118, %s119
    %p128 = scmp.eq.s32.totalorder %s24, 0
    %p129 = por %p127, %p128
    %p130 = scmp.ne.s32.totalorder %s118, %s119
    %p131 = scmp.eq.s32.totalorder %s25, 1
    %p132 = por %p130, %p131
    %p134 = scmp.ne.s32.totalorder %s119, %s133
    %p135 = scmp.eq.s32.totalorder %s25, 0
    %p136 = por %p134, %p135
    %s138 = sadd.s32 %s137, 1
    %p141 = scmp.eq.s32.totalorder %s19, 1
    %p142 = scmp.ne.s32.totalorder %s137, %s139
    %p143 = scmp.eq.s32.totalorder %s19, 0
    %p144 = por %p142, %p143
    %p145 = scmp.ne.s32.totalorder %s137, %s139
    %p146 = scmp.eq.s32.totalorder %s24, 1
    %p147 = por %p145, %p146
    %p148 = scmp.ne.s32.totalorder %s139, %s140
    %p149 = scmp.eq.s32.totalorder %s24, 0
    %p150 = por %p148, %p149
    %p151 = scmp.ne.s32.totalorder %s139, %s140
    %p152 = scmp.eq.s32.totalorder %s25, 1
    %p153 = por %p151, %p152
    %p155 = scmp.ne.s32.totalorder %s140, %s154
    %p156 = scmp.eq.s32.totalorder %s25, 0
    %p157 = por %p155, %p156
    %s159 = sadd.s32 %s158, 1
    %p162 = scmp.eq.s32.totalorder %s19, 1
    %p163 = scmp.ne.s32.totalorder %s158, %s160
    %p164 = scmp.eq.s32.totalorder %s19, 0
    %p165 = por %p163, %p164
    %p166 = scmp.ne.s32.totalorder %s158, %s160
    %p167 = scmp.eq.s32.totalorder %s24, 1
    %p168 = por %p166, %p167
    %p169 = scmp.ne.s32.totalorder %s160, %s161
    %p170 = scmp.eq.s32.totalorder %s24, 0
    %p171 = por %p169, %p170
    %p172 = scmp.ne.s32.totalorder %s160, %s161
    %p173 = scmp.eq.s32.totalorder %s25, 1
    %p174 = por %p172, %p173
    %p176 = scmp.ne.s32.totalorder %s161, %s175
    %p177 = scmp.eq.s32.totalorder %s25, 0
    %p178 = por %p176, %p177
    %s180 = sadd.s32 %s179, 1
    %p183 = scmp.eq.s32.totalorder %s19, 1
    %p184 = scmp.ne.s32.totalorder %s179, %s181
    %p185 = scmp.eq.s32.totalorder %s19, 0
    %p186 = por %p184, %p185
    %p187 = scmp.ne.s32.totalorder %s179, %s181
    %p188 = scmp.eq.s32.totalorder %s24, 1
    %p189 = por %p187, %p188
    %p190 = scmp.ne.s32.totalorder %s181, %s182
    %p191 = scmp.eq.s32.totalorder %s24, 0
    %p192 = por %p190, %p191
    %p193 = scmp.ne.s32.totalorder %s181, %s182
    %p194 = scmp.eq.s32.totalorder %s25, 1
    %p195 = por %p193, %p194
    %p197 = scmp.ne.s32.totalorder %s182, %s196
    %p198 = scmp.eq.s32.totalorder %s25, 0
    %p199 = por %p197, %p198
    %s201 = sadd.s32 %s200, 1
    %p204 = scmp.eq.s32.totalorder %s19, 1
    %p205 = scmp.ne.s32.totalorder %s200, %s202
    %p206 = scmp.eq.s32.totalorder %s19, 0
    %p207 = por %p205, %p206
    %p208 = scmp.ne.s32.totalorder %s200, %s202
    %p209 = scmp.eq.s32.totalorder %s24, 1
    %p210 = por %p208, %p209
    %p211 = scmp.ne.s32.totalorder %s202, %s203
    %p212 = scmp.eq.s32.totalorder %s24, 0
    %p213 = por %p211, %p212
    %p214 = scmp.ne.s32.totalorder %s202, %s203
    %p215 = scmp.eq.s32.totalorder %s25, 1
    %p216 = por %p214, %p215
    %p218 = scmp.ne.s32.totalorder %s203, %s217
    %p219 = scmp.eq.s32.totalorder %s25, 0
    %p220 = por %p218, %p219
    %s222 = sadd.s32 %s221, 1
    %p225 = scmp.eq.s32.totalorder %s19, 1
    %p226 = scmp.ne.s32.totalorder %s221, %s223
    %p227 = scmp.eq.s32.totalorder %s19, 0
    %p228 = por %p226, %p227
    %p229 = scmp.ne.s32.totalorder %s221, %s223
    %p230 = scmp.eq.s32.totalorder %s24, 1
    %p231 = por %p229, %p230
    %p232 = scmp.ne.s32.totalorder %s223, %s224
    %p233 = scmp.eq.s32.totalorder %s24, 0
    %p234 = por %p232, %p233
    %p235 = scmp.ne.s32.totalorder %s223, %s224
    %p236 = scmp.eq.s32.totalorder %s25, 1
    %p237 = por %p235, %p236
    %p239 = scmp.ne.s32.totalorder %s224, %s238
    %p240 = scmp.eq.s32.totalorder %s25, 0
    %p241 = por %p239, %p240
    %s243 = sadd.s32 %s242, 1
    %p246 = scmp.eq.s32.totalorder %s19, 1
    %p247 = scmp.ne.s32.totalorder %s242, %s244
    %p248 = scmp.eq.s32.totalorder %s19, 0
    %p249 = por %p247, %p248
    %p250 = scmp.ne.s32.totalorder %s242, %s244
    %p251 = scmp.eq.s32.totalorder %s24, 1
    %p252 = por %p250, %p251
    %p253 = scmp.ne.s32.totalorder %s244, %s245
    %p254 = scmp.eq.s32.totalorder %s24, 0
    %p255 = por %p253, %p254
    %p256 = scmp.ne.s32.totalorder %s244, %s245
    %p257 = scmp.eq.s32.totalorder %s25, 1
    %p258 = por %p256, %p257
    %p260 = scmp.ne.s32.totalorder %s245, %s259
    %p261 = scmp.eq.s32.totalorder %s25, 0
    %p262 = por %p260, %p261
    %s264 = sadd.s32 %s263, 1
    %p267 = scmp.eq.s32.totalorder %s19, 1
    %p268 = scmp.ne.s32.totalorder %s263, %s265
    %p269 = scmp.eq.s32.totalorder %s19, 0
    %p270 = por %p268, %p269
    %p271 = scmp.ne.s32.totalorder %s263, %s265
    %p272 = scmp.eq.s32.totalorder %s24, 1
    %p273 = por %p271, %p272
    %p274 = scmp.ne.s32.totalorder %s265, %s266
    %p275 = scmp.eq.s32.totalorder %s24, 0
    %p276 = por %p274, %p275
    %p277 = scmp.ne.s32.totalorder %s265, %s266
    %p278 = scmp.eq.s32.totalorder %s25, 1
    %p279 = por %p277, %p278
    %p281 = scmp.ne.s32.totalorder %s266, %s280
    %p282 = scmp.eq.s32.totalorder %s25, 0
    %p283 = por %p281, %p282
    %s285 = sadd.s32 %s284, 1
    %p288 = scmp.eq.s32.totalorder %s19, 1
    %p289 = scmp.ne.s32.totalorder %s284, %s286
    %p290 = scmp.eq.s32.totalorder %s19, 0
    %p291 = por %p289, %p290
    %p292 = scmp.ne.s32.totalorder %s284, %s286
    %p293 = scmp.eq.s32.totalorder %s24, 1
    %p294 = por %p292, %p293
    %p295 = scmp.ne.s32.totalorder %s286, %s287
    %p296 = scmp.eq.s32.totalorder %s24, 0
    %p297 = por %p295, %p296
    %p298 = scmp.ne.s32.totalorder %s286, %s287
    %p299 = scmp.eq.s32.totalorder %s25, 1
    %p300 = por %p298, %p299
    %p302 = scmp.ne.s32.totalorder %s287, %s301
    %p303 = scmp.eq.s32.totalorder %s25, 0
    %p304 = por %p302, %p303
    %s305 = ssub.s32 %s19, %s26
    %p306 = scmp.eq.s32.totalorder %s305, 0
    %s308 = sadd.s32 %s307, 1
    %s309 = scalar_select %p306, %s307, %s308
    %p312 = pneg %p306
    %p313 = scmp.eq.s32.totalorder %s19, 1
    %p314 = por %p312, %p313
    %p315 = scmp.ne.s32.totalorder %s307, %s310
    %p316 = scmp.eq.s32.totalorder %s19, 0
    %p317 = por %p315, %p316
    %p318 = scmp.ne.s32.totalorder %s307, %s310
    %p319 = scmp.eq.s32.totalorder %s24, 1
    %p320 = por %p318, %p319
    %p321 = scmp.ne.s32.totalorder %s310, %s311
    %p322 = scmp.eq.s32.totalorder %s24, 0
    %p323 = por %p321, %p322
    %p324 = scmp.ne.s32.totalorder %s310, %s311
    %p325 = scmp.eq.s32.totalorder %s25, 1
    %p326 = por %p324, %p325
    %p328 = scmp.ne.s32.totalorder %s311, %s327
    %p329 = scmp.eq.s32.totalorder %s25, 0
    %p330 = por %p328, %p329
    %p331 = scmp.le.s32.totalorder 1, %s19
    %p332 = scmp.lt.s32.totalorder %s19, 3
    %p333 = pnand %p331, %p332
    %p334 = pneg %p333
    // Predicated region
    $region9: #{vit_forward.5} parent=5 // pred_check
      _
    $region10: #{vit_forward.5} parent=5 // pred_check_branch
      %336 = sbr.rel (%p333) target = $region12
    $region11: #{vit_forward.5} parent=5 // pred_region
      %s337 = ssub.s32 %s19, 1
      // Predicated region
      $region13: #{vit_forward.5} parent=11 // pred_check
        %p338 = pneg %p66
      $region14: #{vit_forward.5} parent=11 // pred_check_branch
        %340 = sbr.rel (%p338) target = $region16
      $region15: #{vit_forward.5} parent=11 // pred_region
        _
      $region16: #{vit_forward.5} parent=11 // pred_fallthru
        _
      // Predicated region
      $region17: #{vit_forward.5} parent=11 // pred_check
        %p341 = pneg %p87
      $region18: #{vit_forward.5} parent=11 // pred_check_branch
        %343 = sbr.rel (%p341) target = $region20
      $region19: #{vit_forward.5} parent=11 // pred_region
        _
      $region20: #{vit_forward.5} parent=11 // pred_fallthru
        _
      // Predicated region
      $region21: #{vit_forward.5} parent=11 // pred_check
        %p344 = pneg %p108
      $region22: #{vit_forward.5} parent=11 // pred_check_branch
        %346 = sbr.rel (%p344) target = $region24
      $region23: #{vit_forward.5} parent=11 // pred_region
        _
      $region24: #{vit_forward.5} parent=11 // pred_fallthru
        _
      // Predicated region
      $region25: #{vit_forward.5} parent=11 // pred_check
        %p347 = pneg %p129
      $region26: #{vit_forward.5} parent=11 // pred_check_branch
        %349 = sbr.rel (%p347) target = $region28
      $region27: #{vit_forward.5} parent=11 // pred_region
        _
      $region28: #{vit_forward.5} parent=11 // pred_fallthru
        _
      // Predicated region
      $region29: #{vit_forward.5} parent=11 // pred_check
        %p350 = pneg %p150
      $region30: #{vit_forward.5} parent=11 // pred_check_branch
        %352 = sbr.rel (%p350) target = $region32
      $region31: #{vit_forward.5} parent=11 // pred_region
        _
      $region32: #{vit_forward.5} parent=11 // pred_fallthru
        _
      // Predicated region
      $region33: #{vit_forward.5} parent=11 // pred_check
        %p353 = pneg %p171
      $region34: #{vit_forward.5} parent=11 // pred_check_branch
        %355 = sbr.rel (%p353) target = $region36
      $region35: #{vit_forward.5} parent=11 // pred_region
        _
      $region36: #{vit_forward.5} parent=11 // pred_fallthru
        _
      // Predicated region
      $region37: #{vit_forward.5} parent=11 // pred_check
        %p356 = pneg %p192
      $region38: #{vit_forward.5} parent=11 // pred_check_branch
        %358 = sbr.rel (%p356) target = $region40
      $region39: #{vit_forward.5} parent=11 // pred_region
        _
      $region40: #{vit_forward.5} parent=11 // pred_fallthru
        _
      // Predicated region
      $region41: #{vit_forward.5} parent=11 // pred_check
        %p359 = pneg %p213
      $region42: #{vit_forward.5} parent=11 // pred_check_branch
        %361 = sbr.rel (%p359) target = $region44
      $region43: #{vit_forward.5} parent=11 // pred_region
        _
      $region44: #{vit_forward.5} parent=11 // pred_fallthru
        _
      // Predicated region
      $region45: #{vit_forward.5} parent=11 // pred_check
        %p362 = pneg %p234
      $region46: #{vit_forward.5} parent=11 // pred_check_branch
        %364 = sbr.rel (%p362) target = $region48
      $region47: #{vit_forward.5} parent=11 // pred_region
        _
      $region48: #{vit_forward.5} parent=11 // pred_fallthru
        _
      // Predicated region
      $region49: #{vit_forward.5} parent=11 // pred_check
        %p365 = pneg %p255
      $region50: #{vit_forward.5} parent=11 // pred_check_branch
        %367 = sbr.rel (%p365) target = $region52
      $region51: #{vit_forward.5} parent=11 // pred_region
        _
      $region52: #{vit_forward.5} parent=11 // pred_fallthru
        _
      // Predicated region
      $region53: #{vit_forward.5} parent=11 // pred_check
        %p368 = pneg %p276
      $region54: #{vit_forward.5} parent=11 // pred_check_branch
        %370 = sbr.rel (%p368) target = $region56
      $region55: #{vit_forward.5} parent=11 // pred_region
        _
      $region56: #{vit_forward.5} parent=11 // pred_fallthru
        _
      // Predicated region
      $region57: #{vit_forward.5} parent=11 // pred_check
        %p371 = pneg %p297
      $region58: #{vit_forward.5} parent=11 // pred_check_branch
        %373 = sbr.rel (%p371) target = $region60
      $region59: #{vit_forward.5} parent=11 // pred_region
        _
      $region60: #{vit_forward.5} parent=11 // pred_fallthru
        _
    $region12: #{vit_forward.5} parent=5 // pred_fallthru
      _
    %p374 = scmp.lt.s32.totalorder %s19, 2
    // Predicated region
    $region61: #{vit_forward.5} parent=5 // pred_check
      %p375 = pneg %p374
    $region62: #{vit_forward.5} parent=5 // pred_check_branch
      %377 = sbr.rel (%p375) target = $region64
    $region63: #{vit_forward.5} parent=5 // pred_region
      // Predicated region
      $region65: #{vit_forward.5} parent=63 // pred_check
        %p378 = pneg %p39
      $region66: #{vit_forward.5} parent=63 // pred_check_branch
        %380 = sbr.rel (%p378) target = $region68
      $region67: #{vit_forward.5} parent=63 // pred_region
        %s381 = smul.u32 17, %s19
        %p382 = scmp.lt.s32.totalorder %s381, 33
        %s383 = scalar_select %p382, %s381, 33
        %s384 = smul.addr %s383, 8
        %s385 = scalar_lea.vmem %s0, %s384
        %s386 = smul.u32 17, %s19
      $region68: #{vit_forward.5} parent=63 // pred_fallthru
        _
    $region64: #{vit_forward.5} parent=5 // pred_fallthru
      _
    %p387 = scmp.le.s32.totalorder 1, %s19
    %p388 = scmp.lt.s32.totalorder %s19, 3
    %p389 = pnand %p387, %p388
    %p390 = pneg %p389
    // Predicated region
    $region69: #{vit_forward.5} parent=5 // pred_check
      _
    $region70: #{vit_forward.5} parent=5 // pred_check_branch
      %392 = sbr.rel (%p389) target = $region72
    $region71: #{vit_forward.5} parent=5 // pred_region
      %s393 = ssub.s32 %s19, 1
      %s394 = smul.u32 17, %s24
      %p395 = scmp.lt.s32.totalorder %s394, 33
      %s396 = scalar_select %p395, %s394, 33
      %s397 = smul.addr %s396, 8
      %s398 = scalar_lea.vmem %s0, %s397
      %p399 = pneg %p45
      %p400 = pneg %p42
      %p401 = pneg %p66
      %p402 = pneg %p63
      %p403 = pneg %p87
      %p404 = pneg %p84
      %p405 = pneg %p108
      %p406 = pneg %p105
      %p407 = pneg %p129
      %p408 = pneg %p126
      %p409 = pneg %p150
      %p410 = pneg %p147
      %p411 = pneg %p171
      %p412 = pneg %p168
      %p413 = pneg %p192
      %p414 = pneg %p189
      %p415 = pneg %p213
      %p416 = pneg %p210
      %p417 = pneg %p234
      %p418 = pneg %p231
      %p419 = pneg %p255
      %p420 = pneg %p252
      %p421 = pneg %p276
      %p422 = pneg %p273
      %p423 = pneg %p297
      %p424 = pneg %p294
      %p425 = pneg %p323
      %p426 = pneg %p320
      %s427 = smul.u32 17, %s24
      %p428 = scmp.lt.s32.totalorder %s427, 33
      %s429 = scalar_select %p428, %s427, 33
      %s430 = smul.addr %s429, 8
      %s431 = scalar_lea.vmem %s13, %s430
      %s432 = smul.u32 17, %s24
      %p433 = scmp.lt.s32.totalorder %s432, 33
      %s434 = scalar_select %p433, %s432, 33
      %s435 = smul.addr %s434, 8
      %s436 = scalar_lea.vmem %s0, %s435
      %s437 = smul.u32 17, %s24
      %s438 = smul.u32 17, %s24
      %p439 = scmp.lt.s32.totalorder %s438, 33
      %s440 = scalar_select %p439, %s438, 33
      %s441 = smul.addr %s440, 8
      %s442 = scalar_lea.vmem %s13, %s441
      %s443 = smul.u32 17, %s24
      %v445 = vld [vmem:[%s436] sm:$0xff]
      %v446 = vld [vmem:[%s436 + $0x8] sm:$0xff]
      %v447 = vld [vmem:[%s436 + $0x10] sm:$0xff]
      %v448 = vld [vmem:[%s436 + $0x18] sm:$0xff]
      %v449 = vld [vmem:[%s436 + $0x20] sm:$0xff]
      %v450 = vld [vmem:[%s436 + $0x28] sm:$0xff]
      %v451 = vld [vmem:[%s436 + $0x30] sm:$0xff]
      %v452 = vld [vmem:[%s436 + $0x38] sm:$0xff]
      %v453 = vld [vmem:[%s436 + $0x40] sm:$0xff]
      %v454 = vld [vmem:[%s436 + $0x48] sm:$0xff]
      %v455 = vld [vmem:[%s436 + $0x50] sm:$0xff]
      %v456 = vld [vmem:[%s436 + $0x58] sm:$0xff]
      %v457 = vld [vmem:[%s436 + $0x60] sm:$0xff]
      %v458 = vld [vmem:[%s436 + $0x68] sm:$0xff]
      %v459 = vld [vmem:[%s436 + $0x70] sm:$0xff]
      %v460 = vld [vmem:[%s436 + $0x78] sm:$0xff]
      %v461 = vld [vmem:[%s436 + $0x80] sm:$0xff]
      %vm462 = vcmask 261120
      %v463 = vsel %vm462, %v445, 0.0
      %464 = vadd.xlane.f32.xlu0 %v463
      %v465 = vpop.xlane.xlu0 %464
      %v466 = vsel %vm462, %v446, 0.0
      %467 = vadd.xlane.f32.xlu0 %v466
      %v468 = vpop.xlane.xlu0 %467
      %v469 = vsel %vm462, %v447, 0.0
      %470 = vadd.xlane.f32.xlu0 %v469
      %v471 = vpop.xlane.xlu0 %470
      %v472 = vsel %vm462, %v448, 0.0
      %473 = vadd.xlane.f32.xlu0 %v472
      %v474 = vpop.xlane.xlu0 %473
      %v475 = vsel %vm462, %v449, 0.0
      %476 = vadd.xlane.f32.xlu0 %v475
      %v477 = vpop.xlane.xlu0 %476
      %v478 = vsel %vm462, %v450, 0.0
      %479 = vadd.xlane.f32.xlu0 %v478
      %v480 = vpop.xlane.xlu0 %479
      %v481 = vsel %vm462, %v451, 0.0
      %482 = vadd.xlane.f32.xlu0 %v481
      %v483 = vpop.xlane.xlu0 %482
      %v484 = vsel %vm462, %v452, 0.0
      %485 = vadd.xlane.f32.xlu0 %v484
      %v486 = vpop.xlane.xlu0 %485
      %v487 = vsel %vm462, %v453, 0.0
      %488 = vadd.xlane.f32.xlu0 %v487
      %v489 = vpop.xlane.xlu0 %488
      %v490 = vsel %vm462, %v454, 0.0
      %491 = vadd.xlane.f32.xlu0 %v490
      %v492 = vpop.xlane.xlu0 %491
      %v493 = vsel %vm462, %v455, 0.0
      %494 = vadd.xlane.f32.xlu0 %v493
      %v495 = vpop.xlane.xlu0 %494
      %v496 = vsel %vm462, %v456, 0.0
      %497 = vadd.xlane.f32.xlu0 %v496
      %v498 = vpop.xlane.xlu0 %497
      %v499 = vsel %vm462, %v457, 0.0
      %500 = vadd.xlane.f32.xlu0 %v499
      %v501 = vpop.xlane.xlu0 %500
      %v502 = vsel %vm462, %v458, 0.0
      %503 = vadd.xlane.f32.xlu0 %v502
      %v504 = vpop.xlane.xlu0 %503
      %v505 = vsel %vm462, %v459, 0.0
      %506 = vadd.xlane.f32.xlu0 %v505
      %v507 = vpop.xlane.xlu0 %506
      %v508 = vsel %vm462, %v460, 0.0
      %509 = vadd.xlane.f32.xlu0 %v508
      %v510 = vpop.xlane.xlu0 %509
      %v511 = vsel %vm462, %v461, 0.0
      %512 = vadd.xlane.f32.xlu0 %v511
      %v513 = vpop.xlane.xlu0 %512
      %v514 = vrcp.pop 32.0
      %v515 = vmul.f32 %v465, %v514
      %v516 = vmul.f32 %v468, %v514
      %v517 = vmul.f32 %v471, %v514
      %v518 = vmul.f32 %v474, %v514
      %v519 = vmul.f32 %v477, %v514
      %v520 = vmul.f32 %v480, %v514
      %v521 = vmul.f32 %v483, %v514
      %v522 = vmul.f32 %v486, %v514
      %v523 = vmul.f32 %v489, %v514
      %v524 = vmul.f32 %v492, %v514
      %v525 = vmul.f32 %v495, %v514
      %v526 = vmul.f32 %v498, %v514
      %v527 = vmul.f32 %v501, %v514
      %v528 = vmul.f32 %v504, %v514
      %v529 = vmul.f32 %v507, %v514
      %v530 = vmul.f32 %v510, %v514
      %v531 = vmul.f32 %v513, %v514
      %v532 = vsub.f32 %v445, %v515
      %v533 = vsub.f32 %v446, %v516
      %v534 = vsub.f32 %v447, %v517
      %v535 = vsub.f32 %v448, %v518
      %v536 = vsub.f32 %v449, %v519
      %v537 = vsub.f32 %v450, %v520
      %v538 = vsub.f32 %v451, %v521
      %v539 = vsub.f32 %v452, %v522
      %v540 = vsub.f32 %v453, %v523
      %v541 = vsub.f32 %v454, %v524
      %v542 = vsub.f32 %v455, %v525
      %v543 = vsub.f32 %v456, %v526
      %v544 = vsub.f32 %v457, %v527
      %v545 = vsub.f32 %v458, %v528
      %v546 = vsub.f32 %v459, %v529
      %v547 = vsub.f32 %v460, %v530
      %v548 = vsub.f32 %v461, %v531
      %v549 = vmul.f32 %v532, %v532
      %v550 = vmul.f32 %v533, %v533
      %v551 = vmul.f32 %v534, %v534
      %v552 = vmul.f32 %v535, %v535
      %v553 = vmul.f32 %v536, %v536
      %v554 = vmul.f32 %v537, %v537
      %v555 = vmul.f32 %v538, %v538
      %v556 = vmul.f32 %v539, %v539
      %v557 = vmul.f32 %v540, %v540
      %v558 = vmul.f32 %v541, %v541
      %v559 = vmul.f32 %v542, %v542
      %v560 = vmul.f32 %v543, %v543
      %v561 = vmul.f32 %v544, %v544
      %v562 = vmul.f32 %v545, %v545
      %v563 = vmul.f32 %v546, %v546
      %v564 = vmul.f32 %v547, %v547
      %v565 = vmul.f32 %v548, %v548
      %v566 = vsel %vm462, %v549, 0.0
      %567 = vadd.xlane.f32.xlu0 %v566
      %v568 = vpop.xlane.xlu0 %567
      %v569 = vsel %vm462, %v550, 0.0
      %570 = vadd.xlane.f32.xlu0 %v569
      %v571 = vpop.xlane.xlu0 %570
      %v572 = vsel %vm462, %v551, 0.0
      %573 = vadd.xlane.f32.xlu0 %v572
      %v574 = vpop.xlane.xlu0 %573
      %v575 = vsel %vm462, %v552, 0.0
      %576 = vadd.xlane.f32.xlu0 %v575
      %v577 = vpop.xlane.xlu0 %576
      %v578 = vsel %vm462, %v553, 0.0
      %579 = vadd.xlane.f32.xlu0 %v578
      %v580 = vpop.xlane.xlu0 %579
      %v581 = vsel %vm462, %v554, 0.0
      %582 = vadd.xlane.f32.xlu0 %v581
      %v583 = vpop.xlane.xlu0 %582
      %v584 = vsel %vm462, %v555, 0.0
      %585 = vadd.xlane.f32.xlu0 %v584
      %v586 = vpop.xlane.xlu0 %585
      %v587 = vsel %vm462, %v556, 0.0
      %588 = vadd.xlane.f32.xlu0 %v587
      %v589 = vpop.xlane.xlu0 %588
      %v590 = vsel %vm462, %v557, 0.0
      %591 = vadd.xlane.f32.xlu0 %v590
      %v592 = vpop.xlane.xlu0 %591
      %v593 = vsel %vm462, %v558, 0.0
      %594 = vadd.xlane.f32.xlu0 %v593
      %v595 = vpop.xlane.xlu0 %594
      %v596 = vsel %vm462, %v559, 0.0
      %597 = vadd.xlane.f32.xlu0 %v596
      %v598 = vpop.xlane.xlu0 %597
      %v599 = vsel %vm462, %v560, 0.0
      %600 = vadd.xlane.f32.xlu0 %v599
      %v601 = vpop.xlane.xlu0 %600
      %v602 = vsel %vm462, %v561, 0.0
      %603 = vadd.xlane.f32.xlu0 %v602
      %v604 = vpop.xlane.xlu0 %603
      %v605 = vsel %vm462, %v562, 0.0
      %606 = vadd.xlane.f32.xlu0 %v605
      %v607 = vpop.xlane.xlu0 %606
      %v608 = vsel %vm462, %v563, 0.0
      %609 = vadd.xlane.f32.xlu0 %v608
      %v610 = vpop.xlane.xlu0 %609
      %v611 = vsel %vm462, %v564, 0.0
      %612 = vadd.xlane.f32.xlu0 %v611
      %v613 = vpop.xlane.xlu0 %612
      %v614 = vsel %vm462, %v565, 0.0
      %615 = vadd.xlane.f32.xlu0 %v614
      %v616 = vpop.xlane.xlu0 %615
      %v617 = vmul.f32 %v568, %v514
      %v618 = vmul.f32 %v571, %v514
      %v619 = vmul.f32 %v574, %v514
      %v620 = vmul.f32 %v577, %v514
      %v621 = vmul.f32 %v580, %v514
      %v622 = vmul.f32 %v583, %v514
      %v623 = vmul.f32 %v586, %v514
      %v624 = vmul.f32 %v589, %v514
      %v625 = vmul.f32 %v592, %v514
      %v626 = vmul.f32 %v595, %v514
      %v627 = vmul.f32 %v598, %v514
      %v628 = vmul.f32 %v601, %v514
      %v629 = vmul.f32 %v604, %v514
      %v630 = vmul.f32 %v607, %v514
      %v631 = vmul.f32 %v610, %v514
      %v632 = vmul.f32 %v613, %v514
      %v633 = vmul.f32 %v616, %v514
      %v634 = vadd.f32 %v617, 1e-05
      %v635 = vadd.f32 %v618, 1e-05
      %v636 = vadd.f32 %v619, 1e-05
      %v637 = vadd.f32 %v620, 1e-05
      %v638 = vadd.f32 %v621, 1e-05
      %v639 = vadd.f32 %v622, 1e-05
      %v640 = vadd.f32 %v623, 1e-05
      %v641 = vadd.f32 %v624, 1e-05
      %v642 = vadd.f32 %v625, 1e-05
      %v643 = vadd.f32 %v626, 1e-05
      %v644 = vadd.f32 %v627, 1e-05
      %v645 = vadd.f32 %v628, 1e-05
      %v646 = vadd.f32 %v629, 1e-05
      %v647 = vadd.f32 %v630, 1e-05
      %v648 = vadd.f32 %v631, 1e-05
      %v649 = vadd.f32 %v632, 1e-05
      %v650 = vadd.f32 %v633, 1e-05
      %v651 = vrsqrt.pop %v634
      %v652 = vrsqrt.pop %v635
      %v653 = vrsqrt.pop %v636
      %v654 = vrsqrt.pop %v637
      %v655 = vrsqrt.pop %v638
      %v656 = vrsqrt.pop %v639
      %v657 = vrsqrt.pop %v640
      %v658 = vrsqrt.pop %v641
      %v659 = vrsqrt.pop %v642
      %v660 = vrsqrt.pop %v643
      %v661 = vrsqrt.pop %v644
      %v662 = vrsqrt.pop %v645
      %v663 = vrsqrt.pop %v646
      %v664 = vrsqrt.pop %v647
      %v665 = vrsqrt.pop %v648
      %v666 = vrsqrt.pop %v649
      %v667 = vrsqrt.pop %v650
      %v668 = vmul.f32 %v532, %v651
      %v669 = vmul.f32 %v533, %v652
      %v670 = vmul.f32 %v534, %v653
      %v671 = vmul.f32 %v535, %v654
      %v672 = vmul.f32 %v536, %v655
      %v673 = vmul.f32 %v537, %v656
      %v674 = vmul.f32 %v538, %v657
      %v675 = vmul.f32 %v539, %v658
      %v676 = vmul.f32 %v540, %v659
      %v677 = vmul.f32 %v541, %v660
      %v678 = vmul.f32 %v542, %v661
      %v679 = vmul.f32 %v543, %v662
      %v680 = vmul.f32 %v544, %v663
      %v681 = vmul.f32 %v545, %v664
      %v682 = vmul.f32 %v546, %v665
      %v683 = vmul.f32 %v547, %v666
      %v684 = vmul.f32 %v548, %v667
      %v685 = vld [vmem:[%s1] sm:$0x1]
      %v687 = vlaneseq
      %v688 = vshrl.u32 %v687, 7
      %v689 = vsub.s32 0, %v688
      %v690 = vrot.slane %v685, %v689
      %v692 = vmul.f32 %v668, %v690
      %v693 = vmul.f32 %v669, %v690
      %v694 = vmul.f32 %v670, %v690
      %v695 = vmul.f32 %v671, %v690
      %v696 = vmul.f32 %v672, %v690
      %v697 = vmul.f32 %v673, %v690
      %v698 = vmul.f32 %v674, %v690
      %v699 = vmul.f32 %v675, %v690
      %v700 = vmul.f32 %v676, %v690
      %v701 = vmul.f32 %v677, %v690
      %v702 = vmul.f32 %v678, %v690
      %v703 = vmul.f32 %v679, %v690
      %v704 = vmul.f32 %v680, %v690
      %v705 = vmul.f32 %v681, %v690
      %v706 = vmul.f32 %v682, %v690
      %v707 = vmul.f32 %v683, %v690
      %v708 = vmul.f32 %v684, %v690
      %v709 = vld [vmem:[%s2] sm:$0x1]
      %v711 = vlaneseq
      %v712 = vshrl.u32 %v711, 7
      %v713 = vsub.s32 0, %v712
      %v714 = vrot.slane %v709, %v713
      %v716 = vadd.f32 %v692, %v714
      %v717 = vadd.f32 %v693, %v714
      %v718 = vadd.f32 %v694, %v714
      %v719 = vadd.f32 %v695, %v714
      %v720 = vadd.f32 %v696, %v714
      %v721 = vadd.f32 %v697, %v714
      %v722 = vadd.f32 %v698, %v714
      %v723 = vadd.f32 %v699, %v714
      %v724 = vadd.f32 %v700, %v714
      %v725 = vadd.f32 %v701, %v714
      %v726 = vadd.f32 %v702, %v714
      %v727 = vadd.f32 %v703, %v714
      %v728 = vadd.f32 %v704, %v714
      %v729 = vadd.f32 %v705, %v714
      %v730 = vadd.f32 %v706, %v714
      %v731 = vadd.f32 %v707, %v714
      %v732 = vadd.f32 %v708, %v714
      %v733 = vpack.c.bf16 %v717, %v716
      %v734 = vpack.c.bf16 %v719, %v718
      %v735 = vpack.c.bf16 %v721, %v720
      %v736 = vpack.c.bf16 %v723, %v722
      %v737 = vpack.c.bf16 %v725, %v724
      %v738 = vpack.c.bf16 %v727, %v726
      %v739 = vpack.c.bf16 %v729, %v728
      %v740 = vpack.c.bf16 %v731, %v730
      %v741 = vpack.c.bf16 %v732, %v732
      %v742 = vld [vmem:[%s3] sm:$0xf]
      %v743 = vld [vmem:[%s3 + $0x4] sm:$0xf]
      %v744 = vld [vmem:[%s3 + $0x8] sm:$0xf]
      %v745 = vld [vmem:[%s3 + $0xc] sm:$0xf]
      %v746 = vld [vmem:[%s4] sm:$0x1]
      %v748 = vlaneseq
      %v749 = vshrl.u32 %v748, 7
      %v750 = vsub.s32 0, %v749
      %v751 = vrot.slane %v746, %v750
      %v757 = vunpack.c.l.b16 %v742
      %v758 = vunpack.c.l.b16 %v743
      %v759 = vunpack.c.l.b16 %v744
      %v760 = vunpack.c.l.b16 %v745
      %v761 = vpack.c.b16 %v758, %v757
      %v762 = vpack.c.b16 %v760, %v759
      %v766 = vsel %vm462, %v733, 0
      %v769 = vsel %vm462, %v734, 0
      %v772 = vsel %vm462, %v735, 0
      %v775 = vsel %vm462, %v736, 0
      %v778 = vsel %vm462, %v737, 0
      %v781 = vsel %vm462, %v738, 0
      %v784 = vsel %vm462, %v739, 0
      %v787 = vsel %vm462, %v740, 0
      %v790 = vsel %vm462, %v741, 0
      %792 = vmatprep.subr.bf16.mxu0 0
      %793 = vmatpush1.bf16.msra.mxu0 %v761
      %794 = vmatprep.subr.bf16.mxu0 0
      %795 = vmatpush1.bf16.msra.mxu0 %v762
      %796 = vmatprep.subr.bf16.mxu0 0
      %797 = vmatpush1.bf16.msra.mxu0 0
      %798 = vmatprep.subr.bf16.mxu0 0
      %799 = vmatpush1.bf16.msra.mxu0 0
      %800 = vmatprep.subr.bf16.mxu0 0
      %801 = vmatpush1.bf16.msra.mxu0 0
      %802 = vmatprep.subr.bf16.mxu0 0
      %803 = vmatpush1.bf16.msra.mxu0 0
      %804 = vmatprep.subr.bf16.mxu0 0
      %805 = vmatpush1.bf16.msra.mxu0 0
      %806 = vmatprep.subr.bf16.mxu0 0
      %807 = vmatpush1.bf16.msra.mxu0 0
      %808 = vmatprep.subr.bf16.mxu0 0
      %809 = vmatpush1.bf16.msra.mxu0 0
      %810 = vmatprep.subr.bf16.mxu0 0
      %811 = vmatpush1.bf16.msra.mxu0 0
      %812 = vmatprep.subr.bf16.mxu0 0
      %813 = vmatpush1.bf16.msra.mxu0 0
      %814 = vmatprep.subr.bf16.mxu0 0
      %815 = vmatpush1.bf16.msra.mxu0 0
      %816 = vmatprep.subr.bf16.mxu0 0
      %817 = vmatpush1.bf16.msra.mxu0 0
      %818 = vmatprep.subr.bf16.mxu0 0
      %819 = vmatpush1.bf16.msra.mxu0 0
      %820 = vmatprep.subr.bf16.mxu0 0
      %821 = vmatpush1.bf16.msra.mxu0 0
      %822 = vmatprep.subr.bf16.mxu0 0
      %823 = vmatpush1.bf16.msra.mxu0 0
      %824 = vmatprep.mubr.bf16.mxu0 0
      %825 = vmatmul.mubr.bf16.gmra.mrb[0].mxu0 %v766
      %v826 = vpop.f32.mrb[0].mxu0
      %v827 = vadd.f32 %v751, %v826
      %v828 = vpop.f32.mrb[0].mxu0
      %v829 = vpop.f32.mrb[0].mxu0
      %v830 = vadd.f32 %v751, %v829
      %v831 = vpop.f32.mrb[0].mxu0
      %832 = vmatprep.mubr.bf16.mxu0 0
      %833 = vmatmul.mubr.bf16.gmra.mrb[0].mxu0 %v769
      %v834 = vpop.f32.mrb[0].mxu0
      %v835 = vadd.f32 %v751, %v834
      %v836 = vpop.f32.mrb[0].mxu0
      %v837 = vpop.f32.mrb[0].mxu0
      %v838 = vadd.f32 %v751, %v837
      %v839 = vpop.f32.mrb[0].mxu0
      %840 = vmatprep.mubr.bf16.mxu0 0
      %841 = vmatmul.mubr.bf16.gmra.mrb[0].mxu0 %v772
      %v842 = vpop.f32.mrb[0].mxu0
      %v843 = vadd.f32 %v751, %v842
      %v844 = vpop.f32.mrb[0].mxu0
      %v845 = vpop.f32.mrb[0].mxu0
      %v846 = vadd.f32 %v751, %v845
      %v847 = vpop.f32.mrb[0].mxu0
      %848 = vmatprep.mubr.bf16.mxu0 0
      %849 = vmatmul.mubr.bf16.gmra.mrb[0].mxu0 %v775
      %v850 = vpop.f32.mrb[0].mxu0
      %v851 = vadd.f32 %v751, %v850
      %v852 = vpop.f32.mrb[0].mxu0
      %v853 = vpop.f32.mrb[0].mxu0
      %v854 = vadd.f32 %v751, %v853
      %v855 = vpop.f32.mrb[0].mxu0
      %856 = vmatprep.mubr.bf16.mxu0 0
      %857 = vmatmul.mubr.bf16.gmra.mrb[0].mxu0 %v778
      %v858 = vpop.f32.mrb[0].mxu0
      %v859 = vadd.f32 %v751, %v858
      %v860 = vpop.f32.mrb[0].mxu0
      %v861 = vpop.f32.mrb[0].mxu0
      %v862 = vadd.f32 %v751, %v861
      %v863 = vpop.f32.mrb[0].mxu0
      %864 = vmatprep.mubr.bf16.mxu0 0
      %865 = vmatmul.mubr.bf16.gmra.mrb[0].mxu0 %v781
      %v866 = vpop.f32.mrb[0].mxu0
      %v867 = vadd.f32 %v751, %v866
      %v868 = vpop.f32.mrb[0].mxu0
      %v869 = vpop.f32.mrb[0].mxu0
      %v870 = vadd.f32 %v751, %v869
      %v871 = vpop.f32.mrb[0].mxu0
      %872 = vmatprep.mubr.bf16.mxu0 0
      %873 = vmatmul.mubr.bf16.gmra.mrb[0].mxu0 %v784
      %v874 = vpop.f32.mrb[0].mxu0
      %v875 = vadd.f32 %v751, %v874
      %v876 = vpop.f32.mrb[0].mxu0
      %v877 = vpop.f32.mrb[0].mxu0
      %v878 = vadd.f32 %v751, %v877
      %v879 = vpop.f32.mrb[0].mxu0
      %880 = vmatprep.mubr.bf16.mxu0 0
      %881 = vmatmul.mubr.bf16.gmra.mrb[0].mxu0 %v787
      %v882 = vpop.f32.mrb[0].mxu0
      %v883 = vadd.f32 %v751, %v882
      %v884 = vpop.f32.mrb[0].mxu0
      %v885 = vpop.f32.mrb[0].mxu0
      %v886 = vadd.f32 %v751, %v885
      %v887 = vpop.f32.mrb[0].mxu0
      %888 = vmatprep.mubr.bf16.mxu0 0
      %889 = vmatmul.mubr.bf16.gmra.mrb[0].mxu0 %v790
      %v890 = vpop.f32.mrb[0].mxu0
      %v891 = vadd.f32 %v751, %v890
      %v892 = vpop.f32.mrb[0].mxu0
      %v893 = vpop.f32.mrb[0].mxu0
      %v894 = vpop.f32.mrb[0].mxu0
      %895 = vdwg.mxu0
      %v896 = vpack.c.bf16 %v830, %v827
      %v897 = vpack.c.bf16 %v838, %v835
      %v898 = vpack.c.bf16 %v846, %v843
      %v899 = vpack.c.bf16 %v854, %v851
      %v900 = vpack.c.bf16 %v862, %v859
      %v901 = vpack.c.bf16 %v870, %v867
      %v902 = vpack.c.bf16 %v878, %v875
      %v903 = vpack.c.bf16 %v886, %v883
      %v904 = vpack.c.bf16 %v891, %v891
      %907 = vrot.lane.b32.xlu0 %v896, 120
      %v908 = vpop.permute.xlu0 %907
      %909 = vrot.lane.b32.xlu0 %v897, 120
      %v910 = vpop.permute.xlu0 %909
      %911 = vrot.lane.b32.xlu0 %v896, 112
      %v912 = vpop.permute.xlu0 %911
      %913 = vrot.lane.b32.xlu0 %v897, 112
      %v914 = vpop.permute.xlu0 %913
      %915 = vrot.lane.b32.xlu0 %v896, 104
      %v916 = vpop.permute.xlu0 %915
      %917 = vrot.lane.b32.xlu0 %v897, 104
      %v918 = vpop.permute.xlu0 %917
      %919 = vrot.lane.b32.xlu0 %v896, 96
      %v920 = vpop.permute.xlu0 %919
      %921 = vrot.lane.b32.xlu0 %v897, 96
      %v922 = vpop.permute.xlu0 %921
      %vm923 = vcmask 64512
      %v925 = vsel %vm923, %v896, 0
      %v928 = vsel %vm923, %v897, 0
      %v931 = vsel %vm923, %v920, 0
      %v934 = vsel %vm923, %v922, 0
      %936 = vmatprep.subr.bf16.mxu0 0
      %937 = vmatpush1.bf16.xpose.msra.mxu0 %v931
      %938 = vmatprep.subr.bf16.mxu0 0
      %939 = vmatpush1.bf16.xpose.msra.mxu0 %v934
      %940 = vmatprep.subr.bf16.mxu0 0
      %941 = vmatpush1.bf16.xpose.msra.mxu0 0
      %942 = vmatprep.subr.bf16.mxu0 0
      %943 = vmatpush1.bf16.xpose.msra.mxu0 0
      %944 = vmatprep.subr.bf16.mxu0 0
      %945 = vmatpush1.bf16.xpose.msra.mxu0 0
      %946 = vmatprep.subr.bf16.mxu0 0
      %947 = vmatpush1.bf16.xpose.msra.mxu0 0
      %948 = vmatprep.subr.bf16.mxu0 0
      %949 = vmatpush1.bf16.xpose.msra.mxu0 0
      %950 = vmatprep.subr.bf16.mxu0 0
      %951 = vmatpush1.bf16.xpose.msra.mxu0 0
      %952 = vmatprep.subr.bf16.mxu0 0
      %953 = vmatpush1.bf16.xpose.msra.mxu0 0
      %954 = vmatprep.subr.bf16.mxu0 0
      %955 = vmatpush1.bf16.xpose.msra.mxu0 0
      %956 = vmatprep.subr.bf16.mxu0 0
      %957 = vmatpush1.bf16.xpose.msra.mxu0 0
      %958 = vmatprep.subr.bf16.mxu0 0
      %959 = vmatpush1.bf16.xpose.msra.mxu0 0
      %960 = vmatprep.subr.bf16.mxu0 0
      %961 = vmatpush1.bf16.xpose.msra.mxu0 0
      %962 = vmatprep.subr.bf16.mxu0 0
      %963 = vmatpush1.bf16.xpose.msra.mxu0 0
      %964 = vmatprep.subr.bf16.mxu0 0
      %965 = vmatpush1.bf16.xpose.msra.mxu0 0
      %966 = vmatprep.subr.bf16.mxu0 0
      %967 = vmatpush1.bf16.xpose.msra.mxu0 0
      %968 = vmatprep.mubr.bf16.mxu0 0
      %969 = vmatmul.mubr.bf16.gmra.mrb[0].mxu0 %v925
      %v970 = vpop.f32.mrb[0].mxu0
      %v971 = vadd.f32 0.0, %v970
      %v972 = vpop.f32.mrb[0].mxu0
      %v973 = vpop.f32.mrb[0].mxu0
      %v974 = vadd.f32 0.0, %v973
      %v975 = vpop.f32.mrb[0].mxu0
      %976 = vmatprep.mubr.bf16.mxu0 0
      %977 = vmatmul.mubr.bf16.gmra.mrb[0].mxu0 %v928
      %v978 = vpop.f32.mrb[0].mxu0
      %v979 = vadd.f32 0.0, %v978
      %v980 = vpop.f32.mrb[0].mxu0
      %v981 = vpop.f32.mrb[0].mxu0
      %v982 = vpop.f32.mrb[0].mxu0
      %983 = vdwg.mxu0
      %984 = vrot.lane.b32.xlu0 %v908, 96
      %v985 = vpop.permute.xlu0 %984
      %986 = vrot.lane.b32.xlu0 %v910, 96
      %v987 = vpop.permute.xlu0 %986
      %v989 = vsel %vm923, %v908, 0
      %v992 = vsel %vm923, %v910, 0
      %v995 = vsel %vm923, %v985, 0
      %v998 = vsel %vm923, %v987, 0
      %1000 = vmatprep.subr.bf16.mxu0 0
      %1001 = vmatpush1.bf16.xpose.msra.mxu0 %v995
      %1002 = vmatprep.subr.bf16.mxu0 0
      %1003 = vmatpush1.bf16.xpose.msra.mxu0 %v998
      %1004 = vmatprep.subr.bf16.mxu0 0
      %1005 = vmatpush1.bf16.xpose.msra.mxu0 0
      %1006 = vmatprep.subr.bf16.mxu0 0
      %1007 = vmatpush1.bf16.xpose.msra.mxu0 0
      %1008 = vmatprep.subr.bf16.mxu0 0
      %1009 = vmatpush1.bf16.xpose.msra.mxu0 0
      %1010 = vmatprep.subr.bf16.mxu0 0
      %1011 = vmatpush1.bf16.xpose.msra.mxu0 0
      %1012 = vmatprep.subr.bf16.mxu0 0
      %1013 = vmatpush1.bf16.xpose.msra.mxu0 0
      %1014 = vmatprep.subr.bf16.mxu0 0
      %1015 = vmatpush1.bf16.xpose.msra.mxu0 0
      %1016 = vmatprep.subr.bf16.mxu0 0
      %1017 = vmatpush1.bf16.xpose.msra.mxu0 0
      %1018 = vmatprep.subr.bf16.mxu0 0
      %1019 = vmatpush1.bf16.xpose.msra.mxu0 0
      %1020 = vmatprep.subr.bf16.mxu0 0
      %1021 = vmatpush1.bf16.xpose.msra.mxu0 0
      %1022 = vmatprep.subr.bf16.mxu0 0
      %1023 = vmatpush1.bf16.xpose.msra.mxu0 0
      %1024 = vmatprep.subr.bf16.mxu0 0
      %1025 = vmatpush1.bf16.xpose.msra.mxu0 0
      %1026 = vmatprep.subr.bf16.mxu0 0
      %1027 = vmatpush1.bf16.xpose.msra.mxu0 0
      %1028 = vmatprep.subr.bf16.mxu0 0
      %1029 = vmatpush1.bf16.xpose.msra.mxu0 0
      %1030 = vmatprep.subr.bf16.mxu0 0
      %1031 = vmatpush1.bf16.xpose.msra.mxu0 0
      %1032 = vmatprep.mubr.bf16.mxu0 0
      %1033 = vmatmul.mubr.bf16.gmra.mrb[0].mxu0 %v989
      %v1034 = vpop.f32.mrb[0].mxu0
      %v1035 = vadd.f32 0.0, %v1034
      %v1036 = vpop.f32.mrb[0].mxu0
      %v1037 = vpop.f32.mrb[0].mxu0
      %v1038 = vadd.f32 0.0, %v1037
      %v1039 = vpop.f32.mrb[0].mxu0
      %1040 = vmatprep.mubr.bf16.mxu0 0
      %1041 = vmatmul.mubr.bf16.gmra.mrb[0].mxu0 %v992
      %v1042 = vpop.f32.mrb[0].mxu0
      %v1043 = vadd.f32 0.0, %v1042
      %v1044 = vpop.f32.mrb[0].mxu0
      %v1045 = vpop.f32.mrb[0].mxu0
      %v1046 = vpop.f32.mrb[0].mxu0
      %1047 = vdwg.mxu0
      %1048 = vrot.lane.b32.xlu0 %v912, 96
      %v1049 = vpop.permute.xlu0 %1048
      %1050 = vrot.lane.b32.xlu0 %v914, 96
      %v1051 = vpop.permute.xlu0 %1050
      %v1053 = vsel %vm923, %v912, 0
      %v1056 = vsel %vm923, %v914, 0
      %v1059 = vsel %vm923, %v1049, 0
      %v1062 = vsel %vm923, %v1051, 0
      %1064 = vmatprep.subr.bf16.mxu0 0
      %1065 = vmatpush1.bf16.xpose.msra.mxu0 %v1059
      %1066 = vmatprep.subr.bf16.mxu0 0
      %1067 = vmatpush1.bf16.xpose.msra.mxu0 %v1062
      %1068 = vmatprep.subr.bf16.mxu0 0
      %1069 = vmatpush1.bf16.xpose.msra.mxu0 0
      %1070 = vmatprep.subr.bf16.mxu0 0
      %1071 = vmatpush1.bf16.xpose.msra.mxu0 0
      %1072 = vmatprep.subr.bf16.mxu0 0
      %1073 = vmatpush1.bf16.xpose.msra.mxu0 0
      %1074 = vmatprep.subr.bf16.mxu0 0
      %1075 = vmatpush1.bf16.xpose.msra.mxu0 0
      %1076 = vmatprep.subr.bf16.mxu0 0
      %1077 = vmatpush1.bf16.xpose.msra.mxu0 0
      %1078 = vmatprep.subr.bf16.mxu0 0
      %1079 = vmatpush1.bf16.xpose.msra.mxu0 0
      %1080 = vmatprep.subr.bf16.mxu0 0
      %1081 = vmatpush1.bf16.xpose.msra.mxu0 0
      %1082 = vmatprep.subr.bf16.mxu0 0
      %1083 = vmatpush1.bf16.xpose.msra.mxu0 0
      %1084 = vmatprep.subr.bf16.mxu0 0
      %1085 = vmatpush1.bf16.xpose.msra.mxu0 0
      %1086 = vmatprep.subr.bf16.mxu0 0
      %1087 = vmatpush1.bf16.xpose.msra.mxu0 0
      %1088 = vmatprep.subr.bf16.mxu0 0
      %1089 = vmatpush1.bf16.xpose.msra.mxu0 0
      %1090 = vmatprep.subr.bf16.mxu0 0
      %1091 = vmatpush1.bf16.xpose.msra.mxu0 0
      %1092 = vmatprep.subr.bf16.mxu0 0
      %1093 = vmatpush1.bf16.xpose.msra.mxu0 0
      %1094 = vmatprep.subr.bf16.mxu0 0
      %1095 = vmatpush1.bf16.xpose.msra.mxu0 0
      %1096 = vmatprep.mubr.bf16.mxu0 0
      %1097 = vmatmul.mubr.bf16.gmra.mrb[0].mxu0 %v1053
      %v1098 = vpop.f32.mrb[0].mxu0
      %v1099 = vadd.f32 0.0, %v1098
      %v1100 = vpop.f32.mrb[0].mxu0
      %v1101 = vpop.f32.mrb[0].mxu0
      %v1102 = vadd.f32 0.0, %v1101
      %v1103 = vpop.f32.mrb[0].mxu0
      %1104 = vmatprep.mubr.bf16.mxu0 0
      %1105 = vmatmul.mubr.bf16.gmra.mrb[0].mxu0 %v1056
      %v1106 = vpop.f32.mrb[0].mxu0
      %v1107 = vadd.f32 0.0, %v1106
      %v1108 = vpop.f32.mrb[0].mxu0
      %v1109 = vpop.f32.mrb[0].mxu0
      %v1110 = vpop.f32.mrb[0].mxu0
      %1111 = vdwg.mxu0
      %1112 = vrot.lane.b32.xlu0 %v916, 96
      %v1113 = vpop.permute.xlu0 %1112
      %1114 = vrot.lane.b32.xlu0 %v918, 96
      %v1115 = vpop.permute.xlu0 %1114
      %v1117 = vsel %vm923, %v916, 0
      %v1120 = vsel %vm923, %v918, 0
      %v1123 = vsel %vm923, %v1113, 0
      %v1126 = vsel %vm923, %v1115, 0
      %1128 = vmatprep.subr.bf16.mxu0 0
      %1129 = vmatpush1.bf16.xpose.msra.mxu0 %v1123
      %1130 = vmatprep.subr.bf16.mxu0 0
      %1131 = vmatpush1.bf16.xpose.msra.mxu0 %v1126
      %1132 = vmatprep.subr.bf16.mxu0 0
      %1133 = vmatpush1.bf16.xpose.msra.mxu0 0
      %1134 = vmatprep.subr.bf16.mxu0 0
      %1135 = vmatpush1.bf16.xpose.msra.mxu0 0
      %1136 = vmatprep.subr.bf16.mxu0 0
      %1137 = vmatpush1.bf16.xpose.msra.mxu0 0
      %1138 = vmatprep.subr.bf16.mxu0 0
      %1139 = vmatpush1.bf16.xpose.msra.mxu0 0
      %1140 = vmatprep.subr.bf16.mxu0 0
      %1141 = vmatpush1.bf16.xpose.msra.mxu0 0
      %1142 = vmatprep.subr.bf16.mxu0 0
      %1143 = vmatpush1.bf16.xpose.msra.mxu0 0
      %1144 = vmatprep.subr.bf16.mxu0 0
      %1145 = vmatpush1.bf16.xpose.msra.mxu0 0
      %1146 = vmatprep.subr.bf16.mxu0 0
      %1147 = vmatpush1.bf16.xpose.msra.mxu0 0
      %1148 = vmatprep.subr.bf16.mxu0 0
      %1149 = vmatpush1.bf16.xpose.msra.mxu0 0
      %1150 = vmatprep.subr.bf16.mxu0 0
      %1151 = vmatpush1.bf16.xpose.msra.mxu0 0
      %1152 = vmatprep.subr.bf16.mxu0 0
      %1153 = vmatpush1.bf16.xpose.msra.mxu0 0
      %1154 = vmatprep.subr.bf16.mxu0 0
      %1155 = vmatpush1.bf16.xpose.msra.mxu0 0
      %1156 = vmatprep.subr.bf16.mxu0 0
      %1157 = vmatpush1.bf16.xpose.msra.mxu0 0
      %1158 = vmatprep.subr.bf16.mxu0 0
      %1159 = vmatpush1.bf16.xpose.msra.mxu0 0
      %1160 = vmatprep.mubr.bf16.mxu0 0
      %1161 = vmatmul.mubr.bf16.gmra.mrb[0].mxu0 %v1117
      %v1162 = vpop.f32.mrb[0].mxu0
      %v1163 = vadd.f32 0.0, %v1162
      %v1164 = vpop.f32.mrb[0].mxu0
      %v1165 = vpop.f32.mrb[0].mxu0
      %v1166 = vadd.f32 0.0, %v1165
      %v1167 = vpop.f32.mrb[0].mxu0
      %1168 = vmatprep.mubr.bf16.mxu0 0
      %1169 = vmatmul.mubr.bf16.gmra.mrb[0].mxu0 %v1120
      %v1170 = vpop.f32.mrb[0].mxu0
      %v1171 = vadd.f32 0.0, %v1170
      %v1172 = vpop.f32.mrb[0].mxu0
      %v1173 = vpop.f32.mrb[0].mxu0
      %v1174 = vpop.f32.mrb[0].mxu0
      %1175 = vdwg.mxu0
      %v1176 = vmul.f32 %v971, 0.35355338
      %v1177 = vmul.f32 %v974, 0.35355338
      %v1178 = vmul.f32 %v979, 0.35355338
      %v1179 = vmul.f32 %v1035, 0.35355338
      %v1180 = vmul.f32 %v1038, 0.35355338
      %v1181 = vmul.f32 %v1043, 0.35355338
      %v1182 = vmul.f32 %v1099, 0.35355338
      %v1183 = vmul.f32 %v1102, 0.35355338
      %v1184 = vmul.f32 %v1107, 0.35355338
      %v1185 = vmul.f32 %v1163, 0.35355338
      %v1186 = vmul.f32 %v1166, 0.35355338
      %v1187 = vmul.f32 %v1171, 0.35355338
      %vm1188 = vcmask 138240
      %v1189 = vsel %vm1188, %v1176, -inf
      %1190 = vmax.xlane.f32.xlu0 %v1189
      %v1191 = vpop.xlane.xlu0 %1190
      %v1192 = vsel %vm1188, %v1177, -inf
      %1193 = vmax.xlane.f32.xlu0 %v1192
      %v1194 = vpop.xlane.xlu0 %1193
      %vm1195 = vcmask 131072
      %v1196 = vsel %vm1195, %v1178, -inf
      %1197 = vmax.xlane.f32.xlu0 %v1196
      %v1198 = vpop.xlane.xlu0 %1197
      %v1199 = vsel %vm1188, %v1179, -inf
      %1200 = vmax.xlane.f32.xlu0 %v1199
      %v1201 = vpop.xlane.xlu0 %1200
      %v1202 = vsel %vm1188, %v1180, -inf
      %1203 = vmax.xlane.f32.xlu0 %v1202
      %v1204 = vpop.xlane.xlu0 %1203
      %v1205 = vsel %vm1195, %v1181, -inf
      %1206 = vmax.xlane.f32.xlu0 %v1205
      %v1207 = vpop.xlane.xlu0 %1206
      %v1208 = vsel %vm1188, %v1182, -inf
      %1209 = vmax.xlane.f32.xlu0 %v1208
      %v1210 = vpop.xlane.xlu0 %1209
      %v1211 = vsel %vm1188, %v1183, -inf
      %1212 = vmax.xlane.f32.xlu0 %v1211
      %v1213 = vpop.xlane.xlu0 %1212
      %v1214 = vsel %vm1195, %v1184, -inf
      %1215 = vmax.xlane.f32.xlu0 %v1214
      %v1216 = vpop.xlane.xlu0 %1215
      %v1217 = vsel %vm1188, %v1185, -inf
      %1218 = vmax.xlane.f32.xlu0 %v1217
      %v1219 = vpop.xlane.xlu0 %1218
      %v1220 = vsel %vm1188, %v1186, -inf
      %1221 = vmax.xlane.f32.xlu0 %v1220
      %v1222 = vpop.xlane.xlu0 %1221
      %v1223 = vsel %vm1195, %v1187, -inf
      %1224 = vmax.xlane.f32.xlu0 %v1223
      %v1225 = vpop.xlane.xlu0 %1224
      %v1226 = vsub.f32 %v1176, %v1191
      %v1227 = vsub.f32 %v1177, %v1194
      %v1228 = vsub.f32 %v1178, %v1198
      %v1229 = vsub.f32 %v1179, %v1201
      %v1230 = vsub.f32 %v1180, %v1204
      %v1231 = vsub.f32 %v1181, %v1207
      %v1232 = vsub.f32 %v1182, %v1210
      %v1233 = vsub.f32 %v1183, %v1213
      %v1234 = vsub.f32 %v1184, %v1216
      %v1235 = vsub.f32 %v1185, %v1219
      %v1236 = vsub.f32 %v1186, %v1222
      %v1237 = vsub.f32 %v1187, %v1225
      %v1238 = vmul.f32 %v1226, 1.442695
      %v1239 = vpow.pop %v1238
      %v1240 = vmul.f32 %v1227, 1.442695
      %v1241 = vpow.pop %v1240
      %v1242 = vmul.f32 %v1228, 1.442695
      %v1243 = vpow.pop %v1242
      %v1244 = vmul.f32 %v1229, 1.442695
      %v1245 = vpow.pop %v1244
      %v1246 = vmul.f32 %v1230, 1.442695
      %v1247 = vpow.pop %v1246
      %v1248 = vmul.f32 %v1231, 1.442695
      %v1249 = vpow.pop %v1248
      %v1250 = vmul.f32 %v1232, 1.442695
      %v1251 = vpow.pop %v1250
      %v1252 = vmul.f32 %v1233, 1.442695
      %v1253 = vpow.pop %v1252
      %v1254 = vmul.f32 %v1234, 1.442695
      %v1255 = vpow.pop %v1254
      %v1256 = vmul.f32 %v1235, 1.442695
      %v1257 = vpow.pop %v1256
      %v1258 = vmul.f32 %v1236, 1.442695
      %v1259 = vpow.pop %v1258
      %v1260 = vmul.f32 %v1237, 1.442695
      %v1261 = vpow.pop %v1260
      %v1262 = vsel %vm1188, %v1239, 0.0
      %1263 = vadd.xlane.f32.xlu0 %v1262
      %v1264 = vpop.xlane.xlu0 %1263
      %v1265 = vsel %vm1188, %v1241, 0.0
      %1266 = vadd.xlane.f32.xlu0 %v1265
      %v1267 = vpop.xlane.xlu0 %1266
      %v1268 = vsel %vm1195, %v1243, 0.0
      %1269 = vadd.xlane.f32.xlu0 %v1268
      %v1270 = vpop.xlane.xlu0 %1269
      %v1271 = vsel %vm1188, %v1245, 0.0
      %1272 = vadd.xlane.f32.xlu0 %v1271
      %v1273 = vpop.xlane.xlu0 %1272
      %v1274 = vsel %vm1188, %v1247, 0.0
      %1275 = vadd.xlane.f32.xlu0 %v1274
      %v1276 = vpop.xlane.xlu0 %1275
      %v1277 = vsel %vm1195, %v1249, 0.0
      %1278 = vadd.xlane.f32.xlu0 %v1277
      %v1279 = vpop.xlane.xlu0 %1278
      %v1280 = vsel %vm1188, %v1251, 0.0
      %1281 = vadd.xlane.f32.xlu0 %v1280
      %v1282 = vpop.xlane.xlu0 %1281
      %v1283 = vsel %vm1188, %v1253, 0.0
      %1284 = vadd.xlane.f32.xlu0 %v1283
      %v1285 = vpop.xlane.xlu0 %1284
      %v1286 = vsel %vm1195, %v1255, 0.0
      %1287 = vadd.xlane.f32.xlu0 %v1286
      %v1288 = vpop.xlane.xlu0 %1287
      %v1289 = vsel %vm1188, %v1257, 0.0
      %1290 = vadd.xlane.f32.xlu0 %v1289
      %v1291 = vpop.xlane.xlu0 %1290
      %v1292 = vsel %vm1188, %v1259, 0.0
      %1293 = vadd.xlane.f32.xlu0 %v1292
      %v1294 = vpop.xlane.xlu0 %1293
      %v1295 = vsel %vm1195, %v1261, 0.0
      %1296 = vadd.xlane.f32.xlu0 %v1295
      %v1297 = vpop.xlane.xlu0 %1296
      %v1298 = vrcp.pop %v1264
      %v1299 = vrcp.pop %v1267
      %v1300 = vrcp.pop %v1270
      %v1301 = vrcp.pop %v1273
      %v1302 = vrcp.pop %v1276
      %v1303 = vrcp.pop %v1279
      %v1304 = vrcp.pop %v1282
      %v1305 = vrcp.pop %v1285
      %v1306 = vrcp.pop %v1288
      %v1307 = vrcp.pop %v1291
      %v1308 = vrcp.pop %v1294
      %v1309 = vrcp.pop %v1297
      %v1310 = vmul.f32 %v1239, %v1298
      %v1311 = vmul.f32 %v1241, %v1299
      %v1312 = vmul.f32 %v1243, %v1300
      %v1313 = vmul.f32 %v1245, %v1301
      %v1314 = vmul.f32 %v1247, %v1302
      %v1315 = vmul.f32 %v1249, %v1303
      %v1316 = vmul.f32 %v1251, %v1304
      %v1317 = vmul.f32 %v1253, %v1305
      %v1318 = vmul.f32 %v1255, %v1306
      %v1319 = vmul.f32 %v1257, %v1307
      %v1320 = vmul.f32 %v1259, %v1308
      %v1321 = vmul.f32 %v1261, %v1309
      %v1322 = vpack.c.bf16 %v1311, %v1310
      %v1323 = vpack.c.bf16 %v1312, %v1312
      %v1324 = vpack.c.bf16 %v1314, %v1313
      %v1325 = vpack.c.bf16 %v1315, %v1315
      %v1326 = vpack.c.bf16 %v1317, %v1316
      %v1327 = vpack.c.bf16 %v1318, %v1318
      %v1328 = vpack.c.bf16 %v1320, %v1319
      %v1329 = vpack.c.bf16 %v1321, %v1321
      %1330 = vrot.lane.b32.xlu0 %v896, 64
      %v1331 = vpop.permute.xlu0 %1330
      %1332 = vrot.lane.b32.xlu0 %v897, 64
      %v1333 = vpop.permute.xlu0 %1332
      %v1336 = vsel %vm1188, %v1322, 0
      %v1339 = vsel %vm1188, %v1323, 0
      %vm1341 = vcmask 1040384
      %v1342 = vsel 0, 4294967295, 65535
      %v1343 = vsel %vm1341, %v1342, 0
      %v1345 = vand.u32 %v1333, %v1343
      %1347 = vmatprep.subr.bf16.mxu0 0
      %1348 = vmatpush1.bf16.msra.mxu0 %v1331
      %1349 = vmatprep.subr.bf16.mxu0 0
      %1350 = vmatpush1.bf16.msra.mxu0 %v1345
      %1351 = vmatprep.subr.bf16.mxu0 0
      %1352 = vmatpush1.bf16.msra.mxu0 0
      %1353 = vmatprep.subr.bf16.mxu0 0
      %1354 = vmatpush1.bf16.msra.mxu0 0
      %1355 = vmatprep.subr.bf16.mxu0 0
      %1356 = vmatpush1.bf16.msra.mxu0 0
      %1357 = vmatprep.subr.bf16.mxu0 0
      %1358 = vmatpush1.bf16.msra.mxu0 0
      %1359 = vmatprep.subr.bf16.mxu0 0
      %1360 = vmatpush1.bf16.msra.mxu0 0
      %1361 = vmatprep.subr.bf16.mxu0 0
      %1362 = vmatpush1.bf16.msra.mxu0 0
      %1363 = vmatprep.subr.bf16.mxu0 0
      %1364 = vmatpush1.bf16.msra.mxu0 0
      %1365 = vmatprep.subr.bf16.mxu0 0
      %1366 = vmatpush1.bf16.msra.mxu0 0
      %1367 = vmatprep.subr.bf16.mxu0 0
      %1368 = vmatpush1.bf16.msra.mxu0 0
      %1369 = vmatprep.subr.bf16.mxu0 0
      %1370 = vmatpush1.bf16.msra.mxu0 0
      %1371 = vmatprep.subr.bf16.mxu0 0
      %1372 = vmatpush1.bf16.msra.mxu0 0
      %1373 = vmatprep.subr.bf16.mxu0 0
      %1374 = vmatpush1.bf16.msra.mxu0 0
      %1375 = vmatprep.subr.bf16.mxu0 0
      %1376 = vmatpush1.bf16.msra.mxu0 0
      %1377 = vmatprep.subr.bf16.mxu0 0
      %1378 = vmatpush1.bf16.msra.mxu0 0
      %1379 = vmatprep.mubr.bf16.mxu0 0
      %1380 = vmatmul.mubr.bf16.gmra.mrb[0].mxu0 %v1336
      %v1381 = vpop.f32.mrb[0].mxu0
      %v1382 = vadd.f32 0.0, %v1381
      %v1383 = vpop.f32.mrb[0].mxu0
      %v1384 = vpop.f32.mrb[0].mxu0
      %v1385 = vadd.f32 0.0, %v1384
      %v1386 = vpop.f32.mrb[0].mxu0
      %1387 = vmatprep.mubr.bf16.mxu0 0
      %1388 = vmatmul.mubr.bf16.gmra.mrb[0].mxu0 %v1339
      %v1389 = vpop.f32.mrb[0].mxu0
      %v1390 = vadd.f32 0.0, %v1389
      %v1391 = vpop.f32.mrb[0].mxu0
      %v1392 = vpop.f32.mrb[0].mxu0
      %v1393 = vpop.f32.mrb[0].mxu0
      %1394 = vdwg.mxu0
      %1395 = vrot.lane.b32.xlu0 %v908, 64
      %v1396 = vpop.permute.xlu0 %1395
      %1397 = vrot.lane.b32.xlu0 %v910, 64
      %v1398 = vpop.permute.xlu0 %1397
      %v1401 = vsel %vm1188, %v1324, 0
      %v1404 = vsel %vm1188, %v1325, 0
      %v1407 = vand.u32 %v1398, %v1343
      %1409 = vmatprep.subr.bf16.mxu0 0
      %1410 = vmatpush1.bf16.msra.mxu0 %v1396
      %1411 = vmatprep.subr.bf16.mxu0 0
      %1412 = vmatpush1.bf16.msra.mxu0 %v1407
      %1413 = vmatprep.subr.bf16.mxu0 0
      %1414 = vmatpush1.bf16.msra.mxu0 0
      %1415 = vmatprep.subr.bf16.mxu0 0
      %1416 = vmatpush1.bf16.msra.mxu0 0
      %1417 = vmatprep.subr.bf16.mxu0 0
      %1418 = vmatpush1.bf16.msra.mxu0 0
      %1419 = vmatprep.subr.bf16.mxu0 0
      %1420 = vmatpush1.bf16.msra.mxu0 0
      %1421 = vmatprep.subr.bf16.mxu0 0
      %1422 = vmatpush1.bf16.msra.mxu0 0
      %1423 = vmatprep.subr.bf16.mxu0 0
      %1424 = vmatpush1.bf16.msra.mxu0 0
      %1425 = vmatprep.subr.bf16.mxu0 0
      %1426 = vmatpush1.bf16.msra.mxu0 0
      %1427 = vmatprep.subr.bf16.mxu0 0
      %1428 = vmatpush1.bf16.msra.mxu0 0
      %1429 = vmatprep.subr.bf16.mxu0 0
      %1430 = vmatpush1.bf16.msra.mxu0 0
      %1431 = vmatprep.subr.bf16.mxu0 0
      %1432 = vmatpush1.bf16.msra.mxu0 0
      %1433 = vmatprep.subr.bf16.mxu0 0
      %1434 = vmatpush1.bf16.msra.mxu0 0
      %1435 = vmatprep.subr.bf16.mxu0 0
      %1436 = vmatpush1.bf16.msra.mxu0 0
      %1437 = vmatprep.subr.bf16.mxu0 0
      %1438 = vmatpush1.bf16.msra.mxu0 0
      %1439 = vmatprep.subr.bf16.mxu0 0
      %1440 = vmatpush1.bf16.msra.mxu0 0
      %1441 = vmatprep.mubr.bf16.mxu0 0
      %1442 = vmatmul.mubr.bf16.gmra.mrb[0].mxu0 %v1401
      %v1443 = vpop.f32.mrb[0].mxu0
      %v1444 = vadd.f32 0.0, %v1443
      %v1445 = vpop.f32.mrb[0].mxu0
      %v1446 = vpop.f32.mrb[0].mxu0
      %v1447 = vadd.f32 0.0, %v1446
      %v1448 = vpop.f32.mrb[0].mxu0
      %1449 = vmatprep.mubr.bf16.mxu0 0
      %1450 = vmatmul.mubr.bf16.gmra.mrb[0].mxu0 %v1404
      %v1451 = vpop.f32.mrb[0].mxu0
      %v1452 = vadd.f32 0.0, %v1451
      %v1453 = vpop.f32.mrb[0].mxu0
      %v1454 = vpop.f32.mrb[0].mxu0
      %v1455 = vpop.f32.mrb[0].mxu0
      %1456 = vdwg.mxu0
      %1457 = vrot.lane.b32.xlu0 %v912, 64
      %v1458 = vpop.permute.xlu0 %1457
      %1459 = vrot.lane.b32.xlu0 %v914, 64
      %v1460 = vpop.permute.xlu0 %1459
      %v1463 = vsel %vm1188, %v1326, 0
      %v1466 = vsel %vm1188, %v1327, 0
      %v1469 = vand.u32 %v1460, %v1343
      %1471 = vmatprep.subr.bf16.mxu0 0
      %1472 = vmatpush1.bf16.msra.mxu0 %v1458
      %1473 = vmatprep.subr.bf16.mxu0 0
      %1474 = vmatpush1.bf16.msra.mxu0 %v1469
      %1475 = vmatprep.subr.bf16.mxu0 0
      %1476 = vmatpush1.bf16.msra.mxu0 0
      %1477 = vmatprep.subr.bf16.mxu0 0
      %1478 = vmatpush1.bf16.msra.mxu0 0
      %1479 = vmatprep.subr.bf16.mxu0 0
      %1480 = vmatpush1.bf16.msra.mxu0 0
      %1481 = vmatprep.subr.bf16.mxu0 0
      %1482 = vmatpush1.bf16.msra.mxu0 0
      %1483 = vmatprep.subr.bf16.mxu0 0
      %1484 = vmatpush1.bf16.msra.mxu0 0
      %1485 = vmatprep.subr.bf16.mxu0 0
      %1486 = vmatpush1.bf16.msra.mxu0 0
      %1487 = vmatprep.subr.bf16.mxu0 0
      %1488 = vmatpush1.bf16.msra.mxu0 0
      %1489 = vmatprep.subr.bf16.mxu0 0
      %1490 = vmatpush1.bf16.msra.mxu0 0
      %1491 = vmatprep.subr.bf16.mxu0 0
      %1492 = vmatpush1.bf16.msra.mxu0 0
      %1493 = vmatprep.subr.bf16.mxu0 0
      %1494 = vmatpush1.bf16.msra.mxu0 0
      %1495 = vmatprep.subr.bf16.mxu0 0
      %1496 = vmatpush1.bf16.msra.mxu0 0
      %1497 = vmatprep.subr.bf16.mxu0 0
      %1498 = vmatpush1.bf16.msra.mxu0 0
      %1499 = vmatprep.subr.bf16.mxu0 0
      %1500 = vmatpush1.bf16.msra.mxu0 0
      %1501 = vmatprep.subr.bf16.mxu0 0
      %1502 = vmatpush1.bf16.msra.mxu0 0
      %1503 = vmatprep.mubr.bf16.mxu0 0
      %1504 = vmatmul.mubr.bf16.gmra.mrb[0].mxu0 %v1463
      %v1505 = vpop.f32.mrb[0].mxu0
      %v1506 = vadd.f32 0.0, %v1505
      %v1507 = vpop.f32.mrb[0].mxu0
      %v1508 = vpop.f32.mrb[0].mxu0
      %v1509 = vadd.f32 0.0, %v1508
      %v1510 = vpop.f32.mrb[0].mxu0
      %1511 = vmatprep.mubr.bf16.mxu0 0
      %1512 = vmatmul.mubr.bf16.gmra.mrb[0].mxu0 %v1466
      %v1513 = vpop.f32.mrb[0].mxu0
      %v1514 = vadd.f32 0.0, %v1513
      %v1515 = vpop.f32.mrb[0].mxu0
      %v1516 = vpop.f32.mrb[0].mxu0
      %v1517 = vpop.f32.mrb[0].mxu0
      %1518 = vdwg.mxu0
      %1519 = vrot.lane.b32.xlu0 %v916, 64
      %v1520 = vpop.permute.xlu0 %1519
      %1521 = vrot.lane.b32.xlu0 %v918, 64
      %v1522 = vpop.permute.xlu0 %1521
      %v1525 = vsel %vm1188, %v1328, 0
      %v1528 = vsel %vm1188, %v1329, 0
      %v1531 = vand.u32 %v1522, %v1343
      %1533 = vmatprep.subr.bf16.mxu0 0
      %1534 = vmatpush1.bf16.msra.mxu0 %v1520
      %1535 = vmatprep.subr.bf16.mxu0 0
      %1536 = vmatpush1.bf16.msra.mxu0 %v1531
      %1537 = vmatprep.subr.bf16.mxu0 0
      %1538 = vmatpush1.bf16.msra.mxu0 0
      %1539 = vmatprep.subr.bf16.mxu0 0
      %1540 = vmatpush1.bf16.msra.mxu0 0
      %1541 = vmatprep.subr.bf16.mxu0 0
      %1542 = vmatpush1.bf16.msra.mxu0 0
      %1543 = vmatprep.subr.bf16.mxu0 0
      %1544 = vmatpush1.bf16.msra.mxu0 0
      %1545 = vmatprep.subr.bf16.mxu0 0
      %1546 = vmatpush1.bf16.msra.mxu0 0
      %1547 = vmatprep.subr.bf16.mxu0 0
      %1548 = vmatpush1.bf16.msra.mxu0 0
      %1549 = vmatprep.subr.bf16.mxu0 0
      %1550 = vmatpush1.bf16.msra.mxu0 0
      %1551 = vmatprep.subr.bf16.mxu0 0
      %1552 = vmatpush1.bf16.msra.mxu0 0
      %1553 = vmatprep.subr.bf16.mxu0 0
      %1554 = vmatpush1.bf16.msra.mxu0 0
      %1555 = vmatprep.subr.bf16.mxu0 0
      %1556 = vmatpush1.bf16.msra.mxu0 0
      %1557 = vmatprep.subr.bf16.mxu0 0
      %1558 = vmatpush1.bf16.msra.mxu0 0
      %1559 = vmatprep.subr.bf16.mxu0 0
      %1560 = vmatpush1.bf16.msra.mxu0 0
      %1561 = vmatprep.subr.bf16.mxu0 0
      %1562 = vmatpush1.bf16.msra.mxu0 0
      %1563 = vmatprep.subr.bf16.mxu0 0
      %1564 = vmatpush1.bf16.msra.mxu0 0
      %1565 = vmatprep.mubr.bf16.mxu0 0
      %1566 = vmatmul.mubr.bf16.gmra.mrb[0].mxu0 %v1525
      %v1567 = vpop.f32.mrb[0].mxu0
      %v1568 = vadd.f32 0.0, %v1567
      %v1569 = vpop.f32.mrb[0].mxu0
      %v1570 = vpop.f32.mrb[0].mxu0
      %v1571 = vadd.f32 0.0, %v1570
      %v1572 = vpop.f32.mrb[0].mxu0
      %1573 = vmatprep.mubr.bf16.mxu0 0
      %1574 = vmatmul.mubr.bf16.gmra.mrb[0].mxu0 %v1528
      %v1575 = vpop.f32.mrb[0].mxu0
      %v1576 = vadd.f32 0.0, %v1575
      %v1577 = vpop.f32.mrb[0].mxu0
      %v1578 = vpop.f32.mrb[0].mxu0
      %v1579 = vpop.f32.mrb[0].mxu0
      %1580 = vdwg.mxu0
      %v1581 = vpack.c.bf16 %v1385, %v1382
      %v1582 = vpack.c.bf16 %v1390, %v1390
      %v1583 = vld [vmem:[%s5] sm:$0xf]
      %v1584 = vpack.c.bf16 %v1447, %v1444
      %v1585 = vpack.c.bf16 %v1452, %v1452
      %s1586 = scalar_lea.vmem %s5, 4
      %v1587 = vld [vmem:[%s1586] sm:$0xf]
      %v1589 = vsel %vm923, %v1584, 0
      %v1592 = vsel %vm923, %v1585, 0
      %vm1594 = vcmask 1043456
      %v1596 = vsel %vm1594, %v1587, 0
      %1598 = vmatprep.subr.bf16.mxu0 0
      %1599 = vmatpush1.bf16.msra.mxu0 %v1596
      %1600 = vmatprep.subr.bf16.mxu0 0
      %1601 = vmatpush1.bf16.msra.mxu0 0
      %1602 = vmatprep.subr.bf16.mxu0 0
      %1603 = vmatpush1.bf16.msra.mxu0 0
      %1604 = vmatprep.subr.bf16.mxu0 0
      %1605 = vmatpush1.bf16.msra.mxu0 0
      %1606 = vmatprep.subr.bf16.mxu0 0
      %1607 = vmatpush1.bf16.msra.mxu0 0
      %1608 = vmatprep.subr.bf16.mxu0 0
      %1609 = vmatpush1.bf16.msra.mxu0 0
      %1610 = vmatprep.subr.bf16.mxu0 0
      %1611 = vmatpush1.bf16.msra.mxu0 0
      %1612 = vmatprep.subr.bf16.mxu0 0
      %1613 = vmatpush1.bf16.msra.mxu0 0
      %1614 = vmatprep.subr.bf16.mxu0 0
      %1615 = vmatpush1.bf16.msra.mxu0 0
      %1616 = vmatprep.subr.bf16.mxu0 0
      %1617 = vmatpush1.bf16.msra.mxu0 0
      %1618 = vmatprep.subr.bf16.mxu0 0
      %1619 = vmatpush1.bf16.msra.mxu0 0
      %1620 = vmatprep.subr.bf16.mxu0 0
      %1621 = vmatpush1.bf16.msra.mxu0 0
      %1622 = vmatprep.subr.bf16.mxu0 0
      %1623 = vmatpush1.bf16.msra.mxu0 0
      %1624 = vmatprep.subr.bf16.mxu0 0
      %1625 = vmatpush1.bf16.msra.mxu0 0
      %1626 = vmatprep.subr.bf16.mxu0 0
      %1627 = vmatpush1.bf16.msra.mxu0 0
      %1628 = vmatprep.subr.bf16.mxu0 0
      %1629 = vmatpush1.bf16.msra.mxu0 0
      %1630 = vmatprep.mubr.bf16.mxu0 0
      %1631 = vmatmul.mubr.bf16.gmra.mrb[0].mxu0 %v1589
      %v1632 = vpop.f32.mrb[0].mxu0
      %v1633 = vadd.f32 0.0, %v1632
      %v1634 = vpop.f32.mrb[0].mxu0
      %v1635 = vpop.f32.mrb[0].mxu0
      %v1636 = vadd.f32 0.0, %v1635
      %v1637 = vpop.f32.mrb[0].mxu0
      %1638 = vmatprep.mubr.bf16.mxu0 0
      %1639 = vmatmul.mubr.bf16.gmra.mrb[0].mxu0 %v1592
      %v1640 = vpop.f32.mrb[0].mxu0
      %v1641 = vadd.f32 0.0, %v1640
      %v1642 = vpop.f32.mrb[0].mxu0
      %v1643 = vpop.f32.mrb[0].mxu0
      %v1644 = vpop.f32.mrb[0].mxu0
      %1645 = vdwg.mxu0
      %v1647 = vsel %vm923, %v1581, 0
      %v1650 = vsel %vm923, %v1582, 0
      %v1653 = vsel %vm1594, %v1583, 0
      %1655 = vmatprep.subr.bf16.mxu0 0
      %1656 = vmatpush1.bf16.msra.mxu0 %v1653
      %1657 = vmatprep.subr.bf16.mxu0 0
      %1658 = vmatpush1.bf16.msra.mxu0 0
      %1659 = vmatprep.subr.bf16.mxu0 0
      %1660 = vmatpush1.bf16.msra.mxu0 0
      %1661 = vmatprep.subr.bf16.mxu0 0
      %1662 = vmatpush1.bf16.msra.mxu0 0
      %1663 = vmatprep.subr.bf16.mxu0 0
      %1664 = vmatpush1.bf16.msra.mxu0 0
      %1665 = vmatprep.subr.bf16.mxu0 0
      %1666 = vmatpush1.bf16.msra.mxu0 0
      %1667 = vmatprep.subr.bf16.mxu0 0
      %1668 = vmatpush1.bf16.msra.mxu0 0
      %1669 = vmatprep.subr.bf16.mxu0 0
      %1670 = vmatpush1.bf16.msra.mxu0 0
      %1671 = vmatprep.subr.bf16.mxu0 0
      %1672 = vmatpush1.bf16.msra.mxu0 0
      %1673 = vmatprep.subr.bf16.mxu0 0
      %1674 = vmatpush1.bf16.msra.mxu0 0
      %1675 = vmatprep.subr.bf16.mxu0 0
      %1676 = vmatpush1.bf16.msra.mxu0 0
      %1677 = vmatprep.subr.bf16.mxu0 0
      %1678 = vmatpush1.bf16.msra.mxu0 0
      %1679 = vmatprep.subr.bf16.mxu0 0
      %1680 = vmatpush1.bf16.msra.mxu0 0
      %1681 = vmatprep.subr.bf16.mxu0 0
      %1682 = vmatpush1.bf16.msra.mxu0 0
      %1683 = vmatprep.subr.bf16.mxu0 0
      %1684 = vmatpush1.bf16.msra.mxu0 0
      %1685 = vmatprep.subr.bf16.mxu0 0
      %1686 = vmatpush1.bf16.msra.mxu0 0
      %1687 = vmatprep.mubr.bf16.mxu0 0
      %1688 = vmatmul.mubr.bf16.gmra.mrb[0].mxu0 %v1647
      %v1689 = vpop.f32.mrb[0].mxu0
      %v1690 = vadd.f32 %v1633, %v1689
      %v1691 = vpop.f32.mrb[0].mxu0
      %v1692 = vpop.f32.mrb[0].mxu0
      %v1693 = vadd.f32 %v1636, %v1692
      %v1694 = vpop.f32.mrb[0].mxu0
      %1695 = vmatprep.mubr.bf16.mxu0 0
      %1696 = vmatmul.mubr.bf16.gmra.mrb[0].mxu0 %v1650
      %v1697 = vpop.f32.mrb[0].mxu0
      %v1698 = vadd.f32 %v1641, %v1697
      %v1699 = vpop.f32.mrb[0].mxu0
      %v1700 = vpop.f32.mrb[0].mxu0
      %v1701 = vpop.f32.mrb[0].mxu0
      %1702 = vdwg.mxu0
      %v1703 = vpack.c.bf16 %v1509, %v1506
      %v1704 = vpack.c.bf16 %v1514, %v1514
      %s1705 = scalar_lea.vmem %s5, 8
      %v1706 = vld [vmem:[%s1705] sm:$0xf]
      %v1708 = vsel %vm923, %v1703, 0
      %v1711 = vsel %vm923, %v1704, 0
      %v1714 = vsel %vm1594, %v1706, 0
      %1716 = vmatprep.subr.bf16.mxu0 0
      %1717 = vmatpush1.bf16.msra.mxu0 %v1714
      %1718 = vmatprep.subr.bf16.mxu0 0
      %1719 = vmatpush1.bf16.msra.mxu0 0
      %1720 = vmatprep.subr.bf16.mxu0 0
      %1721 = vmatpush1.bf16.msra.mxu0 0
      %1722 = vmatprep.subr.bf16.mxu0 0
      %1723 = vmatpush1.bf16.msra.mxu0 0
      %1724 = vmatprep.subr.bf16.mxu0 0
      %1725 = vmatpush1.bf16.msra.mxu0 0
      %1726 = vmatprep.subr.bf16.mxu0 0
      %1727 = vmatpush1.bf16.msra.mxu0 0
      %1728 = vmatprep.subr.bf16.mxu0 0
      %1729 = vmatpush1.bf16.msra.mxu0 0
      %1730 = vmatprep.subr.bf16.mxu0 0
      %1731 = vmatpush1.bf16.msra.mxu0 0
      %1732 = vmatprep.subr.bf16.mxu0 0
      %1733 = vmatpush1.bf16.msra.mxu0 0
      %1734 = vmatprep.subr.bf16.mxu0 0
      %1735 = vmatpush1.bf16.msra.mxu0 0
      %1736 = vmatprep.subr.bf16.mxu0 0
      %1737 = vmatpush1.bf16.msra.mxu0 0
      %1738 = vmatprep.subr.bf16.mxu0 0
      %1739 = vmatpush1.bf16.msra.mxu0 0
      %1740 = vmatprep.subr.bf16.mxu0 0
      %1741 = vmatpush1.bf16.msra.mxu0 0
      %1742 = vmatprep.subr.bf16.mxu0 0
      %1743 = vmatpush1.bf16.msra.mxu0 0
      %1744 = vmatprep.subr.bf16.mxu0 0
      %1745 = vmatpush1.bf16.msra.mxu0 0
      %1746 = vmatprep.subr.bf16.mxu0 0
      %1747 = vmatpush1.bf16.msra.mxu0 0
      %1748 = vmatprep.mubr.bf16.mxu0 0
      %1749 = vmatmul.mubr.bf16.gmra.mrb[0].mxu0 %v1708
      %v1750 = vpop.f32.mrb[0].mxu0
      %v1751 = vadd.f32 0.0, %v1750
      %v1752 = vpop.f32.mrb[0].mxu0
      %v1753 = vpop.f32.mrb[0].mxu0
      %v1754 = vadd.f32 0.0, %v1753
      %v1755 = vpop.f32.mrb[0].mxu0
      %1756 = vmatprep.mubr.bf16.mxu0 0
      %1757 = vmatmul.mubr.bf16.gmra.mrb[0].mxu0 %v1711
      %v1758 = vpop.f32.mrb[0].mxu0
      %v1759 = vadd.f32 0.0, %v1758
      %v1760 = vpop.f32.mrb[0].mxu0
      %v1761 = vpop.f32.mrb[0].mxu0
      %v1762 = vpop.f32.mrb[0].mxu0
      %1763 = vdwg.mxu0
      %v1764 = vadd.f32 %v1690, %v1751
      %v1765 = vadd.f32 %v1693, %v1754
      %v1766 = vadd.f32 %v1698, %v1759
      %v1767 = vpack.c.bf16 %v1571, %v1568
      %v1768 = vpack.c.bf16 %v1576, %v1576
      %s1769 = scalar_lea.vmem %s5, 12
      %v1770 = vld [vmem:[%s1769] sm:$0xf]
      %v1772 = vsel %vm923, %v1767, 0
      %v1775 = vsel %vm923, %v1768, 0
      %v1778 = vsel %vm1594, %v1770, 0
      %1780 = vmatprep.subr.bf16.mxu0 0
      %1781 = vmatpush1.bf16.msra.mxu0 %v1778
      %1782 = vmatprep.subr.bf16.mxu0 0
      %1783 = vmatpush1.bf16.msra.mxu0 0
      %1784 = vmatprep.subr.bf16.mxu0 0
      %1785 = vmatpush1.bf16.msra.mxu0 0
      %1786 = vmatprep.subr.bf16.mxu0 0
      %1787 = vmatpush1.bf16.msra.mxu0 0
      %1788 = vmatprep.subr.bf16.mxu0 0
      %1789 = vmatpush1.bf16.msra.mxu0 0
      %1790 = vmatprep.subr.bf16.mxu0 0
      %1791 = vmatpush1.bf16.msra.mxu0 0
      %1792 = vmatprep.subr.bf16.mxu0 0
      %1793 = vmatpush1.bf16.msra.mxu0 0
      %1794 = vmatprep.subr.bf16.mxu0 0
      %1795 = vmatpush1.bf16.msra.mxu0 0
      %1796 = vmatprep.subr.bf16.mxu0 0
      %1797 = vmatpush1.bf16.msra.mxu0 0
      %1798 = vmatprep.subr.bf16.mxu0 0
      %1799 = vmatpush1.bf16.msra.mxu0 0
      %1800 = vmatprep.subr.bf16.mxu0 0
      %1801 = vmatpush1.bf16.msra.mxu0 0
      %1802 = vmatprep.subr.bf16.mxu0 0
      %1803 = vmatpush1.bf16.msra.mxu0 0
      %1804 = vmatprep.subr.bf16.mxu0 0
      %1805 = vmatpush1.bf16.msra.mxu0 0
      %1806 = vmatprep.subr.bf16.mxu0 0
      %1807 = vmatpush1.bf16.msra.mxu0 0
      %1808 = vmatprep.subr.bf16.mxu0 0
      %1809 = vmatpush1.bf16.msra.mxu0 0
      %1810 = vmatprep.subr.bf16.mxu0 0
      %1811 = vmatpush1.bf16.msra.mxu0 0
      %1812 = vmatprep.mubr.bf16.mxu0 0
      %1813 = vmatmul.mubr.bf16.gmra.mrb[0].mxu0 %v1772
      %v1814 = vpop.f32.mrb[0].mxu0
      %v1815 = vadd.f32 0.0, %v1814
      %v1816 = vpop.f32.mrb[0].mxu0
      %v1817 = vpop.f32.mrb[0].mxu0
      %v1818 = vadd.f32 0.0, %v1817
      %v1819 = vpop.f32.mrb[0].mxu0
      %1820 = vmatprep.mubr.bf16.mxu0 0
      %1821 = vmatmul.mubr.bf16.gmra.mrb[0].mxu0 %v1775
      %v1822 = vpop.f32.mrb[0].mxu0
      %v1823 = vadd.f32 0.0, %v1822
      %v1824 = vpop.f32.mrb[0].mxu0
      %v1825 = vpop.f32.mrb[0].mxu0
      %v1826 = vpop.f32.mrb[0].mxu0
      %1827 = vdwg.mxu0
      %v1828 = vadd.f32 %v1764, %v1815
      %v1829 = vadd.f32 %v1765, %v1818
      %v1830 = vadd.f32 %v1766, %v1823
      %1831 = vst.msk [vmem:[#allocation2] sm:$0xff] %vm462, %v1828
      %1832 = vst.msk [vmem:[#allocation2 + $0x8] sm:$0xff] %vm462, %v1829
      %vm1833 = vcmask 253952
      %1834 = vst.msk [vmem:[#allocation2 + $0x10] sm:$0x1] %vm1833, %v1830
      %1836 = vrot.lane.b32.xlu0 %v898, 120
      %v1837 = vpop.permute.xlu0 %1836
      %1838 = vrot.lane.b32.xlu0 %v898, 112
      %v1839 = vpop.permute.xlu0 %1838
      %1840 = vrot.lane.b32.xlu0 %v898, 104
      %v1841 = vpop.permute.xlu0 %1840
      %vm1842 = vsmask.f32 7424
      %v1843 = vshrl.u32 %v897, 16
      %v1845 = vshll.u32 %v897, 16
      %v1847 = vrot.slane %v1845, 1
      %v1848 = vor.u32 %v1843, %v1847
      %v1850 = vshll.u32 %v898, 16
      %v1852 = vrot.slane %v1850, 1
      %v1853 = vsel %vm1842, %v1848, %v1852
      %v1854 = vshrl.u32 %v898, 16
      %1856 = vrot.lane.b32.xlu0 %v1853, 96
      %v1857 = vpop.permute.xlu0 %1856
      %1858 = vrot.lane.b32.xlu0 %v1854, 96
      %v1859 = vpop.permute.xlu0 %1858
      %v1861 = vsel %vm923, %v1853, 0
      %v1864 = vsel %vm923, %v1854, 0
      %v1867 = vsel %vm923, %v1857, 0
      %v1870 = vsel %vm923, %v1859, 0
      %1872 = vmatprep.subr.bf16.mxu0 0
      %1873 = vmatpush1.bf16.xpose.msra.mxu0 %v1867
      %1874 = vmatprep.subr.bf16.mxu0 0
      %1875 = vmatpush1.bf16.xpose.msra.mxu0 %v1870
      %1876 = vmatprep.subr.bf16.mxu0 0
      %1877 = vmatpush1.bf16.xpose.msra.mxu0 0
      %1878 = vmatprep.subr.bf16.mxu0 0
      %1879 = vmatpush1.bf16.xpose.msra.mxu0 0
      %1880 = vmatprep.subr.bf16.mxu0 0
      %1881 = vmatpush1.bf16.xpose.msra.mxu0 0
      %1882 = vmatprep.subr.bf16.mxu0 0
      %1883 = vmatpush1.bf16.xpose.msra.mxu0 0
      %1884 = vmatprep.subr.bf16.mxu0 0
      %1885 = vmatpush1.bf16.xpose.msra.mxu0 0
      %1886 = vmatprep.subr.bf16.mxu0 0
      %1887 = vmatpush1.bf16.xpose.msra.mxu0 0
      %1888 = vmatprep.subr.bf16.mxu0 0
      %1889 = vmatpush1.bf16.xpose.msra.mxu0 0
      %1890 = vmatprep.subr.bf16.mxu0 0
      %1891 = vmatpush1.bf16.xpose.msra.mxu0 0
      %1892 = vmatprep.subr.bf16.mxu0 0
      %1893 = vmatpush1.bf16.xpose.msra.mxu0 0
      %1894 = vmatprep.subr.bf16.mxu0 0
      %1895 = vmatpush1.bf16.xpose.msra.mxu0 0
      %1896 = vmatprep.subr.bf16.mxu0 0
      %1897 = vmatpush1.bf16.xpose.msra.mxu0 0
      %1898 = vmatprep.subr.bf16.mxu0 0
      %1899 = vmatpush1.bf16.xpose.msra.mxu0 0
      %1900 = vmatprep.subr.bf16.mxu0 0
      %1901 = vmatpush1.bf16.xpose.msra.mxu0 0
      %1902 = vmatprep.subr.bf16.mxu0 0
      %1903 = vmatpush1.bf16.xpose.msra.mxu0 0
      %1904 = vmatprep.mubr.bf16.mxu0 0
      %1905 = vmatmul.mubr.bf16.gmra.mrb[0].mxu0 %v1861
      %v1906 = vpop.f32.mrb[0].mxu0
      %v1907 = vadd.f32 0.0, %v1906
      %v1908 = vpop.f32.mrb[0].mxu0
      %v1909 = vpop.f32.mrb[0].mxu0
      %v1910 = vadd.f32 0.0, %v1909
      %v1911 = vpop.f32.mrb[0].mxu0
      %1912 = vmatprep.mubr.bf16.mxu0 0
      %1913 = vmatmul.mubr.bf16.gmra.mrb[0].mxu0 %v1864
      %v1914 = vpop.f32.mrb[0].mxu0
      %v1915 = vadd.f32 0.0, %v1914
      %v1916 = vpop.f32.mrb[0].mxu0
      %v1917 = vpop.f32.mrb[0].mxu0
      %v1918 = vpop.f32.mrb[0].mxu0
      %1919 = vdwg.mxu0
      %v1920 = vshrl.u32 %v910, 16
      %v1922 = vshll.u32 %v910, 16
      %v1924 = vrot.slane %v1922, 1
      %v1925 = vor.u32 %v1920, %v1924
      %v1927 = vshll.u32 %v1837, 16
      %v1929 = vrot.slane %v1927, 1
      %v1930 = vsel %vm1842, %v1925, %v1929
      %v1931 = vshrl.u32 %v1837, 16
      %1933 = vrot.lane.b32.xlu0 %v1930, 96
      %v1934 = vpop.permute.xlu0 %1933
      %1935 = vrot.lane.b32.xlu0 %v1931, 96
      %v1936 = vpop.permute.xlu0 %1935
      %v1938 = vsel %vm923, %v1930, 0
      %v1941 = vsel %vm923, %v1931, 0
      %v1944 = vsel %vm923, %v1934, 0
      %v1947 = vsel %vm923, %v1936, 0
      %1949 = vmatprep.subr.bf16.mxu0 0
      %1950 = vmatpush1.bf16.xpose.msra.mxu0 %v1944
      %1951 = vmatprep.subr.bf16.mxu0 0
      %1952 = vmatpush1.bf16.xpose.msra.mxu0 %v1947
      %1953 = vmatprep.subr.bf16.mxu0 0
      %1954 = vmatpush1.bf16.xpose.msra.mxu0 0
      %1955 = vmatprep.subr.bf16.mxu0 0
      %1956 = vmatpush1.bf16.xpose.msra.mxu0 0
      %1957 = vmatprep.subr.bf16.mxu0 0
      %1958 = vmatpush1.bf16.xpose.msra.mxu0 0
      %1959 = vmatprep.subr.bf16.mxu0 0
      %1960 = vmatpush1.bf16.xpose.msra.mxu0 0
      %1961 = vmatprep.subr.bf16.mxu0 0
      %1962 = vmatpush1.bf16.xpose.msra.mxu0 0
      %1963 = vmatprep.subr.bf16.mxu0 0
      %1964 = vmatpush1.bf16.xpose.msra.mxu0 0
      %1965 = vmatprep.subr.bf16.mxu0 0
      %1966 = vmatpush1.bf16.xpose.msra.mxu0 0
      %1967 = vmatprep.subr.bf16.mxu0 0
      %1968 = vmatpush1.bf16.xpose.msra.mxu0 0
      %1969 = vmatprep.subr.bf16.mxu0 0
      %1970 = vmatpush1.bf16.xpose.msra.mxu0 0
      %1971 = vmatprep.subr.bf16.mxu0 0
      %1972 = vmatpush1.bf16.xpose.msra.mxu0 0
      %1973 = vmatprep.subr.bf16.mxu0 0
      %1974 = vmatpush1.bf16.xpose.msra.mxu0 0
      %1975 = vmatprep.subr.bf16.mxu0 0
      %1976 = vmatpush1.bf16.xpose.msra.mxu0 0
      %1977 = vmatprep.subr.bf16.mxu0 0
      %1978 = vmatpush1.bf16.xpose.msra.mxu0 0
      %1979 = vmatprep.subr.bf16.mxu0 0
      %1980 = vmatpush1.bf16.xpose.msra.mxu0 0
      %1981 = vmatprep.mubr.bf16.mxu0 0
      %1982 = vmatmul.mubr.bf16.gmra.mrb[0].mxu0 %v1938
      %v1983 = vpop.f32.mrb[0].mxu0
      %v1984 = vadd.f32 0.0, %v1983
      %v1985 = vpop.f32.mrb[0].mxu0
      %v1986 = vpop.f32.mrb[0].mxu0
      %v1987 = vadd.f32 0.0, %v1986
      %v1988 = vpop.f32.mrb[0].mxu0
      %1989 = vmatprep.mubr.bf16.mxu0 0
      %1990 = vmatmul.mubr.bf16.gmra.mrb[0].mxu0 %v1941
      %v1991 = vpop.f32.mrb[0].mxu0
      %v1992 = vadd.f32 0.0, %v1991
      %v1993 = vpop.f32.mrb[0].mxu0
      %v1994 = vpop.f32.mrb[0].mxu0
      %v1995 = vpop.f32.mrb[0].mxu0
      %1996 = vdwg.mxu0
      %v1997 = vshrl.u32 %v914, 16
      %v1999 = vshll.u32 %v914, 16
      %v2001 = vrot.slane %v1999, 1
      %v2002 = vor.u32 %v1997, %v2001
      %v2004 = vshll.u32 %v1839, 16
      %v2006 = vrot.slane %v2004, 1
      %v2007 = vsel %vm1842, %v2002, %v2006
      %v2008 = vshrl.u32 %v1839, 16
      %2010 = vrot.lane.b32.xlu0 %v2007, 96
      %v2011 = vpop.permute.xlu0 %2010
      %2012 = vrot.lane.b32.xlu0 %v2008, 96
      %v2013 = vpop.permute.xlu0 %2012
      %v2015 = vsel %vm923, %v2007, 0
      %v2018 = vsel %vm923, %v2008, 0
      %v2021 = vsel %vm923, %v2011, 0
      %v2024 = vsel %vm923, %v2013, 0
      %2026 = vmatprep.subr.bf16.mxu0 0
      %2027 = vmatpush1.bf16.xpose.msra.mxu0 %v2021
      %2028 = vmatprep.subr.bf16.mxu0 0
      %2029 = vmatpush1.bf16.xpose.msra.mxu0 %v2024
      %2030 = vmatprep.subr.bf16.mxu0 0
      %2031 = vmatpush1.bf16.xpose.msra.mxu0 0
      %2032 = vmatprep.subr.bf16.mxu0 0
      %2033 = vmatpush1.bf16.xpose.msra.mxu0 0
      %2034 = vmatprep.subr.bf16.mxu0 0
      %2035 = vmatpush1.bf16.xpose.msra.mxu0 0
      %2036 = vmatprep.subr.bf16.mxu0 0
      %2037 = vmatpush1.bf16.xpose.msra.mxu0 0
      %2038 = vmatprep.subr.bf16.mxu0 0
      %2039 = vmatpush1.bf16.xpose.msra.mxu0 0
      %2040 = vmatprep.subr.bf16.mxu0 0
      %2041 = vmatpush1.bf16.xpose.msra.mxu0 0
      %2042 = vmatprep.subr.bf16.mxu0 0
      %2043 = vmatpush1.bf16.xpose.msra.mxu0 0
      %2044 = vmatprep.subr.bf16.mxu0 0
      %2045 = vmatpush1.bf16.xpose.msra.mxu0 0
      %2046 = vmatprep.subr.bf16.mxu0 0
      %2047 = vmatpush1.bf16.xpose.msra.mxu0 0
      %2048 = vmatprep.subr.bf16.mxu0 0
      %2049 = vmatpush1.bf16.xpose.msra.mxu0 0
      %2050 = vmatprep.subr.bf16.mxu0 0
      %2051 = vmatpush1.bf16.xpose.msra.mxu0 0
      %2052 = vmatprep.subr.bf16.mxu0 0
      %2053 = vmatpush1.bf16.xpose.msra.mxu0 0
      %2054 = vmatprep.subr.bf16.mxu0 0
      %2055 = vmatpush1.bf16.xpose.msra.mxu0 0
      %2056 = vmatprep.subr.bf16.mxu0 0
      %2057 = vmatpush1.bf16.xpose.msra.mxu0 0
      %2058 = vmatprep.mubr.bf16.mxu0 0
      %2059 = vmatmul.mubr.bf16.gmra.mrb[0].mxu0 %v2015
      %v2060 = vpop.f32.mrb[0].mxu0
      %v2061 = vadd.f32 0.0, %v2060
      %v2062 = vpop.f32.mrb[0].mxu0
      %v2063 = vpop.f32.mrb[0].mxu0
      %v2064 = vadd.f32 0.0, %v2063
      %v2065 = vpop.f32.mrb[0].mxu0
      %2066 = vmatprep.mubr.bf16.mxu0 0
      %2067 = vmatmul.mubr.bf16.gmra.mrb[0].mxu0 %v2018
      %v2068 = vpop.f32.mrb[0].mxu0
      %v2069 = vadd.f32 0.0, %v2068
      %v2070 = vpop.f32.mrb[0].mxu0
      %v2071 = vpop.f32.mrb[0].mxu0
      %v2072 = vpop.f32.mrb[0].mxu0
      %2073 = vdwg.mxu0
      %v2074 = vshrl.u32 %v918, 16
      %v2076 = vshll.u32 %v918, 16
      %v2078 = vrot.slane %v2076, 1
      %v2079 = vor.u32 %v2074, %v2078
      %v2081 = vshll.u32 %v1841, 16
      %v2083 = vrot.slane %v2081, 1
      %v2084 = vsel %vm1842, %v2079, %v2083
      %v2085 = vshrl.u32 %v1841, 16
      %2087 = vrot.lane.b32.xlu0 %v2084, 96
      %v2088 = vpop.permute.xlu0 %2087
      %2089 = vrot.lane.b32.xlu0 %v2085, 96
      %v2090 = vpop.permute.xlu0 %2089
      %v2092 = vsel %vm923, %v2084, 0
      %v2095 = vsel %vm923, %v2085, 0
      %v2098 = vsel %vm923, %v2088, 0
      %v2101 = vsel %vm923, %v2090, 0
      %2103 = vmatprep.subr.bf16.mxu0 0
      %2104 = vmatpush1.bf16.xpose.msra.mxu0 %v2098
      %2105 = vmatprep.subr.bf16.mxu0 0
      %2106 = vmatpush1.bf16.xpose.msra.mxu0 %v2101
      %2107 = vmatprep.subr.bf16.mxu0 0
      %2108 = vmatpush1.bf16.xpose.msra.mxu0 0
      %2109 = vmatprep.subr.bf16.mxu0 0
      %2110 = vmatpush1.bf16.xpose.msra.mxu0 0
      %2111 = vmatprep.subr.bf16.mxu0 0
      %2112 = vmatpush1.bf16.xpose.msra.mxu0 0
      %2113 = vmatprep.subr.bf16.mxu0 0
      %2114 = vmatpush1.bf16.xpose.msra.mxu0 0
      %2115 = vmatprep.subr.bf16.mxu0 0
      %2116 = vmatpush1.bf16.xpose.msra.mxu0 0
      %2117 = vmatprep.subr.bf16.mxu0 0
      %2118 = vmatpush1.bf16.xpose.msra.mxu0 0
      %2119 = vmatprep.subr.bf16.mxu0 0
      %2120 = vmatpush1.bf16.xpose.msra.mxu0 0
      %2121 = vmatprep.subr.bf16.mxu0 0
      %2122 = vmatpush1.bf16.xpose.msra.mxu0 0
      %2123 = vmatprep.subr.bf16.mxu0 0
      %2124 = vmatpush1.bf16.xpose.msra.mxu0 0
      %2125 = vmatprep.subr.bf16.mxu0 0
      %2126 = vmatpush1.bf16.xpose.msra.mxu0 0
      %2127 = vmatprep.subr.bf16.mxu0 0
      %2128 = vmatpush1.bf16.xpose.msra.mxu0 0
      %2129 = vmatprep.subr.bf16.mxu0 0
      %2130 = vmatpush1.bf16.xpose.msra.mxu0 0
      %2131 = vmatprep.subr.bf16.mxu0 0
      %2132 = vmatpush1.bf16.xpose.msra.mxu0 0
      %2133 = vmatprep.subr.bf16.mxu0 0
      %2134 = vmatpush1.bf16.xpose.msra.mxu0 0
      %2135 = vmatprep.mubr.bf16.mxu0 0
      %2136 = vmatmul.mubr.bf16.gmra.mrb[0].mxu0 %v2092
      %v2137 = vpop.f32.mrb[0].mxu0
      %v2138 = vadd.f32 0.0, %v2137
      %v2139 = vpop.f32.mrb[0].mxu0
      %v2140 = vpop.f32.mrb[0].mxu0
      %v2141 = vadd.f32 0.0, %v2140
      %v2142 = vpop.f32.mrb[0].mxu0
      %2143 = vmatprep.mubr.bf16.mxu0 0
      %2144 = vmatmul.mubr.bf16.gmra.mrb[0].mxu0 %v2095
      %v2145 = vpop.f32.mrb[0].mxu0
      %v2146 = vadd.f32 0.0, %v2145
      %v2147 = vpop.f32.mrb[0].mxu0
      %v2148 = vpop.f32.mrb[0].mxu0
      %v2149 = vpop.f32.mrb[0].mxu0
      %2150 = vdwg.mxu0
      %v2151 = vmul.f32 %v1907, 0.35355338
      %v2152 = vmul.f32 %v1910, 0.35355338
      %v2153 = vmul.f32 %v1915, 0.35355338
      %v2154 = vmul.f32 %v1984, 0.35355338
      %v2155 = vmul.f32 %v1987, 0.35355338
      %v2156 = vmul.f32 %v1992, 0.35355338
      %v2157 = vmul.f32 %v2061, 0.35355338
      %v2158 = vmul.f32 %v2064, 0.35355338
      %v2159 = vmul.f32 %v2069, 0.35355338
      %v2160 = vmul.f32 %v2138, 0.35355338
      %v2161 = vmul.f32 %v2141, 0.35355338
      %v2162 = vmul.f32 %v2146, 0.35355338
      %v2163 = vsel %vm1188, %v2151, -inf
      %2164 = vmax.xlane.f32.xlu0 %v2163
      %v2165 = vpop.xlane.xlu0 %2164
      %v2166 = vsel %vm1188, %v2152, -inf
      %2167 = vmax.xlane.f32.xlu0 %v2166
      %v2168 = vpop.xlane.xlu0 %2167
      %v2169 = vsel %vm1195, %v2153, -inf
      %2170 = vmax.xlane.f32.xlu0 %v2169
      %v2171 = vpop.xlane.xlu0 %2170
      %v2172 = vsel %vm1188, %v2154, -inf
      %2173 = vmax.xlane.f32.xlu0 %v2172
      %v2174 = vpop.xlane.xlu0 %2173
      %v2175 = vsel %vm1188, %v2155, -inf
      %2176 = vmax.xlane.f32.xlu0 %v2175
      %v2177 = vpop.xlane.xlu0 %2176
      %v2178 = vsel %vm1195, %v2156, -inf
      %2179 = vmax.xlane.f32.xlu0 %v2178
      %v2180 = vpop.xlane.xlu0 %2179
      %v2181 = vsel %vm1188, %v2157, -inf
      %2182 = vmax.xlane.f32.xlu0 %v2181
      %v2183 = vpop.xlane.xlu0 %2182
      %v2184 = vsel %vm1188, %v2158, -inf
      %2185 = vmax.xlane.f32.xlu0 %v2184
      %v2186 = vpop.xlane.xlu0 %2185
      %v2187 = vsel %vm1195, %v2159, -inf
      %2188 = vmax.xlane.f32.xlu0 %v2187
      %v2189 = vpop.xlane.xlu0 %2188
      %v2190 = vsel %vm1188, %v2160, -inf
      %2191 = vmax.xlane.f32.xlu0 %v2190
      %v2192 = vpop.xlane.xlu0 %2191
      %v2193 = vsel %vm1188, %v2161, -inf
      %2194 = vmax.xlane.f32.xlu0 %v2193
      %v2195 = vpop.xlane.xlu0 %2194
      %v2196 = vsel %vm1195, %v2162, -inf
      %2197 = vmax.xlane.f32.xlu0 %v2196
      %v2198 = vpop.xlane.xlu0 %2197
      %v2199 = vsub.f32 %v2151, %v2165
      %v2200 = vsub.f32 %v2152, %v2168
      %v2201 = vsub.f32 %v2153, %v2171
      %v2202 = vsub.f32 %v2154, %v2174
      %v2203 = vsub.f32 %v2155, %v2177
      %v2204 = vsub.f32 %v2156, %v2180
      %v2205 = vsub.f32 %v2157, %v2183
      %v2206 = vsub.f32 %v2158, %v2186
      %v2207 = vsub.f32 %v2159, %v2189
      %v2208 = vsub.f32 %v2160, %v2192
      %v2209 = vsub.f32 %v2161, %v2195
      %v2210 = vsub.f32 %v2162, %v2198
      %v2211 = vmul.f32 %v2199, 1.442695
      %v2212 = vpow.pop %v2211
      %v2213 = vmul.f32 %v2200, 1.442695
      %v2214 = vpow.pop %v2213
      %v2215 = vmul.f32 %v2201, 1.442695
      %v2216 = vpow.pop %v2215
      %v2217 = vmul.f32 %v2202, 1.442695
      %v2218 = vpow.pop %v2217
      %v2219 = vmul.f32 %v2203, 1.442695
      %v2220 = vpow.pop %v2219
      %v2221 = vmul.f32 %v2204, 1.442695
      %v2222 = vpow.pop %v2221
      %v2223 = vmul.f32 %v2205, 1.442695
      %v2224 = vpow.pop %v2223
      %v2225 = vmul.f32 %v2206, 1.442695
      %v2226 = vpow.pop %v2225
      %v2227 = vmul.f32 %v2207, 1.442695
      %v2228 = vpow.pop %v2227
      %v2229 = vmul.f32 %v2208, 1.442695
      %v2230 = vpow.pop %v2229
      %v2231 = vmul.f32 %v2209, 1.442695
      %v2232 = vpow.pop %v2231
      %v2233 = vmul.f32 %v2210, 1.442695
      %v2234 = vpow.pop %v2233
      %v2235 = vsel %vm1188, %v2212, 0.0
      %2236 = vadd.xlane.f32.xlu0 %v2235
      %v2237 = vpop.xlane.xlu0 %2236
      %v2238 = vsel %vm1188, %v2214, 0.0
      %2239 = vadd.xlane.f32.xlu0 %v2238
      %v2240 = vpop.xlane.xlu0 %2239
      %v2241 = vsel %vm1195, %v2216, 0.0
      %2242 = vadd.xlane.f32.xlu0 %v2241
      %v2243 = vpop.xlane.xlu0 %2242
      %v2244 = vsel %vm1188, %v2218, 0.0
      %2245 = vadd.xlane.f32.xlu0 %v2244
      %v2246 = vpop.xlane.xlu0 %2245
      %v2247 = vsel %vm1188, %v2220, 0.0
      %2248 = vadd.xlane.f32.xlu0 %v2247
      %v2249 = vpop.xlane.xlu0 %2248
      %v2250 = vsel %vm1195, %v2222, 0.0
      %2251 = vadd.xlane.f32.xlu0 %v2250
      %v2252 = vpop.xlane.xlu0 %2251
      %v2253 = vsel %vm1188, %v2224, 0.0
      %2254 = vadd.xlane.f32.xlu0 %v2253
      %v2255 = vpop.xlane.xlu0 %2254
      %v2256 = vsel %vm1188, %v2226, 0.0
      %2257 = vadd.xlane.f32.xlu0 %v2256
      %v2258 = vpop.xlane.xlu0 %2257
      %v2259 = vsel %vm1195, %v2228, 0.0
      %2260 = vadd.xlane.f32.xlu0 %v2259
      %v2261 = vpop.xlane.xlu0 %2260
      %v2262 = vsel %vm1188, %v2230, 0.0
      %2263 = vadd.xlane.f32.xlu0 %v2262
      %v2264 = vpop.xlane.xlu0 %2263
      %v2265 = vsel %vm1188, %v2232, 0.0
      %2266 = vadd.xlane.f32.xlu0 %v2265
      %v2267 = vpop.xlane.xlu0 %2266
      %v2268 = vsel %vm1195, %v2234, 0.0
      %2269 = vadd.xlane.f32.xlu0 %v2268
      %v2270 = vpop.xlane.xlu0 %2269
      %v2271 = vrcp.pop %v2237
      %v2272 = vrcp.pop %v2240
      %v2273 = vrcp.pop %v2243
      %v2274 = vrcp.pop %v2246
      %v2275 = vrcp.pop %v2249
      %v2276 = vrcp.pop %v2252
      %v2277 = vrcp.pop %v2255
      %v2278 = vrcp.pop %v2258
      %v2279 = vrcp.pop %v2261
      %v2280 = vrcp.pop %v2264
      %v2281 = vrcp.pop %v2267
      %v2282 = vrcp.pop %v2270
      %v2283 = vmul.f32 %v2212, %v2271
      %v2284 = vmul.f32 %v2214, %v2272
      %v2285 = vmul.f32 %v2216, %v2273
      %v2286 = vmul.f32 %v2218, %v2274
      %v2287 = vmul.f32 %v2220, %v2275
      %v2288 = vmul.f32 %v2222, %v2276
      %v2289 = vmul.f32 %v2224, %v2277
      %v2290 = vmul.f32 %v2226, %v2278
      %v2291 = vmul.f32 %v2228, %v2279
      %v2292 = vmul.f32 %v2230, %v2280
      %v2293 = vmul.f32 %v2232, %v2281
      %v2294 = vmul.f32 %v2234, %v2282
      %v2295 = vpack.c.bf16 %v2284, %v2283
      %v2296 = vpack.c.bf16 %v2285, %v2285
      %v2297 = vpack.c.bf16 %v2287, %v2286
      %v2298 = vpack.c.bf16 %v2288, %v2288
      %v2299 = vpack.c.bf16 %v2290, %v2289
      %v2300 = vpack.c.bf16 %v2291, %v2291
      %v2301 = vpack.c.bf16 %v2293, %v2292
      %v2302 = vpack.c.bf16 %v2294, %v2294
      %2303 = vrot.lane.b32.xlu0 %v1853, 64
      %v2304 = vpop.permute.xlu0 %2303
      %2305 = vrot.lane.b32.xlu0 %v1854, 64
      %v2306 = vpop.permute.xlu0 %2305
      %v2309 = vsel %vm1188, %v2295, 0
      %v2312 = vsel %vm1188, %v2296, 0
      %v2315 = vand.u32 %v2306, %v1343
      %2317 = vmatprep.subr.bf16.mxu0 0
      %2318 = vmatpush1.bf16.msra.mxu0 %v2304
      %2319 = vmatprep.subr.bf16.mxu0 0
      %2320 = vmatpush1.bf16.msra.mxu0 %v2315
      %2321 = vmatprep.subr.bf16.mxu0 0
      %2322 = vmatpush1.bf16.msra.mxu0 0
      %2323 = vmatprep.subr.bf16.mxu0 0
      %2324 = vmatpush1.bf16.msra.mxu0 0
      %2325 = vmatprep.subr.bf16.mxu0 0
      %2326 = vmatpush1.bf16.msra.mxu0 0
      %2327 = vmatprep.subr.bf16.mxu0 0
      %2328 = vmatpush1.bf16.msra.mxu0 0
      %2329 = vmatprep.subr.bf16.mxu0 0
      %2330 = vmatpush1.bf16.msra.mxu0 0
      %2331 = vmatprep.subr.bf16.mxu0 0
      %2332 = vmatpush1.bf16.msra.mxu0 0
      %2333 = vmatprep.subr.bf16.mxu0 0
      %2334 = vmatpush1.bf16.msra.mxu0 0
      %2335 = vmatprep.subr.bf16.mxu0 0
      %2336 = vmatpush1.bf16.msra.mxu0 0
      %2337 = vmatprep.subr.bf16.mxu0 0
      %2338 = vmatpush1.bf16.msra.mxu0 0
      %2339 = vmatprep.subr.bf16.mxu0 0
      %2340 = vmatpush1.bf16.msra.mxu0 0
      %2341 = vmatprep.subr.bf16.mxu0 0
      %2342 = vmatpush1.bf16.msra.mxu0 0
      %2343 = vmatprep.subr.bf16.mxu0 0
      %2344 = vmatpush1.bf16.msra.mxu0 0
      %2345 = vmatprep.subr.bf16.mxu0 0
      %2346 = vmatpush1.bf16.msra.mxu0 0
      %2347 = vmatprep.subr.bf16.mxu0 0
      %2348 = vmatpush1.bf16.msra.mxu0 0
      %2349 = vmatprep.mubr.bf16.mxu0 0
      %2350 = vmatmul.mubr.bf16.gmra.mrb[0].mxu0 %v2309
      %v2351 = vpop.f32.mrb[0].mxu0
      %v2352 = vadd.f32 0.0, %v2351
      %v2353 = vpop.f32.mrb[0].mxu0
      %v2354 = vpop.f32.mrb[0].mxu0
      %v2355 = vadd.f32 0.0, %v2354
      %v2356 = vpop.f32.mrb[0].mxu0
      %2357 = vmatprep.mubr.bf16.mxu0 0
      %2358 = vmatmul.mubr.bf16.gmra.mrb[0].mxu0 %v2312
      %v2359 = vpop.f32.mrb[0].mxu0
      %v2360 = vadd.f32 0.0, %v2359
      %v2361 = vpop.f32.mrb[0].mxu0
      %v2362 = vpop.f32.mrb[0].mxu0
      %v2363 = vpop.f32.mrb[0].mxu0
      %2364 = vdwg.mxu0
      %2365 = vrot.lane.b32.xlu0 %v1930, 64
      %v2366 = vpop.permute.xlu0 %2365
      %2367 = vrot.lane.b32.xlu0 %v1931, 64
      %v2368 = vpop.permute.xlu0 %2367
      %v2371 = vsel %vm1188, %v2297, 0
      %v2374 = vsel %vm1188, %v2298, 0
      %v2377 = vand.u32 %v2368, %v1343
      %2379 = vmatprep.subr.bf16.mxu0 0
      %2380 = vmatpush1.bf16.msra.mxu0 %v2366
      %2381 = vmatprep.subr.bf16.mxu0 0
      %2382 = vmatpush1.bf16.msra.mxu0 %v2377
      %2383 = vmatprep.subr.bf16.mxu0 0
      %2384 = vmatpush1.bf16.msra.mxu0 0
      %2385 = vmatprep.subr.bf16.mxu0 0
      %2386 = vmatpush1.bf16.msra.mxu0 0
      %2387 = vmatprep.subr.bf16.mxu0 0
      %2388 = vmatpush1.bf16.msra.mxu0 0
      %2389 = vmatprep.subr.bf16.mxu0 0
      %2390 = vmatpush1.bf16.msra.mxu0 0
      %2391 = vmatprep.subr.bf16.mxu0 0
      %2392 = vmatpush1.bf16.msra.mxu0 0
      %2393 = vmatprep.subr.bf16.mxu0 0
      %2394 = vmatpush1.bf16.msra.mxu0 0
      %2395 = vmatprep.subr.bf16.mxu0 0
      %2396 = vmatpush1.bf16.msra.mxu0 0
      %2397 = vmatprep.subr.bf16.mxu0 0
      %2398 = vmatpush1.bf16.msra.mxu0 0
      %2399 = vmatprep.subr.bf16.mxu0 0
      %2400 = vmatpush1.bf16.msra.mxu0 0
      %2401 = vmatprep.subr.bf16.mxu0 0
      %2402 = vmatpush1.bf16.msra.mxu0 0
      %2403 = vmatprep.subr.bf16.mxu0 0
      %2404 = vmatpush1.bf16.msra.mxu0 0
      %2405 = vmatprep.subr.bf16.mxu0 0
      %2406 = vmatpush1.bf16.msra.mxu0 0
      %2407 = vmatprep.subr.bf16.mxu0 0
      %2408 = vmatpush1.bf16.msra.mxu0 0
      %2409 = vmatprep.subr.bf16.mxu0 0
      %2410 = vmatpush1.bf16.msra.mxu0 0
      %2411 = vmatprep.mubr.bf16.mxu0 0
      %2412 = vmatmul.mubr.bf16.gmra.mrb[0].mxu0 %v2371
      %v2413 = vpop.f32.mrb[0].mxu0
      %v2414 = vadd.f32 0.0, %v2413
      %v2415 = vpop.f32.mrb[0].mxu0
      %v2416 = vpop.f32.mrb[0].mxu0
      %v2417 = vadd.f32 0.0, %v2416
      %v2418 = vpop.f32.mrb[0].mxu0
      %2419 = vmatprep.mubr.bf16.mxu0 0
      %2420 = vmatmul.mubr.bf16.gmra.mrb[0].mxu0 %v2374
      %v2421 = vpop.f32.mrb[0].mxu0
      %v2422 = vadd.f32 0.0, %v2421
      %v2423 = vpop.f32.mrb[0].mxu0
      %v2424 = vpop.f32.mrb[0].mxu0
      %v2425 = vpop.f32.mrb[0].mxu0
      %2426 = vdwg.mxu0
      %2427 = vrot.lane.b32.xlu0 %v2007, 64
      %v2428 = vpop.permute.xlu0 %2427
      %2429 = vrot.lane.b32.xlu0 %v2008, 64
      %v2430 = vpop.permute.xlu0 %2429
      %v2433 = vsel %vm1188, %v2299, 0
      %v2436 = vsel %vm1188, %v2300, 0
      %v2439 = vand.u32 %v2430, %v1343
      %2441 = vmatprep.subr.bf16.mxu0 0
      %2442 = vmatpush1.bf16.msra.mxu0 %v2428
      %2443 = vmatprep.subr.bf16.mxu0 0
      %2444 = vmatpush1.bf16.msra.mxu0 %v2439
      %2445 = vmatprep.subr.bf16.mxu0 0
      %2446 = vmatpush1.bf16.msra.mxu0 0
      %2447 = vmatprep.subr.bf16.mxu0 0
      %2448 = vmatpush1.bf16.msra.mxu0 0
      %2449 = vmatprep.subr.bf16.mxu0 0
      %2450 = vmatpush1.bf16.msra.mxu0 0
      %2451 = vmatprep.subr.bf16.mxu0 0
      %2452 = vmatpush1.bf16.msra.mxu0 0
      %2453 = vmatprep.subr.bf16.mxu0 0
      %2454 = vmatpush1.bf16.msra.mxu0 0
      %2455 = vmatprep.subr.bf16.mxu0 0
      %2456 = vmatpush1.bf16.msra.mxu0 0
      %2457 = vmatprep.subr.bf16.mxu0 0
      %2458 = vmatpush1.bf16.msra.mxu0 0
      %2459 = vmatprep.subr.bf16.mxu0 0
      %2460 = vmatpush1.bf16.msra.mxu0 0
      %2461 = vmatprep.subr.bf16.mxu0 0
      %2462 = vmatpush1.bf16.msra.mxu0 0
      %2463 = vmatprep.subr.bf16.mxu0 0
      %2464 = vmatpush1.bf16.msra.mxu0 0
      %2465 = vmatprep.subr.bf16.mxu0 0
      %2466 = vmatpush1.bf16.msra.mxu0 0
      %2467 = vmatprep.subr.bf16.mxu0 0
      %2468 = vmatpush1.bf16.msra.mxu0 0
      %2469 = vmatprep.subr.bf16.mxu0 0
      %2470 = vmatpush1.bf16.msra.mxu0 0
      %2471 = vmatprep.subr.bf16.mxu0 0
      %2472 = vmatpush1.bf16.msra.mxu0 0
      %2473 = vmatprep.mubr.bf16.mxu0 0
      %2474 = vmatmul.mubr.bf16.gmra.mrb[0].mxu0 %v2433
      %v2475 = vpop.f32.mrb[0].mxu0
      %v2476 = vadd.f32 0.0, %v2475
      %v2477 = vpop.f32.mrb[0].mxu0
      %v2478 = vpop.f32.mrb[0].mxu0
      %v2479 = vadd.f32 0.0, %v2478
      %v2480 = vpop.f32.mrb[0].mxu0
      %2481 = vmatprep.mubr.bf16.mxu0 0
      %2482 = vmatmul.mubr.bf16.gmra.mrb[0].mxu0 %v2436
      %v2483 = vpop.f32.mrb[0].mxu0
      %v2484 = vadd.f32 0.0, %v2483
      %v2485 = vpop.f32.mrb[0].mxu0
      %v2486 = vpop.f32.mrb[0].mxu0
      %v2487 = vpop.f32.mrb[0].mxu0
      %2488 = vdwg.mxu0
      %2489 = vrot.lane.b32.xlu0 %v2084, 64
      %v2490 = vpop.permute.xlu0 %2489
      %2491 = vrot.lane.b32.xlu0 %v2085, 64
      %v2492 = vpop.permute.xlu0 %2491
      %v2495 = vsel %vm1188, %v2301, 0
      %v2498 = vsel %vm1188, %v2302, 0
      %v2501 = vand.u32 %v2492, %v1343
      %2503 = vmatprep.subr.bf16.mxu0 0
      %2504 = vmatpush1.bf16.msra.mxu0 %v2490
      %2505 = vmatprep.subr.bf16.mxu0 0
      %2506 = vmatpush1.bf16.msra.mxu0 %v2501
      %2507 = vmatprep.subr.bf16.mxu0 0
      %2508 = vmatpush1.bf16.msra.mxu0 0
      %2509 = vmatprep.subr.bf16.mxu0 0
      %2510 = vmatpush1.bf16.msra.mxu0 0
      %2511 = vmatprep.subr.bf16.mxu0 0
      %2512 = vmatpush1.bf16.msra.mxu0 0
      %2513 = vmatprep.subr.bf16.mxu0 0
      %2514 = vmatpush1.bf16.msra.mxu0 0
      %2515 = vmatprep.subr.bf16.mxu0 0
      %2516 = vmatpush1.bf16.msra.mxu0 0
      %2517 = vmatprep.subr.bf16.mxu0 0
      %2518 = vmatpush1.bf16.msra.mxu0 0
      %2519 = vmatprep.subr.bf16.mxu0 0
      %2520 = vmatpush1.bf16.msra.mxu0 0
      %2521 = vmatprep.subr.bf16.mxu0 0
      %2522 = vmatpush1.bf16.msra.mxu0 0
      %2523 = vmatprep.subr.bf16.mxu0 0
      %2524 = vmatpush1.bf16.msra.mxu0 0
      %2525 = vmatprep.subr.bf16.mxu0 0
      %2526 = vmatpush1.bf16.msra.mxu0 0
      %2527 = vmatprep.subr.bf16.mxu0 0
      %2528 = vmatpush1.bf16.msra.mxu0 0
      %2529 = vmatprep.subr.bf16.mxu0 0
      %2530 = vmatpush1.bf16.msra.mxu0 0
      %2531 = vmatprep.subr.bf16.mxu0 0
      %2532 = vmatpush1.bf16.msra.mxu0 0
      %2533 = vmatprep.subr.bf16.mxu0 0
      %2534 = vmatpush1.bf16.msra.mxu0 0
      %2535 = vmatprep.mubr.bf16.mxu0 0
      %2536 = vmatmul.mubr.bf16.gmra.mrb[0].mxu0 %v2495
      %v2537 = vpop.f32.mrb[0].mxu0
      %v2538 = vadd.f32 0.0, %v2537
      %v2539 = vpop.f32.mrb[0].mxu0
      %v2540 = vpop.f32.mrb[0].mxu0
      %v2541 = vadd.f32 0.0, %v2540
      %v2542 = vpop.f32.mrb[0].mxu0
      %2543 = vmatprep.mubr.bf16.mxu0 0
      %2544 = vmatmul.mubr.bf16.gmra.mrb[0].mxu0 %v2498
      %v2545 = vpop.f32.mrb[0].mxu0
      %v2546 = vadd.f32 0.0, %v2545
      %v2547 = vpop.f32.mrb[0].mxu0
      %v2548 = vpop.f32.mrb[0].mxu0
      %v2549 = vpop.f32.mrb[0].mxu0
      %2550 = vdwg.mxu0
      %v2551 = vpack.c.bf16 %v2355, %v2352
      %v2552 = vpack.c.bf16 %v2360, %v2360
      %v2553 = vld [vmem:[%s5] sm:$0xf]
      %v2554 = vpack.c.bf16 %v2417, %v2414
      %v2555 = vpack.c.bf16 %v2422, %v2422
      %v2556 = vld [vmem:[%s1586] sm:$0xf]
      %v2558 = vsel %vm923, %v2554, 0
      %v2561 = vsel %vm923, %v2555, 0
      %v2564 = vsel %vm1594, %v2556, 0
      %2566 = vmatprep.subr.bf16.mxu0 0
      %2567 = vmatpush1.bf16.msra.mxu0 %v2564
      %2568 = vmatprep.subr.bf16.mxu0 0
      %2569 = vmatpush1.bf16.msra.mxu0 0
      %2570 = vmatprep.subr.bf16.mxu0 0
      %2571 = vmatpush1.bf16.msra.mxu0 0
      %2572 = vmatprep.subr.bf16.mxu0 0
      %2573 = vmatpush1.bf16.msra.mxu0 0
      %2574 = vmatprep.subr.bf16.mxu0 0
      %2575 = vmatpush1.bf16.msra.mxu0 0
      %2576 = vmatprep.subr.bf16.mxu0 0
      %2577 = vmatpush1.bf16.msra.mxu0 0
      %2578 = vmatprep.subr.bf16.mxu0 0
      %2579 = vmatpush1.bf16.msra.mxu0 0
      %2580 = vmatprep.subr.bf16.mxu0 0
      %2581 = vmatpush1.bf16.msra.mxu0 0
      %2582 = vmatprep.subr.bf16.mxu0 0
      %2583 = vmatpush1.bf16.msra.mxu0 0
      %2584 = vmatprep.subr.bf16.mxu0 0
      %2585 = vmatpush1.bf16.msra.mxu0 0
      %2586 = vmatprep.subr.bf16.mxu0 0
      %2587 = vmatpush1.bf16.msra.mxu0 0
      %2588 = vmatprep.subr.bf16.mxu0 0
      %2589 = vmatpush1.bf16.msra.mxu0 0
      %2590 = vmatprep.subr.bf16.mxu0 0
      %2591 = vmatpush1.bf16.msra.mxu0 0
      %2592 = vmatprep.subr.bf16.mxu0 0
      %2593 = vmatpush1.bf16.msra.mxu0 0
      %2594 = vmatprep.subr.bf16.mxu0 0
      %2595 = vmatpush1.bf16.msra.mxu0 0
      %2596 = vmatprep.subr.bf16.mxu0 0
      %2597 = vmatpush1.bf16.msra.mxu0 0
      %2598 = vmatprep.mubr.bf16.mxu0 0
      %2599 = vmatmul.mubr.bf16.gmra.mrb[0].mxu0 %v2558
      %v2600 = vpop.f32.mrb[0].mxu0
      %v2601 = vadd.f32 0.0, %v2600
      %v2602 = vpop.f32.mrb[0].mxu0
      %v2603 = vpop.f32.mrb[0].mxu0
      %v2604 = vadd.f32 0.0, %v2603
      %v2605 = vpop.f32.mrb[0].mxu0
      %2606 = vmatprep.mubr.bf16.mxu0 0
      %2607 = vmatmul.mubr.bf16.gmra.mrb[0].mxu0 %v2561
      %v2608 = vpop.f32.mrb[0].mxu0
      %v2609 = vadd.f32 0.0, %v2608
      %v2610 = vpop.f32.mrb[0].mxu0
      %v2611 = vpop.f32.mrb[0].mxu0
      %v2612 = vpop.f32.mrb[0].mxu0
      %2613 = vdwg.mxu0
      %v2615 = vsel %vm923, %v2551, 0
      %v2618 = vsel %vm923, %v2552, 0
      %v2621 = vsel %vm1594, %v2553, 0
      %2623 = vmatprep.subr.bf16.mxu0 0
      %2624 = vmatpush1.bf16.msra.mxu0 %v2621
      %2625 = vmatprep.subr.bf16.mxu0 0
      %2626 = vmatpush1.bf16.msra.mxu0 0
      %2627 = vmatprep.subr.bf16.mxu0 0
      %2628 = vmatpush1.bf16.msra.mxu0 0
      %2629 = vmatprep.subr.bf16.mxu0 0
      %2630 = vmatpush1.bf16.msra.mxu0 0
      %2631 = vmatprep.subr.bf16.mxu0 0
      %2632 = vmatpush1.bf16.msra.mxu0 0
      %2633 = vmatprep.subr.bf16.mxu0 0
      %2634 = vmatpush1.bf16.msra.mxu0 0
      %2635 = vmatprep.subr.bf16.mxu0 0
      %2636 = vmatpush1.bf16.msra.mxu0 0
      %2637 = vmatprep.subr.bf16.mxu0 0
      %2638 = vmatpush1.bf16.msra.mxu0 0
      %2639 = vmatprep.subr.bf16.mxu0 0
      %2640 = vmatpush1.bf16.msra.mxu0 0
      %2641 = vmatprep.subr.bf16.mxu0 0
      %2642 = vmatpush1.bf16.msra.mxu0 0
      %2643 = vmatprep.subr.bf16.mxu0 0
      %2644 = vmatpush1.bf16.msra.mxu0 0
      %2645 = vmatprep.subr.bf16.mxu0 0
      %2646 = vmatpush1.bf16.msra.mxu0 0
      %2647 = vmatprep.subr.bf16.mxu0 0
      %2648 = vmatpush1.bf16.msra.mxu0 0
      %2649 = vmatprep.subr.bf16.mxu0 0
      %2650 = vmatpush1.bf16.msra.mxu0 0
      %2651 = vmatprep.subr.bf16.mxu0 0
      %2652 = vmatpush1.bf16.msra.mxu0 0
      %2653 = vmatprep.subr.bf16.mxu0 0
      %2654 = vmatpush1.bf16.msra.mxu0 0
      %2655 = vmatprep.mubr.bf16.mxu0 0
      %2656 = vmatmul.mubr.bf16.gmra.mrb[0].mxu0 %v2615
      %v2657 = vpop.f32.mrb[0].mxu0
      %v2658 = vadd.f32 %v2601, %v2657
      %v2659 = vpop.f32.mrb[0].mxu0
      %v2660 = vpop.f32.mrb[0].mxu0
      %v2661 = vadd.f32 %v2604, %v2660
      %v2662 = vpop.f32.mrb[0].mxu0
      %2663 = vmatprep.mubr.bf16.mxu0 0
      %2664 = vmatmul.mubr.bf16.gmra.mrb[0].mxu0 %v2618
      %v2665 = vpop.f32.mrb[0].mxu0
      %v2666 = vadd.f32 %v2609, %v2665
      %v2667 = vpop.f32.mrb[0].mxu0
      %v2668 = vpop.f32.mrb[0].mxu0
      %v2669 = vpop.f32.mrb[0].mxu0
      %2670 = vdwg.mxu0
      %v2671 = vpack.c.bf16 %v2479, %v2476
      %v2672 = vpack.c.bf16 %v2484, %v2484
      %v2673 = vld [vmem:[%s1705] sm:$0xf]
      %v2675 = vsel %vm923, %v2671, 0
      %v2678 = vsel %vm923, %v2672, 0
      %v2681 = vsel %vm1594, %v2673, 0
      %2683 = vmatprep.subr.bf16.mxu0 0
      %2684 = vmatpush1.bf16.msra.mxu0 %v2681
      %2685 = vmatprep.subr.bf16.mxu0 0
      %2686 = vmatpush1.bf16.msra.mxu0 0
      %2687 = vmatprep.subr.bf16.mxu0 0
      %2688 = vmatpush1.bf16.msra.mxu0 0
      %2689 = vmatprep.subr.bf16.mxu0 0
      %2690 = vmatpush1.bf16.msra.mxu0 0
      %2691 = vmatprep.subr.bf16.mxu0 0
      %2692 = vmatpush1.bf16.msra.mxu0 0
      %2693 = vmatprep.subr.bf16.mxu0 0
      %2694 = vmatpush1.bf16.msra.mxu0 0
      %2695 = vmatprep.subr.bf16.mxu0 0
      %2696 = vmatpush1.bf16.msra.mxu0 0
      %2697 = vmatprep.subr.bf16.mxu0 0
      %2698 = vmatpush1.bf16.msra.mxu0 0
      %2699 = vmatprep.subr.bf16.mxu0 0
      %2700 = vmatpush1.bf16.msra.mxu0 0
      %2701 = vmatprep.subr.bf16.mxu0 0
      %2702 = vmatpush1.bf16.msra.mxu0 0
      %2703 = vmatprep.subr.bf16.mxu0 0
      %2704 = vmatpush1.bf16.msra.mxu0 0
      %2705 = vmatprep.subr.bf16.mxu0 0
      %2706 = vmatpush1.bf16.msra.mxu0 0
      %2707 = vmatprep.subr.bf16.mxu0 0
      %2708 = vmatpush1.bf16.msra.mxu0 0
      %2709 = vmatprep.subr.bf16.mxu0 0
      %2710 = vmatpush1.bf16.msra.mxu0 0
      %2711 = vmatprep.subr.bf16.mxu0 0
      %2712 = vmatpush1.bf16.msra.mxu0 0
      %2713 = vmatprep.subr.bf16.mxu0 0
      %2714 = vmatpush1.bf16.msra.mxu0 0
      %2715 = vmatprep.mubr.bf16.mxu0 0
      %2716 = vmatmul.mubr.bf16.gmra.mrb[0].mxu0 %v2675
      %v2717 = vpop.f32.mrb[0].mxu0
      %v2718 = vadd.f32 0.0, %v2717
      %v2719 = vpop.f32.mrb[0].mxu0
      %v2720 = vpop.f32.mrb[0].mxu0
      %v2721 = vadd.f32 0.0, %v2720
      %v2722 = vpop.f32.mrb[0].mxu0
      %2723 = vmatprep.mubr.bf16.mxu0 0
      %2724 = vmatmul.mubr.bf16.gmra.mrb[0].mxu0 %v2678
      %v2725 = vpop.f32.mrb[0].mxu0
      %v2726 = vadd.f32 0.0, %v2725
      %v2727 = vpop.f32.mrb[0].mxu0
      %v2728 = vpop.f32.mrb[0].mxu0
      %v2729 = vpop.f32.mrb[0].mxu0
      %2730 = vdwg.mxu0
      %v2731 = vadd.f32 %v2658, %v2718
      %v2732 = vadd.f32 %v2661, %v2721
      %v2733 = vadd.f32 %v2666, %v2726
      %v2734 = vpack.c.bf16 %v2541, %v2538
      %v2735 = vpack.c.bf16 %v2546, %v2546
      %v2736 = vld [vmem:[%s1769] sm:$0xf]
      %v2738 = vsel %vm923, %v2734, 0
      %v2741 = vsel %vm923, %v2735, 0
      %v2744 = vsel %vm1594, %v2736, 0
      %2746 = vmatprep.subr.bf16.mxu0 0
      %2747 = vmatpush1.bf16.msra.mxu0 %v2744
      %2748 = vmatprep.subr.bf16.mxu0 0
      %2749 = vmatpush1.bf16.msra.mxu0 0
      %2750 = vmatprep.subr.bf16.mxu0 0
      %2751 = vmatpush1.bf16.msra.mxu0 0
      %2752 = vmatprep.subr.bf16.mxu0 0
      %2753 = vmatpush1.bf16.msra.mxu0 0
      %2754 = vmatprep.subr.bf16.mxu0 0
      %2755 = vmatpush1.bf16.msra.mxu0 0
      %2756 = vmatprep.subr.bf16.mxu0 0
      %2757 = vmatpush1.bf16.msra.mxu0 0
      %2758 = vmatprep.subr.bf16.mxu0 0
      %2759 = vmatpush1.bf16.msra.mxu0 0
      %2760 = vmatprep.subr.bf16.mxu0 0
      %2761 = vmatpush1.bf16.msra.mxu0 0
      %2762 = vmatprep.subr.bf16.mxu0 0
      %2763 = vmatpush1.bf16.msra.mxu0 0
      %2764 = vmatprep.subr.bf16.mxu0 0
      %2765 = vmatpush1.bf16.msra.mxu0 0
      %2766 = vmatprep.subr.bf16.mxu0 0
      %2767 = vmatpush1.bf16.msra.mxu0 0
      %2768 = vmatprep.subr.bf16.mxu0 0
      %2769 = vmatpush1.bf16.msra.mxu0 0
      %2770 = vmatprep.subr.bf16.mxu0 0
      %2771 = vmatpush1.bf16.msra.mxu0 0
      %2772 = vmatprep.subr.bf16.mxu0 0
      %2773 = vmatpush1.bf16.msra.mxu0 0
      %2774 = vmatprep.subr.bf16.mxu0 0
      %2775 = vmatpush1.bf16.msra.mxu0 0
      %2776 = vmatprep.subr.bf16.mxu0 0
      %2777 = vmatpush1.bf16.msra.mxu0 0
      %2778 = vmatprep.mubr.bf16.mxu0 0
      %2779 = vmatmul.mubr.bf16.gmra.mrb[0].mxu0 %v2738
      %v2780 = vpop.f32.mrb[0].mxu0
      %v2781 = vadd.f32 0.0, %v2780
      %v2782 = vpop.f32.mrb[0].mxu0
      %v2783 = vpop.f32.mrb[0].mxu0
      %v2784 = vadd.f32 0.0, %v2783
      %v2785 = vpop.f32.mrb[0].mxu0
      %2786 = vmatprep.mubr.bf16.mxu0 0
      %2787 = vmatmul.mubr.bf16.gmra.mrb[0].mxu0 %v2741
      %v2788 = vpop.f32.mrb[0].mxu0
      %v2789 = vadd.f32 0.0, %v2788
      %v2790 = vpop.f32.mrb[0].mxu0
      %v2791 = vpop.f32.mrb[0].mxu0
      %v2792 = vpop.f32.mrb[0].mxu0
      %2793 = vdwg.mxu0
      %v2794 = vadd.f32 %v2731, %v2781
      %v2795 = vadd.f32 %v2732, %v2784
      %v2796 = vadd.f32 %v2733, %v2789
      %2797 = vst.msk [vmem:[#allocation2 + $0x11] sm:$0xff] %vm462, %v2794
      %2798 = vst.msk [vmem:[#allocation2 + $0x19] sm:$0xff] %vm462, %v2795
      %2799 = vst.msk [vmem:[#allocation2 + $0x21] sm:$0x1] %vm1833, %v2796
      %2801 = vrot.lane.b32.xlu0 %v899, 120
      %v2802 = vpop.permute.xlu0 %2801
      %2803 = vrot.lane.b32.xlu0 %v899, 112
      %v2804 = vpop.permute.xlu0 %2803
      %2805 = vrot.lane.b32.xlu0 %v899, 104
      %v2806 = vpop.permute.xlu0 %2805
      %vm2807 = vcmask 1046528
      %v2808 = vrot.slane %v898, 1
      %v2809 = vrot.slane %v899, 1
      %v2810 = vsel %vm2807, %v2808, %v2809
      %2811 = vrot.lane.b32.xlu0 %v2810, 96
      %v2812 = vpop.permute.xlu0 %2811
      %2813 = vrot.lane.b32.xlu0 %v2809, 96
      %v2814 = vpop.permute.xlu0 %2813
      %v2816 = vsel %vm923, %v2810, 0
      %v2819 = vsel %vm923, %v2809, 0
      %v2822 = vsel %vm923, %v2812, 0
      %v2825 = vsel %vm923, %v2814, 0
      %2827 = vmatprep.subr.bf16.mxu0 0
      %2828 = vmatpush1.bf16.xpose.msra.mxu0 %v2822
      %2829 = vmatprep.subr.bf16.mxu0 0
      %2830 = vmatpush1.bf16.xpose.msra.mxu0 %v2825
      %2831 = vmatprep.subr.bf16.mxu0 0
      %2832 = vmatpush1.bf16.xpose.msra.mxu0 0
      %2833 = vmatprep.subr.bf16.mxu0 0
      %2834 = vmatpush1.bf16.xpose.msra.mxu0 0
      %2835 = vmatprep.subr.bf16.mxu0 0
      %2836 = vmatpush1.bf16.xpose.msra.mxu0 0
      %2837 = vmatprep.subr.bf16.mxu0 0
      %2838 = vmatpush1.bf16.xpose.msra.mxu0 0
      %2839 = vmatprep.subr.bf16.mxu0 0
      %2840 = vmatpush1.bf16.xpose.msra.mxu0 0
      %2841 = vmatprep.subr.bf16.mxu0 0
      %2842 = vmatpush1.bf16.xpose.msra.mxu0 0
      %2843 = vmatprep.subr.bf16.mxu0 0
      %2844 = vmatpush1.bf16.xpose.msra.mxu0 0
      %2845 = vmatprep.subr.bf16.mxu0 0
      %2846 = vmatpush1.bf16.xpose.msra.mxu0 0
      %2847 = vmatprep.subr.bf16.mxu0 0
      %2848 = vmatpush1.bf16.xpose.msra.mxu0 0
      %2849 = vmatprep.subr.bf16.mxu0 0
      %2850 = vmatpush1.bf16.xpose.msra.mxu0 0
      %2851 = vmatprep.subr.bf16.mxu0 0
      %2852 = vmatpush1.bf16.xpose.msra.mxu0 0
      %2853 = vmatprep.subr.bf16.mxu0 0
      %2854 = vmatpush1.bf16.xpose.msra.mxu0 0
      %2855 = vmatprep.subr.bf16.mxu0 0
      %2856 = vmatpush1.bf16.xpose.msra.mxu0 0
      %2857 = vmatprep.subr.bf16.mxu0 0
      %2858 = vmatpush1.bf16.xpose.msra.mxu0 0
      %2859 = vmatprep.mubr.bf16.mxu0 0
      %2860 = vmatmul.mubr.bf16.gmra.mrb[0].mxu0 %v2816
      %v2861 = vpop.f32.mrb[0].mxu0
      %v2862 = vadd.f32 0.0, %v2861
      %v2863 = vpop.f32.mrb[0].mxu0
      %v2864 = vpop.f32.mrb[0].mxu0
      %v2865 = vadd.f32 0.0, %v2864
      %v2866 = vpop.f32.mrb[0].mxu0
      %2867 = vmatprep.mubr.bf16.mxu0 0
      %2868 = vmatmul.mubr.bf16.gmra.mrb[0].mxu0 %v2819
      %v2869 = vpop.f32.mrb[0].mxu0
      %v2870 = vadd.f32 0.0, %v2869
      %v2871 = vpop.f32.mrb[0].mxu0
      %v2872 = vpop.f32.mrb[0].mxu0
      %v2873 = vpop.f32.mrb[0].mxu0
      %2874 = vdwg.mxu0
      %v2875 = vrot.slane %v1837, 1
      %v2876 = vrot.slane %v2802, 1
      %v2877 = vsel %vm2807, %v2875, %v2876
      %2878 = vrot.lane.b32.xlu0 %v2877, 96
      %v2879 = vpop.permute.xlu0 %2878
      %2880 = vrot.lane.b32.xlu0 %v2876, 96
      %v2881 = vpop.permute.xlu0 %2880
      %v2883 = vsel %vm923, %v2877, 0
      %v2886 = vsel %vm923, %v2876, 0
      %v2889 = vsel %vm923, %v2879, 0
      %v2892 = vsel %vm923, %v2881, 0
      %2894 = vmatprep.subr.bf16.mxu0 0
      %2895 = vmatpush1.bf16.xpose.msra.mxu0 %v2889
      %2896 = vmatprep.subr.bf16.mxu0 0
      %2897 = vmatpush1.bf16.xpose.msra.mxu0 %v2892
      %2898 = vmatprep.subr.bf16.mxu0 0
      %2899 = vmatpush1.bf16.xpose.msra.mxu0 0
      %2900 = vmatprep.subr.bf16.mxu0 0
      %2901 = vmatpush1.bf16.xpose.msra.mxu0 0
      %2902 = vmatprep.subr.bf16.mxu0 0
      %2903 = vmatpush1.bf16.xpose.msra.mxu0 0
      %2904 = vmatprep.subr.bf16.mxu0 0
      %2905 = vmatpush1.bf16.xpose.msra.mxu0 0
      %2906 = vmatprep.subr.bf16.mxu0 0
      %2907 = vmatpush1.bf16.xpose.msra.mxu0 0
      %2908 = vmatprep.subr.bf16.mxu0 0
      %2909 = vmatpush1.bf16.xpose.msra.mxu0 0
      %2910 = vmatprep.subr.bf16.mxu0 0
      %2911 = vmatpush1.bf16.xpose.msra.mxu0 0
      %2912 = vmatprep.subr.bf16.mxu0 0
      %2913 = vmatpush1.bf16.xpose.msra.mxu0 0
      %2914 = vmatprep.subr.bf16.mxu0 0
      %2915 = vmatpush1.bf16.xpose.msra.mxu0 0
      %2916 = vmatprep.subr.bf16.mxu0 0
      %2917 = vmatpush1.bf16.xpose.msra.mxu0 0
      %2918 = vmatprep.subr.bf16.mxu0 0
      %2919 = vmatpush1.bf16.xpose.msra.mxu0 0
      %2920 = vmatprep.subr.bf16.mxu0 0
      %2921 = vmatpush1.bf16.xpose.msra.mxu0 0
      %2922 = vmatprep.subr.bf16.mxu0 0
      %2923 = vmatpush1.bf16.xpose.msra.mxu0 0
      %2924 = vmatprep.subr.bf16.mxu0 0
      %2925 = vmatpush1.bf16.xpose.msra.mxu0 0
      %2926 = vmatprep.mubr.bf16.mxu0 0
      %2927 = vmatmul.mubr.bf16.gmra.mrb[0].mxu0 %v2883
      %v2928 = vpop.f32.mrb[0].mxu0
      %v2929 = vadd.f32 0.0, %v2928
      %v2930 = vpop.f32.mrb[0].mxu0
      %v2931 = vpop.f32.mrb[0].mxu0
      %v2932 = vadd.f32 0.0, %v2931
      %v2933 = vpop.f32.mrb[0].mxu0
      %2934 = vmatprep.mubr.bf16.mxu0 0
      %2935 = vmatmul.mubr.bf16.gmra.mrb[0].mxu0 %v2886
      %v2936 = vpop.f32.mrb[0].mxu0
      %v2937 = vadd.f32 0.0, %v2936
      %v2938 = vpop.f32.mrb[0].mxu0
      %v2939 = vpop.f32.mrb[0].mxu0
      %v2940 = vpop.f32.mrb[0].mxu0
      %2941 = vdwg.mxu0
      %v2942 = vrot.slane %v1839, 1
      %v2943 = vrot.slane %v2804, 1
      %v2944 = vsel %vm2807, %v2942, %v2943
      %2945 = vrot.lane.b32.xlu0 %v2944, 96
      %v2946 = vpop.permute.xlu0 %2945
      %2947 = vrot.lane.b32.xlu0 %v2943, 96
      %v2948 = vpop.permute.xlu0 %2947
      %v2950 = vsel %vm923, %v2944, 0
      %v2953 = vsel %vm923, %v2943, 0
      %v2956 = vsel %vm923, %v2946, 0
      %v2959 = vsel %vm923, %v2948, 0
      %2961 = vmatprep.subr.bf16.mxu0 0
      %2962 = vmatpush1.bf16.xpose.msra.mxu0 %v2956
      %2963 = vmatprep.subr.bf16.mxu0 0
      %2964 = vmatpush1.bf16.xpose.msra.mxu0 %v2959
      %2965 = vmatprep.subr.bf16.mxu0 0
      %2966 = vmatpush1.bf16.xpose.msra.mxu0 0
      %2967 = vmatprep.subr.bf16.mxu0 0
      %2968 = vmatpush1.bf16.xpose.msra.mxu0 0
      %2969 = vmatprep.subr.bf16.mxu0 0
      %2970 = vmatpush1.bf16.xpose.msra.mxu0 0
      %2971 = vmatprep.subr.bf16.mxu0 0
      %2972 = vmatpush1.bf16.xpose.msra.mxu0 0
      %2973 = vmatprep.subr.bf16.mxu0 0
      %2974 = vmatpush1.bf16.xpose.msra.mxu0 0
      %2975 = vmatprep.subr.bf16.mxu0 0
      %2976 = vmatpush1.bf16.xpose.msra.mxu0 0
      %2977 = vmatprep.subr.bf16.mxu0 0
      %2978 = vmatpush1.bf16.xpose.msra.mxu0 0
      %2979 = vmatprep.subr.bf16.mxu0 0
      %2980 = vmatpush1.bf16.xpose.msra.mxu0 0
      %2981 = vmatprep.subr.bf16.mxu0 0
      %2982 = vmatpush1.bf16.xpose.msra.mxu0 0
      %2983 = vmatprep.subr.bf16.mxu0 0
      %2984 = vmatpush1.bf16.xpose.msra.mxu0 0
      %2985 = vmatprep.subr.bf16.mxu0 0
      %2986 = vmatpush1.bf16.xpose.msra.mxu0 0
      %2987 = vmatprep.subr.bf16.mxu0 0
      %2988 = vmatpush1.bf16.xpose.msra.mxu0 0
      %2989 = vmatprep.subr.bf16.mxu0 0
      %2990 = vmatpush1.bf16.xpose.msra.mxu0 0
      %2991 = vmatprep.subr.bf16.mxu0 0
      %2992 = vmatpush1.bf16.xpose.msra.mxu0 0
      %2993 = vmatprep.mubr.bf16.mxu0 0
      %2994 = vmatmul.mubr.bf16.gmra.mrb[0].mxu0 %v2950
      %v2995 = vpop.f32.mrb[0].mxu0
      %v2996 = vadd.f32 0.0, %v2995
      %v2997 = vpop.f32.mrb[0].mxu0
      %v2998 = vpop.f32.mrb[0].mxu0
      %v2999 = vadd.f32 0.0, %v2998
      %v3000 = vpop.f32.mrb[0].mxu0
      %3001 = vmatprep.mubr.bf16.mxu0 0
      %3002 = vmatmul.mubr.bf16.gmra.mrb[0].mxu0 %v2953
      %v3003 = vpop.f32.mrb[0].mxu0
      %v3004 = vadd.f32 0.0, %v3003
      %v3005 = vpop.f32.mrb[0].mxu0
      %v3006 = vpop.f32.mrb[0].mxu0
      %v3007 = vpop.f32.mrb[0].mxu0
      %3008 = vdwg.mxu0
      %v3009 = vrot.slane %v1841, 1
      %v3010 = vrot.slane %v2806, 1
      %v3011 = vsel %vm2807, %v3009, %v3010
      %3012 = vrot.lane.b32.xlu0 %v3011, 96
      %v3013 = vpop.permute.xlu0 %3012
      %3014 = vrot.lane.b32.xlu0 %v3010, 96
      %v3015 = vpop.permute.xlu0 %3014
      %v3017 = vsel %vm923, %v3011, 0
      %v3020 = vsel %vm923, %v3010, 0
      %v3023 = vsel %vm923, %v3013, 0
      %v3026 = vsel %vm923, %v3015, 0
      %3028 = vmatprep.subr.bf16.mxu0 0
      %3029 = vmatpush1.bf16.xpose.msra.mxu0 %v3023
      %3030 = vmatprep.subr.bf16.mxu0 0
      %3031 = vmatpush1.bf16.xpose.msra.mxu0 %v3026
      %3032 = vmatprep.subr.bf16.mxu0 0
      %3033 = vmatpush1.bf16.xpose.msra.mxu0 0
      %3034 = vmatprep.subr.bf16.mxu0 0
      %3035 = vmatpush1.bf16.xpose.msra.mxu0 0
      %3036 = vmatprep.subr.bf16.mxu0 0
      %3037 = vmatpush1.bf16.xpose.msra.mxu0 0
      %3038 = vmatprep.subr.bf16.mxu0 0
      %3039 = vmatpush1.bf16.xpose.msra.mxu0 0
      %3040 = vmatprep.subr.bf16.mxu0 0
      %3041 = vmatpush1.bf16.xpose.msra.mxu0 0
      %3042 = vmatprep.subr.bf16.mxu0 0
      %3043 = vmatpush1.bf16.xpose.msra.mxu0 0
      %3044 = vmatprep.subr.bf16.mxu0 0
      %3045 = vmatpush1.bf16.xpose.msra.mxu0 0
      %3046 = vmatprep.subr.bf16.mxu0 0
      %3047 = vmatpush1.bf16.xpose.msra.mxu0 0
      %3048 = vmatprep.subr.bf16.mxu0 0
      %3049 = vmatpush1.bf16.xpose.msra.mxu0 0
      %3050 = vmatprep.subr.bf16.mxu0 0
      %3051 = vmatpush1.bf16.xpose.msra.mxu0 0
      %3052 = vmatprep.subr.bf16.mxu0 0
      %3053 = vmatpush1.bf16.xpose.msra.mxu0 0
      %3054 = vmatprep.subr.bf16.mxu0 0
      %3055 = vmatpush1.bf16.xpose.msra.mxu0 0
      %3056 = vmatprep.subr.bf16.mxu0 0
      %3057 = vmatpush1.bf16.xpose.msra.mxu0 0
      %3058 = vmatprep.subr.bf16.mxu0 0
      %3059 = vmatpush1.bf16.xpose.msra.mxu0 0
      %3060 = vmatprep.mubr.bf16.mxu0 0
      %3061 = vmatmul.mubr.bf16.gmra.mrb[0].mxu0 %v3017
      %v3062 = vpop.f32.mrb[0].mxu0
      %v3063 = vadd.f32 0.0, %v3062
      %v3064 = vpop.f32.mrb[0].mxu0
      %v3065 = vpop.f32.mrb[0].mxu0
      %v3066 = vadd.f32 0.0, %v3065
      %v3067 = vpop.f32.mrb[0].mxu0
      %3068 = vmatprep.mubr.bf16.mxu0 0
      %3069 = vmatmul.mubr.bf16.gmra.mrb[0].mxu0 %v3020
      %v3070 = vpop.f32.mrb[0].mxu0
      %v3071 = vadd.f32 0.0, %v3070
      %v3072 = vpop.f32.mrb[0].mxu0
      %v3073 = vpop.f32.mrb[0].mxu0
      %v3074 = vpop.f32.mrb[0].mxu0
      %3075 = vdwg.mxu0
      %v3076 = vmul.f32 %v2862, 0.35355338
      %v3077 = vmul.f32 %v2865, 0.35355338
      %v3078 = vmul.f32 %v2870, 0.35355338
      %v3079 = vmul.f32 %v2929, 0.35355338
      %v3080 = vmul.f32 %v2932, 0.35355338
      %v3081 = vmul.f32 %v2937, 0.35355338
      %v3082 = vmul.f32 %v2996, 0.35355338
      %v3083 = vmul.f32 %v2999, 0.35355338
      %v3084 = vmul.f32 %v3004, 0.35355338
      %v3085 = vmul.f32 %v3063, 0.35355338
      %v3086 = vmul.f32 %v3066, 0.35355338
      %v3087 = vmul.f32 %v3071, 0.35355338
      %v3088 = vsel %vm1188, %v3076, -inf
      %3089 = vmax.xlane.f32.xlu0 %v3088
      %v3090 = vpop.xlane.xlu0 %3089
      %v3091 = vsel %vm1188, %v3077, -inf
      %3092 = vmax.xlane.f32.xlu0 %v3091
      %v3093 = vpop.xlane.xlu0 %3092
      %v3094 = vsel %vm1195, %v3078, -inf
      %3095 = vmax.xlane.f32.xlu0 %v3094
      %v3096 = vpop.xlane.xlu0 %3095
      %v3097 = vsel %vm1188, %v3079, -inf
      %3098 = vmax.xlane.f32.xlu0 %v3097
      %v3099 = vpop.xlane.xlu0 %3098
      %v3100 = vsel %vm1188, %v3080, -inf
      %3101 = vmax.xlane.f32.xlu0 %v3100
      %v3102 = vpop.xlane.xlu0 %3101
      %v3103 = vsel %vm1195, %v3081, -inf
      %3104 = vmax.xlane.f32.xlu0 %v3103
      %v3105 = vpop.xlane.xlu0 %3104
      %v3106 = vsel %vm1188, %v3082, -inf
      %3107 = vmax.xlane.f32.xlu0 %v3106
      %v3108 = vpop.xlane.xlu0 %3107
      %v3109 = vsel %vm1188, %v3083, -inf
      %3110 = vmax.xlane.f32.xlu0 %v3109
      %v3111 = vpop.xlane.xlu0 %3110
      %v3112 = vsel %vm1195, %v3084, -inf
      %3113 = vmax.xlane.f32.xlu0 %v3112
      %v3114 = vpop.xlane.xlu0 %3113
      %v3115 = vsel %vm1188, %v3085, -inf
      %3116 = vmax.xlane.f32.xlu0 %v3115
      %v3117 = vpop.xlane.xlu0 %3116
      %v3118 = vsel %vm1188, %v3086, -inf
      %3119 = vmax.xlane.f32.xlu0 %v3118
      %v3120 = vpop.xlane.xlu0 %3119
      %v3121 = vsel %vm1195, %v3087, -inf
      %3122 = vmax.xlane.f32.xlu0 %v3121
      %v3123 = vpop.xlane.xlu0 %3122
      %v3124 = vsub.f32 %v3076, %v3090
      %v3125 = vsub.f32 %v3077, %v3093
      %v3126 = vsub.f32 %v3078, %v3096
      %v3127 = vsub.f32 %v3079, %v3099
      %v3128 = vsub.f32 %v3080, %v3102
      %v3129 = vsub.f32 %v3081, %v3105
      %v3130 = vsub.f32 %v3082, %v3108
      %v3131 = vsub.f32 %v3083, %v3111
      %v3132 = vsub.f32 %v3084, %v3114
      %v3133 = vsub.f32 %v3085, %v3117
      %v3134 = vsub.f32 %v3086, %v3120
      %v3135 = vsub.f32 %v3087, %v3123
      %v3136 = vmul.f32 %v3124, 1.442695
      %v3137 = vpow.pop %v3136
      %v3138 = vmul.f32 %v3125, 1.442695
      %v3139 = vpow.pop %v3138
      %v3140 = vmul.f32 %v3126, 1.442695
      %v3141 = vpow.pop %v3140
      %v3142 = vmul.f32 %v3127, 1.442695
      %v3143 = vpow.pop %v3142
      %v3144 = vmul.f32 %v3128, 1.442695
      %v3145 = vpow.pop %v3144
      %v3146 = vmul.f32 %v3129, 1.442695
      %v3147 = vpow.pop %v3146
      %v3148 = vmul.f32 %v3130, 1.442695
      %v3149 = vpow.pop %v3148
      %v3150 = vmul.f32 %v3131, 1.442695
      %v3151 = vpow.pop %v3150
      %v3152 = vmul.f32 %v3132, 1.442695
      %v3153 = vpow.pop %v3152
      %v3154 = vmul.f32 %v3133, 1.442695
      %v3155 = vpow.pop %v3154
      %v3156 = vmul.f32 %v3134, 1.442695
      %v3157 = vpow.pop %v3156
      %v3158 = vmul.f32 %v3135, 1.442695
      %v3159 = vpow.pop %v3158
      %v3160 = vsel %vm1188, %v3137, 0.0
      %3161 = vadd.xlane.f32.xlu0 %v3160
      %v3162 = vpop.xlane.xlu0 %3161
      %v3163 = vsel %vm1188, %v3139, 0.0
      %3164 = vadd.xlane.f32.xlu0 %v3163
      %v3165 = vpop.xlane.xlu0 %3164
      %v3166 = vsel %vm1195, %v3141, 0.0
      %3167 = vadd.xlane.f32.xlu0 %v3166
      %v3168 = vpop.xlane.xlu0 %3167
      %v3169 = vsel %vm1188, %v3143, 0.0
      %3170 = vadd.xlane.f32.xlu0 %v3169
      %v3171 = vpop.xlane.xlu0 %3170
      %v3172 = vsel %vm1188, %v3145, 0.0
      %3173 = vadd.xlane.f32.xlu0 %v3172
      %v3174 = vpop.xlane.xlu0 %3173
      %v3175 = vsel %vm1195, %v3147, 0.0
      %3176 = vadd.xlane.f32.xlu0 %v3175
      %v3177 = vpop.xlane.xlu0 %3176
      %v3178 = vsel %vm1188, %v3149, 0.0
      %3179 = vadd.xlane.f32.xlu0 %v3178
      %v3180 = vpop.xlane.xlu0 %3179
      %v3181 = vsel %vm1188, %v3151, 0.0
      %3182 = vadd.xlane.f32.xlu0 %v3181
      %v3183 = vpop.xlane.xlu0 %3182
      %v3184 = vsel %vm1195, %v3153, 0.0
      %3185 = vadd.xlane.f32.xlu0 %v3184
      %v3186 = vpop.xlane.xlu0 %3185
      %v3187 = vsel %vm1188, %v3155, 0.0
      %3188 = vadd.xlane.f32.xlu0 %v3187
      %v3189 = vpop.xlane.xlu0 %3188
      %v3190 = vsel %vm1188, %v3157, 0.0
      %3191 = vadd.xlane.f32.xlu0 %v3190
      %v3192 = vpop.xlane.xlu0 %3191
      %v3193 = vsel %vm1195, %v3159, 0.0
      %3194 = vadd.xlane.f32.xlu0 %v3193
      %v3195 = vpop.xlane.xlu0 %3194
      %v3196 = vrcp.pop %v3162
      %v3197 = vrcp.pop %v3165
      %v3198 = vrcp.pop %v3168
      %v3199 = vrcp.pop %v3171
      %v3200 = vrcp.pop %v3174
      %v3201 = vrcp.pop %v3177
      %v3202 = vrcp.pop %v3180
      %v3203 = vrcp.pop %v3183
      %v3204 = vrcp.pop %v3186
      %v3205 = vrcp.pop %v3189
      %v3206 = vrcp.pop %v3192
      %v3207 = vrcp.pop %v3195
      %v3208 = vmul.f32 %v3137, %v3196
      %v3209 = vmul.f32 %v3139, %v3197
      %v3210 = vmul.f32 %v3141, %v3198
      %v3211 = vmul.f32 %v3143, %v3199
      %v3212 = vmul.f32 %v3145, %v3200
      %v3213 = vmul.f32 %v3147, %v3201
      %v3214 = vmul.f32 %v3149, %v3202
      %v3215 = vmul.f32 %v3151, %v3203
      %v3216 = vmul.f32 %v3153, %v3204
      %v3217 = vmul.f32 %v3155, %v3205
      %v3218 = vmul.f32 %v3157, %v3206
      %v3219 = vmul.f32 %v3159, %v3207
      %v3220 = vpack.c.bf16 %v3209, %v3208
      %v3221 = vpack.c.bf16 %v3210, %v3210
      %v3222 = vpack.c.bf16 %v3212, %v3211
      %v3223 = vpack.c.bf16 %v3213, %v3213
      %v3224 = vpack.c.bf16 %v3215, %v3214
      %v3225 = vpack.c.bf16 %v3216, %v3216
      %v3226 = vpack.c.bf16 %v3218, %v3217
      %v3227 = vpack.c.bf16 %v3219, %v3219
      %3228 = vrot.lane.b32.xlu0 %v2810, 64
      %v3229 = vpop.permute.xlu0 %3228
      %3230 = vrot.lane.b32.xlu0 %v2809, 64
      %v3231 = vpop.permute.xlu0 %3230
      %v3234 = vsel %vm1188, %v3220, 0
      %v3237 = vsel %vm1188, %v3221, 0
      %v3240 = vand.u32 %v3231, %v1343
      %3242 = vmatprep.subr.bf16.mxu0 0
      %3243 = vmatpush1.bf16.msra.mxu0 %v3229
      %3244 = vmatprep.subr.bf16.mxu0 0
      %3245 = vmatpush1.bf16.msra.mxu0 %v3240
      %3246 = vmatprep.subr.bf16.mxu0 0
      %3247 = vmatpush1.bf16.msra.mxu0 0
      %3248 = vmatprep.subr.bf16.mxu0 0
      %3249 = vmatpush1.bf16.msra.mxu0 0
      %3250 = vmatprep.subr.bf16.mxu0 0
      %3251 = vmatpush1.bf16.msra.mxu0 0
      %3252 = vmatprep.subr.bf16.mxu0 0
      %3253 = vmatpush1.bf16.msra.mxu0 0
      %3254 = vmatprep.subr.bf16.mxu0 0
      %3255 = vmatpush1.bf16.msra.mxu0 0
      %3256 = vmatprep.subr.bf16.mxu0 0
      %3257 = vmatpush1.bf16.msra.mxu0 0
      %3258 = vmatprep.subr.bf16.mxu0 0
      %3259 = vmatpush1.bf16.msra.mxu0 0
      %3260 = vmatprep.subr.bf16.mxu0 0
      %3261 = vmatpush1.bf16.msra.mxu0 0
      %3262 = vmatprep.subr.bf16.mxu0 0
      %3263 = vmatpush1.bf16.msra.mxu0 0
      %3264 = vmatprep.subr.bf16.mxu0 0
      %3265 = vmatpush1.bf16.msra.mxu0 0
      %3266 = vmatprep.subr.bf16.mxu0 0
      %3267 = vmatpush1.bf16.msra.mxu0 0
      %3268 = vmatprep.subr.bf16.mxu0 0
      %3269 = vmatpush1.bf16.msra.mxu0 0
      %3270 = vmatprep.subr.bf16.mxu0 0
      %3271 = vmatpush1.bf16.msra.mxu0 0
      %3272 = vmatprep.subr.bf16.mxu0 0
      %3273 = vmatpush1.bf16.msra.mxu0 0
      %3274 = vmatprep.mubr.bf16.mxu0 0
      %3275 = vmatmul.mubr.bf16.gmra.mrb[0].mxu0 %v3234
      %v3276 = vpop.f32.mrb[0].mxu0
      %v3277 = vadd.f32 0.0, %v3276
      %v3278 = vpop.f32.mrb[0].mxu0
      %v3279 = vpop.f32.mrb[0].mxu0
      %v3280 = vadd.f32 0.0, %v3279
      %v3281 = vpop.f32.mrb[0].mxu0
      %3282 = vmatprep.mubr.bf16.mxu0 0
      %3283 = vmatmul.mubr.bf16.gmra.mrb[0].mxu0 %v3237
      %v3284 = vpop.f32.mrb[0].mxu0
      %v3285 = vadd.f32 0.0, %v3284
      %v3286 = vpop.f32.mrb[0].mxu0
      %v3287 = vpop.f32.mrb[0].mxu0
      %v3288 = vpop.f32.mrb[0].mxu0
      %3289 = vdwg.mxu0
      %3290 = vrot.lane.b32.xlu0 %v2877, 64
      %v3291 = vpop.permute.xlu0 %3290
      %3292 = vrot.lane.b32.xlu0 %v2876, 64
      %v3293 = vpop.permute.xlu0 %3292
      %v3296 = vsel %vm1188, %v3222, 0
      %v3299 = vsel %vm1188, %v3223, 0
      %v3302 = vand.u32 %v3293, %v1343
      %3304 = vmatprep.subr.bf16.mxu0 0
      %3305 = vmatpush1.bf16.msra.mxu0 %v3291
      %3306 = vmatprep.subr.bf16.mxu0 0
      %3307 = vmatpush1.bf16.msra.mxu0 %v3302
      %3308 = vmatprep.subr.bf16.mxu0 0
      %3309 = vmatpush1.bf16.msra.mxu0 0
      %3310 = vmatprep.subr.bf16.mxu0 0
      %3311 = vmatpush1.bf16.msra.mxu0 0
      %3312 = vmatprep.subr.bf16.mxu0 0
      %3313 = vmatpush1.bf16.msra.mxu0 0
      %3314 = vmatprep.subr.bf16.mxu0 0
      %3315 = vmatpush1.bf16.msra.mxu0 0
      %3316 = vmatprep.subr.bf16.mxu0 0
      %3317 = vmatpush1.bf16.msra.mxu0 0
      %3318 = vmatprep.subr.bf16.mxu0 0
      %3319 = vmatpush1.bf16.msra.mxu0 0
      %3320 = vmatprep.subr.bf16.mxu0 0
      %3321 = vmatpush1.bf16.msra.mxu0 0
      %3322 = vmatprep.subr.bf16.mxu0 0
      %3323 = vmatpush1.bf16.msra.mxu0 0
      %3324 = vmatprep.subr.bf16.mxu0 0
      %3325 = vmatpush1.bf16.msra.mxu0 0
      %3326 = vmatprep.subr.bf16.mxu0 0
      %3327 = vmatpush1.bf16.msra.mxu0 0
      %3328 = vmatprep.subr.bf16.mxu0 0
      %3329 = vmatpush1.bf16.msra.mxu0 0
      %3330 = vmatprep.subr.bf16.mxu0 0
      %3331 = vmatpush1.bf16.msra.mxu0 0
      %3332 = vmatprep.subr.bf16.mxu0 0
      %3333 = vmatpush1.bf16.msra.mxu0 0
      %3334 = vmatprep.subr.bf16.mxu0 0
      %3335 = vmatpush1.bf16.msra.mxu0 0
      %3336 = vmatprep.mubr.bf16.mxu0 0
      %3337 = vmatmul.mubr.bf16.gmra.mrb[0].mxu0 %v3296
      %v3338 = vpop.f32.mrb[0].mxu0
      %v3339 = vadd.f32 0.0, %v3338
      %v3340 = vpop.f32.mrb[0].mxu0
      %v3341 = vpop.f32.mrb[0].mxu0
      %v3342 = vadd.f32 0.0, %v3341
      %v3343 = vpop.f32.mrb[0].mxu0
      %3344 = vmatprep.mubr.bf16.mxu0 0
      %3345 = vmatmul.mubr.bf16.gmra.mrb[0].mxu0 %v3299
      %v3346 = vpop.f32.mrb[0].mxu0
      %v3347 = vadd.f32 0.0, %v3346
      %v3348 = vpop.f32.mrb[0].mxu0
      %v3349 = vpop.f32.mrb[0].mxu0
      %v3350 = vpop.f32.mrb[0].mxu0
      %3351 = vdwg.mxu0
      %3352 = vrot.lane.b32.xlu0 %v2944, 64
      %v3353 = vpop.permute.xlu0 %3352
      %3354 = vrot.lane.b32.xlu0 %v2943, 64
      %v3355 = vpop.permute.xlu0 %3354
      %v3358 = vsel %vm1188, %v3224, 0
      %v3361 = vsel %vm1188, %v3225, 0
      %v3364 = vand.u32 %v3355, %v1343
      %3366 = vmatprep.subr.bf16.mxu0 0
      %3367 = vmatpush1.bf16.msra.mxu0 %v3353
      %3368 = vmatprep.subr.bf16.mxu0 0
      %3369 = vmatpush1.bf16.msra.mxu0 %v3364
      %3370 = vmatprep.subr.bf16.mxu0 0
      %3371 = vmatpush1.bf16.msra.mxu0 0
      %3372 = vmatprep.subr.bf16.mxu0 0
      %3373 = vmatpush1.bf16.msra.mxu0 0
      %3374 = vmatprep.subr.bf16.mxu0 0
      %3375 = vmatpush1.bf16.msra.mxu0 0
      %3376 = vmatprep.subr.bf16.mxu0 0
      %3377 = vmatpush1.bf16.msra.mxu0 0
      %3378 = vmatprep.subr.bf16.mxu0 0
      %3379 = vmatpush1.bf16.msra.mxu0 0
      %3380 = vmatprep.subr.bf16.mxu0 0
      %3381 = vmatpush1.bf16.msra.mxu0 0
      %3382 = vmatprep.subr.bf16.mxu0 0
      %3383 = vmatpush1.bf16.msra.mxu0 0
      %3384 = vmatprep.subr.bf16.mxu0 0
      %3385 = vmatpush1.bf16.msra.mxu0 0
      %3386 = vmatprep.subr.bf16.mxu0 0
      %3387 = vmatpush1.bf16.msra.mxu0 0
      %3388 = vmatprep.subr.bf16.mxu0 0
      %3389 = vmatpush1.bf16.msra.mxu0 0
      %3390 = vmatprep.subr.bf16.mxu0 0
      %3391 = vmatpush1.bf16.msra.mxu0 0
      %3392 = vmatprep.subr.bf16.mxu0 0
      %3393 = vmatpush1.bf16.msra.mxu0 0
      %3394 = vmatprep.subr.bf16.mxu0 0
      %3395 = vmatpush1.bf16.msra.mxu0 0
      %3396 = vmatprep.subr.bf16.mxu0 0
      %3397 = vmatpush1.bf16.msra.mxu0 0
      %3398 = vmatprep.mubr.bf16.mxu0 0
      %3399 = vmatmul.mubr.bf16.gmra.mrb[0].mxu0 %v3358
      %v3400 = vpop.f32.mrb[0].mxu0
      %v3401 = vadd.f32 0.0, %v3400
      %v3402 = vpop.f32.mrb[0].mxu0
      %v3403 = vpop.f32.mrb[0].mxu0
      %v3404 = vadd.f32 0.0, %v3403
      %v3405 = vpop.f32.mrb[0].mxu0
      %3406 = vmatprep.mubr.bf16.mxu0 0
      %3407 = vmatmul.mubr.bf16.gmra.mrb[0].mxu0 %v3361
      %v3408 = vpop.f32.mrb[0].mxu0
      %v3409 = vadd.f32 0.0, %v3408
      %v3410 = vpop.f32.mrb[0].mxu0
      %v3411 = vpop.f32.mrb[0].mxu0
      %v3412 = vpop.f32.mrb[0].mxu0
      %3413 = vdwg.mxu0
      %3414 = vrot.lane.b32.xlu0 %v3011, 64
      %v3415 = vpop.permute.xlu0 %3414
      %3416 = vrot.lane.b32.xlu0 %v3010, 64
      %v3417 = vpop.permute.xlu0 %3416
      %v3420 = vsel %vm1188, %v3226, 0
      %v3423 = vsel %vm1188, %v3227, 0
      %v3426 = vand.u32 %v3417, %v1343
      %3428 = vmatprep.subr.bf16.mxu0 0
      %3429 = vmatpush1.bf16.msra.mxu0 %v3415
      %3430 = vmatprep.subr.bf16.mxu0 0
      %3431 = vmatpush1.bf16.msra.mxu0 %v3426
      %3432 = vmatprep.subr.bf16.mxu0 0
      %3433 = vmatpush1.bf16.msra.mxu0 0
      %3434 = vmatprep.subr.bf16.mxu0 0
      %3435 = vmatpush1.bf16.msra.mxu0 0
      %3436 = vmatprep.subr.bf16.mxu0 0
      %3437 = vmatpush1.bf16.msra.mxu0 0
      %3438 = vmatprep.subr.bf16.mxu0 0
      %3439 = vmatpush1.bf16.msra.mxu0 0
      %3440 = vmatprep.subr.bf16.mxu0 0
      %3441 = vmatpush1.bf16.msra.mxu0 0
      %3442 = vmatprep.subr.bf16.mxu0 0
      %3443 = vmatpush1.bf16.msra.mxu0 0
      %3444 = vmatprep.subr.bf16.mxu0 0
      %3445 = vmatpush1.bf16.msra.mxu0 0
      %3446 = vmatprep.subr.bf16.mxu0 0
      %3447 = vmatpush1.bf16.msra.mxu0 0
      %3448 = vmatprep.subr.bf16.mxu0 0
      %3449 = vmatpush1.bf16.msra.mxu0 0
      %3450 = vmatprep.subr.bf16.mxu0 0
      %3451 = vmatpush1.bf16.msra.mxu0 0
      %3452 = vmatprep.subr.bf16.mxu0 0
      %3453 = vmatpush1.bf16.msra.mxu0 0
      %3454 = vmatprep.subr.bf16.mxu0 0
      %3455 = vmatpush1.bf16.msra.mxu0 0
      %3456 = vmatprep.subr.bf16.mxu0 0
      %3457 = vmatpush1.bf16.msra.mxu0 0
      %3458 = vmatprep.subr.bf16.mxu0 0
      %3459 = vmatpush1.bf16.msra.mxu0 0
      %3460 = vmatprep.mubr.bf16.mxu0 0
      %3461 = vmatmul.mubr.bf16.gmra.mrb[0].mxu0 %v3420
      %v3462 = vpop.f32.mrb[0].mxu0
      %v3463 = vadd.f32 0.0, %v3462
      %v3464 = vpop.f32.mrb[0].mxu0
      %v3465 = vpop.f32.mrb[0].mxu0
      %v3466 = vadd.f32 0.0, %v3465
      %v3467 = vpop.f32.mrb[0].mxu0
      %3468 = vmatprep.mubr.bf16.mxu0 0
      %3469 = vmatmul.mubr.bf16.gmra.mrb[0].mxu0 %v3423
      %v3470 = vpop.f32.mrb[0].mxu0
      %v3471 = vadd.f32 0.0, %v3470
      %v3472 = vpop.f32.mrb[0].mxu0
      %v3473 = vpop.f32.mrb[0].mxu0
      %v3474 = vpop.f32.mrb[0].mxu0
      %3475 = vdwg.mxu0
      %v3476 = vpack.c.bf16 %v3280, %v3277
      %v3477 = vpack.c.bf16 %v3285, %v3285
      %v3478 = vld [vmem:[%s5] sm:$0xf]
      %v3479 = vpack.c.bf16 %v3342, %v3339
      %v3480 = vpack.c.bf16 %v3347, %v3347
      %v3481 = vld [vmem:[%s1586] sm:$0xf]
      %v3483 = vsel %vm923, %v3479, 0
      %v3486 = vsel %vm923, %v3480, 0
      %v3489 = vsel %vm1594, %v3481, 0
      %3491 = vmatprep.subr.bf16.mxu0 0
      %3492 = vmatpush1.bf16.msra.mxu0 %v3489
      %3493 = vmatprep.subr.bf16.mxu0 0
      %3494 = vmatpush1.bf16.msra.mxu0 0
      %3495 = vmatprep.subr.bf16.mxu0 0
      %3496 = vmatpush1.bf16.msra.mxu0 0
      %3497 = vmatprep.subr.bf16.mxu0 0
      %3498 = vmatpush1.bf16.msra.mxu0 0
      %3499 = vmatprep.subr.bf16.mxu0 0
      %3500 = vmatpush1.bf16.msra.mxu0 0
      %3501 = vmatprep.subr.bf16.mxu0 0
      %3502 = vmatpush1.bf16.msra.mxu0 0
      %3503 = vmatprep.subr.bf16.mxu0 0
      %3504 = vmatpush1.bf16.msra.mxu0 0
      %3505 = vmatprep.subr.bf16.mxu0 0
      %3506 = vmatpush1.bf16.msra.mxu0 0
      %3507 = vmatprep.subr.bf16.mxu0 0
      %3508 = vmatpush1.bf16.msra.mxu0 0
      %3509 = vmatprep.subr.bf16.mxu0 0
      %3510 = vmatpush1.bf16.msra.mxu0 0
      %3511 = vmatprep.subr.bf16.mxu0 0
      %3512 = vmatpush1.bf16.msra.mxu0 0
      %3513 = vmatprep.subr.bf16.mxu0 0
      %3514 = vmatpush1.bf16.msra.mxu0 0
      %3515 = vmatprep.subr.bf16.mxu0 0
      %3516 = vmatpush1.bf16.msra.mxu0 0
      %3517 = vmatprep.subr.bf16.mxu0 0
      %3518 = vmatpush1.bf16.msra.mxu0 0
      %3519 = vmatprep.subr.bf16.mxu0 0
      %3520 = vmatpush1.bf16.msra.mxu0 0
      %3521 = vmatprep.subr.bf16.mxu0 0
      %3522 = vmatpush1.bf16.msra.mxu0 0
      %3523 = vmatprep.mubr.bf16.mxu0 0
      %3524 = vmatmul.mubr.bf16.gmra.mrb[0].mxu0 %v3483
      %v3525 = vpop.f32.mrb[0].mxu0
      %v3526 = vadd.f32 0.0, %v3525
      %v3527 = vpop.f32.mrb[0].mxu0
      %v3528 = vpop.f32.mrb[0].mxu0
      %v3529 = vadd.f32 0.0, %v3528
      %v3530 = vpop.f32.mrb[0].mxu0
      %3531 = vmatprep.mubr.bf16.mxu0 0
      %3532 = vmatmul.mubr.bf16.gmra.mrb[0].mxu0 %v3486
      %v3533 = vpop.f32.mrb[0].mxu0
      %v3534 = vadd.f32 0.0, %v3533
      %v3535 = vpop.f32.mrb[0].mxu0
      %v3536 = vpop.f32.mrb[0].mxu0
      %v3537 = vpop.f32.mrb[0].mxu0
      %3538 = vdwg.mxu0
      %v3540 = vsel %vm923, %v3476, 0
      %v3543 = vsel %vm923, %v3477, 0
      %v3546 = vsel %vm1594, %v3478, 0
      %3548 = vmatprep.subr.bf16.mxu0 0
      %3549 = vmatpush1.bf16.msra.mxu0 %v3546
      %3550 = vmatprep.subr.bf16.mxu0 0
      %3551 = vmatpush1.bf16.msra.mxu0 0
      %3552 = vmatprep.subr.bf16.mxu0 0
      %3553 = vmatpush1.bf16.msra.mxu0 0
      %3554 = vmatprep.subr.bf16.mxu0 0
      %3555 = vmatpush1.bf16.msra.mxu0 0
      %3556 = vmatprep.subr.bf16.mxu0 0
      %3557 = vmatpush1.bf16.msra.mxu0 0
      %3558 = vmatprep.subr.bf16.mxu0 0
      %3559 = vmatpush1.bf16.msra.mxu0 0
      %3560 = vmatprep.subr.bf16.mxu0 0
      %3561 = vmatpush1.bf16.msra.mxu0 0
      %3562 = vmatprep.subr.bf16.mxu0 0
      %3563 = vmatpush1.bf16.msra.mxu0 0
      %3564 = vmatprep.subr.bf16.mxu0 0
      %3565 = vmatpush1.bf16.msra.mxu0 0
      %3566 = vmatprep.subr.bf16.mxu0 0
      %3567 = vmatpush1.bf16.msra.mxu0 0
      %3568 = vmatprep.subr.bf16.mxu0 0
      %3569 = vmatpush1.bf16.msra.mxu0 0
      %3570 = vmatprep.subr.bf16.mxu0 0
      %3571 = vmatpush1.bf16.msra.mxu0 0
      %3572 = vmatprep.subr.bf16.mxu0 0
      %3573 = vmatpush1.bf16.msra.mxu0 0
      %3574 = vmatprep.subr.bf16.mxu0 0
      %3575 = vmatpush1.bf16.msra.mxu0 0
      %3576 = vmatprep.subr.bf16.mxu0 0
      %3577 = vmatpush1.bf16.msra.mxu0 0
      %3578 = vmatprep.subr.bf16.mxu0 0
      %3579 = vmatpush1.bf16.msra.mxu0 0
      %3580 = vmatprep.mubr.bf16.mxu0 0
      %3581 = vmatmul.mubr.bf16.gmra.mrb[0].mxu0 %v3540
      %v3582 = vpop.f32.mrb[0].mxu0
      %v3583 = vadd.f32 %v3526, %v3582
      %v3584 = vpop.f32.mrb[0].mxu0
      %v3585 = vpop.f32.mrb[0].mxu0
      %v3586 = vadd.f32 %v3529, %v3585
      %v3587 = vpop.f32.mrb[0].mxu0
      %3588 = vmatprep.mubr.bf16.mxu0 0
      %3589 = vmatmul.mubr.bf16.gmra.mrb[0].mxu0 %v3543
      %v3590 = vpop.f32.mrb[0].mxu0
      %v3591 = vadd.f32 %v3534, %v3590
      %v3592 = vpop.f32.mrb[0].mxu0
      %v3593 = vpop.f32.mrb[0].mxu0
      %v3594 = vpop.f32.mrb[0].mxu0
      %3595 = vdwg.mxu0
      %v3596 = vpack.c.bf16 %v3404, %v3401
      %v3597 = vpack.c.bf16 %v3409, %v3409
      %v3598 = vld [vmem:[%s1705] sm:$0xf]
      %v3600 = vsel %vm923, %v3596, 0
      %v3603 = vsel %vm923, %v3597, 0
      %v3606 = vsel %vm1594, %v3598, 0
      %3608 = vmatprep.subr.bf16.mxu0 0
      %3609 = vmatpush1.bf16.msra.mxu0 %v3606
      %3610 = vmatprep.subr.bf16.mxu0 0
      %3611 = vmatpush1.bf16.msra.mxu0 0
      %3612 = vmatprep.subr.bf16.mxu0 0
      %3613 = vmatpush1.bf16.msra.mxu0 0
      %3614 = vmatprep.subr.bf16.mxu0 0
      %3615 = vmatpush1.bf16.msra.mxu0 0
      %3616 = vmatprep.subr.bf16.mxu0 0
      %3617 = vmatpush1.bf16.msra.mxu0 0
      %3618 = vmatprep.subr.bf16.mxu0 0
      %3619 = vmatpush1.bf16.msra.mxu0 0
      %3620 = vmatprep.subr.bf16.mxu0 0
      %3621 = vmatpush1.bf16.msra.mxu0 0
      %3622 = vmatprep.subr.bf16.mxu0 0
      %3623 = vmatpush1.bf16.msra.mxu0 0
      %3624 = vmatprep.subr.bf16.mxu0 0
      %3625 = vmatpush1.bf16.msra.mxu0 0
      %3626 = vmatprep.subr.bf16.mxu0 0
      %3627 = vmatpush1.bf16.msra.mxu0 0
      %3628 = vmatprep.subr.bf16.mxu0 0
      %3629 = vmatpush1.bf16.msra.mxu0 0
      %3630 = vmatprep.subr.bf16.mxu0 0
      %3631 = vmatpush1.bf16.msra.mxu0 0
      %3632 = vmatprep.subr.bf16.mxu0 0
      %3633 = vmatpush1.bf16.msra.mxu0 0
      %3634 = vmatprep.subr.bf16.mxu0 0
      %3635 = vmatpush1.bf16.msra.mxu0 0
      %3636 = vmatprep.subr.bf16.mxu0 0
      %3637 = vmatpush1.bf16.msra.mxu0 0
      %3638 = vmatprep.subr.bf16.mxu0 0
      %3639 = vmatpush1.bf16.msra.mxu0 0
      %3640 = vmatprep.mubr.bf16.mxu0 0
      %3641 = vmatmul.mubr.bf16.gmra.mrb[0].mxu0 %v3600
      %v3642 = vpop.f32.mrb[0].mxu0
      %v3643 = vadd.f32 0.0, %v3642
      %v3644 = vpop.f32.mrb[0].mxu0
      %v3645 = vpop.f32.mrb[0].mxu0
      %v3646 = vadd.f32 0.0, %v3645
      %v3647 = vpop.f32.mrb[0].mxu0
      %3648 = vmatprep.mubr.bf16.mxu0 0
      %3649 = vmatmul.mubr.bf16.gmra.mrb[0].mxu0 %v3603
      %v3650 = vpop.f32.mrb[0].mxu0
      %v3651 = vadd.f32 0.0, %v3650
      %v3652 = vpop.f32.mrb[0].mxu0
      %v3653 = vpop.f32.mrb[0].mxu0
      %v3654 = vpop.f32.mrb[0].mxu0
      %3655 = vdwg.mxu0
      %v3656 = vadd.f32 %v3583, %v3643
      %v3657 = vadd.f32 %v3586, %v3646
      %v3658 = vadd.f32 %v3591, %v3651
      %v3659 = vpack.c.bf16 %v3466, %v3463
      %v3660 = vpack.c.bf16 %v3471, %v3471
      %v3661 = vld [vmem:[%s1769] sm:$0xf]
      %v3663 = vsel %vm923, %v3659, 0
      %v3666 = vsel %vm923, %v3660, 0
      %v3669 = vsel %vm1594, %v3661, 0
      %3671 = vmatprep.subr.bf16.mxu0 0
      %3672 = vmatpush1.bf16.msra.mxu0 %v3669
      %3673 = vmatprep.subr.bf16.mxu0 0
      %3674 = vmatpush1.bf16.msra.mxu0 0
      %3675 = vmatprep.subr.bf16.mxu0 0
      %3676 = vmatpush1.bf16.msra.mxu0 0
      %3677 = vmatprep.subr.bf16.mxu0 0
      %3678 = vmatpush1.bf16.msra.mxu0 0
      %3679 = vmatprep.subr.bf16.mxu0 0
      %3680 = vmatpush1.bf16.msra.mxu0 0
      %3681 = vmatprep.subr.bf16.mxu0 0
      %3682 = vmatpush1.bf16.msra.mxu0 0
      %3683 = vmatprep.subr.bf16.mxu0 0
      %3684 = vmatpush1.bf16.msra.mxu0 0
      %3685 = vmatprep.subr.bf16.mxu0 0
      %3686 = vmatpush1.bf16.msra.mxu0 0
      %3687 = vmatprep.subr.bf16.mxu0 0
      %3688 = vmatpush1.bf16.msra.mxu0 0
      %3689 = vmatprep.subr.bf16.mxu0 0
      %3690 = vmatpush1.bf16.msra.mxu0 0
      %3691 = vmatprep.subr.bf16.mxu0 0
      %3692 = vmatpush1.bf16.msra.mxu0 0
      %3693 = vmatprep.subr.bf16.mxu0 0
      %3694 = vmatpush1.bf16.msra.mxu0 0
      %3695 = vmatprep.subr.bf16.mxu0 0
      %3696 = vmatpush1.bf16.msra.mxu0 0
      %3697 = vmatprep.subr.bf16.mxu0 0
      %3698 = vmatpush1.bf16.msra.mxu0 0
      %3699 = vmatprep.subr.bf16.mxu0 0
      %3700 = vmatpush1.bf16.msra.mxu0 0
      %3701 = vmatprep.subr.bf16.mxu0 0
      %3702 = vmatpush1.bf16.msra.mxu0 0
      %3703 = vmatprep.mubr.bf16.mxu0 0
      %3704 = vmatmul.mubr.bf16.gmra.mrb[0].mxu0 %v3663
      %v3705 = vpop.f32.mrb[0].mxu0
      %v3706 = vadd.f32 0.0, %v3705
      %v3707 = vpop.f32.mrb[0].mxu0
      %v3708 = vpop.f32.mrb[0].mxu0
      %v3709 = vadd.f32 0.0, %v3708
      %v3710 = vpop.f32.mrb[0].mxu0
      %3711 = vmatprep.mubr.bf16.mxu0 0
      %3712 = vmatmul.mubr.bf16.gmra.mrb[0].mxu0 %v3666
      %v3713 = vpop.f32.mrb[0].mxu0
      %v3714 = vadd.f32 0.0, %v3713
      %v3715 = vpop.f32.mrb[0].mxu0
      %v3716 = vpop.f32.mrb[0].mxu0
      %v3717 = vpop.f32.mrb[0].mxu0
      %3718 = vdwg.mxu0
      %v3719 = vadd.f32 %v3656, %v3706
      %v3720 = vadd.f32 %v3657, %v3709
      %v3721 = vadd.f32 %v3658, %v3714
      %3722 = vst.msk [vmem:[#allocation2 + $0x22] sm:$0xff] %vm462, %v3719
      %3723 = vst.msk [vmem:[#allocation2 + $0x2a] sm:$0xff] %vm462, %v3720
      %3724 = vst.msk [vmem:[#allocation2 + $0x32] sm:$0x1] %vm1833, %v3721
      %3726 = vrot.lane.b32.xlu0 %v900, 120
      %v3727 = vpop.permute.xlu0 %3726
      %3728 = vrot.lane.b32.xlu0 %v900, 112
      %v3729 = vpop.permute.xlu0 %3728
      %3730 = vrot.lane.b32.xlu0 %v900, 104
      %v3731 = vpop.permute.xlu0 %3730
      %vm3732 = vsmask.f32 6400
      %v3734 = vshrl.u32 %v899, 16
      %v3736 = vrot.slane %v3734, 1
      %v3737 = vshll.u32 %v899, 16
      %v3739 = vrot.slane %v3737, 2
      %v3740 = vor.u32 %v3736, %v3739
      %v3742 = vshrl.u32 %v900, 16
      %v3744 = vrot.slane %v3742, 1
      %v3745 = vshll.u32 %v900, 16
      %v3747 = vrot.slane %v3745, 2
      %v3748 = vor.u32 %v3744, %v3747
      %v3749 = vsel %vm3732, %v3740, %v3748
      %3750 = vrot.lane.b32.xlu0 %v3749, 96
      %v3751 = vpop.permute.xlu0 %3750
      %3752 = vrot.lane.b32.xlu0 %v3744, 96
      %v3753 = vpop.permute.xlu0 %3752
      %v3755 = vsel %vm923, %v3749, 0
      %v3758 = vsel %vm923, %v3744, 0
      %v3761 = vsel %vm923, %v3751, 0
      %v3764 = vsel %vm923, %v3753, 0
      %3766 = vmatprep.subr.bf16.mxu0 0
      %3767 = vmatpush1.bf16.xpose.msra.mxu0 %v3761
      %3768 = vmatprep.subr.bf16.mxu0 0
      %3769 = vmatpush1.bf16.xpose.msra.mxu0 %v3764
      %3770 = vmatprep.subr.bf16.mxu0 0
      %3771 = vmatpush1.bf16.xpose.msra.mxu0 0
      %3772 = vmatprep.subr.bf16.mxu0 0
      %3773 = vmatpush1.bf16.xpose.msra.mxu0 0
      %3774 = vmatprep.subr.bf16.mxu0 0
      %3775 = vmatpush1.bf16.xpose.msra.mxu0 0
      %3776 = vmatprep.subr.bf16.mxu0 0
      %3777 = vmatpush1.bf16.xpose.msra.mxu0 0
      %3778 = vmatprep.subr.bf16.mxu0 0
      %3779 = vmatpush1.bf16.xpose.msra.mxu0 0
      %3780 = vmatprep.subr.bf16.mxu0 0
      %3781 = vmatpush1.bf16.xpose.msra.mxu0 0
      %3782 = vmatprep.subr.bf16.mxu0 0
      %3783 = vmatpush1.bf16.xpose.msra.mxu0 0
      %3784 = vmatprep.subr.bf16.mxu0 0
      %3785 = vmatpush1.bf16.xpose.msra.mxu0 0
      %3786 = vmatprep.subr.bf16.mxu0 0
      %3787 = vmatpush1.bf16.xpose.msra.mxu0 0
      %3788 = vmatprep.subr.bf16.mxu0 0
      %3789 = vmatpush1.bf16.xpose.msra.mxu0 0
      %3790 = vmatprep.subr.bf16.mxu0 0
      %3791 = vmatpush1.bf16.xpose.msra.mxu0 0
      %3792 = vmatprep.subr.bf16.mxu0 0
      %3793 = vmatpush1.bf16.xpose.msra.mxu0 0
      %3794 = vmatprep.subr.bf16.mxu0 0
      %3795 = vmatpush1.bf16.xpose.msra.mxu0 0
      %3796 = vmatprep.subr.bf16.mxu0 0
      %3797 = vmatpush1.bf16.xpose.msra.mxu0 0
      %3798 = vmatprep.mubr.bf16.mxu0 0
      %3799 = vmatmul.mubr.bf16.gmra.mrb[0].mxu0 %v3755
      %v3800 = vpop.f32.mrb[0].mxu0
      %v3801 = vadd.f32 0.0, %v3800
      %v3802 = vpop.f32.mrb[0].mxu0
      %v3803 = vpop.f32.mrb[0].mxu0
      %v3804 = vadd.f32 0.0, %v3803
      %v3805 = vpop.f32.mrb[0].mxu0
      %3806 = vmatprep.mubr.bf16.mxu0 0
      %3807 = vmatmul.mubr.bf16.gmra.mrb[0].mxu0 %v3758
      %v3808 = vpop.f32.mrb[0].mxu0
      %v3809 = vadd.f32 0.0, %v3808
      %v3810 = vpop.f32.mrb[0].mxu0
      %v3811 = vpop.f32.mrb[0].mxu0
      %v3812 = vpop.f32.mrb[0].mxu0
      %3813 = vdwg.mxu0
      %v3815 = vshrl.u32 %v2802, 16
      %v3817 = vrot.slane %v3815, 1
      %v3818 = vshll.u32 %v2802, 16
      %v3820 = vrot.slane %v3818, 2
      %v3821 = vor.u32 %v3817, %v3820
      %v3823 = vshrl.u32 %v3727, 16
      %v3825 = vrot.slane %v3823, 1
      %v3826 = vshll.u32 %v3727, 16
      %v3828 = vrot.slane %v3826, 2
      %v3829 = vor.u32 %v3825, %v3828
      %v3830 = vsel %vm3732, %v3821, %v3829
      %3831 = vrot.lane.b32.xlu0 %v3830, 96
      %v3832 = vpop.permute.xlu0 %3831
      %3833 = vrot.lane.b32.xlu0 %v3825, 96
      %v3834 = vpop.permute.xlu0 %3833
      %v3836 = vsel %vm923, %v3830, 0
      %v3839 = vsel %vm923, %v3825, 0
      %v3842 = vsel %vm923, %v3832, 0
      %v3845 = vsel %vm923, %v3834, 0
      %3847 = vmatprep.subr.bf16.mxu0 0
      %3848 = vmatpush1.bf16.xpose.msra.mxu0 %v3842
      %3849 = vmatprep.subr.bf16.mxu0 0
      %3850 = vmatpush1.bf16.xpose.msra.mxu0 %v3845
      %3851 = vmatprep.subr.bf16.mxu0 0
      %3852 = vmatpush1.bf16.xpose.msra.mxu0 0
      %3853 = vmatprep.subr.bf16.mxu0 0
      %3854 = vmatpush1.bf16.xpose.msra.mxu0 0
      %3855 = vmatprep.subr.bf16.mxu0 0
      %3856 = vmatpush1.bf16.xpose.msra.mxu0 0
      %3857 = vmatprep.subr.bf16.mxu0 0
      %3858 = vmatpush1.bf16.xpose.msra.mxu0 0
      %3859 = vmatprep.subr.bf16.mxu0 0
      %3860 = vmatpush1.bf16.xpose.msra.mxu0 0
      %3861 = vmatprep.subr.bf16.mxu0 0
      %3862 = vmatpush1.bf16.xpose.msra.mxu0 0
      %3863 = vmatprep.subr.bf16.mxu0 0
      %3864 = vmatpush1.bf16.xpose.msra.mxu0 0
      %3865 = vmatprep.subr.bf16.mxu0 0
      %3866 = vmatpush1.bf16.xpose.msra.mxu0 0
      %3867 = vmatprep.subr.bf16.mxu0 0
      %3868 = vmatpush1.bf16.xpose.msra.mxu0 0
      %3869 = vmatprep.subr.bf16.mxu0 0
      %3870 = vmatpush1.bf16.xpose.msra.mxu0 0
      %3871 = vmatprep.subr.bf16.mxu0 0
      %3872 = vmatpush1.bf16.xpose.msra.mxu0 0
      %3873 = vmatprep.subr.bf16.mxu0 0
      %3874 = vmatpush1.bf16.xpose.msra.mxu0 0
      %3875 = vmatprep.subr.bf16.mxu0 0
      %3876 = vmatpush1.bf16.xpose.msra.mxu0 0
      %3877 = vmatprep.subr.bf16.mxu0 0
      %3878 = vmatpush1.bf16.xpose.msra.mxu0 0
      %3879 = vmatprep.mubr.bf16.mxu0 0
      %3880 = vmatmul.mubr.bf16.gmra.mrb[0].mxu0 %v3836
      %v3881 = vpop.f32.mrb[0].mxu0
      %v3882 = vadd.f32 0.0, %v3881
      %v3883 = vpop.f32.mrb[0].mxu0
      %v3884 = vpop.f32.mrb[0].mxu0
      %v3885 = vadd.f32 0.0, %v3884
      %v3886 = vpop.f32.mrb[0].mxu0
      %3887 = vmatprep.mubr.bf16.mxu0 0
      %3888 = vmatmul.mubr.bf16.gmra.mrb[0].mxu0 %v3839
      %v3889 = vpop.f32.mrb[0].mxu0
      %v3890 = vadd.f32 0.0, %v3889
      %v3891 = vpop.f32.mrb[0].mxu0
      %v3892 = vpop.f32.mrb[0].mxu0
      %v3893 = vpop.f32.mrb[0].mxu0
      %3894 = vdwg.mxu0
      %v3896 = vshrl.u32 %v2804, 16
      %v3898 = vrot.slane %v3896, 1
      %v3899 = vshll.u32 %v2804, 16
      %v3901 = vrot.slane %v3899, 2
      %v3902 = vor.u32 %v3898, %v3901
      %v3904 = vshrl.u32 %v3729, 16
      %v3906 = vrot.slane %v3904, 1
      %v3907 = vshll.u32 %v3729, 16
      %v3909 = vrot.slane %v3907, 2
      %v3910 = vor.u32 %v3906, %v3909
      %v3911 = vsel %vm3732, %v3902, %v3910
      %3912 = vrot.lane.b32.xlu0 %v3911, 96
      %v3913 = vpop.permute.xlu0 %3912
      %3914 = vrot.lane.b32.xlu0 %v3906, 96
      %v3915 = vpop.permute.xlu0 %3914
      %v3917 = vsel %vm923, %v3911, 0
      %v3920 = vsel %vm923, %v3906, 0
      %v3923 = vsel %vm923, %v3913, 0
      %v3926 = vsel %vm923, %v3915, 0
      %3928 = vmatprep.subr.bf16.mxu0 0
      %3929 = vmatpush1.bf16.xpose.msra.mxu0 %v3923
      %3930 = vmatprep.subr.bf16.mxu0 0
      %3931 = vmatpush1.bf16.xpose.msra.mxu0 %v3926
      %3932 = vmatprep.subr.bf16.mxu0 0
      %3933 = vmatpush1.bf16.xpose.msra.mxu0 0
      %3934 = vmatprep.subr.bf16.mxu0 0
      %3935 = vmatpush1.bf16.xpose.msra.mxu0 0
      %3936 = vmatprep.subr.bf16.mxu0 0
      %3937 = vmatpush1.bf16.xpose.msra.mxu0 0
      %3938 = vmatprep.subr.bf16.mxu0 0
      %3939 = vmatpush1.bf16.xpose.msra.mxu0 0
      %3940 = vmatprep.subr.bf16.mxu0 0
      %3941 = vmatpush1.bf16.xpose.msra.mxu0 0
      %3942 = vmatprep.subr.bf16.mxu0 0
      %3943 = vmatpush1.bf16.xpose.msra.mxu0 0
      %3944 = vmatprep.subr.bf16.mxu0 0
      %3945 = vmatpush1.bf16.xpose.msra.mxu0 0
      %3946 = vmatprep.subr.bf16.mxu0 0
      %3947 = vmatpush1.bf16.xpose.msra.mxu0 0
      %3948 = vmatprep.subr.bf16.mxu0 0
      %3949 = vmatpush1.bf16.xpose.msra.mxu0 0
      %3950 = vmatprep.subr.bf16.mxu0 0
      %3951 = vmatpush1.bf16.xpose.msra.mxu0 0
      %3952 = vmatprep.subr.bf16.mxu0 0
      %3953 = vmatpush1.bf16.xpose.msra.mxu0 0
      %3954 = vmatprep.subr.bf16.mxu0 0
      %3955 = vmatpush1.bf16.xpose.msra.mxu0 0
      %3956 = vmatprep.subr.bf16.mxu0 0
      %3957 = vmatpush1.bf16.xpose.msra.mxu0 0
      %3958 = vmatprep.subr.bf16.mxu0 0
      %3959 = vmatpush1.bf16.xpose.msra.mxu0 0
      %3960 = vmatprep.mubr.bf16.mxu0 0
      %3961 = vmatmul.mubr.bf16.gmra.mrb[0].mxu0 %v3917
      %v3962 = vpop.f32.mrb[0].mxu0
      %v3963 = vadd.f32 0.0, %v3962
      %v3964 = vpop.f32.mrb[0].mxu0
      %v3965 = vpop.f32.mrb[0].mxu0
      %v3966 = vadd.f32 0.0, %v3965
      %v3967 = vpop.f32.mrb[0].mxu0
      %3968 = vmatprep.mubr.bf16.mxu0 0
      %3969 = vmatmul.mubr.bf16.gmra.mrb[0].mxu0 %v3920
      %v3970 = vpop.f32.mrb[0].mxu0
      %v3971 = vadd.f32 0.0, %v3970
      %v3972 = vpop.f32.mrb[0].mxu0
      %v3973 = vpop.f32.mrb[0].mxu0
      %v3974 = vpop.f32.mrb[0].mxu0
      %3975 = vdwg.mxu0
      %v3977 = vshrl.u32 %v2806, 16
      %v3979 = vrot.slane %v3977, 1
      %v3980 = vshll.u32 %v2806, 16
      %v3982 = vrot.slane %v3980, 2
      %v3983 = vor.u32 %v3979, %v3982
      %v3985 = vshrl.u32 %v3731, 16
      %v3987 = vrot.slane %v3985, 1
      %v3988 = vshll.u32 %v3731, 16
      %v3990 = vrot.slane %v3988, 2
      %v3991 = vor.u32 %v3987, %v3990
      %v3992 = vsel %vm3732, %v3983, %v3991
      %3993 = vrot.lane.b32.xlu0 %v3992, 96
      %v3994 = vpop.permute.xlu0 %3993
      %3995 = vrot.lane.b32.xlu0 %v3987, 96
      %v3996 = vpop.permute.xlu0 %3995
      %v3998 = vsel %vm923, %v3992, 0
      %v4001 = vsel %vm923, %v3987, 0
      %v4004 = vsel %vm923, %v3994, 0
      %v4007 = vsel %vm923, %v3996, 0
      %4009 = vmatprep.subr.bf16.mxu0 0
      %4010 = vmatpush1.bf16.xpose.msra.mxu0 %v4004
      %4011 = vmatprep.subr.bf16.mxu0 0
      %4012 = vmatpush1.bf16.xpose.msra.mxu0 %v4007
      %4013 = vmatprep.subr.bf16.mxu0 0
      %4014 = vmatpush1.bf16.xpose.msra.mxu0 0
      %4015 = vmatprep.subr.bf16.mxu0 0
      %4016 = vmatpush1.bf16.xpose.msra.mxu0 0
      %4017 = vmatprep.subr.bf16.mxu0 0
      %4018 = vmatpush1.bf16.xpose.msra.mxu0 0
      %4019 = vmatprep.subr.bf16.mxu0 0
      %4020 = vmatpush1.bf16.xpose.msra.mxu0 0
      %4021 = vmatprep.subr.bf16.mxu0 0
      %4022 = vmatpush1.bf16.xpose.msra.mxu0 0
      %4023 = vmatprep.subr.bf16.mxu0 0
      %4024 = vmatpush1.bf16.xpose.msra.mxu0 0
      %4025 = vmatprep.subr.bf16.mxu0 0
      %4026 = vmatpush1.bf16.xpose.msra.mxu0 0
      %4027 = vmatprep.subr.bf16.mxu0 0
      %4028 = vmatpush1.bf16.xpose.msra.mxu0 0
      %4029 = vmatprep.subr.bf16.mxu0 0
      %4030 = vmatpush1.bf16.xpose.msra.mxu0 0
      %4031 = vmatprep.subr.bf16.mxu0 0
      %4032 = vmatpush1.bf16.xpose.msra.mxu0 0
      %4033 = vmatprep.subr.bf16.mxu0 0
      %4034 = vmatpush1.bf16.xpose.msra.mxu0 0
      %4035 = vmatprep.subr.bf16.mxu0 0
      %4036 = vmatpush1.bf16.xpose.msra.mxu0 0
      %4037 = vmatprep.subr.bf16.mxu0 0
      %4038 = vmatpush1.bf16.xpose.msra.mxu0 0
      %4039 = vmatprep.subr.bf16.mxu0 0
      %4040 = vmatpush1.bf16.xpose.msra.mxu0 0
      %4041 = vmatprep.mubr.bf16.mxu0 0
      %4042 = vmatmul.mubr.bf16.gmra.mrb[0].mxu0 %v3998
      %v4043 = vpop.f32.mrb[0].mxu0
      %v4044 = vadd.f32 0.0, %v4043
      %v4045 = vpop.f32.mrb[0].mxu0
      %v4046 = vpop.f32.mrb[0].mxu0
      %v4047 = vadd.f32 0.0, %v4046
      %v4048 = vpop.f32.mrb[0].mxu0
      %4049 = vmatprep.mubr.bf16.mxu0 0
      %4050 = vmatmul.mubr.bf16.gmra.mrb[0].mxu0 %v4001
      %v4051 = vpop.f32.mrb[0].mxu0
      %v4052 = vadd.f32 0.0, %v4051
      %v4053 = vpop.f32.mrb[0].mxu0
      %v4054 = vpop.f32.mrb[0].mxu0
      %v4055 = vpop.f32.mrb[0].mxu0
      %4056 = vdwg.mxu0
      %v4057 = vmul.f32 %v3801, 0.35355338
      %v4058 = vmul.f32 %v3804, 0.35355338
      %v4059 = vmul.f32 %v3809, 0.35355338
      %v4060 = vmul.f32 %v3882, 0.35355338
      %v4061 = vmul.f32 %v3885, 0.35355338
      %v4062 = vmul.f32 %v3890, 0.35355338
      %v4063 = vmul.f32 %v3963, 0.35355338
      %v4064 = vmul.f32 %v3966, 0.35355338
      %v4065 = vmul.f32 %v3971, 0.35355338
      %v4066 = vmul.f32 %v4044, 0.35355338
      %v4067 = vmul.f32 %v4047, 0.35355338
      %v4068 = vmul.f32 %v4052, 0.35355338
      %v4069 = vsel %vm1188, %v4057, -inf
      %4070 = vmax.xlane.f32.xlu0 %v4069
      %v4071 = vpop.xlane.xlu0 %4070
      %v4072 = vsel %vm1188, %v4058, -inf
      %4073 = vmax.xlane.f32.xlu0 %v4072
      %v4074 = vpop.xlane.xlu0 %4073
      %v4075 = vsel %vm1195, %v4059, -inf
      %4076 = vmax.xlane.f32.xlu0 %v4075
      %v4077 = vpop.xlane.xlu0 %4076
      %v4078 = vsel %vm1188, %v4060, -inf
      %4079 = vmax.xlane.f32.xlu0 %v4078
      %v4080 = vpop.xlane.xlu0 %4079
      %v4081 = vsel %vm1188, %v4061, -inf
      %4082 = vmax.xlane.f32.xlu0 %v4081
      %v4083 = vpop.xlane.xlu0 %4082
      %v4084 = vsel %vm1195, %v4062, -inf
      %4085 = vmax.xlane.f32.xlu0 %v4084
      %v4086 = vpop.xlane.xlu0 %4085
      %v4087 = vsel %vm1188, %v4063, -inf
      %4088 = vmax.xlane.f32.xlu0 %v4087
      %v4089 = vpop.xlane.xlu0 %4088
      %v4090 = vsel %vm1188, %v4064, -inf
      %4091 = vmax.xlane.f32.xlu0 %v4090
      %v4092 = vpop.xlane.xlu0 %4091
      %v4093 = vsel %vm1195, %v4065, -inf
      %4094 = vmax.xlane.f32.xlu0 %v4093
      %v4095 = vpop.xlane.xlu0 %4094
      %v4096 = vsel %vm1188, %v4066, -inf
      %4097 = vmax.xlane.f32.xlu0 %v4096
      %v4098 = vpop.xlane.xlu0 %4097
      %v4099 = vsel %vm1188, %v4067, -inf
      %4100 = vmax.xlane.f32.xlu0 %v4099
      %v4101 = vpop.xlane.xlu0 %4100
      %v4102 = vsel %vm1195, %v4068, -inf
      %4103 = vmax.xlane.f32.xlu0 %v4102
      %v4104 = vpop.xlane.xlu0 %4103
      %v4105 = vsub.f32 %v4057, %v4071
      %v4106 = vsub.f32 %v4058, %v4074
      %v4107 = vsub.f32 %v4059, %v4077
      %v4108 = vsub.f32 %v4060, %v4080
      %v4109 = vsub.f32 %v4061, %v4083
      %v4110 = vsub.f32 %v4062, %v4086
      %v4111 = vsub.f32 %v4063, %v4089
      %v4112 = vsub.f32 %v4064, %v4092
      %v4113 = vsub.f32 %v4065, %v4095
      %v4114 = vsub.f32 %v4066, %v4098
      %v4115 = vsub.f32 %v4067, %v4101
      %v4116 = vsub.f32 %v4068, %v4104
      %v4117 = vmul.f32 %v4105, 1.442695
      %v4118 = vpow.pop %v4117
      %v4119 = vmul.f32 %v4106, 1.442695
      %v4120 = vpow.pop %v4119
      %v4121 = vmul.f32 %v4107, 1.442695
      %v4122 = vpow.pop %v4121
      %v4123 = vmul.f32 %v4108, 1.442695
      %v4124 = vpow.pop %v4123
      %v4125 = vmul.f32 %v4109, 1.442695
      %v4126 = vpow.pop %v4125
      %v4127 = vmul.f32 %v4110, 1.442695
      %v4128 = vpow.pop %v4127
      %v4129 = vmul.f32 %v4111, 1.442695
      %v4130 = vpow.pop %v4129
      %v4131 = vmul.f32 %v4112, 1.442695
      %v4132 = vpow.pop %v4131
      %v4133 = vmul.f32 %v4113, 1.442695
      %v4134 = vpow.pop %v4133
      %v4135 = vmul.f32 %v4114, 1.442695
      %v4136 = vpow.pop %v4135
      %v4137 = vmul.f32 %v4115, 1.442695
      %v4138 = vpow.pop %v4137
      %v4139 = vmul.f32 %v4116, 1.442695
      %v4140 = vpow.pop %v4139
      %v4141 = vsel %vm1188, %v4118, 0.0
      %4142 = vadd.xlane.f32.xlu0 %v4141
      %v4143 = vpop.xlane.xlu0 %4142
      %v4144 = vsel %vm1188, %v4120, 0.0
      %4145 = vadd.xlane.f32.xlu0 %v4144
      %v4146 = vpop.xlane.xlu0 %4145
      %v4147 = vsel %vm1195, %v4122, 0.0
      %4148 = vadd.xlane.f32.xlu0 %v4147
      %v4149 = vpop.xlane.xlu0 %4148
      %v4150 = vsel %vm1188, %v4124, 0.0
      %4151 = vadd.xlane.f32.xlu0 %v4150
      %v4152 = vpop.xlane.xlu0 %4151
      %v4153 = vsel %vm1188, %v4126, 0.0
      %4154 = vadd.xlane.f32.xlu0 %v4153
      %v4155 = vpop.xlane.xlu0 %4154
      %v4156 = vsel %vm1195, %v4128, 0.0
      %4157 = vadd.xlane.f32.xlu0 %v4156
      %v4158 = vpop.xlane.xlu0 %4157
      %v4159 = vsel %vm1188, %v4130, 0.0
      %4160 = vadd.xlane.f32.xlu0 %v4159
      %v4161 = vpop.xlane.xlu0 %4160
      %v4162 = vsel %vm1188, %v4132, 0.0
      %4163 = vadd.xlane.f32.xlu0 %v4162
      %v4164 = vpop.xlane.xlu0 %4163
      %v4165 = vsel %vm1195, %v4134, 0.0
      %4166 = vadd.xlane.f32.xlu0 %v4165
      %v4167 = vpop.xlane.xlu0 %4166
      %v4168 = vsel %vm1188, %v4136, 0.0
      %4169 = vadd.xlane.f32.xlu0 %v4168
      %v4170 = vpop.xlane.xlu0 %4169
      %v4171 = vsel %vm1188, %v4138, 0.0
      %4172 = vadd.xlane.f32.xlu0 %v4171
      %v4173 = vpop.xlane.xlu0 %4172
      %v4174 = vsel %vm1195, %v4140, 0.0
      %4175 = vadd.xlane.f32.xlu0 %v4174
      %v4176 = vpop.xlane.xlu0 %4175
      %v4177 = vrcp.pop %v4143
      %v4178 = vrcp.pop %v4146
      %v4179 = vrcp.pop %v4149
      %v4180 = vrcp.pop %v4152
      %v4181 = vrcp.pop %v4155
      %v4182 = vrcp.pop %v4158
      %v4183 = vrcp.pop %v4161
      %v4184 = vrcp.pop %v4164
      %v4185 = vrcp.pop %v4167
      %v4186 = vrcp.pop %v4170
      %v4187 = vrcp.pop %v4173
      %v4188 = vrcp.pop %v4176
      %v4189 = vmul.f32 %v4118, %v4177
      %v4190 = vmul.f32 %v4120, %v4178
      %v4191 = vmul.f32 %v4122, %v4179
      %v4192 = vmul.f32 %v4124, %v4180
      %v4193 = vmul.f32 %v4126, %v4181
      %v4194 = vmul.f32 %v4128, %v4182
      %v4195 = vmul.f32 %v4130, %v4183
      %v4196 = vmul.f32 %v4132, %v4184
      %v4197 = vmul.f32 %v4134, %v4185
      %v4198 = vmul.f32 %v4136, %v4186
      %v4199 = vmul.f32 %v4138, %v4187
      %v4200 = vmul.f32 %v4140, %v4188
      %v4201 = vpack.c.bf16 %v4190, %v4189
      %v4202 = vpack.c.bf16 %v4191, %v4191
      %v4203 = vpack.c.bf16 %v4193, %v4192
      %v4204 = vpack.c.bf16 %v4194, %v4194
      %v4205 = vpack.c.bf16 %v4196, %v4195
      %v4206 = vpack.c.bf16 %v4197, %v4197
      %v4207 = vpack.c.bf16 %v4199, %v4198
      %v4208 = vpack.c.bf16 %v4200, %v4200
      %4209 = vrot.lane.b32.xlu0 %v3749, 64
      %v4210 = vpop.permute.xlu0 %4209
      %4211 = vrot.lane.b32.xlu0 %v3744, 64
      %v4212 = vpop.permute.xlu0 %4211
      %v4215 = vsel %vm1188, %v4201, 0
      %v4218 = vsel %vm1188, %v4202, 0
      %v4221 = vand.u32 %v4212, %v1343
      %4223 = vmatprep.subr.bf16.mxu0 0
      %4224 = vmatpush1.bf16.msra.mxu0 %v4210
      %4225 = vmatprep.subr.bf16.mxu0 0
      %4226 = vmatpush1.bf16.msra.mxu0 %v4221
      %4227 = vmatprep.subr.bf16.mxu0 0
      %4228 = vmatpush1.bf16.msra.mxu0 0
      %4229 = vmatprep.subr.bf16.mxu0 0
      %4230 = vmatpush1.bf16.msra.mxu0 0
      %4231 = vmatprep.subr.bf16.mxu0 0
      %4232 = vmatpush1.bf16.msra.mxu0 0
      %4233 = vmatprep.subr.bf16.mxu0 0
      %4234 = vmatpush1.bf16.msra.mxu0 0
      %4235 = vmatprep.subr.bf16.mxu0 0
      %4236 = vmatpush1.bf16.msra.mxu0 0
      %4237 = vmatprep.subr.bf16.mxu0 0
      %4238 = vmatpush1.bf16.msra.mxu0 0
      %4239 = vmatprep.subr.bf16.mxu0 0
      %4240 = vmatpush1.bf16.msra.mxu0 0
      %4241 = vmatprep.subr.bf16.mxu0 0
      %4242 = vmatpush1.bf16.msra.mxu0 0
      %4243 = vmatprep.subr.bf16.mxu0 0
      %4244 = vmatpush1.bf16.msra.mxu0 0
      %4245 = vmatprep.subr.bf16.mxu0 0
      %4246 = vmatpush1.bf16.msra.mxu0 0
      %4247 = vmatprep.subr.bf16.mxu0 0
      %4248 = vmatpush1.bf16.msra.mxu0 0
      %4249 = vmatprep.subr.bf16.mxu0 0
      %4250 = vmatpush1.bf16.msra.mxu0 0
      %4251 = vmatprep.subr.bf16.mxu0 0
      %4252 = vmatpush1.bf16.msra.mxu0 0
      %4253 = vmatprep.subr.bf16.mxu0 0
      %4254 = vmatpush1.bf16.msra.mxu0 0
      %4255 = vmatprep.mubr.bf16.mxu0 0
      %4256 = vmatmul.mubr.bf16.gmra.mrb[0].mxu0 %v4215
      %v4257 = vpop.f32.mrb[0].mxu0
      %v4258 = vadd.f32 0.0, %v4257
      %v4259 = vpop.f32.mrb[0].mxu0
      %v4260 = vpop.f32.mrb[0].mxu0
      %v4261 = vadd.f32 0.0, %v4260
      %v4262 = vpop.f32.mrb[0].mxu0
      %4263 = vmatprep.mubr.bf16.mxu0 0
      %4264 = vmatmul.mubr.bf16.gmra.mrb[0].mxu0 %v4218
      %v4265 = vpop.f32.mrb[0].mxu0
      %v4266 = vadd.f32 0.0, %v4265
      %v4267 = vpop.f32.mrb[0].mxu0
      %v4268 = vpop.f32.mrb[0].mxu0
      %v4269 = vpop.f32.mrb[0].mxu0
      %4270 = vdwg.mxu0
      %4271 = vrot.lane.b32.xlu0 %v3830, 64
      %v4272 = vpop.permute.xlu0 %4271
      %4273 = vrot.lane.b32.xlu0 %v3825, 64
      %v4274 = vpop.permute.xlu0 %4273
      %v4277 = vsel %vm1188, %v4203, 0
      %v4280 = vsel %vm1188, %v4204, 0
      %v4283 = vand.u32 %v4274, %v1343
      %4285 = vmatprep.subr.bf16.mxu0 0
      %4286 = vmatpush1.bf16.msra.mxu0 %v4272
      %4287 = vmatprep.subr.bf16.mxu0 0
      %4288 = vmatpush1.bf16.msra.mxu0 %v4283
      %4289 = vmatprep.subr.bf16.mxu0 0
      %4290 = vmatpush1.bf16.msra.mxu0 0
      %4291 = vmatprep.subr.bf16.mxu0 0
      %4292 = vmatpush1.bf16.msra.mxu0 0
      %4293 = vmatprep.subr.bf16.mxu0 0
      %4294 = vmatpush1.bf16.msra.mxu0 0
      %4295 = vmatprep.subr.bf16.mxu0 0
      %4296 = vmatpush1.bf16.msra.mxu0 0
      %4297 = vmatprep.subr.bf16.mxu0 0
      %4298 = vmatpush1.bf16.msra.mxu0 0
      %4299 = vmatprep.subr.bf16.mxu0 0
      %4300 = vmatpush1.bf16.msra.mxu0 0
      %4301 = vmatprep.subr.bf16.mxu0 0
      %4302 = vmatpush1.bf16.msra.mxu0 0
      %4303 = vmatprep.subr.bf16.mxu0 0
      %4304 = vmatpush1.bf16.msra.mxu0 0
      %4305 = vmatprep.subr.bf16.mxu0 0
      %4306 = vmatpush1.bf16.msra.mxu0 0
      %4307 = vmatprep.subr.bf16.mxu0 0
      %4308 = vmatpush1.bf16.msra.mxu0 0
      %4309 = vmatprep.subr.bf16.mxu0 0
      %4310 = vmatpush1.bf16.msra.mxu0 0
      %4311 = vmatprep.subr.bf16.mxu0 0
      %4312 = vmatpush1.bf16.msra.mxu0 0
      %4313 = vmatprep.subr.bf16.mxu0 0
      %4314 = vmatpush1.bf16.msra.mxu0 0
      %4315 = vmatprep.subr.bf16.mxu0 0
      %4316 = vmatpush1.bf16.msra.mxu0 0
      %4317 = vmatprep.mubr.bf16.mxu0 0
      %4318 = vmatmul.mubr.bf16.gmra.mrb[0].mxu0 %v4277
      %v4319 = vpop.f32.mrb[0].mxu0
      %v4320 = vadd.f32 0.0, %v4319
      %v4321 = vpop.f32.mrb[0].mxu0
      %v4322 = vpop.f32.mrb[0].mxu0
      %v4323 = vadd.f32 0.0, %v4322
      %v4324 = vpop.f32.mrb[0].mxu0
      %4325 = vmatprep.mubr.bf16.mxu0 0
      %4326 = vmatmul.mubr.bf16.gmra.mrb[0].mxu0 %v4280
      %v4327 = vpop.f32.mrb[0].mxu0
      %v4328 = vadd.f32 0.0, %v4327
      %v4329 = vpop.f32.mrb[0].mxu0
      %v4330 = vpop.f32.mrb[0].mxu0
      %v4331 = vpop.f32.mrb[0].mxu0
      %4332 = vdwg.mxu0
      %4333 = vrot.lane.b32.xlu0 %v3911, 64
      %v4334 = vpop.permute.xlu0 %4333
      %4335 = vrot.lane.b32.xlu0 %v3906, 64
      %v4336 = vpop.permute.xlu0 %4335
      %v4339 = vsel %vm1188, %v4205, 0
      %v4342 = vsel %vm1188, %v4206, 0
      %v4345 = vand.u32 %v4336, %v1343
      %4347 = vmatprep.subr.bf16.mxu0 0
      %4348 = vmatpush1.bf16.msra.mxu0 %v4334
      %4349 = vmatprep.subr.bf16.mxu0 0
      %4350 = vmatpush1.bf16.msra.mxu0 %v4345
      %4351 = vmatprep.subr.bf16.mxu0 0
      %4352 = vmatpush1.bf16.msra.mxu0 0
      %4353 = vmatprep.subr.bf16.mxu0 0
      %4354 = vmatpush1.bf16.msra.mxu0 0
      %4355 = vmatprep.subr.bf16.mxu0 0
      %4356 = vmatpush1.bf16.msra.mxu0 0
      %4357 = vmatprep.subr.bf16.mxu0 0
      %4358 = vmatpush1.bf16.msra.mxu0 0
      %4359 = vmatprep.subr.bf16.mxu0 0
      %4360 = vmatpush1.bf16.msra.mxu0 0
      %4361 = vmatprep.subr.bf16.mxu0 0
      %4362 = vmatpush1.bf16.msra.mxu0 0
      %4363 = vmatprep.subr.bf16.mxu0 0
      %4364 = vmatpush1.bf16.msra.mxu0 0
      %4365 = vmatprep.subr.bf16.mxu0 0
      %4366 = vmatpush1.bf16.msra.mxu0 0
      %4367 = vmatprep.subr.bf16.mxu0 0
      %4368 = vmatpush1.bf16.msra.mxu0 0
      %4369 = vmatprep.subr.bf16.mxu0 0
      %4370 = vmatpush1.bf16.msra.mxu0 0
      %4371 = vmatprep.subr.bf16.mxu0 0
      %4372 = vmatpush1.bf16.msra.mxu0 0
      %4373 = vmatprep.subr.bf16.mxu0 0
      %4374 = vmatpush1.bf16.msra.mxu0 0
      %4375 = vmatprep.subr.bf16.mxu0 0
      %4376 = vmatpush1.bf16.msra.mxu0 0
      %4377 = vmatprep.subr.bf16.mxu0 0
      %4378 = vmatpush1.bf16.msra.mxu0 0
      %4379 = vmatprep.mubr.bf16.mxu0 0
      %4380 = vmatmul.mubr.bf16.gmra.mrb[0].mxu0 %v4339
      %v4381 = vpop.f32.mrb[0].mxu0
      %v4382 = vadd.f32 0.0, %v4381
      %v4383 = vpop.f32.mrb[0].mxu0
      %v4384 = vpop.f32.mrb[0].mxu0
      %v4385 = vadd.f32 0.0, %v4384
      %v4386 = vpop.f32.mrb[0].mxu0
      %4387 = vmatprep.mubr.bf16.mxu0 0
      %4388 = vmatmul.mubr.bf16.gmra.mrb[0].mxu0 %v4342
      %v4389 = vpop.f32.mrb[0].mxu0
      %v4390 = vadd.f32 0.0, %v4389
      %v4391 = vpop.f32.mrb[0].mxu0
      %v4392 = vpop.f32.mrb[0].mxu0
      %v4393 = vpop.f32.mrb[0].mxu0
      %4394 = vdwg.mxu0
      %4395 = vrot.lane.b32.xlu0 %v3992, 64
      %v4396 = vpop.permute.xlu0 %4395
      %4397 = vrot.lane.b32.xlu0 %v3987, 64
      %v4398 = vpop.permute.xlu0 %4397
      %v4401 = vsel %vm1188, %v4207, 0
      %v4404 = vsel %vm1188, %v4208, 0
      %v4407 = vand.u32 %v4398, %v1343
      %4409 = vmatprep.subr.bf16.mxu0 0
      %4410 = vmatpush1.bf16.msra.mxu0 %v4396
      %4411 = vmatprep.subr.bf16.mxu0 0
      %4412 = vmatpush1.bf16.msra.mxu0 %v4407
      %4413 = vmatprep.subr.bf16.mxu0 0
      %4414 = vmatpush1.bf16.msra.mxu0 0
      %4415 = vmatprep.subr.bf16.mxu0 0
      %4416 = vmatpush1.bf16.msra.mxu0 0
      %4417 = vmatprep.subr.bf16.mxu0 0
      %4418 = vmatpush1.bf16.msra.mxu0 0
      %4419 = vmatprep.subr.bf16.mxu0 0
      %4420 = vmatpush1.bf16.msra.mxu0 0
      %4421 = vmatprep.subr.bf16.mxu0 0
      %4422 = vmatpush1.bf16.msra.mxu0 0
      %4423 = vmatprep.subr.bf16.mxu0 0
      %4424 = vmatpush1.bf16.msra.mxu0 0
      %4425 = vmatprep.subr.bf16.mxu0 0
      %4426 = vmatpush1.bf16.msra.mxu0 0
      %4427 = vmatprep.subr.bf16.mxu0 0
      %4428 = vmatpush1.bf16.msra.mxu0 0
      %4429 = vmatprep.subr.bf16.mxu0 0
      %4430 = vmatpush1.bf16.msra.mxu0 0
      %4431 = vmatprep.subr.bf16.mxu0 0
      %4432 = vmatpush1.bf16.msra.mxu0 0
      %4433 = vmatprep.subr.bf16.mxu0 0
      %4434 = vmatpush1.bf16.msra.mxu0 0
      %4435 = vmatprep.subr.bf16.mxu0 0
      %4436 = vmatpush1.bf16.msra.mxu0 0
      %4437 = vmatprep.subr.bf16.mxu0 0
      %4438 = vmatpush1.bf16.msra.mxu0 0
      %4439 = vmatprep.subr.bf16.mxu0 0
      %4440 = vmatpush1.bf16.msra.mxu0 0
      %4441 = vmatprep.mubr.bf16.mxu0 0
      %4442 = vmatmul.mubr.bf16.gmra.mrb[0].mxu0 %v4401
      %v4443 = vpop.f32.mrb[0].mxu0
      %v4444 = vadd.f32 0.0, %v4443
      %v4445 = vpop.f32.mrb[0].mxu0
      %v4446 = vpop.f32.mrb[0].mxu0
      %v4447 = vadd.f32 0.0, %v4446
      %v4448 = vpop.f32.mrb[0].mxu0
      %4449 = vmatprep.mubr.bf16.mxu0 0
      %4450 = vmatmul.mubr.bf16.gmra.mrb[0].mxu0 %v4404
      %v4451 = vpop.f32.mrb[0].mxu0
      %v4452 = vadd.f32 0.0, %v4451
      %v4453 = vpop.f32.mrb[0].mxu0
      %v4454 = vpop.f32.mrb[0].mxu0
      %v4455 = vpop.f32.mrb[0].mxu0
      %4456 = vdwg.mxu0
      %v4457 = vpack.c.bf16 %v4261, %v4258
      %v4458 = vpack.c.bf16 %v4266, %v4266
      %v4459 = vld [vmem:[%s5] sm:$0xf]
      %v4460 = vpack.c.bf16 %v4323, %v4320
      %v4461 = vpack.c.bf16 %v4328, %v4328
      %v4462 = vld [vmem:[%s1586] sm:$0xf]
      %v4464 = vsel %vm923, %v4460, 0
      %v4467 = vsel %vm923, %v4461, 0
      %v4470 = vsel %vm1594, %v4462, 0
      %4472 = vmatprep.subr.bf16.mxu0 0
      %4473 = vmatpush1.bf16.msra.mxu0 %v4470
      %4474 = vmatprep.subr.bf16.mxu0 0
      %4475 = vmatpush1.bf16.msra.mxu0 0
      %4476 = vmatprep.subr.bf16.mxu0 0
      %4477 = vmatpush1.bf16.msra.mxu0 0
      %4478 = vmatprep.subr.bf16.mxu0 0
      %4479 = vmatpush1.bf16.msra.mxu0 0
      %4480 = vmatprep.subr.bf16.mxu0 0
      %4481 = vmatpush1.bf16.msra.mxu0 0
      %4482 = vmatprep.subr.bf16.mxu0 0
      %4483 = vmatpush1.bf16.msra.mxu0 0
      %4484 = vmatprep.subr.bf16.mxu0 0
      %4485 = vmatpush1.bf16.msra.mxu0 0
      %4486 = vmatprep.subr.bf16.mxu0 0
      %4487 = vmatpush1.bf16.msra.mxu0 0
      %4488 = vmatprep.subr.bf16.mxu0 0
      %4489 = vmatpush1.bf16.msra.mxu0 0
      %4490 = vmatprep.subr.bf16.mxu0 0
      %4491 = vmatpush1.bf16.msra.mxu0 0
      %4492 = vmatprep.subr.bf16.mxu0 0
      %4493 = vmatpush1.bf16.msra.mxu0 0
      %4494 = vmatprep.subr.bf16.mxu0 0
      %4495 = vmatpush1.bf16.msra.mxu0 0
      %4496 = vmatprep.subr.bf16.mxu0 0
      %4497 = vmatpush1.bf16.msra.mxu0 0
      %4498 = vmatprep.subr.bf16.mxu0 0
      %4499 = vmatpush1.bf16.msra.mxu0 0
      %4500 = vmatprep.subr.bf16.mxu0 0
      %4501 = vmatpush1.bf16.msra.mxu0 0
      %4502 = vmatprep.subr.bf16.mxu0 0
      %4503 = vmatpush1.bf16.msra.mxu0 0
      %4504 = vmatprep.mubr.bf16.mxu0 0
      %4505 = vmatmul.mubr.bf16.gmra.mrb[0].mxu0 %v4464
      %v4506 = vpop.f32.mrb[0].mxu0
      %v4507 = vadd.f32 0.0, %v4506
      %v4508 = vpop.f32.mrb[0].mxu0
      %v4509 = vpop.f32.mrb[0].mxu0
      %v4510 = vadd.f32 0.0, %v4509
      %v4511 = vpop.f32.mrb[0].mxu0
      %4512 = vmatprep.mubr.bf16.mxu0 0
      %4513 = vmatmul.mubr.bf16.gmra.mrb[0].mxu0 %v4467
      %v4514 = vpop.f32.mrb[0].mxu0
      %v4515 = vadd.f32 0.0, %v4514
      %v4516 = vpop.f32.mrb[0].mxu0
      %v4517 = vpop.f32.mrb[0].mxu0
      %v4518 = vpop.f32.mrb[0].mxu0
      %4519 = vdwg.mxu0
      %v4521 = vsel %vm923, %v4457, 0
      %v4524 = vsel %vm923, %v4458, 0
      %v4527 = vsel %vm1594, %v4459, 0
      %4529 = vmatprep.subr.bf16.mxu0 0
      %4530 = vmatpush1.bf16.msra.mxu0 %v4527
      %4531 = vmatprep.subr.bf16.mxu0 0
      %4532 = vmatpush1.bf16.msra.mxu0 0
      %4533 = vmatprep.subr.bf16.mxu0 0
      %4534 = vmatpush1.bf16.msra.mxu0 0
      %4535 = vmatprep.subr.bf16.mxu0 0
      %4536 = vmatpush1.bf16.msra.mxu0 0
      %4537 = vmatprep.subr.bf16.mxu0 0
      %4538 = vmatpush1.bf16.msra.mxu0 0
      %4539 = vmatprep.subr.bf16.mxu0 0
      %4540 = vmatpush1.bf16.msra.mxu0 0
      %4541 = vmatprep.subr.bf16.mxu0 0
      %4542 = vmatpush1.bf16.msra.mxu0 0
      %4543 = vmatprep.subr.bf16.mxu0 0
      %4544 = vmatpush1.bf16.msra.mxu0 0
      %4545 = vmatprep.subr.bf16.mxu0 0
      %4546 = vmatpush1.bf16.msra.mxu0 0
      %4547 = vmatprep.subr.bf16.mxu0 0
      %4548 = vmatpush1.bf16.msra.mxu0 0
      %4549 = vmatprep.subr.bf16.mxu0 0
      %4550 = vmatpush1.bf16.msra.mxu0 0
      %4551 = vmatprep.subr.bf16.mxu0 0
      %4552 = vmatpush1.bf16.msra.mxu0 0
      %4553 = vmatprep.subr.bf16.mxu0 0
      %4554 = vmatpush1.bf16.msra.mxu0 0
      %4555 = vmatprep.subr.bf16.mxu0 0
      %4556 = vmatpush1.bf16.msra.mxu0 0
      %4557 = vmatprep.subr.bf16.mxu0 0
      %4558 = vmatpush1.bf16.msra.mxu0 0
      %4559 = vmatprep.subr.bf16.mxu0 0
      %4560 = vmatpush1.bf16.msra.mxu0 0
      %4561 = vmatprep.mubr.bf16.mxu0 0
      %4562 = vmatmul.mubr.bf16.gmra.mrb[0].mxu0 %v4521
      %v4563 = vpop.f32.mrb[0].mxu0
      %v4564 = vadd.f32 %v4507, %v4563
      %v4565 = vpop.f32.mrb[0].mxu0
      %v4566 = vpop.f32.mrb[0].mxu0
      %v4567 = vadd.f32 %v4510, %v4566
      %v4568 = vpop.f32.mrb[0].mxu0
      %4569 = vmatprep.mubr.bf16.mxu0 0
      %4570 = vmatmul.mubr.bf16.gmra.mrb[0].mxu0 %v4524
      %v4571 = vpop.f32.mrb[0].mxu0
      %v4572 = vadd.f32 %v4515, %v4571
      %v4573 = vpop.f32.mrb[0].mxu0
      %v4574 = vpop.f32.mrb[0].mxu0
      %v4575 = vpop.f32.mrb[0].mxu0
      %4576 = vdwg.mxu0
      %v4577 = vpack.c.bf16 %v4385, %v4382
      %v4578 = vpack.c.bf16 %v4390, %v4390
      %v4579 = vld [vmem:[%s1705] sm:$0xf]
      %v4581 = vsel %vm923, %v4577, 0
      %v4584 = vsel %vm923, %v4578, 0
      %v4587 = vsel %vm1594, %v4579, 0
      %4589 = vmatprep.subr.bf16.mxu0 0
      %4590 = vmatpush1.bf16.msra.mxu0 %v4587
      %4591 = vmatprep.subr.bf16.mxu0 0
      %4592 = vmatpush1.bf16.msra.mxu0 0
      %4593 = vmatprep.subr.bf16.mxu0 0
      %4594 = vmatpush1.bf16.msra.mxu0 0
      %4595 = vmatprep.subr.bf16.mxu0 0
      %4596 = vmatpush1.bf16.msra.mxu0 0
      %4597 = vmatprep.subr.bf16.mxu0 0
      %4598 = vmatpush1.bf16.msra.mxu0 0
      %4599 = vmatprep.subr.bf16.mxu0 0
      %4600 = vmatpush1.bf16.msra.mxu0 0
      %4601 = vmatprep.subr.bf16.mxu0 0
      %4602 = vmatpush1.bf16.msra.mxu0 0
      %4603 = vmatprep.subr.bf16.mxu0 0
      %4604 = vmatpush1.bf16.msra.mxu0 0
      %4605 = vmatprep.subr.bf16.mxu0 0
      %4606 = vmatpush1.bf16.msra.mxu0 0
      %4607 = vmatprep.subr.bf16.mxu0 0
      %4608 = vmatpush1.bf16.msra.mxu0 0
      %4609 = vmatprep.subr.bf16.mxu0 0
      %4610 = vmatpush1.bf16.msra.mxu0 0
      %4611 = vmatprep.subr.bf16.mxu0 0
      %4612 = vmatpush1.bf16.msra.mxu0 0
      %4613 = vmatprep.subr.bf16.mxu0 0
      %4614 = vmatpush1.bf16.msra.mxu0 0
      %4615 = vmatprep.subr.bf16.mxu0 0
      %4616 = vmatpush1.bf16.msra.mxu0 0
      %4617 = vmatprep.subr.bf16.mxu0 0
      %4618 = vmatpush1.bf16.msra.mxu0 0
      %4619 = vmatprep.subr.bf16.mxu0 0
      %4620 = vmatpush1.bf16.msra.mxu0 0
      %4621 = vmatprep.mubr.bf16.mxu0 0
      %4622 = vmatmul.mubr.bf16.gmra.mrb[0].mxu0 %v4581
      %v4623 = vpop.f32.mrb[0].mxu0
      %v4624 = vadd.f32 0.0, %v4623
      %v4625 = vpop.f32.mrb[0].mxu0
      %v4626 = vpop.f32.mrb[0].mxu0
      %v4627 = vadd.f32 0.0, %v4626
      %v4628 = vpop.f32.mrb[0].mxu0
      %4629 = vmatprep.mubr.bf16.mxu0 0
      %4630 = vmatmul.mubr.bf16.gmra.mrb[0].mxu0 %v4584
      %v4631 = vpop.f32.mrb[0].mxu0
      %v4632 = vadd.f32 0.0, %v4631
      %v4633 = vpop.f32.mrb[0].mxu0
      %v4634 = vpop.f32.mrb[0].mxu0
      %v4635 = vpop.f32.mrb[0].mxu0
      %4636 = vdwg.mxu0
      %v4637 = vadd.f32 %v4564, %v4624
      %v4638 = vadd.f32 %v4567, %v4627
      %v4639 = vadd.f32 %v4572, %v4632
      %v4640 = vpack.c.bf16 %v4447, %v4444
      %v4641 = vpack.c.bf16 %v4452, %v4452
      %v4642 = vld [vmem:[%s1769] sm:$0xf]
      %v4644 = vsel %vm923, %v4640, 0
      %v4647 = vsel %vm923, %v4641, 0
      %v4650 = vsel %vm1594, %v4642, 0
      %4652 = vmatprep.subr.bf16.mxu0 0
      %4653 = vmatpush1.bf16.msra.mxu0 %v4650
      %4654 = vmatprep.subr.bf16.mxu0 0
      %4655 = vmatpush1.bf16.msra.mxu0 0
      %4656 = vmatprep.subr.bf16.mxu0 0
      %4657 = vmatpush1.bf16.msra.mxu0 0
      %4658 = vmatprep.subr.bf16.mxu0 0
      %4659 = vmatpush1.bf16.msra.mxu0 0
      %4660 = vmatprep.subr.bf16.mxu0 0
      %4661 = vmatpush1.bf16.msra.mxu0 0
      %4662 = vmatprep.subr.bf16.mxu0 0
      %4663 = vmatpush1.bf16.msra.mxu0 0
      %4664 = vmatprep.subr.bf16.mxu0 0
      %4665 = vmatpush1.bf16.msra.mxu0 0
      %4666 = vmatprep.subr.bf16.mxu0 0
      %4667 = vmatpush1.bf16.msra.mxu0 0
      %4668 = vmatprep.subr.bf16.mxu0 0
      %4669 = vmatpush1.bf16.msra.mxu0 0
      %4670 = vmatprep.subr.bf16.mxu0 0
      %4671 = vmatpush1.bf16.msra.mxu0 0
      %4672 = vmatprep.subr.bf16.mxu0 0
      %4673 = vmatpush1.bf16.msra.mxu0 0
      %4674 = vmatprep.subr.bf16.mxu0 0
      %4675 = vmatpush1.bf16.msra.mxu0 0
      %4676 = vmatprep.subr.bf16.mxu0 0
      %4677 = vmatpush1.bf16.msra.mxu0 0
      %4678 = vmatprep.subr.bf16.mxu0 0
      %4679 = vmatpush1.bf16.msra.mxu0 0
      %4680 = vmatprep.subr.bf16.mxu0 0
      %4681 = vmatpush1.bf16.msra.mxu0 0
      %4682 = vmatprep.subr.bf16.mxu0 0
      %4683 = vmatpush1.bf16.msra.mxu0 0
      %4684 = vmatprep.mubr.bf16.mxu0 0
      %4685 = vmatmul.mubr.bf16.gmra.mrb[0].mxu0 %v4644
      %v4686 = vpop.f32.mrb[0].mxu0
      %v4687 = vadd.f32 0.0, %v4686
      %v4688 = vpop.f32.mrb[0].mxu0
      %v4689 = vpop.f32.mrb[0].mxu0
      %v4690 = vadd.f32 0.0, %v4689
      %v4691 = vpop.f32.mrb[0].mxu0
      %4692 = vmatprep.mubr.bf16.mxu0 0
      %4693 = vmatmul.mubr.bf16.gmra.mrb[0].mxu0 %v4647
      %v4694 = vpop.f32.mrb[0].mxu0
      %v4695 = vadd.f32 0.0, %v4694
      %v4696 = vpop.f32.mrb[0].mxu0
      %v4697 = vpop.f32.mrb[0].mxu0
      %v4698 = vpop.f32.mrb[0].mxu0
      %4699 = vdwg.mxu0
      %v4700 = vadd.f32 %v4637, %v4687
      %v4701 = vadd.f32 %v4638, %v4690
      %v4702 = vadd.f32 %v4639, %v4695
      %4703 = vst.msk [vmem:[#allocation2 + $0x33] sm:$0xff] %vm462, %v4700
      %4704 = vst.msk [vmem:[#allocation2 + $0x3b] sm:$0xff] %vm462, %v4701
      %4705 = vst.msk [vmem:[#allocation2 + $0x43] sm:$0x1] %vm1833, %v4702
      %4707 = vrot.lane.b32.xlu0 %v901, 120
      %v4708 = vpop.permute.xlu0 %4707
      %4709 = vrot.lane.b32.xlu0 %v901, 112
      %v4710 = vpop.permute.xlu0 %4709
      %4711 = vrot.lane.b32.xlu0 %v901, 104
      %v4712 = vpop.permute.xlu0 %4711
      %vm4713 = vcmask 1045504
      %v4714 = vrot.slane %v900, 2
      %v4715 = vrot.slane %v901, 2
      %v4716 = vsel %vm4713, %v4714, %v4715
      %4717 = vrot.lane.b32.xlu0 %v4716, 96
      %v4718 = vpop.permute.xlu0 %4717
      %4719 = vrot.lane.b32.xlu0 %v4715, 96
      %v4720 = vpop.permute.xlu0 %4719
      %v4722 = vsel %vm923, %v4716, 0
      %v4725 = vsel %vm923, %v4715, 0
      %v4728 = vsel %vm923, %v4718, 0
      %v4731 = vsel %vm923, %v4720, 0
      %4733 = vmatprep.subr.bf16.mxu0 0
      %4734 = vmatpush1.bf16.xpose.msra.mxu0 %v4728
      %4735 = vmatprep.subr.bf16.mxu0 0
      %4736 = vmatpush1.bf16.xpose.msra.mxu0 %v4731
      %4737 = vmatprep.subr.bf16.mxu0 0
      %4738 = vmatpush1.bf16.xpose.msra.mxu0 0
      %4739 = vmatprep.subr.bf16.mxu0 0
      %4740 = vmatpush1.bf16.xpose.msra.mxu0 0
      %4741 = vmatprep.subr.bf16.mxu0 0
      %4742 = vmatpush1.bf16.xpose.msra.mxu0 0
      %4743 = vmatprep.subr.bf16.mxu0 0
      %4744 = vmatpush1.bf16.xpose.msra.mxu0 0
      %4745 = vmatprep.subr.bf16.mxu0 0
      %4746 = vmatpush1.bf16.xpose.msra.mxu0 0
      %4747 = vmatprep.subr.bf16.mxu0 0
      %4748 = vmatpush1.bf16.xpose.msra.mxu0 0
      %4749 = vmatprep.subr.bf16.mxu0 0
      %4750 = vmatpush1.bf16.xpose.msra.mxu0 0
      %4751 = vmatprep.subr.bf16.mxu0 0
      %4752 = vmatpush1.bf16.xpose.msra.mxu0 0
      %4753 = vmatprep.subr.bf16.mxu0 0
      %4754 = vmatpush1.bf16.xpose.msra.mxu0 0
      %4755 = vmatprep.subr.bf16.mxu0 0
      %4756 = vmatpush1.bf16.xpose.msra.mxu0 0
      %4757 = vmatprep.subr.bf16.mxu0 0
      %4758 = vmatpush1.bf16.xpose.msra.mxu0 0
      %4759 = vmatprep.subr.bf16.mxu0 0
      %4760 = vmatpush1.bf16.xpose.msra.mxu0 0
      %4761 = vmatprep.subr.bf16.mxu0 0
      %4762 = vmatpush1.bf16.xpose.msra.mxu0 0
      %4763 = vmatprep.subr.bf16.mxu0 0
      %4764 = vmatpush1.bf16.xpose.msra.mxu0 0
      %4765 = vmatprep.mubr.bf16.mxu0 0
      %4766 = vmatmul.mubr.bf16.gmra.mrb[0].mxu0 %v4722
      %v4767 = vpop.f32.mrb[0].mxu0
      %v4768 = vadd.f32 0.0, %v4767
      %v4769 = vpop.f32.mrb[0].mxu0
      %v4770 = vpop.f32.mrb[0].mxu0
      %v4771 = vadd.f32 0.0, %v4770
      %v4772 = vpop.f32.mrb[0].mxu0
      %4773 = vmatprep.mubr.bf16.mxu0 0
      %4774 = vmatmul.mubr.bf16.gmra.mrb[0].mxu0 %v4725
      %v4775 = vpop.f32.mrb[0].mxu0
      %v4776 = vadd.f32 0.0, %v4775
      %v4777 = vpop.f32.mrb[0].mxu0
      %v4778 = vpop.f32.mrb[0].mxu0
      %v4779 = vpop.f32.mrb[0].mxu0
      %4780 = vdwg.mxu0
      %v4781 = vrot.slane %v3727, 2
      %v4782 = vrot.slane %v4708, 2
      %v4783 = vsel %vm4713, %v4781, %v4782
      %4784 = vrot.lane.b32.xlu0 %v4783, 96
      %v4785 = vpop.permute.xlu0 %4784
      %4786 = vrot.lane.b32.xlu0 %v4782, 96
      %v4787 = vpop.permute.xlu0 %4786
      %v4789 = vsel %vm923, %v4783, 0
      %v4792 = vsel %vm923, %v4782, 0
      %v4795 = vsel %vm923, %v4785, 0
      %v4798 = vsel %vm923, %v4787, 0
      %4800 = vmatprep.subr.bf16.mxu0 0
      %4801 = vmatpush1.bf16.xpose.msra.mxu0 %v4795
      %4802 = vmatprep.subr.bf16.mxu0 0
      %4803 = vmatpush1.bf16.xpose.msra.mxu0 %v4798
      %4804 = vmatprep.subr.bf16.mxu0 0
      %4805 = vmatpush1.bf16.xpose.msra.mxu0 0
      %4806 = vmatprep.subr.bf16.mxu0 0
      %4807 = vmatpush1.bf16.xpose.msra.mxu0 0
      %4808 = vmatprep.subr.bf16.mxu0 0
      %4809 = vmatpush1.bf16.xpose.msra.mxu0 0
      %4810 = vmatprep.subr.bf16.mxu0 0
      %4811 = vmatpush1.bf16.xpose.msra.mxu0 0
      %4812 = vmatprep.subr.bf16.mxu0 0
      %4813 = vmatpush1.bf16.xpose.msra.mxu0 0
      %4814 = vmatprep.subr.bf16.mxu0 0
      %4815 = vmatpush1.bf16.xpose.msra.mxu0 0
      %4816 = vmatprep.subr.bf16.mxu0 0
      %4817 = vmatpush1.bf16.xpose.msra.mxu0 0
      %4818 = vmatprep.subr.bf16.mxu0 0
      %4819 = vmatpush1.bf16.xpose.msra.mxu0 0
      %4820 = vmatprep.subr.bf16.mxu0 0
      %4821 = vmatpush1.bf16.xpose.msra.mxu0 0
      %4822 = vmatprep.subr.bf16.mxu0 0
      %4823 = vmatpush1.bf16.xpose.msra.mxu0 0
      %4824 = vmatprep.subr.bf16.mxu0 0
      %4825 = vmatpush1.bf16.xpose.msra.mxu0 0
      %4826 = vmatprep.subr.bf16.mxu0 0
      %4827 = vmatpush1.bf16.xpose.msra.mxu0 0
      %4828 = vmatprep.subr.bf16.mxu0 0
      %4829 = vmatpush1.bf16.xpose.msra.mxu0 0
      %4830 = vmatprep.subr.bf16.mxu0 0
      %4831 = vmatpush1.bf16.xpose.msra.mxu0 0
      %4832 = vmatprep.mubr.bf16.mxu0 0
      %4833 = vmatmul.mubr.bf16.gmra.mrb[0].mxu0 %v4789
      %v4834 = vpop.f32.mrb[0].mxu0
      %v4835 = vadd.f32 0.0, %v4834
      %v4836 = vpop.f32.mrb[0].mxu0
      %v4837 = vpop.f32.mrb[0].mxu0
      %v4838 = vadd.f32 0.0, %v4837
      %v4839 = vpop.f32.mrb[0].mxu0
      %4840 = vmatprep.mubr.bf16.mxu0 0
      %4841 = vmatmul.mubr.bf16.gmra.mrb[0].mxu0 %v4792
      %v4842 = vpop.f32.mrb[0].mxu0
      %v4843 = vadd.f32 0.0, %v4842
      %v4844 = vpop.f32.mrb[0].mxu0
      %v4845 = vpop.f32.mrb[0].mxu0
      %v4846 = vpop.f32.mrb[0].mxu0
      %4847 = vdwg.mxu0
      %v4848 = vrot.slane %v3729, 2
      %v4849 = vrot.slane %v4710, 2
      %v4850 = vsel %vm4713, %v4848, %v4849
      %4851 = vrot.lane.b32.xlu0 %v4850, 96
      %v4852 = vpop.permute.xlu0 %4851
      %4853 = vrot.lane.b32.xlu0 %v4849, 96
      %v4854 = vpop.permute.xlu0 %4853
      %v4856 = vsel %vm923, %v4850, 0
      %v4859 = vsel %vm923, %v4849, 0
      %v4862 = vsel %vm923, %v4852, 0
      %v4865 = vsel %vm923, %v4854, 0
      %4867 = vmatprep.subr.bf16.mxu0 0
      %4868 = vmatpush1.bf16.xpose.msra.mxu0 %v4862
      %4869 = vmatprep.subr.bf16.mxu0 0
      %4870 = vmatpush1.bf16.xpose.msra.mxu0 %v4865
      %4871 = vmatprep.subr.bf16.mxu0 0
      %4872 = vmatpush1.bf16.xpose.msra.mxu0 0
      %4873 = vmatprep.subr.bf16.mxu0 0
      %4874 = vmatpush1.bf16.xpose.msra.mxu0 0
      %4875 = vmatprep.subr.bf16.mxu0 0
      %4876 = vmatpush1.bf16.xpose.msra.mxu0 0
      %4877 = vmatprep.subr.bf16.mxu0 0
      %4878 = vmatpush1.bf16.xpose.msra.mxu0 0
      %4879 = vmatprep.subr.bf16.mxu0 0
      %4880 = vmatpush1.bf16.xpose.msra.mxu0 0
      %4881 = vmatprep.subr.bf16.mxu0 0
      %4882 = vmatpush1.bf16.xpose.msra.mxu0 0
      %4883 = vmatprep.subr.bf16.mxu0 0
      %4884 = vmatpush1.bf16.xpose.msra.mxu0 0
      %4885 = vmatprep.subr.bf16.mxu0 0
      %4886 = vmatpush1.bf16.xpose.msra.mxu0 0
      %4887 = vmatprep.subr.bf16.mxu0 0
      %4888 = vmatpush1.bf16.xpose.msra.mxu0 0
      %4889 = vmatprep.subr.bf16.mxu0 0
      %4890 = vmatpush1.bf16.xpose.msra.mxu0 0
      %4891 = vmatprep.subr.bf16.mxu0 0
      %4892 = vmatpush1.bf16.xpose.msra.mxu0 0
      %4893 = vmatprep.subr.bf16.mxu0 0
      %4894 = vmatpush1.bf16.xpose.msra.mxu0 0
      %4895 = vmatprep.subr.bf16.mxu0 0
      %4896 = vmatpush1.bf16.xpose.msra.mxu0 0
      %4897 = vmatprep.subr.bf16.mxu0 0
      %4898 = vmatpush1.bf16.xpose.msra.mxu0 0
      %4899 = vmatprep.mubr.bf16.mxu0 0
      %4900 = vmatmul.mubr.bf16.gmra.mrb[0].mxu0 %v4856
      %v4901 = vpop.f32.mrb[0].mxu0
      %v4902 = vadd.f32 0.0, %v4901
      %v4903 = vpop.f32.mrb[0].mxu0
      %v4904 = vpop.f32.mrb[0].mxu0
      %v4905 = vadd.f32 0.0, %v4904
      %v4906 = vpop.f32.mrb[0].mxu0
      %4907 = vmatprep.mubr.bf16.mxu0 0
      %4908 = vmatmul.mubr.bf16.gmra.mrb[0].mxu0 %v4859
      %v4909 = vpop.f32.mrb[0].mxu0
      %v4910 = vadd.f32 0.0, %v4909
      %v4911 = vpop.f32.mrb[0].mxu0
      %v4912 = vpop.f32.mrb[0].mxu0
      %v4913 = vpop.f32.mrb[0].mxu0
      %4914 = vdwg.mxu0
      %v4915 = vrot.slane %v3731, 2
      %v4916 = vrot.slane %v4712, 2
      %v4917 = vsel %vm4713, %v4915, %v4916
      %4918 = vrot.lane.b32.xlu0 %v4917, 96
      %v4919 = vpop.permute.xlu0 %4918
      %4920 = vrot.lane.b32.xlu0 %v4916, 96
      %v4921 = vpop.permute.xlu0 %4920
      %v4923 = vsel %vm923, %v4917, 0
      %v4926 = vsel %vm923, %v4916, 0
      %v4929 = vsel %vm923, %v4919, 0
      %v4932 = vsel %vm923, %v4921, 0
      %4934 = vmatprep.subr.bf16.mxu0 0
      %4935 = vmatpush1.bf16.xpose.msra.mxu0 %v4929
      %4936 = vmatprep.subr.bf16.mxu0 0
      %4937 = vmatpush1.bf16.xpose.msra.mxu0 %v4932
      %4938 = vmatprep.subr.bf16.mxu0 0
      %4939 = vmatpush1.bf16.xpose.msra.mxu0 0
      %4940 = vmatprep.subr.bf16.mxu0 0
      %4941 = vmatpush1.bf16.xpose.msra.mxu0 0
      %4942 = vmatprep.subr.bf16.mxu0 0
      %4943 = vmatpush1.bf16.xpose.msra.mxu0 0
      %4944 = vmatprep.subr.bf16.mxu0 0
      %4945 = vmatpush1.bf16.xpose.msra.mxu0 0
      %4946 = vmatprep.subr.bf16.mxu0 0
      %4947 = vmatpush1.bf16.xpose.msra.mxu0 0
      %4948 = vmatprep.subr.bf16.mxu0 0
      %4949 = vmatpush1.bf16.xpose.msra.mxu0 0
      %4950 = vmatprep.subr.bf16.mxu0 0
      %4951 = vmatpush1.bf16.xpose.msra.mxu0 0
      %4952 = vmatprep.subr.bf16.mxu0 0
      %4953 = vmatpush1.bf16.xpose.msra.mxu0 0
      %4954 = vmatprep.subr.bf16.mxu0 0
      %4955 = vmatpush1.bf16.xpose.msra.mxu0 0
      %4956 = vmatprep.subr.bf16.mxu0 0
      %4957 = vmatpush1.bf16.xpose.msra.mxu0 0
      %4958 = vmatprep.subr.bf16.mxu0 0
      %4959 = vmatpush1.bf16.xpose.msra.mxu0 0
      %4960 = vmatprep.subr.bf16.mxu0 0
      %4961 = vmatpush1.bf16.xpose.msra.mxu0 0
      %4962 = vmatprep.subr.bf16.mxu0 0
      %4963 = vmatpush1.bf16.xpose.msra.mxu0 0
      %4964 = vmatprep.subr.bf16.mxu0 0
      %4965 = vmatpush1.bf16.xpose.msra.mxu0 0
      %4966 = vmatprep.mubr.bf16.mxu0 0
      %4967 = vmatmul.mubr.bf16.gmra.mrb[0].mxu0 %v4923
      %v4968 = vpop.f32.mrb[0].mxu0
      %v4969 = vadd.f32 0.0, %v4968
      %v4970 = vpop.f32.mrb[0].mxu0
      %v4971 = vpop.f32.mrb[0].mxu0
      %v4972 = vadd.f32 0.0, %v4971
      %v4973 = vpop.f32.mrb[0].mxu0
      %4974 = vmatprep.mubr.bf16.mxu0 0
      %4975 = vmatmul.mubr.bf16.gmra.mrb[0].mxu0 %v4926
      %v4976 = vpop.f32.mrb[0].mxu0
      %v4977 = vadd.f32 0.0, %v4976
      %v4978 = vpop.f32.mrb[0].mxu0
      %v4979 = vpop.f32.mrb[0].mxu0
      %v4980 = vpop.f32.mrb[0].mxu0
      %4981 = vdwg.mxu0
      %v4982 = vmul.f32 %v4768, 0.35355338
      %v4983 = vmul.f32 %v4771, 0.35355338
      %v4984 = vmul.f32 %v4776, 0.35355338
      %v4985 = vmul.f32 %v4835, 0.35355338
      %v4986 = vmul.f32 %v4838, 0.35355338
      %v4987 = vmul.f32 %v4843, 0.35355338
      %v4988 = vmul.f32 %v4902, 0.35355338
      %v4989 = vmul.f32 %v4905, 0.35355338
      %v4990 = vmul.f32 %v4910, 0.35355338
      %v4991 = vmul.f32 %v4969, 0.35355338
      %v4992 = vmul.f32 %v4972, 0.35355338
      %v4993 = vmul.f32 %v4977, 0.35355338
      %v4994 = vsel %vm1188, %v4982, -inf
      %4995 = vmax.xlane.f32.xlu0 %v4994
      %v4996 = vpop.xlane.xlu0 %4995
      %v4997 = vsel %vm1188, %v4983, -inf
      %4998 = vmax.xlane.f32.xlu0 %v4997
      %v4999 = vpop.xlane.xlu0 %4998
      %v5000 = vsel %vm1195, %v4984, -inf
      %5001 = vmax.xlane.f32.xlu0 %v5000
      %v5002 = vpop.xlane.xlu0 %5001
      %v5003 = vsel %vm1188, %v4985, -inf
      %5004 = vmax.xlane.f32.xlu0 %v5003
      %v5005 = vpop.xlane.xlu0 %5004
      %v5006 = vsel %vm1188, %v4986, -inf
      %5007 = vmax.xlane.f32.xlu0 %v5006
      %v5008 = vpop.xlane.xlu0 %5007
      %v5009 = vsel %vm1195, %v4987, -inf
      %5010 = vmax.xlane.f32.xlu0 %v5009
      %v5011 = vpop.xlane.xlu0 %5010
      %v5012 = vsel %vm1188, %v4988, -inf
      %5013 = vmax.xlane.f32.xlu0 %v5012
      %v5014 = vpop.xlane.xlu0 %5013
      %v5015 = vsel %vm1188, %v4989, -inf
      %5016 = vmax.xlane.f32.xlu0 %v5015
      %v5017 = vpop.xlane.xlu0 %5016
      %v5018 = vsel %vm1195, %v4990, -inf
      %5019 = vmax.xlane.f32.xlu0 %v5018
      %v5020 = vpop.xlane.xlu0 %5019
      %v5021 = vsel %vm1188, %v4991, -inf
      %5022 = vmax.xlane.f32.xlu0 %v5021
      %v5023 = vpop.xlane.xlu0 %5022
      %v5024 = vsel %vm1188, %v4992, -inf
      %5025 = vmax.xlane.f32.xlu0 %v5024
      %v5026 = vpop.xlane.xlu0 %5025
      %v5027 = vsel %vm1195, %v4993, -inf
      %5028 = vmax.xlane.f32.xlu0 %v5027
      %v5029 = vpop.xlane.xlu0 %5028
      %v5030 = vsub.f32 %v4982, %v4996
      %v5031 = vsub.f32 %v4983, %v4999
      %v5032 = vsub.f32 %v4984, %v5002
      %v5033 = vsub.f32 %v4985, %v5005
      %v5034 = vsub.f32 %v4986, %v5008
      %v5035 = vsub.f32 %v4987, %v5011
      %v5036 = vsub.f32 %v4988, %v5014
      %v5037 = vsub.f32 %v4989, %v5017
      %v5038 = vsub.f32 %v4990, %v5020
      %v5039 = vsub.f32 %v4991, %v5023
      %v5040 = vsub.f32 %v4992, %v5026
      %v5041 = vsub.f32 %v4993, %v5029
      %v5042 = vmul.f32 %v5030, 1.442695
      %v5043 = vpow.pop %v5042
      %v5044 = vmul.f32 %v5031, 1.442695
      %v5045 = vpow.pop %v5044
      %v5046 = vmul.f32 %v5032, 1.442695
      %v5047 = vpow.pop %v5046
      %v5048 = vmul.f32 %v5033, 1.442695
      %v5049 = vpow.pop %v5048
      %v5050 = vmul.f32 %v5034, 1.442695
      %v5051 = vpow.pop %v5050
      %v5052 = vmul.f32 %v5035, 1.442695
      %v5053 = vpow.pop %v5052
      %v5054 = vmul.f32 %v5036, 1.442695
      %v5055 = vpow.pop %v5054
      %v5056 = vmul.f32 %v5037, 1.442695
      %v5057 = vpow.pop %v5056
      %v5058 = vmul.f32 %v5038, 1.442695
      %v5059 = vpow.pop %v5058
      %v5060 = vmul.f32 %v5039, 1.442695
      %v5061 = vpow.pop %v5060
      %v5062 = vmul.f32 %v5040, 1.442695
      %v5063 = vpow.pop %v5062
      %v5064 = vmul.f32 %v5041, 1.442695
      %v5065 = vpow.pop %v5064
      %v5066 = vsel %vm1188, %v5043, 0.0
      %5067 = vadd.xlane.f32.xlu0 %v5066
      %v5068 = vpop.xlane.xlu0 %5067
      %v5069 = vsel %vm1188, %v5045, 0.0
      %5070 = vadd.xlane.f32.xlu0 %v5069
      %v5071 = vpop.xlane.xlu0 %5070
      %v5072 = vsel %vm1195, %v5047, 0.0
      %5073 = vadd.xlane.f32.xlu0 %v5072
      %v5074 = vpop.xlane.xlu0 %5073
      %v5075 = vsel %vm1188, %v5049, 0.0
      %5076 = vadd.xlane.f32.xlu0 %v5075
      %v5077 = vpop.xlane.xlu0 %5076
      %v5078 = vsel %vm1188, %v5051, 0.0
      %5079 = vadd.xlane.f32.xlu0 %v5078
      %v5080 = vpop.xlane.xlu0 %5079
      %v5081 = vsel %vm1195, %v5053, 0.0
      %5082 = vadd.xlane.f32.xlu0 %v5081
      %v5083 = vpop.xlane.xlu0 %5082
      %v5084 = vsel %vm1188, %v5055, 0.0
      %5085 = vadd.xlane.f32.xlu0 %v5084
      %v5086 = vpop.xlane.xlu0 %5085
      %v5087 = vsel %vm1188, %v5057, 0.0
      %5088 = vadd.xlane.f32.xlu0 %v5087
      %v5089 = vpop.xlane.xlu0 %5088
      %v5090 = vsel %vm1195, %v5059, 0.0
      %5091 = vadd.xlane.f32.xlu0 %v5090
      %v5092 = vpop.xlane.xlu0 %5091
      %v5093 = vsel %vm1188, %v5061, 0.0
      %5094 = vadd.xlane.f32.xlu0 %v5093
      %v5095 = vpop.xlane.xlu0 %5094
      %v5096 = vsel %vm1188, %v5063, 0.0
      %5097 = vadd.xlane.f32.xlu0 %v5096
      %v5098 = vpop.xlane.xlu0 %5097
      %v5099 = vsel %vm1195, %v5065, 0.0
      %5100 = vadd.xlane.f32.xlu0 %v5099
      %v5101 = vpop.xlane.xlu0 %5100
      %v5102 = vrcp.pop %v5068
      %v5103 = vrcp.pop %v5071
      %v5104 = vrcp.pop %v5074
      %v5105 = vrcp.pop %v5077
      %v5106 = vrcp.pop %v5080
      %v5107 = vrcp.pop %v5083
      %v5108 = vrcp.pop %v5086
      %v5109 = vrcp.pop %v5089
      %v5110 = vrcp.pop %v5092
      %v5111 = vrcp.pop %v5095
      %v5112 = vrcp.pop %v5098
      %v5113 = vrcp.pop %v5101
      %v5114 = vmul.f32 %v5043, %v5102
      %v5115 = vmul.f32 %v5045, %v5103
      %v5116 = vmul.f32 %v5047, %v5104
      %v5117 = vmul.f32 %v5049, %v5105
      %v5118 = vmul.f32 %v5051, %v5106
      %v5119 = vmul.f32 %v5053, %v5107
      %v5120 = vmul.f32 %v5055, %v5108
      %v5121 = vmul.f32 %v5057, %v5109
      %v5122 = vmul.f32 %v5059, %v5110
      %v5123 = vmul.f32 %v5061, %v5111
      %v5124 = vmul.f32 %v5063, %v5112
      %v5125 = vmul.f32 %v5065, %v5113
      %v5126 = vpack.c.bf16 %v5115, %v5114
      %v5127 = vpack.c.bf16 %v5116, %v5116
      %v5128 = vpack.c.bf16 %v5118, %v5117
      %v5129 = vpack.c.bf16 %v5119, %v5119
      %v5130 = vpack.c.bf16 %v5121, %v5120
      %v5131 = vpack.c.bf16 %v5122, %v5122
      %v5132 = vpack.c.bf16 %v5124, %v5123
      %v5133 = vpack.c.bf16 %v5125, %v5125
      %5134 = vrot.lane.b32.xlu0 %v4716, 64
      %v5135 = vpop.permute.xlu0 %5134
      %5136 = vrot.lane.b32.xlu0 %v4715, 64
      %v5137 = vpop.permute.xlu0 %5136
      %v5140 = vsel %vm1188, %v5126, 0
      %v5143 = vsel %vm1188, %v5127, 0
      %v5146 = vand.u32 %v5137, %v1343
      %5148 = vmatprep.subr.bf16.mxu0 0
      %5149 = vmatpush1.bf16.msra.mxu0 %v5135
      %5150 = vmatprep.subr.bf16.mxu0 0
      %5151 = vmatpush1.bf16.msra.mxu0 %v5146
      %5152 = vmatprep.subr.bf16.mxu0 0
      %5153 = vmatpush1.bf16.msra.mxu0 0
      %5154 = vmatprep.subr.bf16.mxu0 0
      %5155 = vmatpush1.bf16.msra.mxu0 0
      %5156 = vmatprep.subr.bf16.mxu0 0
      %5157 = vmatpush1.bf16.msra.mxu0 0
      %5158 = vmatprep.subr.bf16.mxu0 0
      %5159 = vmatpush1.bf16.msra.mxu0 0
      %5160 = vmatprep.subr.bf16.mxu0 0
      %5161 = vmatpush1.bf16.msra.mxu0 0
      %5162 = vmatprep.subr.bf16.mxu0 0
      %5163 = vmatpush1.bf16.msra.mxu0 0
      %5164 = vmatprep.subr.bf16.mxu0 0
      %5165 = vmatpush1.bf16.msra.mxu0 0
      %5166 = vmatprep.subr.bf16.mxu0 0
      %5167 = vmatpush1.bf16.msra.mxu0 0
      %5168 = vmatprep.subr.bf16.mxu0 0
      %5169 = vmatpush1.bf16.msra.mxu0 0
      %5170 = vmatprep.subr.bf16.mxu0 0
      %5171 = vmatpush1.bf16.msra.mxu0 0
      %5172 = vmatprep.subr.bf16.mxu0 0
      %5173 = vmatpush1.bf16.msra.mxu0 0
      %5174 = vmatprep.subr.bf16.mxu0 0
      %5175 = vmatpush1.bf16.msra.mxu0 0
      %5176 = vmatprep.subr.bf16.mxu0 0
      %5177 = vmatpush1.bf16.msra.mxu0 0
      %5178 = vmatprep.subr.bf16.mxu0 0
      %5179 = vmatpush1.bf16.msra.mxu0 0
      %5180 = vmatprep.mubr.bf16.mxu0 0
      %5181 = vmatmul.mubr.bf16.gmra.mrb[0].mxu0 %v5140
      %v5182 = vpop.f32.mrb[0].mxu0
      %v5183 = vadd.f32 0.0, %v5182
      %v5184 = vpop.f32.mrb[0].mxu0
      %v5185 = vpop.f32.mrb[0].mxu0
      %v5186 = vadd.f32 0.0, %v5185
      %v5187 = vpop.f32.mrb[0].mxu0
      %5188 = vmatprep.mubr.bf16.mxu0 0
      %5189 = vmatmul.mubr.bf16.gmra.mrb[0].mxu0 %v5143
      %v5190 = vpop.f32.mrb[0].mxu0
      %v5191 = vadd.f32 0.0, %v5190
      %v5192 = vpop.f32.mrb[0].mxu0
      %v5193 = vpop.f32.mrb[0].mxu0
      %v5194 = vpop.f32.mrb[0].mxu0
      %5195 = vdwg.mxu0
      %5196 = vrot.lane.b32.xlu0 %v4783, 64
      %v5197 = vpop.permute.xlu0 %5196
      %5198 = vrot.lane.b32.xlu0 %v4782, 64
      %v5199 = vpop.permute.xlu0 %5198
      %v5202 = vsel %vm1188, %v5128, 0
      %v5205 = vsel %vm1188, %v5129, 0
      %v5208 = vand.u32 %v5199, %v1343
      %5210 = vmatprep.subr.bf16.mxu0 0
      %5211 = vmatpush1.bf16.msra.mxu0 %v5197
      %5212 = vmatprep.subr.bf16.mxu0 0
      %5213 = vmatpush1.bf16.msra.mxu0 %v5208
      %5214 = vmatprep.subr.bf16.mxu0 0
      %5215 = vmatpush1.bf16.msra.mxu0 0
      %5216 = vmatprep.subr.bf16.mxu0 0
      %5217 = vmatpush1.bf16.msra.mxu0 0
      %5218 = vmatprep.subr.bf16.mxu0 0
      %5219 = vmatpush1.bf16.msra.mxu0 0
      %5220 = vmatprep.subr.bf16.mxu0 0
      %5221 = vmatpush1.bf16.msra.mxu0 0
      %5222 = vmatprep.subr.bf16.mxu0 0
      %5223 = vmatpush1.bf16.msra.mxu0 0
      %5224 = vmatprep.subr.bf16.mxu0 0
      %5225 = vmatpush1.bf16.msra.mxu0 0
      %5226 = vmatprep.subr.bf16.mxu0 0
      %5227 = vmatpush1.bf16.msra.mxu0 0
      %5228 = vmatprep.subr.bf16.mxu0 0
      %5229 = vmatpush1.bf16.msra.mxu0 0
      %5230 = vmatprep.subr.bf16.mxu0 0
      %5231 = vmatpush1.bf16.msra.mxu0 0
      %5232 = vmatprep.subr.bf16.mxu0 0
      %5233 = vmatpush1.bf16.msra.mxu0 0
      %5234 = vmatprep.subr.bf16.mxu0 0
      %5235 = vmatpush1.bf16.msra.mxu0 0
      %5236 = vmatprep.subr.bf16.mxu0 0
      %5237 = vmatpush1.bf16.msra.mxu0 0
      %5238 = vmatprep.subr.bf16.mxu0 0
      %5239 = vmatpush1.bf16.msra.mxu0 0
      %5240 = vmatprep.subr.bf16.mxu0 0
      %5241 = vmatpush1.bf16.msra.mxu0 0
      %5242 = vmatprep.mubr.bf16.mxu0 0
      %5243 = vmatmul.mubr.bf16.gmra.mrb[0].mxu0 %v5202
      %v5244 = vpop.f32.mrb[0].mxu0
      %v5245 = vadd.f32 0.0, %v5244
      %v5246 = vpop.f32.mrb[0].mxu0
      %v5247 = vpop.f32.mrb[0].mxu0
      %v5248 = vadd.f32 0.0, %v5247
      %v5249 = vpop.f32.mrb[0].mxu0
      %5250 = vmatprep.mubr.bf16.mxu0 0
      %5251 = vmatmul.mubr.bf16.gmra.mrb[0].mxu0 %v5205
      %v5252 = vpop.f32.mrb[0].mxu0
      %v5253 = vadd.f32 0.0, %v5252
      %v5254 = vpop.f32.mrb[0].mxu0
      %v5255 = vpop.f32.mrb[0].mxu0
      %v5256 = vpop.f32.mrb[0].mxu0
      %5257 = vdwg.mxu0
      %5258 = vrot.lane.b32.xlu0 %v4850, 64
      %v5259 = vpop.permute.xlu0 %5258
      %5260 = vrot.lane.b32.xlu0 %v4849, 64
      %v5261 = vpop.permute.xlu0 %5260
      %v5264 = vsel %vm1188, %v5130, 0
      %v5267 = vsel %vm1188, %v5131, 0
      %v5270 = vand.u32 %v5261, %v1343
      %5272 = vmatprep.subr.bf16.mxu0 0
      %5273 = vmatpush1.bf16.msra.mxu0 %v5259
      %5274 = vmatprep.subr.bf16.mxu0 0
      %5275 = vmatpush1.bf16.msra.mxu0 %v5270
      %5276 = vmatprep.subr.bf16.mxu0 0
      %5277 = vmatpush1.bf16.msra.mxu0 0
      %5278 = vmatprep.subr.bf16.mxu0 0
      %5279 = vmatpush1.bf16.msra.mxu0 0
      %5280 = vmatprep.subr.bf16.mxu0 0
      %5281 = vmatpush1.bf16.msra.mxu0 0
      %5282 = vmatprep.subr.bf16.mxu0 0
      %5283 = vmatpush1.bf16.msra.mxu0 0
      %5284 = vmatprep.subr.bf16.mxu0 0
      %5285 = vmatpush1.bf16.msra.mxu0 0
      %5286 = vmatprep.subr.bf16.mxu0 0
      %5287 = vmatpush1.bf16.msra.mxu0 0
      %5288 = vmatprep.subr.bf16.mxu0 0
      %5289 = vmatpush1.bf16.msra.mxu0 0
      %5290 = vmatprep.subr.bf16.mxu0 0
      %5291 = vmatpush1.bf16.msra.mxu0 0
      %5292 = vmatprep.subr.bf16.mxu0 0
      %5293 = vmatpush1.bf16.msra.mxu0 0
      %5294 = vmatprep.subr.bf16.mxu0 0
      %5295 = vmatpush1.bf16.msra.mxu0 0
      %5296 = vmatprep.subr.bf16.mxu0 0
      %5297 = vmatpush1.bf16.msra.mxu0 0
      %5298 = vmatprep.subr.bf16.mxu0 0
      %5299 = vmatpush1.bf16.msra.mxu0 0
      %5300 = vmatprep.subr.bf16.mxu0 0
      %5301 = vmatpush1.bf16.msra.mxu0 0
      %5302 = vmatprep.subr.bf16.mxu0 0
      %5303 = vmatpush1.bf16.msra.mxu0 0
      %5304 = vmatprep.mubr.bf16.mxu0 0
      %5305 = vmatmul.mubr.bf16.gmra.mrb[0].mxu0 %v5264
      %v5306 = vpop.f32.mrb[0].mxu0
      %v5307 = vadd.f32 0.0, %v5306
      %v5308 = vpop.f32.mrb[0].mxu0
      %v5309 = vpop.f32.mrb[0].mxu0
      %v5310 = vadd.f32 0.0, %v5309
      %v5311 = vpop.f32.mrb[0].mxu0
      %5312 = vmatprep.mubr.bf16.mxu0 0
      %5313 = vmatmul.mubr.bf16.gmra.mrb[0].mxu0 %v5267
      %v5314 = vpop.f32.mrb[0].mxu0
      %v5315 = vadd.f32 0.0, %v5314
      %v5316 = vpop.f32.mrb[0].mxu0
      %v5317 = vpop.f32.mrb[0].mxu0
      %v5318 = vpop.f32.mrb[0].mxu0
      %5319 = vdwg.mxu0
      %5320 = vrot.lane.b32.xlu0 %v4917, 64
      %v5321 = vpop.permute.xlu0 %5320
      %5322 = vrot.lane.b32.xlu0 %v4916, 64
      %v5323 = vpop.permute.xlu0 %5322
      %v5326 = vsel %vm1188, %v5132, 0
      %v5329 = vsel %vm1188, %v5133, 0
      %v5332 = vand.u32 %v5323, %v1343
      %5334 = vmatprep.subr.bf16.mxu0 0
      %5335 = vmatpush1.bf16.msra.mxu0 %v5321
      %5336 = vmatprep.subr.bf16.mxu0 0
      %5337 = vmatpush1.bf16.msra.mxu0 %v5332
      %5338 = vmatprep.subr.bf16.mxu0 0
      %5339 = vmatpush1.bf16.msra.mxu0 0
      %5340 = vmatprep.subr.bf16.mxu0 0
      %5341 = vmatpush1.bf16.msra.mxu0 0
      %5342 = vmatprep.subr.bf16.mxu0 0
      %5343 = vmatpush1.bf16.msra.mxu0 0
      %5344 = vmatprep.subr.bf16.mxu0 0
      %5345 = vmatpush1.bf16.msra.mxu0 0
      %5346 = vmatprep.subr.bf16.mxu0 0
      %5347 = vmatpush1.bf16.msra.mxu0 0
      %5348 = vmatprep.subr.bf16.mxu0 0
      %5349 = vmatpush1.bf16.msra.mxu0 0
      %5350 = vmatprep.subr.bf16.mxu0 0
      %5351 = vmatpush1.bf16.msra.mxu0 0
      %5352 = vmatprep.subr.bf16.mxu0 0
      %5353 = vmatpush1.bf16.msra.mxu0 0
      %5354 = vmatprep.subr.bf16.mxu0 0
      %5355 = vmatpush1.bf16.msra.mxu0 0
      %5356 = vmatprep.subr.bf16.mxu0 0
      %5357 = vmatpush1.bf16.msra.mxu0 0
      %5358 = vmatprep.subr.bf16.mxu0 0
      %5359 = vmatpush1.bf16.msra.mxu0 0
      %5360 = vmatprep.subr.bf16.mxu0 0
      %5361 = vmatpush1.bf16.msra.mxu0 0
      %5362 = vmatprep.subr.bf16.mxu0 0
      %5363 = vmatpush1.bf16.msra.mxu0 0
      %5364 = vmatprep.subr.bf16.mxu0 0
      %5365 = vmatpush1.bf16.msra.mxu0 0
      %5366 = vmatprep.mubr.bf16.mxu0 0
      %5367 = vmatmul.mubr.bf16.gmra.mrb[0].mxu0 %v5326
      %v5368 = vpop.f32.mrb[0].mxu0
      %v5369 = vadd.f32 0.0, %v5368
      %v5370 = vpop.f32.mrb[0].mxu0
      %v5371 = vpop.f32.mrb[0].mxu0
      %v5372 = vadd.f32 0.0, %v5371
      %v5373 = vpop.f32.mrb[0].mxu0
      %5374 = vmatprep.mubr.bf16.mxu0 0
      %5375 = vmatmul.mubr.bf16.gmra.mrb[0].mxu0 %v5329
      %v5376 = vpop.f32.mrb[0].mxu0
      %v5377 = vadd.f32 0.0, %v5376
      %v5378 = vpop.f32.mrb[0].mxu0
      %v5379 = vpop.f32.mrb[0].mxu0
      %v5380 = vpop.f32.mrb[0].mxu0
      %5381 = vdwg.mxu0
      %v5382 = vpack.c.bf16 %v5186, %v5183
      %v5383 = vpack.c.bf16 %v5191, %v5191
      %v5384 = vld [vmem:[%s5] sm:$0xf]
      %v5385 = vpack.c.bf16 %v5248, %v5245
      %v5386 = vpack.c.bf16 %v5253, %v5253
      %v5387 = vld [vmem:[%s1586] sm:$0xf]
      %v5389 = vsel %vm923, %v5385, 0
      %v5392 = vsel %vm923, %v5386, 0
      %v5395 = vsel %vm1594, %v5387, 0
      %5397 = vmatprep.subr.bf16.mxu0 0
      %5398 = vmatpush1.bf16.msra.mxu0 %v5395
      %5399 = vmatprep.subr.bf16.mxu0 0
      %5400 = vmatpush1.bf16.msra.mxu0 0
      %5401 = vmatprep.subr.bf16.mxu0 0
      %5402 = vmatpush1.bf16.msra.mxu0 0
      %5403 = vmatprep.subr.bf16.mxu0 0
      %5404 = vmatpush1.bf16.msra.mxu0 0
      %5405 = vmatprep.subr.bf16.mxu0 0
      %5406 = vmatpush1.bf16.msra.mxu0 0
      %5407 = vmatprep.subr.bf16.mxu0 0
      %5408 = vmatpush1.bf16.msra.mxu0 0
      %5409 = vmatprep.subr.bf16.mxu0 0
      %5410 = vmatpush1.bf16.msra.mxu0 0
      %5411 = vmatprep.subr.bf16.mxu0 0
      %5412 = vmatpush1.bf16.msra.mxu0 0
      %5413 = vmatprep.subr.bf16.mxu0 0
      %5414 = vmatpush1.bf16.msra.mxu0 0
      %5415 = vmatprep.subr.bf16.mxu0 0
      %5416 = vmatpush1.bf16.msra.mxu0 0
      %5417 = vmatprep.subr.bf16.mxu0 0
      %5418 = vmatpush1.bf16.msra.mxu0 0
      %5419 = vmatprep.subr.bf16.mxu0 0
      %5420 = vmatpush1.bf16.msra.mxu0 0
      %5421 = vmatprep.subr.bf16.mxu0 0
      %5422 = vmatpush1.bf16.msra.mxu0 0
      %5423 = vmatprep.subr.bf16.mxu0 0
      %5424 = vmatpush1.bf16.msra.mxu0 0
      %5425 = vmatprep.subr.bf16.mxu0 0
      %5426 = vmatpush1.bf16.msra.mxu0 0
      %5427 = vmatprep.subr.bf16.mxu0 0
      %5428 = vmatpush1.bf16.msra.mxu0 0
      %5429 = vmatprep.mubr.bf16.mxu0 0
      %5430 = vmatmul.mubr.bf16.gmra.mrb[0].mxu0 %v5389
      %v5431 = vpop.f32.mrb[0].mxu0
      %v5432 = vadd.f32 0.0, %v5431
      %v5433 = vpop.f32.mrb[0].mxu0
      %v5434 = vpop.f32.mrb[0].mxu0
      %v5435 = vadd.f32 0.0, %v5434
      %v5436 = vpop.f32.mrb[0].mxu0
      %5437 = vmatprep.mubr.bf16.mxu0 0
      %5438 = vmatmul.mubr.bf16.gmra.mrb[0].mxu0 %v5392
      %v5439 = vpop.f32.mrb[0].mxu0
      %v5440 = vadd.f32 0.0, %v5439
      %v5441 = vpop.f32.mrb[0].mxu0
      %v5442 = vpop.f32.mrb[0].mxu0
      %v5443 = vpop.f32.mrb[0].mxu0
      %5444 = vdwg.mxu0
      %v5446 = vsel %vm923, %v5382, 0
      %v5449 = vsel %vm923, %v5383, 0
      %v5452 = vsel %vm1594, %v5384, 0
      %5454 = vmatprep.subr.bf16.mxu0 0
      %5455 = vmatpush1.bf16.msra.mxu0 %v5452
      %5456 = vmatprep.subr.bf16.mxu0 0
      %5457 = vmatpush1.bf16.msra.mxu0 0
      %5458 = vmatprep.subr.bf16.mxu0 0
      %5459 = vmatpush1.bf16.msra.mxu0 0
      %5460 = vmatprep.subr.bf16.mxu0 0
      %5461 = vmatpush1.bf16.msra.mxu0 0
      %5462 = vmatprep.subr.bf16.mxu0 0
      %5463 = vmatpush1.bf16.msra.mxu0 0
      %5464 = vmatprep.subr.bf16.mxu0 0
      %5465 = vmatpush1.bf16.msra.mxu0 0
      %5466 = vmatprep.subr.bf16.mxu0 0
      %5467 = vmatpush1.bf16.msra.mxu0 0
      %5468 = vmatprep.subr.bf16.mxu0 0
      %5469 = vmatpush1.bf16.msra.mxu0 0
      %5470 = vmatprep.subr.bf16.mxu0 0
      %5471 = vmatpush1.bf16.msra.mxu0 0
      %5472 = vmatprep.subr.bf16.mxu0 0
      %5473 = vmatpush1.bf16.msra.mxu0 0
      %5474 = vmatprep.subr.bf16.mxu0 0
      %5475 = vmatpush1.bf16.msra.mxu0 0
      %5476 = vmatprep.subr.bf16.mxu0 0
      %5477 = vmatpush1.bf16.msra.mxu0 0
      %5478 = vmatprep.subr.bf16.mxu0 0
      %5479 = vmatpush1.bf16.msra.mxu0 0
      %5480 = vmatprep.subr.bf16.mxu0 0
      %5481 = vmatpush1.bf16.msra.mxu0 0
      %5482 = vmatprep.subr.bf16.mxu0 0
      %5483 = vmatpush1.bf16.msra.mxu0 0
      %5484 = vmatprep.subr.bf16.mxu0 0
      %5485 = vmatpush1.bf16.msra.mxu0 0
      %5486 = vmatprep.mubr.bf16.mxu0 0
      %5487 = vmatmul.mubr.bf16.gmra.mrb[0].mxu0 %v5446
      %v5488 = vpop.f32.mrb[0].mxu0
      %v5489 = vadd.f32 %v5432, %v5488
      %v5490 = vpop.f32.mrb[0].mxu0
      %v5491 = vpop.f32.mrb[0].mxu0
      %v5492 = vadd.f32 %v5435, %v5491
      %v5493 = vpop.f32.mrb[0].mxu0
      %5494 = vmatprep.mubr.bf16.mxu0 0
      %5495 = vmatmul.mubr.bf16.gmra.mrb[0].mxu0 %v5449
      %v5496 = vpop.f32.mrb[0].mxu0
      %v5497 = vadd.f32 %v5440, %v5496
      %v5498 = vpop.f32.mrb[0].mxu0
      %v5499 = vpop.f32.mrb[0].mxu0
      %v5500 = vpop.f32.mrb[0].mxu0
      %5501 = vdwg.mxu0
      %v5502 = vpack.c.bf16 %v5310, %v5307
      %v5503 = vpack.c.bf16 %v5315, %v5315
      %v5504 = vld [vmem:[%s1705] sm:$0xf]
      %v5506 = vsel %vm923, %v5502, 0
      %v5509 = vsel %vm923, %v5503, 0
      %v5512 = vsel %vm1594, %v5504, 0
      %5514 = vmatprep.subr.bf16.mxu0 0
      %5515 = vmatpush1.bf16.msra.mxu0 %v5512
      %5516 = vmatprep.subr.bf16.mxu0 0
      %5517 = vmatpush1.bf16.msra.mxu0 0
      %5518 = vmatprep.subr.bf16.mxu0 0
      %5519 = vmatpush1.bf16.msra.mxu0 0
      %5520 = vmatprep.subr.bf16.mxu0 0
      %5521 = vmatpush1.bf16.msra.mxu0 0
      %5522 = vmatprep.subr.bf16.mxu0 0
      %5523 = vmatpush1.bf16.msra.mxu0 0
      %5524 = vmatprep.subr.bf16.mxu0 0
      %5525 = vmatpush1.bf16.msra.mxu0 0
      %5526 = vmatprep.subr.bf16.mxu0 0
      %5527 = vmatpush1.bf16.msra.mxu0 0
      %5528 = vmatprep.subr.bf16.mxu0 0
      %5529 = vmatpush1.bf16.msra.mxu0 0
      %5530 = vmatprep.subr.bf16.mxu0 0
      %5531 = vmatpush1.bf16.msra.mxu0 0
      %5532 = vmatprep.subr.bf16.mxu0 0
      %5533 = vmatpush1.bf16.msra.mxu0 0
      %5534 = vmatprep.subr.bf16.mxu0 0
      %5535 = vmatpush1.bf16.msra.mxu0 0
      %5536 = vmatprep.subr.bf16.mxu0 0
      %5537 = vmatpush1.bf16.msra.mxu0 0
      %5538 = vmatprep.subr.bf16.mxu0 0
      %5539 = vmatpush1.bf16.msra.mxu0 0
      %5540 = vmatprep.subr.bf16.mxu0 0
      %5541 = vmatpush1.bf16.msra.mxu0 0
      %5542 = vmatprep.subr.bf16.mxu0 0
      %5543 = vmatpush1.bf16.msra.mxu0 0
      %5544 = vmatprep.subr.bf16.mxu0 0
      %5545 = vmatpush1.bf16.msra.mxu0 0
      %5546 = vmatprep.mubr.bf16.mxu0 0
      %5547 = vmatmul.mubr.bf16.gmra.mrb[0].mxu0 %v5506
      %v5548 = vpop.f32.mrb[0].mxu0
      %v5549 = vadd.f32 0.0, %v5548
      %v5550 = vpop.f32.mrb[0].mxu0
      %v5551 = vpop.f32.mrb[0].mxu0
      %v5552 = vadd.f32 0.0, %v5551
      %v5553 = vpop.f32.mrb[0].mxu0
      %5554 = vmatprep.mubr.bf16.mxu0 0
      %5555 = vmatmul.mubr.bf16.gmra.mrb[0].mxu0 %v5509
      %v5556 = vpop.f32.mrb[0].mxu0
      %v5557 = vadd.f32 0.0, %v5556
      %v5558 = vpop.f32.mrb[0].mxu0
      %v5559 = vpop.f32.mrb[0].mxu0
      %v5560 = vpop.f32.mrb[0].mxu0
      %5561 = vdwg.mxu0
      %v5562 = vadd.f32 %v5489, %v5549
      %v5563 = vadd.f32 %v5492, %v5552
      %v5564 = vadd.f32 %v5497, %v5557
      %v5565 = vpack.c.bf16 %v5372, %v5369
      %v5566 = vpack.c.bf16 %v5377, %v5377
      %v5567 = vld [vmem:[%s1769] sm:$0xf]
      %v5569 = vsel %vm923, %v5565, 0
      %v5572 = vsel %vm923, %v5566, 0
      %v5575 = vsel %vm1594, %v5567, 0
      %5577 = vmatprep.subr.bf16.mxu0 0
      %5578 = vmatpush1.bf16.msra.mxu0 %v5575
      %5579 = vmatprep.subr.bf16.mxu0 0
      %5580 = vmatpush1.bf16.msra.mxu0 0
      %5581 = vmatprep.subr.bf16.mxu0 0
      %5582 = vmatpush1.bf16.msra.mxu0 0
      %5583 = vmatprep.subr.bf16.mxu0 0
      %5584 = vmatpush1.bf16.msra.mxu0 0
      %5585 = vmatprep.subr.bf16.mxu0 0
      %5586 = vmatpush1.bf16.msra.mxu0 0
      %5587 = vmatprep.subr.bf16.mxu0 0
      %5588 = vmatpush1.bf16.msra.mxu0 0
      %5589 = vmatprep.subr.bf16.mxu0 0
      %5590 = vmatpush1.bf16.msra.mxu0 0
      %5591 = vmatprep.subr.bf16.mxu0 0
      %5592 = vmatpush1.bf16.msra.mxu0 0
      %5593 = vmatprep.subr.bf16.mxu0 0
      %5594 = vmatpush1.bf16.msra.mxu0 0
      %5595 = vmatprep.subr.bf16.mxu0 0
      %5596 = vmatpush1.bf16.msra.mxu0 0
      %5597 = vmatprep.subr.bf16.mxu0 0
      %5598 = vmatpush1.bf16.msra.mxu0 0
      %5599 = vmatprep.subr.bf16.mxu0 0
      %5600 = vmatpush1.bf16.msra.mxu0 0
      %5601 = vmatprep.subr.bf16.mxu0 0
      %5602 = vmatpush1.bf16.msra.mxu0 0
      %5603 = vmatprep.subr.bf16.mxu0 0
      %5604 = vmatpush1.bf16.msra.mxu0 0
      %5605 = vmatprep.subr.bf16.mxu0 0
      %5606 = vmatpush1.bf16.msra.mxu0 0
      %5607 = vmatprep.subr.bf16.mxu0 0
      %5608 = vmatpush1.bf16.msra.mxu0 0
      %5609 = vmatprep.mubr.bf16.mxu0 0
      %5610 = vmatmul.mubr.bf16.gmra.mrb[0].mxu0 %v5569
      %v5611 = vpop.f32.mrb[0].mxu0
      %v5612 = vadd.f32 0.0, %v5611
      %v5613 = vpop.f32.mrb[0].mxu0
      %v5614 = vpop.f32.mrb[0].mxu0
      %v5615 = vadd.f32 0.0, %v5614
      %v5616 = vpop.f32.mrb[0].mxu0
      %5617 = vmatprep.mubr.bf16.mxu0 0
      %5618 = vmatmul.mubr.bf16.gmra.mrb[0].mxu0 %v5572
      %v5619 = vpop.f32.mrb[0].mxu0
      %v5620 = vadd.f32 0.0, %v5619
      %v5621 = vpop.f32.mrb[0].mxu0
      %v5622 = vpop.f32.mrb[0].mxu0
      %v5623 = vpop.f32.mrb[0].mxu0
      %5624 = vdwg.mxu0
      %v5625 = vadd.f32 %v5562, %v5612
      %v5626 = vadd.f32 %v5563, %v5615
      %v5627 = vadd.f32 %v5564, %v5620
      %5628 = vst.msk [vmem:[#allocation2 + $0x44] sm:$0xff] %vm462, %v5625
      %5629 = vst.msk [vmem:[#allocation2 + $0x4c] sm:$0xff] %vm462, %v5626
      %5630 = vst.msk [vmem:[#allocation2 + $0x54] sm:$0x1] %vm1833, %v5627
      %5632 = vrot.lane.b32.xlu0 %v902, 120
      %v5633 = vpop.permute.xlu0 %5632
      %5634 = vrot.lane.b32.xlu0 %v902, 112
      %v5635 = vpop.permute.xlu0 %5634
      %5636 = vrot.lane.b32.xlu0 %v902, 104
      %v5637 = vpop.permute.xlu0 %5636
      %vm5638 = vsmask.f32 5376
      %v5640 = vshrl.u32 %v901, 16
      %v5642 = vrot.slane %v5640, 2
      %v5643 = vshll.u32 %v901, 16
      %v5645 = vrot.slane %v5643, 3
      %v5646 = vor.u32 %v5642, %v5645
      %v5648 = vshrl.u32 %v902, 16
      %v5650 = vrot.slane %v5648, 2
      %v5651 = vshll.u32 %v902, 16
      %v5653 = vrot.slane %v5651, 3
      %v5654 = vor.u32 %v5650, %v5653
      %v5655 = vsel %vm5638, %v5646, %v5654
      %5656 = vrot.lane.b32.xlu0 %v5655, 96
      %v5657 = vpop.permute.xlu0 %5656
      %5658 = vrot.lane.b32.xlu0 %v5650, 96
      %v5659 = vpop.permute.xlu0 %5658
      %v5661 = vsel %vm923, %v5655, 0
      %v5664 = vsel %vm923, %v5650, 0
      %v5667 = vsel %vm923, %v5657, 0
      %v5670 = vsel %vm923, %v5659, 0
      %5672 = vmatprep.subr.bf16.mxu0 0
      %5673 = vmatpush1.bf16.xpose.msra.mxu0 %v5667
      %5674 = vmatprep.subr.bf16.mxu0 0
      %5675 = vmatpush1.bf16.xpose.msra.mxu0 %v5670
      %5676 = vmatprep.subr.bf16.mxu0 0
      %5677 = vmatpush1.bf16.xpose.msra.mxu0 0
      %5678 = vmatprep.subr.bf16.mxu0 0
      %5679 = vmatpush1.bf16.xpose.msra.mxu0 0
      %5680 = vmatprep.subr.bf16.mxu0 0
      %5681 = vmatpush1.bf16.xpose.msra.mxu0 0
      %5682 = vmatprep.subr.bf16.mxu0 0
      %5683 = vmatpush1.bf16.xpose.msra.mxu0 0
      %5684 = vmatprep.subr.bf16.mxu0 0
      %5685 = vmatpush1.bf16.xpose.msra.mxu0 0
      %5686 = vmatprep.subr.bf16.mxu0 0
      %5687 = vmatpush1.bf16.xpose.msra.mxu0 0
      %5688 = vmatprep.subr.bf16.mxu0 0
      %5689 = vmatpush1.bf16.xpose.msra.mxu0 0
      %5690 = vmatprep.subr.bf16.mxu0 0
      %5691 = vmatpush1.bf16.xpose.msra.mxu0 0
      %5692 = vmatprep.subr.bf16.mxu0 0
      %5693 = vmatpush1.bf16.xpose.msra.mxu0 0
      %5694 = vmatprep.subr.bf16.mxu0 0
      %5695 = vmatpush1.bf16.xpose.msra.mxu0 0
      %5696 = vmatprep.subr.bf16.mxu0 0
      %5697 = vmatpush1.bf16.xpose.msra.mxu0 0
      %5698 = vmatprep.subr.bf16.mxu0 0
      %5699 = vmatpush1.bf16.xpose.msra.mxu0 0
      %5700 = vmatprep.subr.bf16.mxu0 0
      %5701 = vmatpush1.bf16.xpose.msra.mxu0 0
      %5702 = vmatprep.subr.bf16.mxu0 0
      %5703 = vmatpush1.bf16.xpose.msra.mxu0 0
      %5704 = vmatprep.mubr.bf16.mxu0 0
      %5705 = vmatmul.mubr.bf16.gmra.mrb[0].mxu0 %v5661
      %v5706 = vpop.f32.mrb[0].mxu0
      %v5707 = vadd.f32 0.0, %v5706
      %v5708 = vpop.f32.mrb[0].mxu0
      %v5709 = vpop.f32.mrb[0].mxu0
      %v5710 = vadd.f32 0.0, %v5709
      %v5711 = vpop.f32.mrb[0].mxu0
      %5712 = vmatprep.mubr.bf16.mxu0 0
      %5713 = vmatmul.mubr.bf16.gmra.mrb[0].mxu0 %v5664
      %v5714 = vpop.f32.mrb[0].mxu0
      %v5715 = vadd.f32 0.0, %v5714
      %v5716 = vpop.f32.mrb[0].mxu0
      %v5717 = vpop.f32.mrb[0].mxu0
      %v5718 = vpop.f32.mrb[0].mxu0
      %5719 = vdwg.mxu0
      %v5721 = vshrl.u32 %v4708, 16
      %v5723 = vrot.slane %v5721, 2
      %v5724 = vshll.u32 %v4708, 16
      %v5726 = vrot.slane %v5724, 3
      %v5727 = vor.u32 %v5723, %v5726
      %v5729 = vshrl.u32 %v5633, 16
      %v5731 = vrot.slane %v5729, 2
      %v5732 = vshll.u32 %v5633, 16
      %v5734 = vrot.slane %v5732, 3
      %v5735 = vor.u32 %v5731, %v5734
      %v5736 = vsel %vm5638, %v5727, %v5735
      %5737 = vrot.lane.b32.xlu0 %v5736, 96
      %v5738 = vpop.permute.xlu0 %5737
      %5739 = vrot.lane.b32.xlu0 %v5731, 96
      %v5740 = vpop.permute.xlu0 %5739
      %v5742 = vsel %vm923, %v5736, 0
      %v5745 = vsel %vm923, %v5731, 0
      %v5748 = vsel %vm923, %v5738, 0
      %v5751 = vsel %vm923, %v5740, 0
      %5753 = vmatprep.subr.bf16.mxu0 0
      %5754 = vmatpush1.bf16.xpose.msra.mxu0 %v5748
      %5755 = vmatprep.subr.bf16.mxu0 0
      %5756 = vmatpush1.bf16.xpose.msra.mxu0 %v5751
      %5757 = vmatprep.subr.bf16.mxu0 0
      %5758 = vmatpush1.bf16.xpose.msra.mxu0 0
      %5759 = vmatprep.subr.bf16.mxu0 0
      %5760 = vmatpush1.bf16.xpose.msra.mxu0 0
      %5761 = vmatprep.subr.bf16.mxu0 0
      %5762 = vmatpush1.bf16.xpose.msra.mxu0 0
      %5763 = vmatprep.subr.bf16.mxu0 0
      %5764 = vmatpush1.bf16.xpose.msra.mxu0 0
      %5765 = vmatprep.subr.bf16.mxu0 0
      %5766 = vmatpush1.bf16.xpose.msra.mxu0 0
      %5767 = vmatprep.subr.bf16.mxu0 0
      %5768 = vmatpush1.bf16.xpose.msra.mxu0 0
      %5769 = vmatprep.subr.bf16.mxu0 0
      %5770 = vmatpush1.bf16.xpose.msra.mxu0 0
      %5771 = vmatprep.subr.bf16.mxu0 0
      %5772 = vmatpush1.bf16.xpose.msra.mxu0 0
      %5773 = vmatprep.subr.bf16.mxu0 0
      %5774 = vmatpush1.bf16.xpose.msra.mxu0 0
      %5775 = vmatprep.subr.bf16.mxu0 0
      %5776 = vmatpush1.bf16.xpose.msra.mxu0 0
      %5777 = vmatprep.subr.bf16.mxu0 0
      %5778 = vmatpush1.bf16.xpose.msra.mxu0 0
      %5779 = vmatprep.subr.bf16.mxu0 0
      %5780 = vmatpush1.bf16.xpose.msra.mxu0 0
      %5781 = vmatprep.subr.bf16.mxu0 0
      %5782 = vmatpush1.bf16.xpose.msra.mxu0 0
      %5783 = vmatprep.subr.bf16.mxu0 0
      %5784 = vmatpush1.bf16.xpose.msra.mxu0 0
      %5785 = vmatprep.mubr.bf16.mxu0 0
      %5786 = vmatmul.mubr.bf16.gmra.mrb[0].mxu0 %v5742
      %v5787 = vpop.f32.mrb[0].mxu0
      %v5788 = vadd.f32 0.0, %v5787
      %v5789 = vpop.f32.mrb[0].mxu0
      %v5790 = vpop.f32.mrb[0].mxu0
      %v5791 = vadd.f32 0.0, %v5790
      %v5792 = vpop.f32.mrb[0].mxu0
      %5793 = vmatprep.mubr.bf16.mxu0 0
      %5794 = vmatmul.mubr.bf16.gmra.mrb[0].mxu0 %v5745
      %v5795 = vpop.f32.mrb[0].mxu0
      %v5796 = vadd.f32 0.0, %v5795
      %v5797 = vpop.f32.mrb[0].mxu0
      %v5798 = vpop.f32.mrb[0].mxu0
      %v5799 = vpop.f32.mrb[0].mxu0
      %5800 = vdwg.mxu0
      %v5802 = vshrl.u32 %v4710, 16
      %v5804 = vrot.slane %v5802, 2
      %v5805 = vshll.u32 %v4710, 16
      %v5807 = vrot.slane %v5805, 3
      %v5808 = vor.u32 %v5804, %v5807
      %v5810 = vshrl.u32 %v5635, 16
      %v5812 = vrot.slane %v5810, 2
      %v5813 = vshll.u32 %v5635, 16
      %v5815 = vrot.slane %v5813, 3
      %v5816 = vor.u32 %v5812, %v5815
      %v5817 = vsel %vm5638, %v5808, %v5816
      %5818 = vrot.lane.b32.xlu0 %v5817, 96
      %v5819 = vpop.permute.xlu0 %5818
      %5820 = vrot.lane.b32.xlu0 %v5812, 96
      %v5821 = vpop.permute.xlu0 %5820
      %v5823 = vsel %vm923, %v5817, 0
      %v5826 = vsel %vm923, %v5812, 0
      %v5829 = vsel %vm923, %v5819, 0
      %v5832 = vsel %vm923, %v5821, 0
      %5834 = vmatprep.subr.bf16.mxu0 0
      %5835 = vmatpush1.bf16.xpose.msra.mxu0 %v5829
      %5836 = vmatprep.subr.bf16.mxu0 0
      %5837 = vmatpush1.bf16.xpose.msra.mxu0 %v5832
      %5838 = vmatprep.subr.bf16.mxu0 0
      %5839 = vmatpush1.bf16.xpose.msra.mxu0 0
      %5840 = vmatprep.subr.bf16.mxu0 0
      %5841 = vmatpush1.bf16.xpose.msra.mxu0 0
      %5842 = vmatprep.subr.bf16.mxu0 0
      %5843 = vmatpush1.bf16.xpose.msra.mxu0 0
      %5844 = vmatprep.subr.bf16.mxu0 0
      %5845 = vmatpush1.bf16.xpose.msra.mxu0 0
      %5846 = vmatprep.subr.bf16.mxu0 0
      %5847 = vmatpush1.bf16.xpose.msra.mxu0 0
      %5848 = vmatprep.subr.bf16.mxu0 0
      %5849 = vmatpush1.bf16.xpose.msra.mxu0 0
      %5850 = vmatprep.subr.bf16.mxu0 0
      %5851 = vmatpush1.bf16.xpose.msra.mxu0 0
      %5852 = vmatprep.subr.bf16.mxu0 0
      %5853 = vmatpush1.bf16.xpose.msra.mxu0 0
      %5854 = vmatprep.subr.bf16.mxu0 0
      %5855 = vmatpush1.bf16.xpose.msra.mxu0 0
      %5856 = vmatprep.subr.bf16.mxu0 0
      %5857 = vmatpush1.bf16.xpose.msra.mxu0 0
      %5858 = vmatprep.subr.bf16.mxu0 0
      %5859 = vmatpush1.bf16.xpose.msra.mxu0 0
      %5860 = vmatprep.subr.bf16.mxu0 0
      %5861 = vmatpush1.bf16.xpose.msra.mxu0 0
      %5862 = vmatprep.subr.bf16.mxu0 0
      %5863 = vmatpush1.bf16.xpose.msra.mxu0 0
      %5864 = vmatprep.subr.bf16.mxu0 0
      %5865 = vmatpush1.bf16.xpose.msra.mxu0 0
      %5866 = vmatprep.mubr.bf16.mxu0 0
      %5867 = vmatmul.mubr.bf16.gmra.mrb[0].mxu0 %v5823
      %v5868 = vpop.f32.mrb[0].mxu0
      %v5869 = vadd.f32 0.0, %v5868
      %v5870 = vpop.f32.mrb[0].mxu0
      %v5871 = vpop.f32.mrb[0].mxu0
      %v5872 = vadd.f32 0.0, %v5871
      %v5873 = vpop.f32.mrb[0].mxu0
      %5874 = vmatprep.mubr.bf16.mxu0 0
      %5875 = vmatmul.mubr.bf16.gmra.mrb[0].mxu0 %v5826
      %v5876 = vpop.f32.mrb[0].mxu0
      %v5877 = vadd.f32 0.0, %v5876
      %v5878 = vpop.f32.mrb[0].mxu0
      %v5879 = vpop.f32.mrb[0].mxu0
      %v5880 = vpop.f32.mrb[0].mxu0
      %5881 = vdwg.mxu0
      %v5883 = vshrl.u32 %v4712, 16
      %v5885 = vrot.slane %v5883, 2
      %v5886 = vshll.u32 %v4712, 16
      %v5888 = vrot.slane %v5886, 3
      %v5889 = vor.u32 %v5885, %v5888
      %v5891 = vshrl.u32 %v5637, 16
      %v5893 = vrot.slane %v5891, 2
      %v5894 = vshll.u32 %v5637, 16
      %v5896 = vrot.slane %v5894, 3
      %v5897 = vor.u32 %v5893, %v5896
      %v5898 = vsel %vm5638, %v5889, %v5897
      %5899 = vrot.lane.b32.xlu0 %v5898, 96
      %v5900 = vpop.permute.xlu0 %5899
      %5901 = vrot.lane.b32.xlu0 %v5893, 96
      %v5902 = vpop.permute.xlu0 %5901
      %v5904 = vsel %vm923, %v5898, 0
      %v5907 = vsel %vm923, %v5893, 0
      %v5910 = vsel %vm923, %v5900, 0
      %v5913 = vsel %vm923, %v5902, 0
      %5915 = vmatprep.subr.bf16.mxu0 0
      %5916 = vmatpush1.bf16.xpose.msra.mxu0 %v5910
      %5917 = vmatprep.subr.bf16.mxu0 0
      %5918 = vmatpush1.bf16.xpose.msra.mxu0 %v5913
      %5919 = vmatprep.subr.bf16.mxu0 0
      %5920 = vmatpush1.bf16.xpose.msra.mxu0 0
      %5921 = vmatprep.subr.bf16.mxu0 0
      %5922 = vmatpush1.bf16.xpose.msra.mxu0 0
      %5923 = vmatprep.subr.bf16.mxu0 0
      %5924 = vmatpush1.bf16.xpose.msra.mxu0 0
      %5925 = vmatprep.subr.bf16.mxu0 0
      %5926 = vmatpush1.bf16.xpose.msra.mxu0 0
      %5927 = vmatprep.subr.bf16.mxu0 0
      %5928 = vmatpush1.bf16.xpose.msra.mxu0 0
      %5929 = vmatprep.subr.bf16.mxu0 0
      %5930 = vmatpush1.bf16.xpose.msra.mxu0 0
      %5931 = vmatprep.subr.bf16.mxu0 0
      %5932 = vmatpush1.bf16.xpose.msra.mxu0 0
      %5933 = vmatprep.subr.bf16.mxu0 0
      %5934 = vmatpush1.bf16.xpose.msra.mxu0 0
      %5935 = vmatprep.subr.bf16.mxu0 0
      %5936 = vmatpush1.bf16.xpose.msra.mxu0 0
      %5937 = vmatprep.subr.bf16.mxu0 0
      %5938 = vmatpush1.bf16.xpose.msra.mxu0 0
      %5939 = vmatprep.subr.bf16.mxu0 0
      %5940 = vmatpush1.bf16.xpose.msra.mxu0 0
      %5941 = vmatprep.subr.bf16.mxu0 0
      %5942 = vmatpush1.bf16.xpose.msra.mxu0 0
      %5943 = vmatprep.subr.bf16.mxu0 0
      %5944 = vmatpush1.bf16.xpose.msra.mxu0 0
      %5945 = vmatprep.subr.bf16.mxu0 0
      %5946 = vmatpush1.bf16.xpose.msra.mxu0 0
      %5947 = vmatprep.mubr.bf16.mxu0 0
      %5948 = vmatmul.mubr.bf16.gmra.mrb[0].mxu0 %v5904
      %v5949 = vpop.f32.mrb[0].mxu0
      %v5950 = vadd.f32 0.0, %v5949
      %v5951 = vpop.f32.mrb[0].mxu0
      %v5952 = vpop.f32.mrb[0].mxu0
      %v5953 = vadd.f32 0.0, %v5952
      %v5954 = vpop.f32.mrb[0].mxu0
      %5955 = vmatprep.mubr.bf16.mxu0 0
      %5956 = vmatmul.mubr.bf16.gmra.mrb[0].mxu0 %v5907
      %v5957 = vpop.f32.mrb[0].mxu0
      %v5958 = vadd.f32 0.0, %v5957
      %v5959 = vpop.f32.mrb[0].mxu0
      %v5960 = vpop.f32.mrb[0].mxu0
      %v5961 = vpop.f32.mrb[0].mxu0
      %5962 = vdwg.mxu0
      %v5963 = vmul.f32 %v5707, 0.35355338
      %v5964 = vmul.f32 %v5710, 0.35355338
      %v5965 = vmul.f32 %v5715, 0.35355338
      %v5966 = vmul.f32 %v5788, 0.35355338
      %v5967 = vmul.f32 %v5791, 0.35355338
      %v5968 = vmul.f32 %v5796, 0.35355338
      %v5969 = vmul.f32 %v5869, 0.35355338
      %v5970 = vmul.f32 %v5872, 0.35355338
      %v5971 = vmul.f32 %v5877, 0.35355338
      %v5972 = vmul.f32 %v5950, 0.35355338
      %v5973 = vmul.f32 %v5953, 0.35355338
      %v5974 = vmul.f32 %v5958, 0.35355338
      %v5975 = vsel %vm1188, %v5963, -inf
      %5976 = vmax.xlane.f32.xlu0 %v5975
      %v5977 = vpop.xlane.xlu0 %5976
      %v5978 = vsel %vm1188, %v5964, -inf
      %5979 = vmax.xlane.f32.xlu0 %v5978
      %v5980 = vpop.xlane.xlu0 %5979
      %v5981 = vsel %vm1195, %v5965, -inf
      %5982 = vmax.xlane.f32.xlu0 %v5981
      %v5983 = vpop.xlane.xlu0 %5982
      %v5984 = vsel %vm1188, %v5966, -inf
      %5985 = vmax.xlane.f32.xlu0 %v5984
      %v5986 = vpop.xlane.xlu0 %5985
      %v5987 = vsel %vm1188, %v5967, -inf
      %5988 = vmax.xlane.f32.xlu0 %v5987
      %v5989 = vpop.xlane.xlu0 %5988
      %v5990 = vsel %vm1195, %v5968, -inf
      %5991 = vmax.xlane.f32.xlu0 %v5990
      %v5992 = vpop.xlane.xlu0 %5991
      %v5993 = vsel %vm1188, %v5969, -inf
      %5994 = vmax.xlane.f32.xlu0 %v5993
      %v5995 = vpop.xlane.xlu0 %5994
      %v5996 = vsel %vm1188, %v5970, -inf
      %5997 = vmax.xlane.f32.xlu0 %v5996
      %v5998 = vpop.xlane.xlu0 %5997
      %v5999 = vsel %vm1195, %v5971, -inf
      %6000 = vmax.xlane.f32.xlu0 %v5999
      %v6001 = vpop.xlane.xlu0 %6000
      %v6002 = vsel %vm1188, %v5972, -inf
      %6003 = vmax.xlane.f32.xlu0 %v6002
      %v6004 = vpop.xlane.xlu0 %6003
      %v6005 = vsel %vm1188, %v5973, -inf
      %6006 = vmax.xlane.f32.xlu0 %v6005
      %v6007 = vpop.xlane.xlu0 %6006
      %v6008 = vsel %vm1195, %v5974, -inf
      %6009 = vmax.xlane.f32.xlu0 %v6008
      %v6010 = vpop.xlane.xlu0 %6009
      %v6011 = vsub.f32 %v5963, %v5977
      %v6012 = vsub.f32 %v5964, %v5980
      %v6013 = vsub.f32 %v5965, %v5983
      %v6014 = vsub.f32 %v5966, %v5986
      %v6015 = vsub.f32 %v5967, %v5989
      %v6016 = vsub.f32 %v5968, %v5992
      %v6017 = vsub.f32 %v5969, %v5995
      %v6018 = vsub.f32 %v5970, %v5998
      %v6019 = vsub.f32 %v5971, %v6001
      %v6020 = vsub.f32 %v5972, %v6004
      %v6021 = vsub.f32 %v5973, %v6007
      %v6022 = vsub.f32 %v5974, %v6010
      %v6023 = vmul.f32 %v6011, 1.442695
      %v6024 = vpow.pop %v6023
      %v6025 = vmul.f32 %v6012, 1.442695
      %v6026 = vpow.pop %v6025
      %v6027 = vmul.f32 %v6013, 1.442695
      %v6028 = vpow.pop %v6027
      %v6029 = vmul.f32 %v6014, 1.442695
      %v6030 = vpow.pop %v6029
      %v6031 = vmul.f32 %v6015, 1.442695
      %v6032 = vpow.pop %v6031
      %v6033 = vmul.f32 %v6016, 1.442695
      %v6034 = vpow.pop %v6033
      %v6035 = vmul.f32 %v6017, 1.442695
      %v6036 = vpow.pop %v6035
      %v6037 = vmul.f32 %v6018, 1.442695
      %v6038 = vpow.pop %v6037
      %v6039 = vmul.f32 %v6019, 1.442695
      %v6040 = vpow.pop %v6039
      %v6041 = vmul.f32 %v6020, 1.442695
      %v6042 = vpow.pop %v6041
      %v6043 = vmul.f32 %v6021, 1.442695
      %v6044 = vpow.pop %v6043
      %v6045 = vmul.f32 %v6022, 1.442695
      %v6046 = vpow.pop %v6045
      %v6047 = vsel %vm1188, %v6024, 0.0
      %6048 = vadd.xlane.f32.xlu0 %v6047
      %v6049 = vpop.xlane.xlu0 %6048
      %v6050 = vsel %vm1188, %v6026, 0.0
      %6051 = vadd.xlane.f32.xlu0 %v6050
      %v6052 = vpop.xlane.xlu0 %6051
      %v6053 = vsel %vm1195, %v6028, 0.0
      %6054 = vadd.xlane.f32.xlu0 %v6053
      %v6055 = vpop.xlane.xlu0 %6054
      %v6056 = vsel %vm1188, %v6030, 0.0
      %6057 = vadd.xlane.f32.xlu0 %v6056
      %v6058 = vpop.xlane.xlu0 %6057
      %v6059 = vsel %vm1188, %v6032, 0.0
      %6060 = vadd.xlane.f32.xlu0 %v6059
      %v6061 = vpop.xlane.xlu0 %6060
      %v6062 = vsel %vm1195, %v6034, 0.0
      %6063 = vadd.xlane.f32.xlu0 %v6062
      %v6064 = vpop.xlane.xlu0 %6063
      %v6065 = vsel %vm1188, %v6036, 0.0
      %6066 = vadd.xlane.f32.xlu0 %v6065
      %v6067 = vpop.xlane.xlu0 %6066
      %v6068 = vsel %vm1188, %v6038, 0.0
      %6069 = vadd.xlane.f32.xlu0 %v6068
      %v6070 = vpop.xlane.xlu0 %6069
      %v6071 = vsel %vm1195, %v6040, 0.0
      %6072 = vadd.xlane.f32.xlu0 %v6071
      %v6073 = vpop.xlane.xlu0 %6072
      %v6074 = vsel %vm1188, %v6042, 0.0
      %6075 = vadd.xlane.f32.xlu0 %v6074
      %v6076 = vpop.xlane.xlu0 %6075
      %v6077 = vsel %vm1188, %v6044, 0.0
      %6078 = vadd.xlane.f32.xlu0 %v6077
      %v6079 = vpop.xlane.xlu0 %6078
      %v6080 = vsel %vm1195, %v6046, 0.0
      %6081 = vadd.xlane.f32.xlu0 %v6080
      %v6082 = vpop.xlane.xlu0 %6081
      %v6083 = vrcp.pop %v6049
      %v6084 = vrcp.pop %v6052
      %v6085 = vrcp.pop %v6055
      %v6086 = vrcp.pop %v6058
      %v6087 = vrcp.pop %v6061
      %v6088 = vrcp.pop %v6064
      %v6089 = vrcp.pop %v6067
      %v6090 = vrcp.pop %v6070
      %v6091 = vrcp.pop %v6073
      %v6092 = vrcp.pop %v6076
      %v6093 = vrcp.pop %v6079
      %v6094 = vrcp.pop %v6082
      %v6095 = vmul.f32 %v6024, %v6083
      %v6096 = vmul.f32 %v6026, %v6084
      %v6097 = vmul.f32 %v6028, %v6085
      %v6098 = vmul.f32 %v6030, %v6086
      %v6099 = vmul.f32 %v6032, %v6087
      %v6100 = vmul.f32 %v6034, %v6088
      %v6101 = vmul.f32 %v6036, %v6089
      %v6102 = vmul.f32 %v6038, %v6090
      %v6103 = vmul.f32 %v6040, %v6091
      %v6104 = vmul.f32 %v6042, %v6092
      %v6105 = vmul.f32 %v6044, %v6093
      %v6106 = vmul.f32 %v6046, %v6094
      %v6107 = vpack.c.bf16 %v6096, %v6095
      %v6108 = vpack.c.bf16 %v6097, %v6097
      %v6109 = vpack.c.bf16 %v6099, %v6098
      %v6110 = vpack.c.bf16 %v6100, %v6100
      %v6111 = vpack.c.bf16 %v6102, %v6101
      %v6112 = vpack.c.bf16 %v6103, %v6103
      %v6113 = vpack.c.bf16 %v6105, %v6104
      %v6114 = vpack.c.bf16 %v6106, %v6106
      %6115 = vrot.lane.b32.xlu0 %v5655, 64
      %v6116 = vpop.permute.xlu0 %6115
      %6117 = vrot.lane.b32.xlu0 %v5650, 64
      %v6118 = vpop.permute.xlu0 %6117
      %v6121 = vsel %vm1188, %v6107, 0
      %v6124 = vsel %vm1188, %v6108, 0
      %v6127 = vand.u32 %v6118, %v1343
      %6129 = vmatprep.subr.bf16.mxu0 0
      %6130 = vmatpush1.bf16.msra.mxu0 %v6116
      %6131 = vmatprep.subr.bf16.mxu0 0
      %6132 = vmatpush1.bf16.msra.mxu0 %v6127
      %6133 = vmatprep.subr.bf16.mxu0 0
      %6134 = vmatpush1.bf16.msra.mxu0 0
      %6135 = vmatprep.subr.bf16.mxu0 0
      %6136 = vmatpush1.bf16.msra.mxu0 0
      %6137 = vmatprep.subr.bf16.mxu0 0
      %6138 = vmatpush1.bf16.msra.mxu0 0
      %6139 = vmatprep.subr.bf16.mxu0 0
      %6140 = vmatpush1.bf16.msra.mxu0 0
      %6141 = vmatprep.subr.bf16.mxu0 0
      %6142 = vmatpush1.bf16.msra.mxu0 0
      %6143 = vmatprep.subr.bf16.mxu0 0
      %6144 = vmatpush1.bf16.msra.mxu0 0
      %6145 = vmatprep.subr.bf16.mxu0 0
      %6146 = vmatpush1.bf16.msra.mxu0 0
      %6147 = vmatprep.subr.bf16.mxu0 0
      %6148 = vmatpush1.bf16.msra.mxu0 0
      %6149 = vmatprep.subr.bf16.mxu0 0
      %6150 = vmatpush1.bf16.msra.mxu0 0
      %6151 = vmatprep.subr.bf16.mxu0 0
      %6152 = vmatpush1.bf16.msra.mxu0 0
      %6153 = vmatprep.subr.bf16.mxu0 0
      %6154 = vmatpush1.bf16.msra.mxu0 0
      %6155 = vmatprep.subr.bf16.mxu0 0
      %6156 = vmatpush1.bf16.msra.mxu0 0
      %6157 = vmatprep.subr.bf16.mxu0 0
      %6158 = vmatpush1.bf16.msra.mxu0 0
      %6159 = vmatprep.subr.bf16.mxu0 0
      %6160 = vmatpush1.bf16.msra.mxu0 0
      %6161 = vmatprep.mubr.bf16.mxu0 0
      %6162 = vmatmul.mubr.bf16.gmra.mrb[0].mxu0 %v6121
      %v6163 = vpop.f32.mrb[0].mxu0
      %v6164 = vadd.f32 0.0, %v6163
      %v6165 = vpop.f32.mrb[0].mxu0
      %v6166 = vpop.f32.mrb[0].mxu0
      %v6167 = vadd.f32 0.0, %v6166
      %v6168 = vpop.f32.mrb[0].mxu0
      %6169 = vmatprep.mubr.bf16.mxu0 0
      %6170 = vmatmul.mubr.bf16.gmra.mrb[0].mxu0 %v6124
      %v6171 = vpop.f32.mrb[0].mxu0
      %v6172 = vadd.f32 0.0, %v6171
      %v6173 = vpop.f32.mrb[0].mxu0
      %v6174 = vpop.f32.mrb[0].mxu0
      %v6175 = vpop.f32.mrb[0].mxu0
      %6176 = vdwg.mxu0
      %6177 = vrot.lane.b32.xlu0 %v5736, 64
      %v6178 = vpop.permute.xlu0 %6177
      %6179 = vrot.lane.b32.xlu0 %v5731, 64
      %v6180 = vpop.permute.xlu0 %6179
      %v6183 = vsel %vm1188, %v6109, 0
      %v6186 = vsel %vm1188, %v6110, 0
      %v6189 = vand.u32 %v6180, %v1343
      %6191 = vmatprep.subr.bf16.mxu0 0
      %6192 = vmatpush1.bf16.msra.mxu0 %v6178
      %6193 = vmatprep.subr.bf16.mxu0 0
      %6194 = vmatpush1.bf16.msra.mxu0 %v6189
      %6195 = vmatprep.subr.bf16.mxu0 0
      %6196 = vmatpush1.bf16.msra.mxu0 0
      %6197 = vmatprep.subr.bf16.mxu0 0
      %6198 = vmatpush1.bf16.msra.mxu0 0
      %6199 = vmatprep.subr.bf16.mxu0 0
      %6200 = vmatpush1.bf16.msra.mxu0 0
      %6201 = vmatprep.subr.bf16.mxu0 0
      %6202 = vmatpush1.bf16.msra.mxu0 0
      %6203 = vmatprep.subr.bf16.mxu0 0
      %6204 = vmatpush1.bf16.msra.mxu0 0
      %6205 = vmatprep.subr.bf16.mxu0 0
      %6206 = vmatpush1.bf16.msra.mxu0 0
      %6207 = vmatprep.subr.bf16.mxu0 0
      %6208 = vmatpush1.bf16.msra.mxu0 0
      %6209 = vmatprep.subr.bf16.mxu0 0
      %6210 = vmatpush1.bf16.msra.mxu0 0
      %6211 = vmatprep.subr.bf16.mxu0 0
      %6212 = vmatpush1.bf16.msra.mxu0 0
      %6213 = vmatprep.subr.bf16.mxu0 0
      %6214 = vmatpush1.bf16.msra.mxu0 0
      %6215 = vmatprep.subr.bf16.mxu0 0
      %6216 = vmatpush1.bf16.msra.mxu0 0
      %6217 = vmatprep.subr.bf16.mxu0 0
      %6218 = vmatpush1.bf16.msra.mxu0 0
      %6219 = vmatprep.subr.bf16.mxu0 0
      %6220 = vmatpush1.bf16.msra.mxu0 0
      %6221 = vmatprep.subr.bf16.mxu0 0
      %6222 = vmatpush1.bf16.msra.mxu0 0
      %6223 = vmatprep.mubr.bf16.mxu0 0
      %6224 = vmatmul.mubr.bf16.gmra.mrb[0].mxu0 %v6183
      %v6225 = vpop.f32.mrb[0].mxu0
      %v6226 = vadd.f32 0.0, %v6225
      %v6227 = vpop.f32.mrb[0].mxu0
      %v6228 = vpop.f32.mrb[0].mxu0
      %v6229 = vadd.f32 0.0, %v6228
      %v6230 = vpop.f32.mrb[0].mxu0
      %6231 = vmatprep.mubr.bf16.mxu0 0
      %6232 = vmatmul.mubr.bf16.gmra.mrb[0].mxu0 %v6186
      %v6233 = vpop.f32.mrb[0].mxu0
      %v6234 = vadd.f32 0.0, %v6233
      %v6235 = vpop.f32.mrb[0].mxu0
      %v6236 = vpop.f32.mrb[0].mxu0
      %v6237 = vpop.f32.mrb[0].mxu0
      %6238 = vdwg.mxu0
      %6239 = vrot.lane.b32.xlu0 %v5817, 64
      %v6240 = vpop.permute.xlu0 %6239
      %6241 = vrot.lane.b32.xlu0 %v5812, 64
      %v6242 = vpop.permute.xlu0 %6241
      %v6245 = vsel %vm1188, %v6111, 0
      %v6248 = vsel %vm1188, %v6112, 0
      %v6251 = vand.u32 %v6242, %v1343
      %6253 = vmatprep.subr.bf16.mxu0 0
      %6254 = vmatpush1.bf16.msra.mxu0 %v6240
      %6255 = vmatprep.subr.bf16.mxu0 0
      %6256 = vmatpush1.bf16.msra.mxu0 %v6251
      %6257 = vmatprep.subr.bf16.mxu0 0
      %6258 = vmatpush1.bf16.msra.mxu0 0
      %6259 = vmatprep.subr.bf16.mxu0 0
      %6260 = vmatpush1.bf16.msra.mxu0 0
      %6261 = vmatprep.subr.bf16.mxu0 0
      %6262 = vmatpush1.bf16.msra.mxu0 0
      %6263 = vmatprep.subr.bf16.mxu0 0
      %6264 = vmatpush1.bf16.msra.mxu0 0
      %6265 = vmatprep.subr.bf16.mxu0 0
      %6266 = vmatpush1.bf16.msra.mxu0 0
      %6267 = vmatprep.subr.bf16.mxu0 0
      %6268 = vmatpush1.bf16.msra.mxu0 0
      %6269 = vmatprep.subr.bf16.mxu0 0
      %6270 = vmatpush1.bf16.msra.mxu0 0
      %6271 = vmatprep.subr.bf16.mxu0 0
      %6272 = vmatpush1.bf16.msra.mxu0 0
      %6273 = vmatprep.subr.bf16.mxu0 0
      %6274 = vmatpush1.bf16.msra.mxu0 0
      %6275 = vmatprep.subr.bf16.mxu0 0
      %6276 = vmatpush1.bf16.msra.mxu0 0
      %6277 = vmatprep.subr.bf16.mxu0 0
      %6278 = vmatpush1.bf16.msra.mxu0 0
      %6279 = vmatprep.subr.bf16.mxu0 0
      %6280 = vmatpush1.bf16.msra.mxu0 0
      %6281 = vmatprep.subr.bf16.mxu0 0
      %6282 = vmatpush1.bf16.msra.mxu0 0
      %6283 = vmatprep.subr.bf16.mxu0 0
      %6284 = vmatpush1.bf16.msra.mxu0 0
      %6285 = vmatprep.mubr.bf16.mxu0 0
      %6286 = vmatmul.mubr.bf16.gmra.mrb[0].mxu0 %v6245
      %v6287 = vpop.f32.mrb[0].mxu0
      %v6288 = vadd.f32 0.0, %v6287
      %v6289 = vpop.f32.mrb[0].mxu0
      %v6290 = vpop.f32.mrb[0].mxu0
      %v6291 = vadd.f32 0.0, %v6290
      %v6292 = vpop.f32.mrb[0].mxu0
      %6293 = vmatprep.mubr.bf16.mxu0 0
      %6294 = vmatmul.mubr.bf16.gmra.mrb[0].mxu0 %v6248
      %v6295 = vpop.f32.mrb[0].mxu0
      %v6296 = vadd.f32 0.0, %v6295
      %v6297 = vpop.f32.mrb[0].mxu0
      %v6298 = vpop.f32.mrb[0].mxu0
      %v6299 = vpop.f32.mrb[0].mxu0
      %6300 = vdwg.mxu0
      %6301 = vrot.lane.b32.xlu0 %v5898, 64
      %v6302 = vpop.permute.xlu0 %6301
      %6303 = vrot.lane.b32.xlu0 %v5893, 64
      %v6304 = vpop.permute.xlu0 %6303
      %v6307 = vsel %vm1188, %v6113, 0
      %v6310 = vsel %vm1188, %v6114, 0
      %v6313 = vand.u32 %v6304, %v1343
      %6315 = vmatprep.subr.bf16.mxu0 0
      %6316 = vmatpush1.bf16.msra.mxu0 %v6302
      %6317 = vmatprep.subr.bf16.mxu0 0
      %6318 = vmatpush1.bf16.msra.mxu0 %v6313
      %6319 = vmatprep.subr.bf16.mxu0 0
      %6320 = vmatpush1.bf16.msra.mxu0 0
      %6321 = vmatprep.subr.bf16.mxu0 0
      %6322 = vmatpush1.bf16.msra.mxu0 0
      %6323 = vmatprep.subr.bf16.mxu0 0
      %6324 = vmatpush1.bf16.msra.mxu0 0
      %6325 = vmatprep.subr.bf16.mxu0 0
      %6326 = vmatpush1.bf16.msra.mxu0 0
      %6327 = vmatprep.subr.bf16.mxu0 0
      %6328 = vmatpush1.bf16.msra.mxu0 0
      %6329 = vmatprep.subr.bf16.mxu0 0
      %6330 = vmatpush1.bf16.msra.mxu0 0
      %6331 = vmatprep.subr.bf16.mxu0 0
      %6332 = vmatpush1.bf16.msra.mxu0 0
      %6333 = vmatprep.subr.bf16.mxu0 0
      %6334 = vmatpush1.bf16.msra.mxu0 0
      %6335 = vmatprep.subr.bf16.mxu0 0
      %6336 = vmatpush1.bf16.msra.mxu0 0
      %6337 = vmatprep.subr.bf16.mxu0 0
      %6338 = vmatpush1.bf16.msra.mxu0 0
      %6339 = vmatprep.subr.bf16.mxu0 0
      %6340 = vmatpush1.bf16.msra.mxu0 0
      %6341 = vmatprep.subr.bf16.mxu0 0
      %6342 = vmatpush1.bf16.msra.mxu0 0
      %6343 = vmatprep.subr.bf16.mxu0 0
      %6344 = vmatpush1.bf16.msra.mxu0 0
      %6345 = vmatprep.subr.bf16.mxu0 0
      %6346 = vmatpush1.bf16.msra.mxu0 0
      %6347 = vmatprep.mubr.bf16.mxu0 0
      %6348 = vmatmul.mubr.bf16.gmra.mrb[0].mxu0 %v6307
      %v6349 = vpop.f32.mrb[0].mxu0
      %v6350 = vadd.f32 0.0, %v6349
      %v6351 = vpop.f32.mrb[0].mxu0
      %v6352 = vpop.f32.mrb[0].mxu0
      %v6353 = vadd.f32 0.0, %v6352
      %v6354 = vpop.f32.mrb[0].mxu0
      %6355 = vmatprep.mubr.bf16.mxu0 0
      %6356 = vmatmul.mubr.bf16.gmra.mrb[0].mxu0 %v6310
      %v6357 = vpop.f32.mrb[0].mxu0
      %v6358 = vadd.f32 0.0, %v6357
      %v6359 = vpop.f32.mrb[0].mxu0
      %v6360 = vpop.f32.mrb[0].mxu0
      %v6361 = vpop.f32.mrb[0].mxu0
      %6362 = vdwg.mxu0
      %v6363 = vpack.c.bf16 %v6167, %v6164
      %v6364 = vpack.c.bf16 %v6172, %v6172
      %v6365 = vld [vmem:[%s5] sm:$0xf]
      %v6366 = vpack.c.bf16 %v6229, %v6226
      %v6367 = vpack.c.bf16 %v6234, %v6234
      %v6368 = vld [vmem:[%s1586] sm:$0xf]
      %v6370 = vsel %vm923, %v6366, 0
      %v6373 = vsel %vm923, %v6367, 0
      %v6376 = vsel %vm1594, %v6368, 0
      %6378 = vmatprep.subr.bf16.mxu0 0
      %6379 = vmatpush1.bf16.msra.mxu0 %v6376
      %6380 = vmatprep.subr.bf16.mxu0 0
      %6381 = vmatpush1.bf16.msra.mxu0 0
      %6382 = vmatprep.subr.bf16.mxu0 0
      %6383 = vmatpush1.bf16.msra.mxu0 0
      %6384 = vmatprep.subr.bf16.mxu0 0
      %6385 = vmatpush1.bf16.msra.mxu0 0
      %6386 = vmatprep.subr.bf16.mxu0 0
      %6387 = vmatpush1.bf16.msra.mxu0 0
      %6388 = vmatprep.subr.bf16.mxu0 0
      %6389 = vmatpush1.bf16.msra.mxu0 0
      %6390 = vmatprep.subr.bf16.mxu0 0
      %6391 = vmatpush1.bf16.msra.mxu0 0
      %6392 = vmatprep.subr.bf16.mxu0 0
      %6393 = vmatpush1.bf16.msra.mxu0 0
      %6394 = vmatprep.subr.bf16.mxu0 0
      %6395 = vmatpush1.bf16.msra.mxu0 0
      %6396 = vmatprep.subr.bf16.mxu0 0
      %6397 = vmatpush1.bf16.msra.mxu0 0
      %6398 = vmatprep.subr.bf16.mxu0 0
      %6399 = vmatpush1.bf16.msra.mxu0 0
      %6400 = vmatprep.subr.bf16.mxu0 0
      %6401 = vmatpush1.bf16.msra.mxu0 0
      %6402 = vmatprep.subr.bf16.mxu0 0
      %6403 = vmatpush1.bf16.msra.mxu0 0
      %6404 = vmatprep.subr.bf16.mxu0 0
      %6405 = vmatpush1.bf16.msra.mxu0 0
      %6406 = vmatprep.subr.bf16.mxu0 0
      %6407 = vmatpush1.bf16.msra.mxu0 0
      %6408 = vmatprep.subr.bf16.mxu0 0
      %6409 = vmatpush1.bf16.msra.mxu0 0
      %6410 = vmatprep.mubr.bf16.mxu0 0
      %6411 = vmatmul.mubr.bf16.gmra.mrb[0].mxu0 %v6370
      %v6412 = vpop.f32.mrb[0].mxu0
      %v6413 = vadd.f32 0.0, %v6412
      %v6414 = vpop.f32.mrb[0].mxu0
      %v6415 = vpop.f32.mrb[0].mxu0
      %v6416 = vadd.f32 0.0, %v6415
      %v6417 = vpop.f32.mrb[0].mxu0
      %6418 = vmatprep.mubr.bf16.mxu0 0
      %6419 = vmatmul.mubr.bf16.gmra.mrb[0].mxu0 %v6373
      %v6420 = vpop.f32.mrb[0].mxu0
      %v6421 = vadd.f32 0.0, %v6420
      %v6422 = vpop.f32.mrb[0].mxu0
      %v6423 = vpop.f32.mrb[0].mxu0
      %v6424 = vpop.f32.mrb[0].mxu0
      %6425 = vdwg.mxu0
      %v6427 = vsel %vm923, %v6363, 0
      %v6430 = vsel %vm923, %v6364, 0
      %v6433 = vsel %vm1594, %v6365, 0
      %6435 = vmatprep.subr.bf16.mxu0 0
      %6436 = vmatpush1.bf16.msra.mxu0 %v6433
      %6437 = vmatprep.subr.bf16.mxu0 0
      %6438 = vmatpush1.bf16.msra.mxu0 0
      %6439 = vmatprep.subr.bf16.mxu0 0
      %6440 = vmatpush1.bf16.msra.mxu0 0
      %6441 = vmatprep.subr.bf16.mxu0 0
      %6442 = vmatpush1.bf16.msra.mxu0 0
      %6443 = vmatprep.subr.bf16.mxu0 0
      %6444 = vmatpush1.bf16.msra.mxu0 0
      %6445 = vmatprep.subr.bf16.mxu0 0
      %6446 = vmatpush1.bf16.msra.mxu0 0
      %6447 = vmatprep.subr.bf16.mxu0 0
      %6448 = vmatpush1.bf16.msra.mxu0 0
      %6449 = vmatprep.subr.bf16.mxu0 0
      %6450 = vmatpush1.bf16.msra.mxu0 0
      %6451 = vmatprep.subr.bf16.mxu0 0
      %6452 = vmatpush1.bf16.msra.mxu0 0
      %6453 = vmatprep.subr.bf16.mxu0 0
      %6454 = vmatpush1.bf16.msra.mxu0 0
      %6455 = vmatprep.subr.bf16.mxu0 0
      %6456 = vmatpush1.bf16.msra.mxu0 0
      %6457 = vmatprep.subr.bf16.mxu0 0
      %6458 = vmatpush1.bf16.msra.mxu0 0
      %6459 = vmatprep.subr.bf16.mxu0 0
      %6460 = vmatpush1.bf16.msra.mxu0 0
      %6461 = vmatprep.subr.bf16.mxu0 0
      %6462 = vmatpush1.bf16.msra.mxu0 0
      %6463 = vmatprep.subr.bf16.mxu0 0
      %6464 = vmatpush1.bf16.msra.mxu0 0
      %6465 = vmatprep.subr.bf16.mxu0 0
      %6466 = vmatpush1.bf16.msra.mxu0 0
      %6467 = vmatprep.mubr.bf16.mxu0 0
      %6468 = vmatmul.mubr.bf16.gmra.mrb[0].mxu0 %v6427
      %v6469 = vpop.f32.mrb[0].mxu0
      %v6470 = vadd.f32 %v6413, %v6469
      %v6471 = vpop.f32.mrb[0].mxu0
      %v6472 = vpop.f32.mrb[0].mxu0
      %v6473 = vadd.f32 %v6416, %v6472
      %v6474 = vpop.f32.mrb[0].mxu0
      %6475 = vmatprep.mubr.bf16.mxu0 0
      %6476 = vmatmul.mubr.bf16.gmra.mrb[0].mxu0 %v6430
      %v6477 = vpop.f32.mrb[0].mxu0
      %v6478 = vadd.f32 %v6421, %v6477
      %v6479 = vpop.f32.mrb[0].mxu0
      %v6480 = vpop.f32.mrb[0].mxu0
      %v6481 = vpop.f32.mrb[0].mxu0
      %6482 = vdwg.mxu0
      %v6483 = vpack.c.bf16 %v6291, %v6288
      %v6484 = vpack.c.bf16 %v6296, %v6296
      %v6485 = vld [vmem:[%s1705] sm:$0xf]
      %v6487 = vsel %vm923, %v6483, 0
      %v6490 = vsel %vm923, %v6484, 0
      %v6493 = vsel %vm1594, %v6485, 0
      %6495 = vmatprep.subr.bf16.mxu0 0
      %6496 = vmatpush1.bf16.msra.mxu0 %v6493
      %6497 = vmatprep.subr.bf16.mxu0 0
      %6498 = vmatpush1.bf16.msra.mxu0 0
      %6499 = vmatprep.subr.bf16.mxu0 0
      %6500 = vmatpush1.bf16.msra.mxu0 0
      %6501 = vmatprep.subr.bf16.mxu0 0
      %6502 = vmatpush1.bf16.msra.mxu0 0
      %6503 = vmatprep.subr.bf16.mxu0 0
      %6504 = vmatpush1.bf16.msra.mxu0 0
      %6505 = vmatprep.subr.bf16.mxu0 0
      %6506 = vmatpush1.bf16.msra.mxu0 0
      %6507 = vmatprep.subr.bf16.mxu0 0
      %6508 = vmatpush1.bf16.msra.mxu0 0
      %6509 = vmatprep.subr.bf16.mxu0 0
      %6510 = vmatpush1.bf16.msra.mxu0 0
      %6511 = vmatprep.subr.bf16.mxu0 0
      %6512 = vmatpush1.bf16.msra.mxu0 0
      %6513 = vmatprep.subr.bf16.mxu0 0
      %6514 = vmatpush1.bf16.msra.mxu0 0
      %6515 = vmatprep.subr.bf16.mxu0 0
      %6516 = vmatpush1.bf16.msra.mxu0 0
      %6517 = vmatprep.subr.bf16.mxu0 0
      %6518 = vmatpush1.bf16.msra.mxu0 0
      %6519 = vmatprep.subr.bf16.mxu0 0
      %6520 = vmatpush1.bf16.msra.mxu0 0
      %6521 = vmatprep.subr.bf16.mxu0 0
      %6522 = vmatpush1.bf16.msra.mxu0 0
      %6523 = vmatprep.subr.bf16.mxu0 0
      %6524 = vmatpush1.bf16.msra.mxu0 0
      %6525 = vmatprep.subr.bf16.mxu0 0
      %6526 = vmatpush1.bf16.msra.mxu0 0
      %6527 = vmatprep.mubr.bf16.mxu0 0
      %6528 = vmatmul.mubr.bf16.gmra.mrb[0].mxu0 %v6487
      %v6529 = vpop.f32.mrb[0].mxu0
      %v6530 = vadd.f32 0.0, %v6529
      %v6531 = vpop.f32.mrb[0].mxu0
      %v6532 = vpop.f32.mrb[0].mxu0
      %v6533 = vadd.f32 0.0, %v6532
      %v6534 = vpop.f32.mrb[0].mxu0
      %6535 = vmatprep.mubr.bf16.mxu0 0
      %6536 = vmatmul.mubr.bf16.gmra.mrb[0].mxu0 %v6490
      %v6537 = vpop.f32.mrb[0].mxu0
      %v6538 = vadd.f32 0.0, %v6537
      %v6539 = vpop.f32.mrb[0].mxu0
      %v6540 = vpop.f32.mrb[0].mxu0
      %v6541 = vpop.f32.mrb[0].mxu0
      %6542 = vdwg.mxu0
      %v6543 = vadd.f32 %v6470, %v6530
      %v6544 = vadd.f32 %v6473, %v6533
      %v6545 = vadd.f32 %v6478, %v6538
      %v6546 = vpack.c.bf16 %v6353, %v6350
      %v6547 = vpack.c.bf16 %v6358, %v6358
      %v6548 = vld [vmem:[%s1769] sm:$0xf]
      %v6550 = vsel %vm923, %v6546, 0
      %v6553 = vsel %vm923, %v6547, 0
      %v6556 = vsel %vm1594, %v6548, 0
      %6558 = vmatprep.subr.bf16.mxu0 0
      %6559 = vmatpush1.bf16.msra.mxu0 %v6556
      %6560 = vmatprep.subr.bf16.mxu0 0
      %6561 = vmatpush1.bf16.msra.mxu0 0
      %6562 = vmatprep.subr.bf16.mxu0 0
      %6563 = vmatpush1.bf16.msra.mxu0 0
      %6564 = vmatprep.subr.bf16.mxu0 0
      %6565 = vmatpush1.bf16.msra.mxu0 0
      %6566 = vmatprep.subr.bf16.mxu0 0
      %6567 = vmatpush1.bf16.msra.mxu0 0
      %6568 = vmatprep.subr.bf16.mxu0 0
      %6569 = vmatpush1.bf16.msra.mxu0 0
      %6570 = vmatprep.subr.bf16.mxu0 0
      %6571 = vmatpush1.bf16.msra.mxu0 0
      %6572 = vmatprep.subr.bf16.mxu0 0
      %6573 = vmatpush1.bf16.msra.mxu0 0
      %6574 = vmatprep.subr.bf16.mxu0 0
      %6575 = vmatpush1.bf16.msra.mxu0 0
      %6576 = vmatprep.subr.bf16.mxu0 0
      %6577 = vmatpush1.bf16.msra.mxu0 0
      %6578 = vmatprep.subr.bf16.mxu0 0
      %6579 = vmatpush1.bf16.msra.mxu0 0
      %6580 = vmatprep.subr.bf16.mxu0 0
      %6581 = vmatpush1.bf16.msra.mxu0 0
      %6582 = vmatprep.subr.bf16.mxu0 0
      %6583 = vmatpush1.bf16.msra.mxu0 0
      %6584 = vmatprep.subr.bf16.mxu0 0
      %6585 = vmatpush1.bf16.msra.mxu0 0
      %6586 = vmatprep.subr.bf16.mxu0 0
      %6587 = vmatpush1.bf16.msra.mxu0 0
      %6588 = vmatprep.subr.bf16.mxu0 0
      %6589 = vmatpush1.bf16.msra.mxu0 0
      %6590 = vmatprep.mubr.bf16.mxu0 0
      %6591 = vmatmul.mubr.bf16.gmra.mrb[0].mxu0 %v6550
      %v6592 = vpop.f32.mrb[0].mxu0
      %v6593 = vadd.f32 0.0, %v6592
      %v6594 = vpop.f32.mrb[0].mxu0
      %v6595 = vpop.f32.mrb[0].mxu0
      %v6596 = vadd.f32 0.0, %v6595
      %v6597 = vpop.f32.mrb[0].mxu0
      %6598 = vmatprep.mubr.bf16.mxu0 0
      %6599 = vmatmul.mubr.bf16.gmra.mrb[0].mxu0 %v6553
      %v6600 = vpop.f32.mrb[0].mxu0
      %v6601 = vadd.f32 0.0, %v6600
      %v6602 = vpop.f32.mrb[0].mxu0
      %v6603 = vpop.f32.mrb[0].mxu0
      %v6604 = vpop.f32.mrb[0].mxu0
      %6605 = vdwg.mxu0
      %v6606 = vadd.f32 %v6543, %v6593
      %v6607 = vadd.f32 %v6544, %v6596
      %v6608 = vadd.f32 %v6545, %v6601
      %6609 = vst.msk [vmem:[#allocation2 + $0x55] sm:$0xff] %vm462, %v6606
      %6610 = vst.msk [vmem:[#allocation2 + $0x5d] sm:$0xff] %vm462, %v6607
      %6611 = vst.msk [vmem:[#allocation2 + $0x65] sm:$0x1] %vm1833, %v6608
      %6613 = vrot.lane.b32.xlu0 %v903, 120
      %v6614 = vpop.permute.xlu0 %6613
      %6615 = vrot.lane.b32.xlu0 %v903, 112
      %v6616 = vpop.permute.xlu0 %6615
      %6617 = vrot.lane.b32.xlu0 %v903, 104
      %v6618 = vpop.permute.xlu0 %6617
      %vm6619 = vcmask 1044480
      %v6620 = vrot.slane %v902, 3
      %v6621 = vrot.slane %v903, 3
      %v6622 = vsel %vm6619, %v6620, %v6621
      %6623 = vrot.lane.b32.xlu0 %v6622, 96
      %v6624 = vpop.permute.xlu0 %6623
      %6625 = vrot.lane.b32.xlu0 %v6621, 96
      %v6626 = vpop.permute.xlu0 %6625
      %v6628 = vsel %vm923, %v6622, 0
      %v6631 = vsel %vm923, %v6621, 0
      %v6634 = vsel %vm923, %v6624, 0
      %v6637 = vsel %vm923, %v6626, 0
      %6639 = vmatprep.subr.bf16.mxu0 0
      %6640 = vmatpush1.bf16.xpose.msra.mxu0 %v6634
      %6641 = vmatprep.subr.bf16.mxu0 0
      %6642 = vmatpush1.bf16.xpose.msra.mxu0 %v6637
      %6643 = vmatprep.subr.bf16.mxu0 0
      %6644 = vmatpush1.bf16.xpose.msra.mxu0 0
      %6645 = vmatprep.subr.bf16.mxu0 0
      %6646 = vmatpush1.bf16.xpose.msra.mxu0 0
      %6647 = vmatprep.subr.bf16.mxu0 0
      %6648 = vmatpush1.bf16.xpose.msra.mxu0 0
      %6649 = vmatprep.subr.bf16.mxu0 0
      %6650 = vmatpush1.bf16.xpose.msra.mxu0 0
      %6651 = vmatprep.subr.bf16.mxu0 0
      %6652 = vmatpush1.bf16.xpose.msra.mxu0 0
      %6653 = vmatprep.subr.bf16.mxu0 0
      %6654 = vmatpush1.bf16.xpose.msra.mxu0 0
      %6655 = vmatprep.subr.bf16.mxu0 0
      %6656 = vmatpush1.bf16.xpose.msra.mxu0 0
      %6657 = vmatprep.subr.bf16.mxu0 0
      %6658 = vmatpush1.bf16.xpose.msra.mxu0 0
      %6659 = vmatprep.subr.bf16.mxu0 0
      %6660 = vmatpush1.bf16.xpose.msra.mxu0 0
      %6661 = vmatprep.subr.bf16.mxu0 0
      %6662 = vmatpush1.bf16.xpose.msra.mxu0 0
      %6663 = vmatprep.subr.bf16.mxu0 0
      %6664 = vmatpush1.bf16.xpose.msra.mxu0 0
      %6665 = vmatprep.subr.bf16.mxu0 0
      %6666 = vmatpush1.bf16.xpose.msra.mxu0 0
      %6667 = vmatprep.subr.bf16.mxu0 0
      %6668 = vmatpush1.bf16.xpose.msra.mxu0 0
      %6669 = vmatprep.subr.bf16.mxu0 0
      %6670 = vmatpush1.bf16.xpose.msra.mxu0 0
      %6671 = vmatprep.mubr.bf16.mxu0 0
      %6672 = vmatmul.mubr.bf16.gmra.mrb[0].mxu0 %v6628
      %v6673 = vpop.f32.mrb[0].mxu0
      %v6674 = vadd.f32 0.0, %v6673
      %v6675 = vpop.f32.mrb[0].mxu0
      %v6676 = vpop.f32.mrb[0].mxu0
      %v6677 = vadd.f32 0.0, %v6676
      %v6678 = vpop.f32.mrb[0].mxu0
      %6679 = vmatprep.mubr.bf16.mxu0 0
      %6680 = vmatmul.mubr.bf16.gmra.mrb[0].mxu0 %v6631
      %v6681 = vpop.f32.mrb[0].mxu0
      %v6682 = vadd.f32 0.0, %v6681
      %v6683 = vpop.f32.mrb[0].mxu0
      %v6684 = vpop.f32.mrb[0].mxu0
      %v6685 = vpop.f32.mrb[0].mxu0
      %6686 = vdwg.mxu0
      %v6687 = vrot.slane %v5633, 3
      %v6688 = vrot.slane %v6614, 3
      %v6689 = vsel %vm6619, %v6687, %v6688
      %6690 = vrot.lane.b32.xlu0 %v6689, 96
      %v6691 = vpop.permute.xlu0 %6690
      %6692 = vrot.lane.b32.xlu0 %v6688, 96
      %v6693 = vpop.permute.xlu0 %6692
      %v6695 = vsel %vm923, %v6689, 0
      %v6698 = vsel %vm923, %v6688, 0
      %v6701 = vsel %vm923, %v6691, 0
      %v6704 = vsel %vm923, %v6693, 0
      %6706 = vmatprep.subr.bf16.mxu0 0
      %6707 = vmatpush1.bf16.xpose.msra.mxu0 %v6701
      %6708 = vmatprep.subr.bf16.mxu0 0
      %6709 = vmatpush1.bf16.xpose.msra.mxu0 %v6704
      %6710 = vmatprep.subr.bf16.mxu0 0
      %6711 = vmatpush1.bf16.xpose.msra.mxu0 0
      %6712 = vmatprep.subr.bf16.mxu0 0
      %6713 = vmatpush1.bf16.xpose.msra.mxu0 0
      %6714 = vmatprep.subr.bf16.mxu0 0
      %6715 = vmatpush1.bf16.xpose.msra.mxu0 0
      %6716 = vmatprep.subr.bf16.mxu0 0
      %6717 = vmatpush1.bf16.xpose.msra.mxu0 0
      %6718 = vmatprep.subr.bf16.mxu0 0
      %6719 = vmatpush1.bf16.xpose.msra.mxu0 0
      %6720 = vmatprep.subr.bf16.mxu0 0
      %6721 = vmatpush1.bf16.xpose.msra.mxu0 0
      %6722 = vmatprep.subr.bf16.mxu0 0
      %6723 = vmatpush1.bf16.xpose.msra.mxu0 0
      %6724 = vmatprep.subr.bf16.mxu0 0
      %6725 = vmatpush1.bf16.xpose.msra.mxu0 0
      %6726 = vmatprep.subr.bf16.mxu0 0
      %6727 = vmatpush1.bf16.xpose.msra.mxu0 0
      %6728 = vmatprep.subr.bf16.mxu0 0
      %6729 = vmatpush1.bf16.xpose.msra.mxu0 0
      %6730 = vmatprep.subr.bf16.mxu0 0
      %6731 = vmatpush1.bf16.xpose.msra.mxu0 0
      %6732 = vmatprep.subr.bf16.mxu0 0
      %6733 = vmatpush1.bf16.xpose.msra.mxu0 0
      %6734 = vmatprep.subr.bf16.mxu0 0
      %6735 = vmatpush1.bf16.xpose.msra.mxu0 0
      %6736 = vmatprep.subr.bf16.mxu0 0
      %6737 = vmatpush1.bf16.xpose.msra.mxu0 0
      %6738 = vmatprep.mubr.bf16.mxu0 0
      %6739 = vmatmul.mubr.bf16.gmra.mrb[0].mxu0 %v6695
      %v6740 = vpop.f32.mrb[0].mxu0
      %v6741 = vadd.f32 0.0, %v6740
      %v6742 = vpop.f32.mrb[0].mxu0
      %v6743 = vpop.f32.mrb[0].mxu0
      %v6744 = vadd.f32 0.0, %v6743
      %v6745 = vpop.f32.mrb[0].mxu0
      %6746 = vmatprep.mubr.bf16.mxu0 0
      %6747 = vmatmul.mubr.bf16.gmra.mrb[0].mxu0 %v6698
      %v6748 = vpop.f32.mrb[0].mxu0
      %v6749 = vadd.f32 0.0, %v6748
      %v6750 = vpop.f32.mrb[0].mxu0
      %v6751 = vpop.f32.mrb[0].mxu0
      %v6752 = vpop.f32.mrb[0].mxu0
      %6753 = vdwg.mxu0
      %v6754 = vrot.slane %v5635, 3
      %v6755 = vrot.slane %v6616, 3
      %v6756 = vsel %vm6619, %v6754, %v6755
      %6757 = vrot.lane.b32.xlu0 %v6756, 96
      %v6758 = vpop.permute.xlu0 %6757
      %6759 = vrot.lane.b32.xlu0 %v6755, 96
      %v6760 = vpop.permute.xlu0 %6759
      %v6762 = vsel %vm923, %v6756, 0
      %v6765 = vsel %vm923, %v6755, 0
      %v6768 = vsel %vm923, %v6758, 0
      %v6771 = vsel %vm923, %v6760, 0
      %6773 = vmatprep.subr.bf16.mxu0 0
      %6774 = vmatpush1.bf16.xpose.msra.mxu0 %v6768
      %6775 = vmatprep.subr.bf16.mxu0 0
      %6776 = vmatpush1.bf16.xpose.msra.mxu0 %v6771
      %6777 = vmatprep.subr.bf16.mxu0 0
      %6778 = vmatpush1.bf16.xpose.msra.mxu0 0
      %6779 = vmatprep.subr.bf16.mxu0 0
      %6780 = vmatpush1.bf16.xpose.msra.mxu0 0
      %6781 = vmatprep.subr.bf16.mxu0 0
      %6782 = vmatpush1.bf16.xpose.msra.mxu0 0
      %6783 = vmatprep.subr.bf16.mxu0 0
      %6784 = vmatpush1.bf16.xpose.msra.mxu0 0
      %6785 = vmatprep.subr.bf16.mxu0 0
      %6786 = vmatpush1.bf16.xpose.msra.mxu0 0
      %6787 = vmatprep.subr.bf16.mxu0 0
      %6788 = vmatpush1.bf16.xpose.msra.mxu0 0
      %6789 = vmatprep.subr.bf16.mxu0 0
      %6790 = vmatpush1.bf16.xpose.msra.mxu0 0
      %6791 = vmatprep.subr.bf16.mxu0 0
      %6792 = vmatpush1.bf16.xpose.msra.mxu0 0
      %6793 = vmatprep.subr.bf16.mxu0 0
      %6794 = vmatpush1.bf16.xpose.msra.mxu0 0
      %6795 = vmatprep.subr.bf16.mxu0 0
      %6796 = vmatpush1.bf16.xpose.msra.mxu0 0
      %6797 = vmatprep.subr.bf16.mxu0 0
      %6798 = vmatpush1.bf16.xpose.msra.mxu0 0
      %6799 = vmatprep.subr.bf16.mxu0 0
      %6800 = vmatpush1.bf16.xpose.msra.mxu0 0
      %6801 = vmatprep.subr.bf16.mxu0 0
      %6802 = vmatpush1.bf16.xpose.msra.mxu0 0
      %6803 = vmatprep.subr.bf16.mxu0 0
      %6804 = vmatpush1.bf16.xpose.msra.mxu0 0
      %6805 = vmatprep.mubr.bf16.mxu0 0
      %6806 = vmatmul.mubr.bf16.gmra.mrb[0].mxu0 %v6762
      %v6807 = vpop.f32.mrb[0].mxu0
      %v6808 = vadd.f32 0.0, %v6807
      %v6809 = vpop.f32.mrb[0].mxu0
      %v6810 = vpop.f32.mrb[0].mxu0
      %v6811 = vadd.f32 0.0, %v6810
      %v6812 = vpop.f32.mrb[0].mxu0
      %6813 = vmatprep.mubr.bf16.mxu0 0
      %6814 = vmatmul.mubr.bf16.gmra.mrb[0].mxu0 %v6765
      %v6815 = vpop.f32.mrb[0].mxu0
      %v6816 = vadd.f32 0.0, %v6815
      %v6817 = vpop.f32.mrb[0].mxu0
      %v6818 = vpop.f32.mrb[0].mxu0
      %v6819 = vpop.f32.mrb[0].mxu0
      %6820 = vdwg.mxu0
      %v6821 = vrot.slane %v5637, 3
      %v6822 = vrot.slane %v6618, 3
      %v6823 = vsel %vm6619, %v6821, %v6822
      %6824 = vrot.lane.b32.xlu0 %v6823, 96
      %v6825 = vpop.permute.xlu0 %6824
      %6826 = vrot.lane.b32.xlu0 %v6822, 96
      %v6827 = vpop.permute.xlu0 %6826
      %v6829 = vsel %vm923, %v6823, 0
      %v6832 = vsel %vm923, %v6822, 0
      %v6835 = vsel %vm923, %v6825, 0
      %v6838 = vsel %vm923, %v6827, 0
      %6840 = vmatprep.subr.bf16.mxu0 0
      %6841 = vmatpush1.bf16.xpose.msra.mxu0 %v6835
      %6842 = vmatprep.subr.bf16.mxu0 0
      %6843 = vmatpush1.bf16.xpose.msra.mxu0 %v6838
      %6844 = vmatprep.subr.bf16.mxu0 0
      %6845 = vmatpush1.bf16.xpose.msra.mxu0 0
      %6846 = vmatprep.subr.bf16.mxu0 0
      %6847 = vmatpush1.bf16.xpose.msra.mxu0 0
      %6848 = vmatprep.subr.bf16.mxu0 0
      %6849 = vmatpush1.bf16.xpose.msra.mxu0 0
      %6850 = vmatprep.subr.bf16.mxu0 0
      %6851 = vmatpush1.bf16.xpose.msra.mxu0 0
      %6852 = vmatprep.subr.bf16.mxu0 0
      %6853 = vmatpush1.bf16.xpose.msra.mxu0 0
      %6854 = vmatprep.subr.bf16.mxu0 0
      %6855 = vmatpush1.bf16.xpose.msra.mxu0 0
      %6856 = vmatprep.subr.bf16.mxu0 0
      %6857 = vmatpush1.bf16.xpose.msra.mxu0 0
      %6858 = vmatprep.subr.bf16.mxu0 0
      %6859 = vmatpush1.bf16.xpose.msra.mxu0 0
      %6860 = vmatprep.subr.bf16.mxu0 0
      %6861 = vmatpush1.bf16.xpose.msra.mxu0 0
      %6862 = vmatprep.subr.bf16.mxu0 0
      %6863 = vmatpush1.bf16.xpose.msra.mxu0 0
      %6864 = vmatprep.subr.bf16.mxu0 0
      %6865 = vmatpush1.bf16.xpose.msra.mxu0 0
      %6866 = vmatprep.subr.bf16.mxu0 0
      %6867 = vmatpush1.bf16.xpose.msra.mxu0 0
      %6868 = vmatprep.subr.bf16.mxu0 0
      %6869 = vmatpush1.bf16.xpose.msra.mxu0 0
      %6870 = vmatprep.subr.bf16.mxu0 0
      %6871 = vmatpush1.bf16.xpose.msra.mxu0 0
      %6872 = vmatprep.mubr.bf16.mxu0 0
      %6873 = vmatmul.mubr.bf16.gmra.mrb[0].mxu0 %v6829
      %v6874 = vpop.f32.mrb[0].mxu0
      %v6875 = vadd.f32 0.0, %v6874
      %v6876 = vpop.f32.mrb[0].mxu0
      %v6877 = vpop.f32.mrb[0].mxu0
      %v6878 = vadd.f32 0.0, %v6877
      %v6879 = vpop.f32.mrb[0].mxu0
      %6880 = vmatprep.mubr.bf16.mxu0 0
      %6881 = vmatmul.mubr.bf16.gmra.mrb[0].mxu0 %v6832
      %v6882 = vpop.f32.mrb[0].mxu0
      %v6883 = vadd.f32 0.0, %v6882
      %v6884 = vpop.f32.mrb[0].mxu0
      %v6885 = vpop.f32.mrb[0].mxu0
      %v6886 = vpop.f32.mrb[0].mxu0
      %6887 = vdwg.mxu0
      %v6888 = vmul.f32 %v6674, 0.35355338
      %v6889 = vmul.f32 %v6677, 0.35355338
      %v6890 = vmul.f32 %v6682, 0.35355338
      %v6891 = vmul.f32 %v6741, 0.35355338
      %v6892 = vmul.f32 %v6744, 0.35355338
      %v6893 = vmul.f32 %v6749, 0.35355338
      %v6894 = vmul.f32 %v6808, 0.35355338
      %v6895 = vmul.f32 %v6811, 0.35355338
      %v6896 = vmul.f32 %v6816, 0.35355338
      %v6897 = vmul.f32 %v6875, 0.35355338
      %v6898 = vmul.f32 %v6878, 0.35355338
      %v6899 = vmul.f32 %v6883, 0.35355338
      %v6900 = vsel %vm1188, %v6888, -inf
      %6901 = vmax.xlane.f32.xlu0 %v6900
      %v6902 = vpop.xlane.xlu0 %6901
      %v6903 = vsel %vm1188, %v6889, -inf
      %6904 = vmax.xlane.f32.xlu0 %v6903
      %v6905 = vpop.xlane.xlu0 %6904
      %v6906 = vsel %vm1195, %v6890, -inf
      %6907 = vmax.xlane.f32.xlu0 %v6906
      %v6908 = vpop.xlane.xlu0 %6907
      %v6909 = vsel %vm1188, %v6891, -inf
      %6910 = vmax.xlane.f32.xlu0 %v6909
      %v6911 = vpop.xlane.xlu0 %6910
      %v6912 = vsel %vm1188, %v6892, -inf
      %6913 = vmax.xlane.f32.xlu0 %v6912
      %v6914 = vpop.xlane.xlu0 %6913
      %v6915 = vsel %vm1195, %v6893, -inf
      %6916 = vmax.xlane.f32.xlu0 %v6915
      %v6917 = vpop.xlane.xlu0 %6916
      %v6918 = vsel %vm1188, %v6894, -inf
      %6919 = vmax.xlane.f32.xlu0 %v6918
      %v6920 = vpop.xlane.xlu0 %6919
      %v6921 = vsel %vm1188, %v6895, -inf
      %6922 = vmax.xlane.f32.xlu0 %v6921
      %v6923 = vpop.xlane.xlu0 %6922
      %v6924 = vsel %vm1195, %v6896, -inf
      %6925 = vmax.xlane.f32.xlu0 %v6924
      %v6926 = vpop.xlane.xlu0 %6925
      %v6927 = vsel %vm1188, %v6897, -inf
      %6928 = vmax.xlane.f32.xlu0 %v6927
      %v6929 = vpop.xlane.xlu0 %6928
      %v6930 = vsel %vm1188, %v6898, -inf
      %6931 = vmax.xlane.f32.xlu0 %v6930
      %v6932 = vpop.xlane.xlu0 %6931
      %v6933 = vsel %vm1195, %v6899, -inf
      %6934 = vmax.xlane.f32.xlu0 %v6933
      %v6935 = vpop.xlane.xlu0 %6934
      %v6936 = vsub.f32 %v6888, %v6902
      %v6937 = vsub.f32 %v6889, %v6905
      %v6938 = vsub.f32 %v6890, %v6908
      %v6939 = vsub.f32 %v6891, %v6911
      %v6940 = vsub.f32 %v6892, %v6914
      %v6941 = vsub.f32 %v6893, %v6917
      %v6942 = vsub.f32 %v6894, %v6920
      %v6943 = vsub.f32 %v6895, %v6923
      %v6944 = vsub.f32 %v6896, %v6926
      %v6945 = vsub.f32 %v6897, %v6929
      %v6946 = vsub.f32 %v6898, %v6932
      %v6947 = vsub.f32 %v6899, %v6935
      %v6948 = vmul.f32 %v6936, 1.442695
      %v6949 = vpow.pop %v6948
      %v6950 = vmul.f32 %v6937, 1.442695
      %v6951 = vpow.pop %v6950
      %v6952 = vmul.f32 %v6938, 1.442695
      %v6953 = vpow.pop %v6952
      %v6954 = vmul.f32 %v6939, 1.442695
      %v6955 = vpow.pop %v6954
      %v6956 = vmul.f32 %v6940, 1.442695
      %v6957 = vpow.pop %v6956
      %v6958 = vmul.f32 %v6941, 1.442695
      %v6959 = vpow.pop %v6958
      %v6960 = vmul.f32 %v6942, 1.442695
      %v6961 = vpow.pop %v6960
      %v6962 = vmul.f32 %v6943, 1.442695
      %v6963 = vpow.pop %v6962
      %v6964 = vmul.f32 %v6944, 1.442695
      %v6965 = vpow.pop %v6964
      %v6966 = vmul.f32 %v6945, 1.442695
      %v6967 = vpow.pop %v6966
      %v6968 = vmul.f32 %v6946, 1.442695
      %v6969 = vpow.pop %v6968
      %v6970 = vmul.f32 %v6947, 1.442695
      %v6971 = vpow.pop %v6970
      %v6972 = vsel %vm1188, %v6949, 0.0
      %6973 = vadd.xlane.f32.xlu0 %v6972
      %v6974 = vpop.xlane.xlu0 %6973
      %v6975 = vsel %vm1188, %v6951, 0.0
      %6976 = vadd.xlane.f32.xlu0 %v6975
      %v6977 = vpop.xlane.xlu0 %6976
      %v6978 = vsel %vm1195, %v6953, 0.0
      %6979 = vadd.xlane.f32.xlu0 %v6978
      %v6980 = vpop.xlane.xlu0 %6979
      %v6981 = vsel %vm1188, %v6955, 0.0
      %6982 = vadd.xlane.f32.xlu0 %v6981
      %v6983 = vpop.xlane.xlu0 %6982
      %v6984 = vsel %vm1188, %v6957, 0.0
      %6985 = vadd.xlane.f32.xlu0 %v6984
      %v6986 = vpop.xlane.xlu0 %6985
      %v6987 = vsel %vm1195, %v6959, 0.0
      %6988 = vadd.xlane.f32.xlu0 %v6987
      %v6989 = vpop.xlane.xlu0 %6988
      %v6990 = vsel %vm1188, %v6961, 0.0
      %6991 = vadd.xlane.f32.xlu0 %v6990
      %v6992 = vpop.xlane.xlu0 %6991
      %v6993 = vsel %vm1188, %v6963, 0.0
      %6994 = vadd.xlane.f32.xlu0 %v6993
      %v6995 = vpop.xlane.xlu0 %6994
      %v6996 = vsel %vm1195, %v6965, 0.0
      %6997 = vadd.xlane.f32.xlu0 %v6996
      %v6998 = vpop.xlane.xlu0 %6997
      %v6999 = vsel %vm1188, %v6967, 0.0
      %7000 = vadd.xlane.f32.xlu0 %v6999
      %v7001 = vpop.xlane.xlu0 %7000
      %v7002 = vsel %vm1188, %v6969, 0.0
      %7003 = vadd.xlane.f32.xlu0 %v7002
      %v7004 = vpop.xlane.xlu0 %7003
      %v7005 = vsel %vm1195, %v6971, 0.0
      %7006 = vadd.xlane.f32.xlu0 %v7005
      %v7007 = vpop.xlane.xlu0 %7006
      %v7008 = vrcp.pop %v6974
      %v7009 = vrcp.pop %v6977
      %v7010 = vrcp.pop %v6980
      %v7011 = vrcp.pop %v6983
      %v7012 = vrcp.pop %v6986
      %v7013 = vrcp.pop %v6989
      %v7014 = vrcp.pop %v6992
      %v7015 = vrcp.pop %v6995
      %v7016 = vrcp.pop %v6998
      %v7017 = vrcp.pop %v7001
      %v7018 = vrcp.pop %v7004
      %v7019 = vrcp.pop %v7007
      %v7020 = vmul.f32 %v6949, %v7008
      %v7021 = vmul.f32 %v6951, %v7009
      %v7022 = vmul.f32 %v6953, %v7010
      %v7023 = vmul.f32 %v6955, %v7011
      %v7024 = vmul.f32 %v6957, %v7012
      %v7025 = vmul.f32 %v6959, %v7013
      %v7026 = vmul.f32 %v6961, %v7014
      %v7027 = vmul.f32 %v6963, %v7015
      %v7028 = vmul.f32 %v6965, %v7016
      %v7029 = vmul.f32 %v6967, %v7017
      %v7030 = vmul.f32 %v6969, %v7018
      %v7031 = vmul.f32 %v6971, %v7019
      %v7032 = vpack.c.bf16 %v7021, %v7020
      %v7033 = vpack.c.bf16 %v7022, %v7022
      %v7034 = vpack.c.bf16 %v7024, %v7023
      %v7035 = vpack.c.bf16 %v7025, %v7025
      %v7036 = vpack.c.bf16 %v7027, %v7026
      %v7037 = vpack.c.bf16 %v7028, %v7028
      %v7038 = vpack.c.bf16 %v7030, %v7029
      %v7039 = vpack.c.bf16 %v7031, %v7031
      %7040 = vrot.lane.b32.xlu0 %v6622, 64
      %v7041 = vpop.permute.xlu0 %7040
      %7042 = vrot.lane.b32.xlu0 %v6621, 64
      %v7043 = vpop.permute.xlu0 %7042
      %v7046 = vsel %vm1188, %v7032, 0
      %v7049 = vsel %vm1188, %v7033, 0
      %v7052 = vand.u32 %v7043, %v1343
      %7054 = vmatprep.subr.bf16.mxu0 0
      %7055 = vmatpush1.bf16.msra.mxu0 %v7041
      %7056 = vmatprep.subr.bf16.mxu0 0
      %7057 = vmatpush1.bf16.msra.mxu0 %v7052
      %7058 = vmatprep.subr.bf16.mxu0 0
      %7059 = vmatpush1.bf16.msra.mxu0 0
      %7060 = vmatprep.subr.bf16.mxu0 0
      %7061 = vmatpush1.bf16.msra.mxu0 0
      %7062 = vmatprep.subr.bf16.mxu0 0
      %7063 = vmatpush1.bf16.msra.mxu0 0
      %7064 = vmatprep.subr.bf16.mxu0 0
      %7065 = vmatpush1.bf16.msra.mxu0 0
      %7066 = vmatprep.subr.bf16.mxu0 0
      %7067 = vmatpush1.bf16.msra.mxu0 0
      %7068 = vmatprep.subr.bf16.mxu0 0
      %7069 = vmatpush1.bf16.msra.mxu0 0
      %7070 = vmatprep.subr.bf16.mxu0 0
      %7071 = vmatpush1.bf16.msra.mxu0 0
      %7072 = vmatprep.subr.bf16.mxu0 0
      %7073 = vmatpush1.bf16.msra.mxu0 0
      %7074 = vmatprep.subr.bf16.mxu0 0
      %7075 = vmatpush1.bf16.msra.mxu0 0
      %7076 = vmatprep.subr.bf16.mxu0 0
      %7077 = vmatpush1.bf16.msra.mxu0 0
      %7078 = vmatprep.subr.bf16.mxu0 0
      %7079 = vmatpush1.bf16.msra.mxu0 0
      %7080 = vmatprep.subr.bf16.mxu0 0
      %7081 = vmatpush1.bf16.msra.mxu0 0
      %7082 = vmatprep.subr.bf16.mxu0 0
      %7083 = vmatpush1.bf16.msra.mxu0 0
      %7084 = vmatprep.subr.bf16.mxu0 0
      %7085 = vmatpush1.bf16.msra.mxu0 0
      %7086 = vmatprep.mubr.bf16.mxu0 0
      %7087 = vmatmul.mubr.bf16.gmra.mrb[0].mxu0 %v7046
      %v7088 = vpop.f32.mrb[0].mxu0
      %v7089 = vadd.f32 0.0, %v7088
      %v7090 = vpop.f32.mrb[0].mxu0
      %v7091 = vpop.f32.mrb[0].mxu0
      %v7092 = vadd.f32 0.0, %v7091
      %v7093 = vpop.f32.mrb[0].mxu0
      %7094 = vmatprep.mubr.bf16.mxu0 0
      %7095 = vmatmul.mubr.bf16.gmra.mrb[0].mxu0 %v7049
      %v7096 = vpop.f32.mrb[0].mxu0
      %v7097 = vadd.f32 0.0, %v7096
      %v7098 = vpop.f32.mrb[0].mxu0
      %v7099 = vpop.f32.mrb[0].mxu0
      %v7100 = vpop.f32.mrb[0].mxu0
      %7101 = vdwg.mxu0
      %7102 = vrot.lane.b32.xlu0 %v6689, 64
      %v7103 = vpop.permute.xlu0 %7102
      %7104 = vrot.lane.b32.xlu0 %v6688, 64
      %v7105 = vpop.permute.xlu0 %7104
      %v7108 = vsel %vm1188, %v7034, 0
      %v7111 = vsel %vm1188, %v7035, 0
      %v7114 = vand.u32 %v7105, %v1343
      %7116 = vmatprep.subr.bf16.mxu0 0
      %7117 = vmatpush1.bf16.msra.mxu0 %v7103
      %7118 = vmatprep.subr.bf16.mxu0 0
      %7119 = vmatpush1.bf16.msra.mxu0 %v7114
      %7120 = vmatprep.subr.bf16.mxu0 0
      %7121 = vmatpush1.bf16.msra.mxu0 0
      %7122 = vmatprep.subr.bf16.mxu0 0
      %7123 = vmatpush1.bf16.msra.mxu0 0
      %7124 = vmatprep.subr.bf16.mxu0 0
      %7125 = vmatpush1.bf16.msra.mxu0 0
      %7126 = vmatprep.subr.bf16.mxu0 0
      %7127 = vmatpush1.bf16.msra.mxu0 0
      %7128 = vmatprep.subr.bf16.mxu0 0
      %7129 = vmatpush1.bf16.msra.mxu0 0
      %7130 = vmatprep.subr.bf16.mxu0 0
      %7131 = vmatpush1.bf16.msra.mxu0 0
      %7132 = vmatprep.subr.bf16.mxu0 0
      %7133 = vmatpush1.bf16.msra.mxu0 0
      %7134 = vmatprep.subr.bf16.mxu0 0
      %7135 = vmatpush1.bf16.msra.mxu0 0
      %7136 = vmatprep.subr.bf16.mxu0 0
      %7137 = vmatpush1.bf16.msra.mxu0 0
      %7138 = vmatprep.subr.bf16.mxu0 0
      %7139 = vmatpush1.bf16.msra.mxu0 0
      %7140 = vmatprep.subr.bf16.mxu0 0
      %7141 = vmatpush1.bf16.msra.mxu0 0
      %7142 = vmatprep.subr.bf16.mxu0 0
      %7143 = vmatpush1.bf16.msra.mxu0 0
      %7144 = vmatprep.subr.bf16.mxu0 0
      %7145 = vmatpush1.bf16.msra.mxu0 0
      %7146 = vmatprep.subr.bf16.mxu0 0
      %7147 = vmatpush1.bf16.msra.mxu0 0
      %7148 = vmatprep.mubr.bf16.mxu0 0
      %7149 = vmatmul.mubr.bf16.gmra.mrb[0].mxu0 %v7108
      %v7150 = vpop.f32.mrb[0].mxu0
      %v7151 = vadd.f32 0.0, %v7150
      %v7152 = vpop.f32.mrb[0].mxu0
      %v7153 = vpop.f32.mrb[0].mxu0
      %v7154 = vadd.f32 0.0, %v7153
      %v7155 = vpop.f32.mrb[0].mxu0
      %7156 = vmatprep.mubr.bf16.mxu0 0
      %7157 = vmatmul.mubr.bf16.gmra.mrb[0].mxu0 %v7111
      %v7158 = vpop.f32.mrb[0].mxu0
      %v7159 = vadd.f32 0.0, %v7158
      %v7160 = vpop.f32.mrb[0].mxu0
      %v7161 = vpop.f32.mrb[0].mxu0
      %v7162 = vpop.f32.mrb[0].mxu0
      %7163 = vdwg.mxu0
      %7164 = vrot.lane.b32.xlu0 %v6756, 64
      %v7165 = vpop.permute.xlu0 %7164
      %7166 = vrot.lane.b32.xlu0 %v6755, 64
      %v7167 = vpop.permute.xlu0 %7166
      %v7170 = vsel %vm1188, %v7036, 0
      %v7173 = vsel %vm1188, %v7037, 0
      %v7176 = vand.u32 %v7167, %v1343
      %7178 = vmatprep.subr.bf16.mxu0 0
      %7179 = vmatpush1.bf16.msra.mxu0 %v7165
      %7180 = vmatprep.subr.bf16.mxu0 0
      %7181 = vmatpush1.bf16.msra.mxu0 %v7176
      %7182 = vmatprep.subr.bf16.mxu0 0
      %7183 = vmatpush1.bf16.msra.mxu0 0
      %7184 = vmatprep.subr.bf16.mxu0 0
      %7185 = vmatpush1.bf16.msra.mxu0 0
      %7186 = vmatprep.subr.bf16.mxu0 0
      %7187 = vmatpush1.bf16.msra.mxu0 0
      %7188 = vmatprep.subr.bf16.mxu0 0
      %7189 = vmatpush1.bf16.msra.mxu0 0
      %7190 = vmatprep.subr.bf16.mxu0 0
      %7191 = vmatpush1.bf16.msra.mxu0 0
      %7192 = vmatprep.subr.bf16.mxu0 0
      %7193 = vmatpush1.bf16.msra.mxu0 0
      %7194 = vmatprep.subr.bf16.mxu0 0
      %7195 = vmatpush1.bf16.msra.mxu0 0
      %7196 = vmatprep.subr.bf16.mxu0 0
      %7197 = vmatpush1.bf16.msra.mxu0 0
      %7198 = vmatprep.subr.bf16.mxu0 0
      %7199 = vmatpush1.bf16.msra.mxu0 0
      %7200 = vmatprep.subr.bf16.mxu0 0
      %7201 = vmatpush1.bf16.msra.mxu0 0
      %7202 = vmatprep.subr.bf16.mxu0 0
      %7203 = vmatpush1.bf16.msra.mxu0 0
      %7204 = vmatprep.subr.bf16.mxu0 0
      %7205 = vmatpush1.bf16.msra.mxu0 0
      %7206 = vmatprep.subr.bf16.mxu0 0
      %7207 = vmatpush1.bf16.msra.mxu0 0
      %7208 = vmatprep.subr.bf16.mxu0 0
      %7209 = vmatpush1.bf16.msra.mxu0 0
      %7210 = vmatprep.mubr.bf16.mxu0 0
      %7211 = vmatmul.mubr.bf16.gmra.mrb[0].mxu0 %v7170
      %v7212 = vpop.f32.mrb[0].mxu0
      %v7213 = vadd.f32 0.0, %v7212
      %v7214 = vpop.f32.mrb[0].mxu0
      %v7215 = vpop.f32.mrb[0].mxu0
      %v7216 = vadd.f32 0.0, %v7215
      %v7217 = vpop.f32.mrb[0].mxu0
      %7218 = vmatprep.mubr.bf16.mxu0 0
      %7219 = vmatmul.mubr.bf16.gmra.mrb[0].mxu0 %v7173
      %v7220 = vpop.f32.mrb[0].mxu0
      %v7221 = vadd.f32 0.0, %v7220
      %v7222 = vpop.f32.mrb[0].mxu0
      %v7223 = vpop.f32.mrb[0].mxu0
      %v7224 = vpop.f32.mrb[0].mxu0
      %7225 = vdwg.mxu0
      %7226 = vrot.lane.b32.xlu0 %v6823, 64
      %v7227 = vpop.permute.xlu0 %7226
      %7228 = vrot.lane.b32.xlu0 %v6822, 64
      %v7229 = vpop.permute.xlu0 %7228
      %v7232 = vsel %vm1188, %v7038, 0
      %v7235 = vsel %vm1188, %v7039, 0
      %v7238 = vand.u32 %v7229, %v1343
      %7240 = vmatprep.subr.bf16.mxu0 0
      %7241 = vmatpush1.bf16.msra.mxu0 %v7227
      %7242 = vmatprep.subr.bf16.mxu0 0
      %7243 = vmatpush1.bf16.msra.mxu0 %v7238
      %7244 = vmatprep.subr.bf16.mxu0 0
      %7245 = vmatpush1.bf16.msra.mxu0 0
      %7246 = vmatprep.subr.bf16.mxu0 0
      %7247 = vmatpush1.bf16.msra.mxu0 0
      %7248 = vmatprep.subr.bf16.mxu0 0
      %7249 = vmatpush1.bf16.msra.mxu0 0
      %7250 = vmatprep.subr.bf16.mxu0 0
      %7251 = vmatpush1.bf16.msra.mxu0 0
      %7252 = vmatprep.subr.bf16.mxu0 0
      %7253 = vmatpush1.bf16.msra.mxu0 0
      %7254 = vmatprep.subr.bf16.mxu0 0
      %7255 = vmatpush1.bf16.msra.mxu0 0
      %7256 = vmatprep.subr.bf16.mxu0 0
      %7257 = vmatpush1.bf16.msra.mxu0 0
      %7258 = vmatprep.subr.bf16.mxu0 0
      %7259 = vmatpush1.bf16.msra.mxu0 0
      %7260 = vmatprep.subr.bf16.mxu0 0
      %7261 = vmatpush1.bf16.msra.mxu0 0
      %7262 = vmatprep.subr.bf16.mxu0 0
      %7263 = vmatpush1.bf16.msra.mxu0 0
      %7264 = vmatprep.subr.bf16.mxu0 0
      %7265 = vmatpush1.bf16.msra.mxu0 0
      %7266 = vmatprep.subr.bf16.mxu0 0
      %7267 = vmatpush1.bf16.msra.mxu0 0
      %7268 = vmatprep.subr.bf16.mxu0 0
      %7269 = vmatpush1.bf16.msra.mxu0 0
      %7270 = vmatprep.subr.bf16.mxu0 0
      %7271 = vmatpush1.bf16.msra.mxu0 0
      %7272 = vmatprep.mubr.bf16.mxu0 0
      %7273 = vmatmul.mubr.bf16.gmra.mrb[0].mxu0 %v7232
      %v7274 = vpop.f32.mrb[0].mxu0
      %v7275 = vadd.f32 0.0, %v7274
      %v7276 = vpop.f32.mrb[0].mxu0
      %v7277 = vpop.f32.mrb[0].mxu0
      %v7278 = vadd.f32 0.0, %v7277
      %v7279 = vpop.f32.mrb[0].mxu0
      %7280 = vmatprep.mubr.bf16.mxu0 0
      %7281 = vmatmul.mubr.bf16.gmra.mrb[0].mxu0 %v7235
      %v7282 = vpop.f32.mrb[0].mxu0
      %v7283 = vadd.f32 0.0, %v7282
      %v7284 = vpop.f32.mrb[0].mxu0
      %v7285 = vpop.f32.mrb[0].mxu0
      %v7286 = vpop.f32.mrb[0].mxu0
      %7287 = vdwg.mxu0
      %v7288 = vpack.c.bf16 %v7092, %v7089
      %v7289 = vpack.c.bf16 %v7097, %v7097
      %v7290 = vld [vmem:[%s5] sm:$0xf]
      %v7291 = vpack.c.bf16 %v7154, %v7151
      %v7292 = vpack.c.bf16 %v7159, %v7159
      %v7293 = vld [vmem:[%s1586] sm:$0xf]
      %v7295 = vsel %vm923, %v7291, 0
      %v7298 = vsel %vm923, %v7292, 0
      %v7301 = vsel %vm1594, %v7293, 0
      %7303 = vmatprep.subr.bf16.mxu0 0
      %7304 = vmatpush1.bf16.msra.mxu0 %v7301
      %7305 = vmatprep.subr.bf16.mxu0 0
      %7306 = vmatpush1.bf16.msra.mxu0 0
      %7307 = vmatprep.subr.bf16.mxu0 0
      %7308 = vmatpush1.bf16.msra.mxu0 0
      %7309 = vmatprep.subr.bf16.mxu0 0
      %7310 = vmatpush1.bf16.msra.mxu0 0
      %7311 = vmatprep.subr.bf16.mxu0 0
      %7312 = vmatpush1.bf16.msra.mxu0 0
      %7313 = vmatprep.subr.bf16.mxu0 0
      %7314 = vmatpush1.bf16.msra.mxu0 0
      %7315 = vmatprep.subr.bf16.mxu0 0
      %7316 = vmatpush1.bf16.msra.mxu0 0
      %7317 = vmatprep.subr.bf16.mxu0 0
      %7318 = vmatpush1.bf16.msra.mxu0 0
      %7319 = vmatprep.subr.bf16.mxu0 0
      %7320 = vmatpush1.bf16.msra.mxu0 0
      %7321 = vmatprep.subr.bf16.mxu0 0
      %7322 = vmatpush1.bf16.msra.mxu0 0
      %7323 = vmatprep.subr.bf16.mxu0 0
      %7324 = vmatpush1.bf16.msra.mxu0 0
      %7325 = vmatprep.subr.bf16.mxu0 0
      %7326 = vmatpush1.bf16.msra.mxu0 0
      %7327 = vmatprep.subr.bf16.mxu0 0
      %7328 = vmatpush1.bf16.msra.mxu0 0
      %7329 = vmatprep.subr.bf16.mxu0 0
      %7330 = vmatpush1.bf16.msra.mxu0 0
      %7331 = vmatprep.subr.bf16.mxu0 0
      %7332 = vmatpush1.bf16.msra.mxu0 0
      %7333 = vmatprep.subr.bf16.mxu0 0
      %7334 = vmatpush1.bf16.msra.mxu0 0
      %7335 = vmatprep.mubr.bf16.mxu0 0
      %7336 = vmatmul.mubr.bf16.gmra.mrb[0].mxu0 %v7295
      %v7337 = vpop.f32.mrb[0].mxu0
      %v7338 = vadd.f32 0.0, %v7337
      %v7339 = vpop.f32.mrb[0].mxu0
      %v7340 = vpop.f32.mrb[0].mxu0
      %v7341 = vadd.f32 0.0, %v7340
      %v7342 = vpop.f32.mrb[0].mxu0
      %7343 = vmatprep.mubr.bf16.mxu0 0
      %7344 = vmatmul.mubr.bf16.gmra.mrb[0].mxu0 %v7298
      %v7345 = vpop.f32.mrb[0].mxu0
      %v7346 = vadd.f32 0.0, %v7345
      %v7347 = vpop.f32.mrb[0].mxu0
      %v7348 = vpop.f32.mrb[0].mxu0
      %v7349 = vpop.f32.mrb[0].mxu0
      %7350 = vdwg.mxu0
      %v7352 = vsel %vm923, %v7288, 0
      %v7355 = vsel %vm923, %v7289, 0
      %v7358 = vsel %vm1594, %v7290, 0
      %7360 = vmatprep.subr.bf16.mxu0 0
      %7361 = vmatpush1.bf16.msra.mxu0 %v7358
      %7362 = vmatprep.subr.bf16.mxu0 0
      %7363 = vmatpush1.bf16.msra.mxu0 0
      %7364 = vmatprep.subr.bf16.mxu0 0
      %7365 = vmatpush1.bf16.msra.mxu0 0
      %7366 = vmatprep.subr.bf16.mxu0 0
      %7367 = vmatpush1.bf16.msra.mxu0 0
      %7368 = vmatprep.subr.bf16.mxu0 0
      %7369 = vmatpush1.bf16.msra.mxu0 0
      %7370 = vmatprep.subr.bf16.mxu0 0
      %7371 = vmatpush1.bf16.msra.mxu0 0
      %7372 = vmatprep.subr.bf16.mxu0 0
      %7373 = vmatpush1.bf16.msra.mxu0 0
      %7374 = vmatprep.subr.bf16.mxu0 0
      %7375 = vmatpush1.bf16.msra.mxu0 0
      %7376 = vmatprep.subr.bf16.mxu0 0
      %7377 = vmatpush1.bf16.msra.mxu0 0
      %7378 = vmatprep.subr.bf16.mxu0 0
      %7379 = vmatpush1.bf16.msra.mxu0 0
      %7380 = vmatprep.subr.bf16.mxu0 0
      %7381 = vmatpush1.bf16.msra.mxu0 0
      %7382 = vmatprep.subr.bf16.mxu0 0
      %7383 = vmatpush1.bf16.msra.mxu0 0
      %7384 = vmatprep.subr.bf16.mxu0 0
      %7385 = vmatpush1.bf16.msra.mxu0 0
      %7386 = vmatprep.subr.bf16.mxu0 0
      %7387 = vmatpush1.bf16.msra.mxu0 0
      %7388 = vmatprep.subr.bf16.mxu0 0
      %7389 = vmatpush1.bf16.msra.mxu0 0
      %7390 = vmatprep.subr.bf16.mxu0 0
      %7391 = vmatpush1.bf16.msra.mxu0 0
      %7392 = vmatprep.mubr.bf16.mxu0 0
      %7393 = vmatmul.mubr.bf16.gmra.mrb[0].mxu0 %v7352
      %v7394 = vpop.f32.mrb[0].mxu0
      %v7395 = vadd.f32 %v7338, %v7394
      %v7396 = vpop.f32.mrb[0].mxu0
      %v7397 = vpop.f32.mrb[0].mxu0
      %v7398 = vadd.f32 %v7341, %v7397
      %v7399 = vpop.f32.mrb[0].mxu0
      %7400 = vmatprep.mubr.bf16.mxu0 0
      %7401 = vmatmul.mubr.bf16.gmra.mrb[0].mxu0 %v7355
      %v7402 = vpop.f32.mrb[0].mxu0
      %v7403 = vadd.f32 %v7346, %v7402
      %v7404 = vpop.f32.mrb[0].mxu0
      %v7405 = vpop.f32.mrb[0].mxu0
      %v7406 = vpop.f32.mrb[0].mxu0
      %7407 = vdwg.mxu0
      %v7408 = vpack.c.bf16 %v7216, %v7213
      %v7409 = vpack.c.bf16 %v7221, %v7221
      %v7410 = vld [vmem:[%s1705] sm:$0xf]
      %v7412 = vsel %vm923, %v7408, 0
      %v7415 = vsel %vm923, %v7409, 0
      %v7418 = vsel %vm1594, %v7410, 0
      %7420 = vmatprep.subr.bf16.mxu0 0
      %7421 = vmatpush1.bf16.msra.mxu0 %v7418
      %7422 = vmatprep.subr.bf16.mxu0 0
      %7423 = vmatpush1.bf16.msra.mxu0 0
      %7424 = vmatprep.subr.bf16.mxu0 0
      %7425 = vmatpush1.bf16.msra.mxu0 0
      %7426 = vmatprep.subr.bf16.mxu0 0
      %7427 = vmatpush1.bf16.msra.mxu0 0
      %7428 = vmatprep.subr.bf16.mxu0 0
      %7429 = vmatpush1.bf16.msra.mxu0 0
      %7430 = vmatprep.subr.bf16.mxu0 0
      %7431 = vmatpush1.bf16.msra.mxu0 0
      %7432 = vmatprep.subr.bf16.mxu0 0
      %7433 = vmatpush1.bf16.msra.mxu0 0
      %7434 = vmatprep.subr.bf16.mxu0 0
      %7435 = vmatpush1.bf16.msra.mxu0 0
      %7436 = vmatprep.subr.bf16.mxu0 0
      %7437 = vmatpush1.bf16.msra.mxu0 0
      %7438 = vmatprep.subr.bf16.mxu0 0
      %7439 = vmatpush1.bf16.msra.mxu0 0
      %7440 = vmatprep.subr.bf16.mxu0 0
      %7441 = vmatpush1.bf16.msra.mxu0 0
      %7442 = vmatprep.subr.bf16.mxu0 0
      %7443 = vmatpush1.bf16.msra.mxu0 0
      %7444 = vmatprep.subr.bf16.mxu0 0
      %7445 = vmatpush1.bf16.msra.mxu0 0
      %7446 = vmatprep.subr.bf16.mxu0 0
      %7447 = vmatpush1.bf16.msra.mxu0 0
      %7448 = vmatprep.subr.bf16.mxu0 0
      %7449 = vmatpush1.bf16.msra.mxu0 0
      %7450 = vmatprep.subr.bf16.mxu0 0
      %7451 = vmatpush1.bf16.msra.mxu0 0
      %7452 = vmatprep.mubr.bf16.mxu0 0
      %7453 = vmatmul.mubr.bf16.gmra.mrb[0].mxu0 %v7412
      %v7454 = vpop.f32.mrb[0].mxu0
      %v7455 = vadd.f32 0.0, %v7454
      %v7456 = vpop.f32.mrb[0].mxu0
      %v7457 = vpop.f32.mrb[0].mxu0
      %v7458 = vadd.f32 0.0, %v7457
      %v7459 = vpop.f32.mrb[0].mxu0
      %7460 = vmatprep.mubr.bf16.mxu0 0
      %7461 = vmatmul.mubr.bf16.gmra.mrb[0].mxu0 %v7415
      %v7462 = vpop.f32.mrb[0].mxu0
      %v7463 = vadd.f32 0.0, %v7462
      %v7464 = vpop.f32.mrb[0].mxu0
      %v7465 = vpop.f32.mrb[0].mxu0
      %v7466 = vpop.f32.mrb[0].mxu0
      %7467 = vdwg.mxu0
      %v7468 = vadd.f32 %v7395, %v7455
      %v7469 = vadd.f32 %v7398, %v7458
      %v7470 = vadd.f32 %v7403, %v7463
      %v7471 = vpack.c.bf16 %v7278, %v7275
      %v7472 = vpack.c.bf16 %v7283, %v7283
      %v7473 = vld [vmem:[%s1769] sm:$0xf]
      %v7475 = vsel %vm923, %v7471, 0
      %v7478 = vsel %vm923, %v7472, 0
      %v7481 = vsel %vm1594, %v7473, 0
      %7483 = vmatprep.subr.bf16.mxu0 0
      %7484 = vmatpush1.bf16.msra.mxu0 %v7481
      %7485 = vmatprep.subr.bf16.mxu0 0
      %7486 = vmatpush1.bf16.msra.mxu0 0
      %7487 = vmatprep.subr.bf16.mxu0 0
      %7488 = vmatpush1.bf16.msra.mxu0 0
      %7489 = vmatprep.subr.bf16.mxu0 0
      %7490 = vmatpush1.bf16.msra.mxu0 0
      %7491 = vmatprep.subr.bf16.mxu0 0
      %7492 = vmatpush1.bf16.msra.mxu0 0
      %7493 = vmatprep.subr.bf16.mxu0 0
      %7494 = vmatpush1.bf16.msra.mxu0 0
      %7495 = vmatprep.subr.bf16.mxu0 0
      %7496 = vmatpush1.bf16.msra.mxu0 0
      %7497 = vmatprep.subr.bf16.mxu0 0
      %7498 = vmatpush1.bf16.msra.mxu0 0
      %7499 = vmatprep.subr.bf16.mxu0 0
      %7500 = vmatpush1.bf16.msra.mxu0 0
      %7501 = vmatprep.subr.bf16.mxu0 0
      %7502 = vmatpush1.bf16.msra.mxu0 0
      %7503 = vmatprep.subr.bf16.mxu0 0
      %7504 = vmatpush1.bf16.msra.mxu0 0
      %7505 = vmatprep.subr.bf16.mxu0 0
      %7506 = vmatpush1.bf16.msra.mxu0 0
      %7507 = vmatprep.subr.bf16.mxu0 0
      %7508 = vmatpush1.bf16.msra.mxu0 0
      %7509 = vmatprep.subr.bf16.mxu0 0
      %7510 = vmatpush1.bf16.msra.mxu0 0
      %7511 = vmatprep.subr.bf16.mxu0 0
      %7512 = vmatpush1.bf16.msra.mxu0 0
      %7513 = vmatprep.subr.bf16.mxu0 0
      %7514 = vmatpush1.bf16.msra.mxu0 0
      %7515 = vmatprep.mubr.bf16.mxu0 0
      %7516 = vmatmul.mubr.bf16.gmra.mrb[0].mxu0 %v7475
      %v7517 = vpop.f32.mrb[0].mxu0
      %v7518 = vadd.f32 0.0, %v7517
      %v7519 = vpop.f32.mrb[0].mxu0
      %v7520 = vpop.f32.mrb[0].mxu0
      %v7521 = vadd.f32 0.0, %v7520
      %v7522 = vpop.f32.mrb[0].mxu0
      %7523 = vmatprep.mubr.bf16.mxu0 0
      %7524 = vmatmul.mubr.bf16.gmra.mrb[0].mxu0 %v7478
      %v7525 = vpop.f32.mrb[0].mxu0
      %v7526 = vadd.f32 0.0, %v7525
      %v7527 = vpop.f32.mrb[0].mxu0
      %v7528 = vpop.f32.mrb[0].mxu0
      %v7529 = vpop.f32.mrb[0].mxu0
      %7530 = vdwg.mxu0
      %v7531 = vadd.f32 %v7468, %v7518
      %v7532 = vadd.f32 %v7469, %v7521
      %v7533 = vadd.f32 %v7470, %v7526
      %7534 = vst.msk [vmem:[#allocation2 + $0x66] sm:$0xff] %vm462, %v7531
      %7535 = vst.msk [vmem:[#allocation2 + $0x6e] sm:$0xff] %vm462, %v7532
      %7536 = vst.msk [vmem:[#allocation2 + $0x76] sm:$0x1] %vm1833, %v7533
      %7538 = vrot.lane.b32.xlu0 %v904, 120
      %v7539 = vpop.permute.xlu0 %7538
      %7540 = vrot.lane.b32.xlu0 %v904, 112
      %v7541 = vpop.permute.xlu0 %7540
      %7542 = vrot.lane.b32.xlu0 %v904, 104
      %v7543 = vpop.permute.xlu0 %7542
      %vm7544 = vsmask.f32 4352
      %v7546 = vshrl.u32 %v903, 16
      %v7548 = vrot.slane %v7546, 3
      %v7549 = vshll.u32 %v903, 16
      %v7551 = vrot.slane %v7549, 4
      %v7552 = vor.u32 %v7548, %v7551
      %v7554 = vshrl.u32 %v904, 16
      %v7556 = vrot.slane %v7554, 3
      %v7557 = vshll.u32 %v904, 16
      %v7559 = vrot.slane %v7557, 4
      %v7560 = vor.u32 %v7556, %v7559
      %v7561 = vsel %vm7544, %v7552, %v7560
      %7562 = vrot.lane.b32.xlu0 %v7561, 96
      %v7563 = vpop.permute.xlu0 %7562
      %7564 = vrot.lane.b32.xlu0 %v7556, 96
      %v7565 = vpop.permute.xlu0 %7564
      %v7567 = vsel %vm923, %v7561, 0
      %v7570 = vsel %vm923, %v7556, 0
      %v7573 = vsel %vm923, %v7563, 0
      %v7576 = vsel %vm923, %v7565, 0
      %7578 = vmatprep.subr.bf16.mxu0 0
      %7579 = vmatpush1.bf16.xpose.msra.mxu0 %v7573
      %7580 = vmatprep.subr.bf16.mxu0 0
      %7581 = vmatpush1.bf16.xpose.msra.mxu0 %v7576
      %7582 = vmatprep.subr.bf16.mxu0 0
      %7583 = vmatpush1.bf16.xpose.msra.mxu0 0
      %7584 = vmatprep.subr.bf16.mxu0 0
      %7585 = vmatpush1.bf16.xpose.msra.mxu0 0
      %7586 = vmatprep.subr.bf16.mxu0 0
      %7587 = vmatpush1.bf16.xpose.msra.mxu0 0
      %7588 = vmatprep.subr.bf16.mxu0 0
      %7589 = vmatpush1.bf16.xpose.msra.mxu0 0
      %7590 = vmatprep.subr.bf16.mxu0 0
      %7591 = vmatpush1.bf16.xpose.msra.mxu0 0
      %7592 = vmatprep.subr.bf16.mxu0 0
      %7593 = vmatpush1.bf16.xpose.msra.mxu0 0
      %7594 = vmatprep.subr.bf16.mxu0 0
      %7595 = vmatpush1.bf16.xpose.msra.mxu0 0
      %7596 = vmatprep.subr.bf16.mxu0 0
      %7597 = vmatpush1.bf16.xpose.msra.mxu0 0
      %7598 = vmatprep.subr.bf16.mxu0 0
      %7599 = vmatpush1.bf16.xpose.msra.mxu0 0
      %7600 = vmatprep.subr.bf16.mxu0 0
      %7601 = vmatpush1.bf16.xpose.msra.mxu0 0
      %7602 = vmatprep.subr.bf16.mxu0 0
      %7603 = vmatpush1.bf16.xpose.msra.mxu0 0
      %7604 = vmatprep.subr.bf16.mxu0 0
      %7605 = vmatpush1.bf16.xpose.msra.mxu0 0
      %7606 = vmatprep.subr.bf16.mxu0 0
      %7607 = vmatpush1.bf16.xpose.msra.mxu0 0
      %7608 = vmatprep.subr.bf16.mxu0 0
      %7609 = vmatpush1.bf16.xpose.msra.mxu0 0
      %7610 = vmatprep.mubr.bf16.mxu0 0
      %7611 = vmatmul.mubr.bf16.gmra.mrb[0].mxu0 %v7567
      %v7612 = vpop.f32.mrb[0].mxu0
      %v7613 = vadd.f32 0.0, %v7612
      %v7614 = vpop.f32.mrb[0].mxu0
      %v7615 = vpop.f32.mrb[0].mxu0
      %v7616 = vadd.f32 0.0, %v7615
      %v7617 = vpop.f32.mrb[0].mxu0
      %7618 = vmatprep.mubr.bf16.mxu0 0
      %7619 = vmatmul.mubr.bf16.gmra.mrb[0].mxu0 %v7570
      %v7620 = vpop.f32.mrb[0].mxu0
      %v7621 = vadd.f32 0.0, %v7620
      %v7622 = vpop.f32.mrb[0].mxu0
      %v7623 = vpop.f32.mrb[0].mxu0
      %v7624 = vpop.f32.mrb[0].mxu0
      %7625 = vdwg.mxu0
      %v7627 = vshrl.u32 %v6614, 16
      %v7629 = vrot.slane %v7627, 3
      %v7630 = vshll.u32 %v6614, 16
      %v7632 = vrot.slane %v7630, 4
      %v7633 = vor.u32 %v7629, %v7632
      %v7635 = vshrl.u32 %v7539, 16
      %v7637 = vrot.slane %v7635, 3
      %v7638 = vshll.u32 %v7539, 16
      %v7640 = vrot.slane %v7638, 4
      %v7641 = vor.u32 %v7637, %v7640
      %v7642 = vsel %vm7544, %v7633, %v7641
      %7643 = vrot.lane.b32.xlu0 %v7642, 96
      %v7644 = vpop.permute.xlu0 %7643
      %7645 = vrot.lane.b32.xlu0 %v7637, 96
      %v7646 = vpop.permute.xlu0 %7645
      %v7648 = vsel %vm923, %v7642, 0
      %v7651 = vsel %vm923, %v7637, 0
      %v7654 = vsel %vm923, %v7644, 0
      %v7657 = vsel %vm923, %v7646, 0
      %7659 = vmatprep.subr.bf16.mxu0 0
      %7660 = vmatpush1.bf16.xpose.msra.mxu0 %v7654
      %7661 = vmatprep.subr.bf16.mxu0 0
      %7662 = vmatpush1.bf16.xpose.msra.mxu0 %v7657
      %7663 = vmatprep.subr.bf16.mxu0 0
      %7664 = vmatpush1.bf16.xpose.msra.mxu0 0
      %7665 = vmatprep.subr.bf16.mxu0 0
      %7666 = vmatpush1.bf16.xpose.msra.mxu0 0
      %7667 = vmatprep.subr.bf16.mxu0 0
      %7668 = vmatpush1.bf16.xpose.msra.mxu0 0
      %7669 = vmatprep.subr.bf16.mxu0 0
      %7670 = vmatpush1.bf16.xpose.msra.mxu0 0
      %7671 = vmatprep.subr.bf16.mxu0 0
      %7672 = vmatpush1.bf16.xpose.msra.mxu0 0
      %7673 = vmatprep.subr.bf16.mxu0 0
      %7674 = vmatpush1.bf16.xpose.msra.mxu0 0
      %7675 = vmatprep.subr.bf16.mxu0 0
      %7676 = vmatpush1.bf16.xpose.msra.mxu0 0
      %7677 = vmatprep.subr.bf16.mxu0 0
      %7678 = vmatpush1.bf16.xpose.msra.mxu0 0
      %7679 = vmatprep.subr.bf16.mxu0 0
      %7680 = vmatpush1.bf16.xpose.msra.mxu0 0
      %7681 = vmatprep.subr.bf16.mxu0 0
      %7682 = vmatpush1.bf16.xpose.msra.mxu0 0
      %7683 = vmatprep.subr.bf16.mxu0 0
      %7684 = vmatpush1.bf16.xpose.msra.mxu0 0
      %7685 = vmatprep.subr.bf16.mxu0 0
      %7686 = vmatpush1.bf16.xpose.msra.mxu0 0
      %7687 = vmatprep.subr.bf16.mxu0 0
      %7688 = vmatpush1.bf16.xpose.msra.mxu0 0
      %7689 = vmatprep.subr.bf16.mxu0 0
      %7690 = vmatpush1.bf16.xpose.msra.mxu0 0
      %7691 = vmatprep.mubr.bf16.mxu0 0
      %7692 = vmatmul.mubr.bf16.gmra.mrb[0].mxu0 %v7648
      %v7693 = vpop.f32.mrb[0].mxu0
      %v7694 = vadd.f32 0.0, %v7693
      %v7695 = vpop.f32.mrb[0].mxu0
      %v7696 = vpop.f32.mrb[0].mxu0
      %v7697 = vadd.f32 0.0, %v7696
      %v7698 = vpop.f32.mrb[0].mxu0
      %7699 = vmatprep.mubr.bf16.mxu0 0
      %7700 = vmatmul.mubr.bf16.gmra.mrb[0].mxu0 %v7651
      %v7701 = vpop.f32.mrb[0].mxu0
      %v7702 = vadd.f32 0.0, %v7701
      %v7703 = vpop.f32.mrb[0].mxu0
      %v7704 = vpop.f32.mrb[0].mxu0
      %v7705 = vpop.f32.mrb[0].mxu0
      %7706 = vdwg.mxu0
      %v7708 = vshrl.u32 %v6616, 16
      %v7710 = vrot.slane %v7708, 3
      %v7711 = vshll.u32 %v6616, 16
      %v7713 = vrot.slane %v7711, 4
      %v7714 = vor.u32 %v7710, %v7713
      %v7716 = vshrl.u32 %v7541, 16
      %v7718 = vrot.slane %v7716, 3
      %v7719 = vshll.u32 %v7541, 16
      %v7721 = vrot.slane %v7719, 4
      %v7722 = vor.u32 %v7718, %v7721
      %v7723 = vsel %vm7544, %v7714, %v7722
      %7724 = vrot.lane.b32.xlu0 %v7723, 96
      %v7725 = vpop.permute.xlu0 %7724
      %7726 = vrot.lane.b32.xlu0 %v7718, 96
      %v7727 = vpop.permute.xlu0 %7726
      %v7729 = vsel %vm923, %v7723, 0
      %v7732 = vsel %vm923, %v7718, 0
      %v7735 = vsel %vm923, %v7725, 0
      %v7738 = vsel %vm923, %v7727, 0
      %7740 = vmatprep.subr.bf16.mxu0 0
      %7741 = vmatpush1.bf16.xpose.msra.mxu0 %v7735
      %7742 = vmatprep.subr.bf16.mxu0 0
      %7743 = vmatpush1.bf16.xpose.msra.mxu0 %v7738
      %7744 = vmatprep.subr.bf16.mxu0 0
      %7745 = vmatpush1.bf16.xpose.msra.mxu0 0
      %7746 = vmatprep.subr.bf16.mxu0 0
      %7747 = vmatpush1.bf16.xpose.msra.mxu0 0
      %7748 = vmatprep.subr.bf16.mxu0 0
      %7749 = vmatpush1.bf16.xpose.msra.mxu0 0
      %7750 = vmatprep.subr.bf16.mxu0 0
      %7751 = vmatpush1.bf16.xpose.msra.mxu0 0
      %7752 = vmatprep.subr.bf16.mxu0 0
      %7753 = vmatpush1.bf16.xpose.msra.mxu0 0
      %7754 = vmatprep.subr.bf16.mxu0 0
      %7755 = vmatpush1.bf16.xpose.msra.mxu0 0
      %7756 = vmatprep.subr.bf16.mxu0 0
      %7757 = vmatpush1.bf16.xpose.msra.mxu0 0
      %7758 = vmatprep.subr.bf16.mxu0 0
      %7759 = vmatpush1.bf16.xpose.msra.mxu0 0
      %7760 = vmatprep.subr.bf16.mxu0 0
      %7761 = vmatpush1.bf16.xpose.msra.mxu0 0
      %7762 = vmatprep.subr.bf16.mxu0 0
      %7763 = vmatpush1.bf16.xpose.msra.mxu0 0
      %7764 = vmatprep.subr.bf16.mxu0 0
      %7765 = vmatpush1.bf16.xpose.msra.mxu0 0
      %7766 = vmatprep.subr.bf16.mxu0 0
      %7767 = vmatpush1.bf16.xpose.msra.mxu0 0
      %7768 = vmatprep.subr.bf16.mxu0 0
      %7769 = vmatpush1.bf16.xpose.msra.mxu0 0
      %7770 = vmatprep.subr.bf16.mxu0 0
      %7771 = vmatpush1.bf16.xpose.msra.mxu0 0
      %7772 = vmatprep.mubr.bf16.mxu0 0
      %7773 = vmatmul.mubr.bf16.gmra.mrb[0].mxu0 %v7729
      %v7774 = vpop.f32.mrb[0].mxu0
      %v7775 = vadd.f32 0.0, %v7774
      %v7776 = vpop.f32.mrb[0].mxu0
      %v7777 = vpop.f32.mrb[0].mxu0
      %v7778 = vadd.f32 0.0, %v7777
      %v7779 = vpop.f32.mrb[0].mxu0
      %7780 = vmatprep.mubr.bf16.mxu0 0
      %7781 = vmatmul.mubr.bf16.gmra.mrb[0].mxu0 %v7732
      %v7782 = vpop.f32.mrb[0].mxu0
      %v7783 = vadd.f32 0.0, %v7782
      %v7784 = vpop.f32.mrb[0].mxu0
      %v7785 = vpop.f32.mrb[0].mxu0
      %v7786 = vpop.f32.mrb[0].mxu0
      %7787 = vdwg.mxu0
      %v7789 = vshrl.u32 %v6618, 16
      %v7791 = vrot.slane %v7789, 3
      %v7792 = vshll.u32 %v6618, 16
      %v7794 = vrot.slane %v7792, 4
      %v7795 = vor.u32 %v7791, %v7794
      %v7797 = vshrl.u32 %v7543, 16
      %v7799 = vrot.slane %v7797, 3
      %v7800 = vshll.u32 %v7543, 16
      %v7802 = vrot.slane %v7800, 4
      %v7803 = vor.u32 %v7799, %v7802
      %v7804 = vsel %vm7544, %v7795, %v7803
      %7805 = vrot.lane.b32.xlu0 %v7804, 96
      %v7806 = vpop.permute.xlu0 %7805
      %7807 = vrot.lane.b32.xlu0 %v7799, 96
      %v7808 = vpop.permute.xlu0 %7807
      %v7810 = vsel %vm923, %v7804, 0
      %v7813 = vsel %vm923, %v7799, 0
      %v7816 = vsel %vm923, %v7806, 0
      %v7819 = vsel %vm923, %v7808, 0
      %7821 = vmatprep.subr.bf16.mxu0 0
      %7822 = vmatpush1.bf16.xpose.msra.mxu0 %v7816
      %7823 = vmatprep.subr.bf16.mxu0 0
      %7824 = vmatpush1.bf16.xpose.msra.mxu0 %v7819
      %7825 = vmatprep.subr.bf16.mxu0 0
      %7826 = vmatpush1.bf16.xpose.msra.mxu0 0
      %7827 = vmatprep.subr.bf16.mxu0 0
      %7828 = vmatpush1.bf16.xpose.msra.mxu0 0
      %7829 = vmatprep.subr.bf16.mxu0 0
      %7830 = vmatpush1.bf16.xpose.msra.mxu0 0
      %7831 = vmatprep.subr.bf16.mxu0 0
      %7832 = vmatpush1.bf16.xpose.msra.mxu0 0
      %7833 = vmatprep.subr.bf16.mxu0 0
      %7834 = vmatpush1.bf16.xpose.msra.mxu0 0
      %7835 = vmatprep.subr.bf16.mxu0 0
      %7836 = vmatpush1.bf16.xpose.msra.mxu0 0
      %7837 = vmatprep.subr.bf16.mxu0 0
      %7838 = vmatpush1.bf16.xpose.msra.mxu0 0
      %7839 = vmatprep.subr.bf16.mxu0 0
      %7840 = vmatpush1.bf16.xpose.msra.mxu0 0
      %7841 = vmatprep.subr.bf16.mxu0 0
      %7842 = vmatpush1.bf16.xpose.msra.mxu0 0
      %7843 = vmatprep.subr.bf16.mxu0 0
      %7844 = vmatpush1.bf16.xpose.msra.mxu0 0
      %7845 = vmatprep.subr.bf16.mxu0 0
      %7846 = vmatpush1.bf16.xpose.msra.mxu0 0
      %7847 = vmatprep.subr.bf16.mxu0 0
      %7848 = vmatpush1.bf16.xpose.msra.mxu0 0
      %7849 = vmatprep.subr.bf16.mxu0 0
      %7850 = vmatpush1.bf16.xpose.msra.mxu0 0
      %7851 = vmatprep.subr.bf16.mxu0 0
      %7852 = vmatpush1.bf16.xpose.msra.mxu0 0
      %7853 = vmatprep.mubr.bf16.mxu0 0
      %7854 = vmatmul.mubr.bf16.gmra.mrb[0].mxu0 %v7810
      %v7855 = vpop.f32.mrb[0].mxu0
      %v7856 = vadd.f32 0.0, %v7855
      %v7857 = vpop.f32.mrb[0].mxu0
      %v7858 = vpop.f32.mrb[0].mxu0
      %v7859 = vadd.f32 0.0, %v7858
      %v7860 = vpop.f32.mrb[0].mxu0
      %7861 = vmatprep.mubr.bf16.mxu0 0
      %7862 = vmatmul.mubr.bf16.gmra.mrb[0].mxu0 %v7813
      %v7863 = vpop.f32.mrb[0].mxu0
      %v7864 = vadd.f32 0.0, %v7863
      %v7865 = vpop.f32.mrb[0].mxu0
      %v7866 = vpop.f32.mrb[0].mxu0
      %v7867 = vpop.f32.mrb[0].mxu0
      %7868 = vdwg.mxu0
      %v7869 = vmul.f32 %v7613, 0.35355338
      %v7870 = vmul.f32 %v7616, 0.35355338
      %v7871 = vmul.f32 %v7621, 0.35355338
      %v7872 = vmul.f32 %v7694, 0.35355338
      %v7873 = vmul.f32 %v7697, 0.35355338
      %v7874 = vmul.f32 %v7702, 0.35355338
      %v7875 = vmul.f32 %v7775, 0.35355338
      %v7876 = vmul.f32 %v7778, 0.35355338
      %v7877 = vmul.f32 %v7783, 0.35355338
      %v7878 = vmul.f32 %v7856, 0.35355338
      %v7879 = vmul.f32 %v7859, 0.35355338
      %v7880 = vmul.f32 %v7864, 0.35355338
      %v7881 = vsel %vm1188, %v7869, -inf
      %7882 = vmax.xlane.f32.xlu0 %v7881
      %v7883 = vpop.xlane.xlu0 %7882
      %v7884 = vsel %vm1188, %v7870, -inf
      %7885 = vmax.xlane.f32.xlu0 %v7884
      %v7886 = vpop.xlane.xlu0 %7885
      %v7887 = vsel %vm1195, %v7871, -inf
      %7888 = vmax.xlane.f32.xlu0 %v7887
      %v7889 = vpop.xlane.xlu0 %7888
      %v7890 = vsel %vm1188, %v7872, -inf
      %7891 = vmax.xlane.f32.xlu0 %v7890
      %v7892 = vpop.xlane.xlu0 %7891
      %v7893 = vsel %vm1188, %v7873, -inf
      %7894 = vmax.xlane.f32.xlu0 %v7893
      %v7895 = vpop.xlane.xlu0 %7894
      %v7896 = vsel %vm1195, %v7874, -inf
      %7897 = vmax.xlane.f32.xlu0 %v7896
      %v7898 = vpop.xlane.xlu0 %7897
      %v7899 = vsel %vm1188, %v7875, -inf
      %7900 = vmax.xlane.f32.xlu0 %v7899
      %v7901 = vpop.xlane.xlu0 %7900
      %v7902 = vsel %vm1188, %v7876, -inf
      %7903 = vmax.xlane.f32.xlu0 %v7902
      %v7904 = vpop.xlane.xlu0 %7903
      %v7905 = vsel %vm1195, %v7877, -inf
      %7906 = vmax.xlane.f32.xlu0 %v7905
      %v7907 = vpop.xlane.xlu0 %7906
      %v7908 = vsel %vm1188, %v7878, -inf
      %7909 = vmax.xlane.f32.xlu0 %v7908
      %v7910 = vpop.xlane.xlu0 %7909
      %v7911 = vsel %vm1188, %v7879, -inf
      %7912 = vmax.xlane.f32.xlu0 %v7911
      %v7913 = vpop.xlane.xlu0 %7912
      %v7914 = vsel %vm1195, %v7880, -inf
      %7915 = vmax.xlane.f32.xlu0 %v7914
      %v7916 = vpop.xlane.xlu0 %7915
      %v7917 = vsub.f32 %v7869, %v7883
      %v7918 = vsub.f32 %v7870, %v7886
      %v7919 = vsub.f32 %v7871, %v7889
      %v7920 = vsub.f32 %v7872, %v7892
      %v7921 = vsub.f32 %v7873, %v7895
      %v7922 = vsub.f32 %v7874, %v7898
      %v7923 = vsub.f32 %v7875, %v7901
      %v7924 = vsub.f32 %v7876, %v7904
      %v7925 = vsub.f32 %v7877, %v7907
      %v7926 = vsub.f32 %v7878, %v7910
      %v7927 = vsub.f32 %v7879, %v7913
      %v7928 = vsub.f32 %v7880, %v7916
      %v7929 = vmul.f32 %v7917, 1.442695
      %v7930 = vpow.pop %v7929
      %v7931 = vmul.f32 %v7918, 1.442695
      %v7932 = vpow.pop %v7931
      %v7933 = vmul.f32 %v7919, 1.442695
      %v7934 = vpow.pop %v7933
      %v7935 = vmul.f32 %v7920, 1.442695
      %v7936 = vpow.pop %v7935
      %v7937 = vmul.f32 %v7921, 1.442695
      %v7938 = vpow.pop %v7937
      %v7939 = vmul.f32 %v7922, 1.442695
      %v7940 = vpow.pop %v7939
      %v7941 = vmul.f32 %v7923, 1.442695
      %v7942 = vpow.pop %v7941
      %v7943 = vmul.f32 %v7924, 1.442695
      %v7944 = vpow.pop %v7943
      %v7945 = vmul.f32 %v7925, 1.442695
      %v7946 = vpow.pop %v7945
      %v7947 = vmul.f32 %v7926, 1.442695
      %v7948 = vpow.pop %v7947
      %v7949 = vmul.f32 %v7927, 1.442695
      %v7950 = vpow.pop %v7949
      %v7951 = vmul.f32 %v7928, 1.442695
      %v7952 = vpow.pop %v7951
      %v7953 = vsel %vm1188, %v7930, 0.0
      %7954 = vadd.xlane.f32.xlu0 %v7953
      %v7955 = vpop.xlane.xlu0 %7954
      %v7956 = vsel %vm1188, %v7932, 0.0
      %7957 = vadd.xlane.f32.xlu0 %v7956
      %v7958 = vpop.xlane.xlu0 %7957
      %v7959 = vsel %vm1195, %v7934, 0.0
      %7960 = vadd.xlane.f32.xlu0 %v7959
      %v7961 = vpop.xlane.xlu0 %7960
      %v7962 = vsel %vm1188, %v7936, 0.0
      %7963 = vadd.xlane.f32.xlu0 %v7962
      %v7964 = vpop.xlane.xlu0 %7963
      %v7965 = vsel %vm1188, %v7938, 0.0
      %7966 = vadd.xlane.f32.xlu0 %v7965
      %v7967 = vpop.xlane.xlu0 %7966
      %v7968 = vsel %vm1195, %v7940, 0.0
      %7969 = vadd.xlane.f32.xlu0 %v7968
      %v7970 = vpop.xlane.xlu0 %7969
      %v7971 = vsel %vm1188, %v7942, 0.0
      %7972 = vadd.xlane.f32.xlu0 %v7971
      %v7973 = vpop.xlane.xlu0 %7972
      %v7974 = vsel %vm1188, %v7944, 0.0
      %7975 = vadd.xlane.f32.xlu0 %v7974
      %v7976 = vpop.xlane.xlu0 %7975
      %v7977 = vsel %vm1195, %v7946, 0.0
      %7978 = vadd.xlane.f32.xlu0 %v7977
      %v7979 = vpop.xlane.xlu0 %7978
      %v7980 = vsel %vm1188, %v7948, 0.0
      %7981 = vadd.xlane.f32.xlu0 %v7980
      %v7982 = vpop.xlane.xlu0 %7981
      %v7983 = vsel %vm1188, %v7950, 0.0
      %7984 = vadd.xlane.f32.xlu0 %v7983
      %v7985 = vpop.xlane.xlu0 %7984
      %v7986 = vsel %vm1195, %v7952, 0.0
      %7987 = vadd.xlane.f32.xlu0 %v7986
      %v7988 = vpop.xlane.xlu0 %7987
      %v7989 = vrcp.pop %v7955
      %v7990 = vrcp.pop %v7958
      %v7991 = vrcp.pop %v7961
      %v7992 = vrcp.pop %v7964
      %v7993 = vrcp.pop %v7967
      %v7994 = vrcp.pop %v7970
      %v7995 = vrcp.pop %v7973
      %v7996 = vrcp.pop %v7976
      %v7997 = vrcp.pop %v7979
      %v7998 = vrcp.pop %v7982
      %v7999 = vrcp.pop %v7985
      %v8000 = vrcp.pop %v7988
      %v8001 = vmul.f32 %v7930, %v7989
      %v8002 = vmul.f32 %v7932, %v7990
      %v8003 = vmul.f32 %v7934, %v7991
      %v8004 = vmul.f32 %v7936, %v7992
      %v8005 = vmul.f32 %v7938, %v7993
      %v8006 = vmul.f32 %v7940, %v7994
      %v8007 = vmul.f32 %v7942, %v7995
      %v8008 = vmul.f32 %v7944, %v7996
      %v8009 = vmul.f32 %v7946, %v7997
      %v8010 = vmul.f32 %v7948, %v7998
      %v8011 = vmul.f32 %v7950, %v7999
      %v8012 = vmul.f32 %v7952, %v8000
      %v8013 = vpack.c.bf16 %v8002, %v8001
      %v8014 = vpack.c.bf16 %v8003, %v8003
      %v8015 = vpack.c.bf16 %v8005, %v8004
      %v8016 = vpack.c.bf16 %v8006, %v8006
      %v8017 = vpack.c.bf16 %v8008, %v8007
      %v8018 = vpack.c.bf16 %v8009, %v8009
      %v8019 = vpack.c.bf16 %v8011, %v8010
      %v8020 = vpack.c.bf16 %v8012, %v8012
      %8021 = vrot.lane.b32.xlu0 %v7561, 64
      %v8022 = vpop.permute.xlu0 %8021
      %8023 = vrot.lane.b32.xlu0 %v7556, 64
      %v8024 = vpop.permute.xlu0 %8023
      %v8027 = vsel %vm1188, %v8013, 0
      %v8030 = vsel %vm1188, %v8014, 0
      %v8033 = vand.u32 %v8024, %v1343
      %8035 = vmatprep.subr.bf16.mxu0 0
      %8036 = vmatpush1.bf16.msra.mxu0 %v8022
      %8037 = vmatprep.subr.bf16.mxu0 0
      %8038 = vmatpush1.bf16.msra.mxu0 %v8033
      %8039 = vmatprep.subr.bf16.mxu0 0
      %8040 = vmatpush1.bf16.msra.mxu0 0
      %8041 = vmatprep.subr.bf16.mxu0 0
      %8042 = vmatpush1.bf16.msra.mxu0 0
      %8043 = vmatprep.subr.bf16.mxu0 0
      %8044 = vmatpush1.bf16.msra.mxu0 0
      %8045 = vmatprep.subr.bf16.mxu0 0
      %8046 = vmatpush1.bf16.msra.mxu0 0
      %8047 = vmatprep.subr.bf16.mxu0 0
      %8048 = vmatpush1.bf16.msra.mxu0 0
      %8049 = vmatprep.subr.bf16.mxu0 0
      %8050 = vmatpush1.bf16.msra.mxu0 0
      %8051 = vmatprep.subr.bf16.mxu0 0
      %8052 = vmatpush1.bf16.msra.mxu0 0
      %8053 = vmatprep.subr.bf16.mxu0 0
      %8054 = vmatpush1.bf16.msra.mxu0 0
      %8055 = vmatprep.subr.bf16.mxu0 0
      %8056 = vmatpush1.bf16.msra.mxu0 0
      %8057 = vmatprep.subr.bf16.mxu0 0
      %8058 = vmatpush1.bf16.msra.mxu0 0
      %8059 = vmatprep.subr.bf16.mxu0 0
      %8060 = vmatpush1.bf16.msra.mxu0 0
      %8061 = vmatprep.subr.bf16.mxu0 0
      %8062 = vmatpush1.bf16.msra.mxu0 0
      %8063 = vmatprep.subr.bf16.mxu0 0
      %8064 = vmatpush1.bf16.msra.mxu0 0
      %8065 = vmatprep.subr.bf16.mxu0 0
      %8066 = vmatpush1.bf16.msra.mxu0 0
      %8067 = vmatprep.mubr.bf16.mxu0 0
      %8068 = vmatmul.mubr.bf16.gmra.mrb[0].mxu0 %v8027
      %v8069 = vpop.f32.mrb[0].mxu0
      %v8070 = vadd.f32 0.0, %v8069
      %v8071 = vpop.f32.mrb[0].mxu0
      %v8072 = vpop.f32.mrb[0].mxu0
      %v8073 = vadd.f32 0.0, %v8072
      %v8074 = vpop.f32.mrb[0].mxu0
      %8075 = vmatprep.mubr.bf16.mxu0 0
      %8076 = vmatmul.mubr.bf16.gmra.mrb[0].mxu0 %v8030
      %v8077 = vpop.f32.mrb[0].mxu0
      %v8078 = vadd.f32 0.0, %v8077
      %v8079 = vpop.f32.mrb[0].mxu0
      %v8080 = vpop.f32.mrb[0].mxu0
      %v8081 = vpop.f32.mrb[0].mxu0
      %8082 = vdwg.mxu0
      %8083 = vrot.lane.b32.xlu0 %v7642, 64
      %v8084 = vpop.permute.xlu0 %8083
      %8085 = vrot.lane.b32.xlu0 %v7637, 64
      %v8086 = vpop.permute.xlu0 %8085
      %v8089 = vsel %vm1188, %v8015, 0
      %v8092 = vsel %vm1188, %v8016, 0
      %v8095 = vand.u32 %v8086, %v1343
      %8097 = vmatprep.subr.bf16.mxu0 0
      %8098 = vmatpush1.bf16.msra.mxu0 %v8084
      %8099 = vmatprep.subr.bf16.mxu0 0
      %8100 = vmatpush1.bf16.msra.mxu0 %v8095
      %8101 = vmatprep.subr.bf16.mxu0 0
      %8102 = vmatpush1.bf16.msra.mxu0 0
      %8103 = vmatprep.subr.bf16.mxu0 0
      %8104 = vmatpush1.bf16.msra.mxu0 0
      %8105 = vmatprep.subr.bf16.mxu0 0
      %8106 = vmatpush1.bf16.msra.mxu0 0
      %8107 = vmatprep.subr.bf16.mxu0 0
      %8108 = vmatpush1.bf16.msra.mxu0 0
      %8109 = vmatprep.subr.bf16.mxu0 0
      %8110 = vmatpush1.bf16.msra.mxu0 0
      %8111 = vmatprep.subr.bf16.mxu0 0
      %8112 = vmatpush1.bf16.msra.mxu0 0
      %8113 = vmatprep.subr.bf16.mxu0 0
      %8114 = vmatpush1.bf16.msra.mxu0 0
      %8115 = vmatprep.subr.bf16.mxu0 0
      %8116 = vmatpush1.bf16.msra.mxu0 0
      %8117 = vmatprep.subr.bf16.mxu0 0
      %8118 = vmatpush1.bf16.msra.mxu0 0
      %8119 = vmatprep.subr.bf16.mxu0 0
      %8120 = vmatpush1.bf16.msra.mxu0 0
      %8121 = vmatprep.subr.bf16.mxu0 0
      %8122 = vmatpush1.bf16.msra.mxu0 0
      %8123 = vmatprep.subr.bf16.mxu0 0
      %8124 = vmatpush1.bf16.msra.mxu0 0
      %8125 = vmatprep.subr.bf16.mxu0 0
      %8126 = vmatpush1.bf16.msra.mxu0 0
      %8127 = vmatprep.subr.bf16.mxu0 0
      %8128 = vmatpush1.bf16.msra.mxu0 0
      %8129 = vmatprep.mubr.bf16.mxu0 0
      %8130 = vmatmul.mubr.bf16.gmra.mrb[0].mxu0 %v8089
      %v8131 = vpop.f32.mrb[0].mxu0
      %v8132 = vadd.f32 0.0, %v8131
      %v8133 = vpop.f32.mrb[0].mxu0
      %v8134 = vpop.f32.mrb[0].mxu0
      %v8135 = vadd.f32 0.0, %v8134
      %v8136 = vpop.f32.mrb[0].mxu0
      %8137 = vmatprep.mubr.bf16.mxu0 0
      %8138 = vmatmul.mubr.bf16.gmra.mrb[0].mxu0 %v8092
      %v8139 = vpop.f32.mrb[0].mxu0
      %v8140 = vadd.f32 0.0, %v8139
      %v8141 = vpop.f32.mrb[0].mxu0
      %v8142 = vpop.f32.mrb[0].mxu0
      %v8143 = vpop.f32.mrb[0].mxu0
      %8144 = vdwg.mxu0
      %8145 = vrot.lane.b32.xlu0 %v7723, 64
      %v8146 = vpop.permute.xlu0 %8145
      %8147 = vrot.lane.b32.xlu0 %v7718, 64
      %v8148 = vpop.permute.xlu0 %8147
      %v8151 = vsel %vm1188, %v8017, 0
      %v8154 = vsel %vm1188, %v8018, 0
      %v8157 = vand.u32 %v8148, %v1343
      %8159 = vmatprep.subr.bf16.mxu0 0
      %8160 = vmatpush1.bf16.msra.mxu0 %v8146
      %8161 = vmatprep.subr.bf16.mxu0 0
      %8162 = vmatpush1.bf16.msra.mxu0 %v8157
      %8163 = vmatprep.subr.bf16.mxu0 0
      %8164 = vmatpush1.bf16.msra.mxu0 0
      %8165 = vmatprep.subr.bf16.mxu0 0
      %8166 = vmatpush1.bf16.msra.mxu0 0
      %8167 = vmatprep.subr.bf16.mxu0 0
      %8168 = vmatpush1.bf16.msra.mxu0 0
      %8169 = vmatprep.subr.bf16.mxu0 0
      %8170 = vmatpush1.bf16.msra.mxu0 0
      %8171 = vmatprep.subr.bf16.mxu0 0
      %8172 = vmatpush1.bf16.msra.mxu0 0
      %8173 = vmatprep.subr.bf16.mxu0 0
      %8174 = vmatpush1.bf16.msra.mxu0 0
      %8175 = vmatprep.subr.bf16.mxu0 0
      %8176 = vmatpush1.bf16.msra.mxu0 0
      %8177 = vmatprep.subr.bf16.mxu0 0
      %8178 = vmatpush1.bf16.msra.mxu0 0
      %8179 = vmatprep.subr.bf16.mxu0 0
      %8180 = vmatpush1.bf16.msra.mxu0 0
      %8181 = vmatprep.subr.bf16.mxu0 0
      %8182 = vmatpush1.bf16.msra.mxu0 0
      %8183 = vmatprep.subr.bf16.mxu0 0
      %8184 = vmatpush1.bf16.msra.mxu0 0
      %8185 = vmatprep.subr.bf16.mxu0 0
      %8186 = vmatpush1.bf16.msra.mxu0 0
      %8187 = vmatprep.subr.bf16.mxu0 0
      %8188 = vmatpush1.bf16.msra.mxu0 0
      %8189 = vmatprep.subr.bf16.mxu0 0
      %8190 = vmatpush1.bf16.msra.mxu0 0
      %8191 = vmatprep.mubr.bf16.mxu0 0
      %8192 = vmatmul.mubr.bf16.gmra.mrb[0].mxu0 %v8151
      %v8193 = vpop.f32.mrb[0].mxu0
      %v8194 = vadd.f32 0.0, %v8193
      %v8195 = vpop.f32.mrb[0].mxu0
      %v8196 = vpop.f32.mrb[0].mxu0
      %v8197 = vadd.f32 0.0, %v8196
      %v8198 = vpop.f32.mrb[0].mxu0
      %8199 = vmatprep.mubr.bf16.mxu0 0
      %8200 = vmatmul.mubr.bf16.gmra.mrb[0].mxu0 %v8154
      %v8201 = vpop.f32.mrb[0].mxu0
      %v8202 = vadd.f32 0.0, %v8201
      %v8203 = vpop.f32.mrb[0].mxu0
      %v8204 = vpop.f32.mrb[0].mxu0
      %v8205 = vpop.f32.mrb[0].mxu0
      %8206 = vdwg.mxu0
      %8207 = vrot.lane.b32.xlu0 %v7804, 64
      %v8208 = vpop.permute.xlu0 %8207
      %8209 = vrot.lane.b32.xlu0 %v7799, 64
      %v8210 = vpop.permute.xlu0 %8209
      %v8213 = vsel %vm1188, %v8019, 0
      %v8216 = vsel %vm1188, %v8020, 0
      %v8219 = vand.u32 %v8210, %v1343
      %8221 = vmatprep.subr.bf16.mxu0 0
      %8222 = vmatpush1.bf16.msra.mxu0 %v8208
      %8223 = vmatprep.subr.bf16.mxu0 0
      %8224 = vmatpush1.bf16.msra.mxu0 %v8219
      %8225 = vmatprep.subr.bf16.mxu0 0
      %8226 = vmatpush1.bf16.msra.mxu0 0
      %8227 = vmatprep.subr.bf16.mxu0 0
      %8228 = vmatpush1.bf16.msra.mxu0 0
      %8229 = vmatprep.subr.bf16.mxu0 0
      %8230 = vmatpush1.bf16.msra.mxu0 0
      %8231 = vmatprep.subr.bf16.mxu0 0
      %8232 = vmatpush1.bf16.msra.mxu0 0
      %8233 = vmatprep.subr.bf16.mxu0 0
      %8234 = vmatpush1.bf16.msra.mxu0 0
      %8235 = vmatprep.subr.bf16.mxu0 0
      %8236 = vmatpush1.bf16.msra.mxu0 0
      %8237 = vmatprep.subr.bf16.mxu0 0
      %8238 = vmatpush1.bf16.msra.mxu0 0
      %8239 = vmatprep.subr.bf16.mxu0 0
      %8240 = vmatpush1.bf16.msra.mxu0 0
      %8241 = vmatprep.subr.bf16.mxu0 0
      %8242 = vmatpush1.bf16.msra.mxu0 0
      %8243 = vmatprep.subr.bf16.mxu0 0
      %8244 = vmatpush1.bf16.msra.mxu0 0
      %8245 = vmatprep.subr.bf16.mxu0 0
      %8246 = vmatpush1.bf16.msra.mxu0 0
      %8247 = vmatprep.subr.bf16.mxu0 0
      %8248 = vmatpush1.bf16.msra.mxu0 0
      %8249 = vmatprep.subr.bf16.mxu0 0
      %8250 = vmatpush1.bf16.msra.mxu0 0
      %8251 = vmatprep.subr.bf16.mxu0 0
      %8252 = vmatpush1.bf16.msra.mxu0 0
      %8253 = vmatprep.mubr.bf16.mxu0 0
      %8254 = vmatmul.mubr.bf16.gmra.mrb[0].mxu0 %v8213
      %v8255 = vpop.f32.mrb[0].mxu0
      %v8256 = vadd.f32 0.0, %v8255
      %v8257 = vpop.f32.mrb[0].mxu0
      %v8258 = vpop.f32.mrb[0].mxu0
      %v8259 = vadd.f32 0.0, %v8258
      %v8260 = vpop.f32.mrb[0].mxu0
      %8261 = vmatprep.mubr.bf16.mxu0 0
      %8262 = vmatmul.mubr.bf16.gmra.mrb[0].mxu0 %v8216
      %v8263 = vpop.f32.mrb[0].mxu0
      %v8264 = vadd.f32 0.0, %v8263
      %v8265 = vpop.f32.mrb[0].mxu0
      %v8266 = vpop.f32.mrb[0].mxu0
      %v8267 = vpop.f32.mrb[0].mxu0
      %8268 = vdwg.mxu0
      %v8269 = vpack.c.bf16 %v8073, %v8070
      %v8270 = vpack.c.bf16 %v8078, %v8078
      %v8271 = vld [vmem:[%s5] sm:$0xf]
      %v8272 = vpack.c.bf16 %v8135, %v8132
      %v8273 = vpack.c.bf16 %v8140, %v8140
      %v8274 = vld [vmem:[%s1586] sm:$0xf]
      %v8276 = vsel %vm923, %v8272, 0
      %v8279 = vsel %vm923, %v8273, 0
      %v8282 = vsel %vm1594, %v8274, 0
      %8284 = vmatprep.subr.bf16.mxu0 0
      %8285 = vmatpush1.bf16.msra.mxu0 %v8282
      %8286 = vmatprep.subr.bf16.mxu0 0
      %8287 = vmatpush1.bf16.msra.mxu0 0
      %8288 = vmatprep.subr.bf16.mxu0 0
      %8289 = vmatpush1.bf16.msra.mxu0 0
      %8290 = vmatprep.subr.bf16.mxu0 0
      %8291 = vmatpush1.bf16.msra.mxu0 0
      %8292 = vmatprep.subr.bf16.mxu0 0
      %8293 = vmatpush1.bf16.msra.mxu0 0
      %8294 = vmatprep.subr.bf16.mxu0 0
      %8295 = vmatpush1.bf16.msra.mxu0 0
      %8296 = vmatprep.subr.bf16.mxu0 0
      %8297 = vmatpush1.bf16.msra.mxu0 0
      %8298 = vmatprep.subr.bf16.mxu0 0
      %8299 = vmatpush1.bf16.msra.mxu0 0
      %8300 = vmatprep.subr.bf16.mxu0 0
      %8301 = vmatpush1.bf16.msra.mxu0 0
      %8302 = vmatprep.subr.bf16.mxu0 0
      %8303 = vmatpush1.bf16.msra.mxu0 0
      %8304 = vmatprep.subr.bf16.mxu0 0
      %8305 = vmatpush1.bf16.msra.mxu0 0
      %8306 = vmatprep.subr.bf16.mxu0 0
      %8307 = vmatpush1.bf16.msra.mxu0 0
      %8308 = vmatprep.subr.bf16.mxu0 0
      %8309 = vmatpush1.bf16.msra.mxu0 0
      %8310 = vmatprep.subr.bf16.mxu0 0
      %8311 = vmatpush1.bf16.msra.mxu0 0
      %8312 = vmatprep.subr.bf16.mxu0 0
      %8313 = vmatpush1.bf16.msra.mxu0 0
      %8314 = vmatprep.subr.bf16.mxu0 0
      %8315 = vmatpush1.bf16.msra.mxu0 0
      %8316 = vmatprep.mubr.bf16.mxu0 0
      %8317 = vmatmul.mubr.bf16.gmra.mrb[0].mxu0 %v8276
      %v8318 = vpop.f32.mrb[0].mxu0
      %v8319 = vadd.f32 0.0, %v8318
      %v8320 = vpop.f32.mrb[0].mxu0
      %v8321 = vpop.f32.mrb[0].mxu0
      %v8322 = vadd.f32 0.0, %v8321
      %v8323 = vpop.f32.mrb[0].mxu0
      %8324 = vmatprep.mubr.bf16.mxu0 0
      %8325 = vmatmul.mubr.bf16.gmra.mrb[0].mxu0 %v8279
      %v8326 = vpop.f32.mrb[0].mxu0
      %v8327 = vadd.f32 0.0, %v8326
      %v8328 = vpop.f32.mrb[0].mxu0
      %v8329 = vpop.f32.mrb[0].mxu0
      %v8330 = vpop.f32.mrb[0].mxu0
      %8331 = vdwg.mxu0
      %v8333 = vsel %vm923, %v8269, 0
      %v8336 = vsel %vm923, %v8270, 0
      %v8339 = vsel %vm1594, %v8271, 0
      %8341 = vmatprep.subr.bf16.mxu0 0
      %8342 = vmatpush1.bf16.msra.mxu0 %v8339
      %8343 = vmatprep.subr.bf16.mxu0 0
      %8344 = vmatpush1.bf16.msra.mxu0 0
      %8345 = vmatprep.subr.bf16.mxu0 0
      %8346 = vmatpush1.bf16.msra.mxu0 0
      %8347 = vmatprep.subr.bf16.mxu0 0
      %8348 = vmatpush1.bf16.msra.mxu0 0
      %8349 = vmatprep.subr.bf16.mxu0 0
      %8350 = vmatpush1.bf16.msra.mxu0 0
      %8351 = vmatprep.subr.bf16.mxu0 0
      %8352 = vmatpush1.bf16.msra.mxu0 0
      %8353 = vmatprep.subr.bf16.mxu0 0
      %8354 = vmatpush1.bf16.msra.mxu0 0
      %8355 = vmatprep.subr.bf16.mxu0 0
      %8356 = vmatpush1.bf16.msra.mxu0 0
      %8357 = vmatprep.subr.bf16.mxu0 0
      %8358 = vmatpush1.bf16.msra.mxu0 0
      %8359 = vmatprep.subr.bf16.mxu0 0
      %8360 = vmatpush1.bf16.msra.mxu0 0
      %8361 = vmatprep.subr.bf16.mxu0 0
      %8362 = vmatpush1.bf16.msra.mxu0 0
      %8363 = vmatprep.subr.bf16.mxu0 0
      %8364 = vmatpush1.bf16.msra.mxu0 0
      %8365 = vmatprep.subr.bf16.mxu0 0
      %8366 = vmatpush1.bf16.msra.mxu0 0
      %8367 = vmatprep.subr.bf16.mxu0 0
      %8368 = vmatpush1.bf16.msra.mxu0 0
      %8369 = vmatprep.subr.bf16.mxu0 0
      %8370 = vmatpush1.bf16.msra.mxu0 0
      %8371 = vmatprep.subr.bf16.mxu0 0
      %8372 = vmatpush1.bf16.msra.mxu0 0
      %8373 = vmatprep.mubr.bf16.mxu0 0
      %8374 = vmatmul.mubr.bf16.gmra.mrb[0].mxu0 %v8333
      %v8375 = vpop.f32.mrb[0].mxu0
      %v8376 = vadd.f32 %v8319, %v8375
      %v8377 = vpop.f32.mrb[0].mxu0
      %v8378 = vpop.f32.mrb[0].mxu0
      %v8379 = vadd.f32 %v8322, %v8378
      %v8380 = vpop.f32.mrb[0].mxu0
      %8381 = vmatprep.mubr.bf16.mxu0 0
      %8382 = vmatmul.mubr.bf16.gmra.mrb[0].mxu0 %v8336
      %v8383 = vpop.f32.mrb[0].mxu0
      %v8384 = vadd.f32 %v8327, %v8383
      %v8385 = vpop.f32.mrb[0].mxu0
      %v8386 = vpop.f32.mrb[0].mxu0
      %v8387 = vpop.f32.mrb[0].mxu0
      %8388 = vdwg.mxu0
      %v8389 = vpack.c.bf16 %v8197, %v8194
      %v8390 = vpack.c.bf16 %v8202, %v8202
      %v8391 = vld [vmem:[%s1705] sm:$0xf]
      %v8393 = vsel %vm923, %v8389, 0
      %v8396 = vsel %vm923, %v8390, 0
      %v8399 = vsel %vm1594, %v8391, 0
      %8401 = vmatprep.subr.bf16.mxu0 0
      %8402 = vmatpush1.bf16.msra.mxu0 %v8399
      %8403 = vmatprep.subr.bf16.mxu0 0
      %8404 = vmatpush1.bf16.msra.mxu0 0
      %8405 = vmatprep.subr.bf16.mxu0 0
      %8406 = vmatpush1.bf16.msra.mxu0 0
      %8407 = vmatprep.subr.bf16.mxu0 0
      %8408 = vmatpush1.bf16.msra.mxu0 0
      %8409 = vmatprep.subr.bf16.mxu0 0
      %8410 = vmatpush1.bf16.msra.mxu0 0
      %8411 = vmatprep.subr.bf16.mxu0 0
      %8412 = vmatpush1.bf16.msra.mxu0 0
      %8413 = vmatprep.subr.bf16.mxu0 0
      %8414 = vmatpush1.bf16.msra.mxu0 0
      %8415 = vmatprep.subr.bf16.mxu0 0
      %8416 = vmatpush1.bf16.msra.mxu0 0
      %8417 = vmatprep.subr.bf16.mxu0 0
      %8418 = vmatpush1.bf16.msra.mxu0 0
      %8419 = vmatprep.subr.bf16.mxu0 0
      %8420 = vmatpush1.bf16.msra.mxu0 0
      %8421 = vmatprep.subr.bf16.mxu0 0
      %8422 = vmatpush1.bf16.msra.mxu0 0
      %8423 = vmatprep.subr.bf16.mxu0 0
      %8424 = vmatpush1.bf16.msra.mxu0 0
      %8425 = vmatprep.subr.bf16.mxu0 0
      %8426 = vmatpush1.bf16.msra.mxu0 0
      %8427 = vmatprep.subr.bf16.mxu0 0
      %8428 = vmatpush1.bf16.msra.mxu0 0
      %8429 = vmatprep.subr.bf16.mxu0 0
      %8430 = vmatpush1.bf16.msra.mxu0 0
      %8431 = vmatprep.subr.bf16.mxu0 0
      %8432 = vmatpush1.bf16.msra.mxu0 0
      %8433 = vmatprep.mubr.bf16.mxu0 0
      %8434 = vmatmul.mubr.bf16.gmra.mrb[0].mxu0 %v8393
      %v8435 = vpop.f32.mrb[0].mxu0
      %v8436 = vadd.f32 0.0, %v8435
      %v8437 = vpop.f32.mrb[0].mxu0
      %v8438 = vpop.f32.mrb[0].mxu0
      %v8439 = vadd.f32 0.0, %v8438
      %v8440 = vpop.f32.mrb[0].mxu0
      %8441 = vmatprep.mubr.bf16.mxu0 0
      %8442 = vmatmul.mubr.bf16.gmra.mrb[0].mxu0 %v8396
      %v8443 = vpop.f32.mrb[0].mxu0
      %v8444 = vadd.f32 0.0, %v8443
      %v8445 = vpop.f32.mrb[0].mxu0
      %v8446 = vpop.f32.mrb[0].mxu0
      %v8447 = vpop.f32.mrb[0].mxu0
      %8448 = vdwg.mxu0
      %v8449 = vadd.f32 %v8376, %v8436
      %v8450 = vadd.f32 %v8379, %v8439
      %v8451 = vadd.f32 %v8384, %v8444
      %v8452 = vpack.c.bf16 %v8259, %v8256
      %v8453 = vpack.c.bf16 %v8264, %v8264
      %v8454 = vld [vmem:[%s1769] sm:$0xf]
      %v8456 = vsel %vm923, %v8452, 0
      %v8459 = vsel %vm923, %v8453, 0
      %v8462 = vsel %vm1594, %v8454, 0
      %8464 = vmatprep.subr.bf16.mxu0 0
      %8465 = vmatpush1.bf16.msra.mxu0 %v8462
      %8466 = vmatprep.subr.bf16.mxu0 0
      %8467 = vmatpush1.bf16.msra.mxu0 0
      %8468 = vmatprep.subr.bf16.mxu0 0
      %8469 = vmatpush1.bf16.msra.mxu0 0
      %8470 = vmatprep.subr.bf16.mxu0 0
      %8471 = vmatpush1.bf16.msra.mxu0 0
      %8472 = vmatprep.subr.bf16.mxu0 0
      %8473 = vmatpush1.bf16.msra.mxu0 0
      %8474 = vmatprep.subr.bf16.mxu0 0
      %8475 = vmatpush1.bf16.msra.mxu0 0
      %8476 = vmatprep.subr.bf16.mxu0 0
      %8477 = vmatpush1.bf16.msra.mxu0 0
      %8478 = vmatprep.subr.bf16.mxu0 0
      %8479 = vmatpush1.bf16.msra.mxu0 0
      %8480 = vmatprep.subr.bf16.mxu0 0
      %8481 = vmatpush1.bf16.msra.mxu0 0
      %8482 = vmatprep.subr.bf16.mxu0 0
      %8483 = vmatpush1.bf16.msra.mxu0 0
      %8484 = vmatprep.subr.bf16.mxu0 0
      %8485 = vmatpush1.bf16.msra.mxu0 0
      %8486 = vmatprep.subr.bf16.mxu0 0
      %8487 = vmatpush1.bf16.msra.mxu0 0
      %8488 = vmatprep.subr.bf16.mxu0 0
      %8489 = vmatpush1.bf16.msra.mxu0 0
      %8490 = vmatprep.subr.bf16.mxu0 0
      %8491 = vmatpush1.bf16.msra.mxu0 0
      %8492 = vmatprep.subr.bf16.mxu0 0
      %8493 = vmatpush1.bf16.msra.mxu0 0
      %8494 = vmatprep.subr.bf16.mxu0 0
      %8495 = vmatpush1.bf16.msra.mxu0 0
      %8496 = vmatprep.mubr.bf16.mxu0 0
      %8497 = vmatmul.mubr.bf16.gmra.mrb[0].mxu0 %v8456
      %v8498 = vpop.f32.mrb[0].mxu0
      %v8499 = vadd.f32 0.0, %v8498
      %v8500 = vpop.f32.mrb[0].mxu0
      %v8501 = vpop.f32.mrb[0].mxu0
      %v8502 = vadd.f32 0.0, %v8501
      %v8503 = vpop.f32.mrb[0].mxu0
      %8504 = vmatprep.mubr.bf16.mxu0 0
      %8505 = vmatmul.mubr.bf16.gmra.mrb[0].mxu0 %v8459
      %v8506 = vpop.f32.mrb[0].mxu0
      %v8507 = vadd.f32 0.0, %v8506
      %v8508 = vpop.f32.mrb[0].mxu0
      %v8509 = vpop.f32.mrb[0].mxu0
      %v8510 = vpop.f32.mrb[0].mxu0
      %8511 = vdwg.mxu0
      %v8512 = vadd.f32 %v8449, %v8499
      %v8513 = vadd.f32 %v8450, %v8502
      %v8514 = vadd.f32 %v8451, %v8507
      %8515 = vst.msk [vmem:[#allocation2 + $0x77] sm:$0xff] %vm462, %v8512
      %8516 = vst.msk [vmem:[#allocation2 + $0x7f] sm:$0xff] %vm462, %v8513
      %8517 = vst.msk [vmem:[#allocation2 + $0x87] sm:$0x1] %vm1833, %v8514
      %v8518 = vld [vmem:[#allocation2] sm:$0xff]
      %v8519 = vld [vmem:[#allocation2 + $0x8] sm:$0xff]
      %v8520 = vld [vmem:[#allocation2 + $0x10] sm:$0xff]
      %v8521 = vld [vmem:[#allocation2 + $0x18] sm:$0xff]
      %v8522 = vld [vmem:[#allocation2 + $0x20] sm:$0xff]
      %v8523 = vld [vmem:[#allocation2 + $0x28] sm:$0xff]
      %v8524 = vld [vmem:[#allocation2 + $0x30] sm:$0xff]
      %v8525 = vld [vmem:[#allocation2 + $0x38] sm:$0xff]
      %v8526 = vld [vmem:[#allocation2 + $0x40] sm:$0xff]
      %v8527 = vld [vmem:[#allocation2 + $0x48] sm:$0xff]
      %v8528 = vld [vmem:[#allocation2 + $0x50] sm:$0xff]
      %v8529 = vld [vmem:[#allocation2 + $0x58] sm:$0xff]
      %v8530 = vld [vmem:[#allocation2 + $0x60] sm:$0xff]
      %v8531 = vld [vmem:[#allocation2 + $0x68] sm:$0xff]
      %v8532 = vld [vmem:[#allocation2 + $0x70] sm:$0xff]
      %v8533 = vld [vmem:[#allocation2 + $0x78] sm:$0xff]
      %v8534 = vld [vmem:[#allocation2 + $0x80] sm:$0xff]
      %v8535 = vadd.f32 %v445, %v8518
      %v8536 = vadd.f32 %v446, %v8519
      %v8537 = vadd.f32 %v447, %v8520
      %v8538 = vadd.f32 %v448, %v8521
      %v8539 = vadd.f32 %v449, %v8522
      %v8540 = vadd.f32 %v450, %v8523
      %v8541 = vadd.f32 %v451, %v8524
      %v8542 = vadd.f32 %v452, %v8525
      %v8543 = vadd.f32 %v453, %v8526
      %v8544 = vadd.f32 %v454, %v8527
      %v8545 = vadd.f32 %v455, %v8528
      %v8546 = vadd.f32 %v456, %v8529
      %v8547 = vadd.f32 %v457, %v8530
      %v8548 = vadd.f32 %v458, %v8531
      %v8549 = vadd.f32 %v459, %v8532
      %v8550 = vadd.f32 %v460, %v8533
      %v8551 = vadd.f32 %v461, %v8534
      %v8552 = vld [vmem:[%s6] sm:$0x1]
      %v8554 = vlaneseq
      %v8555 = vshrl.u32 %v8554, 7
      %v8556 = vsub.s32 0, %v8555
      %v8557 = vrot.slane %v8552, %v8556
      %v8559 = vadd.f32 %v8535, %v8557
      %v8560 = vadd.f32 %v8536, %v8557
      %v8561 = vadd.f32 %v8537, %v8557
      %v8562 = vadd.f32 %v8538, %v8557
      %v8563 = vadd.f32 %v8539, %v8557
      %v8564 = vadd.f32 %v8540, %v8557
      %v8565 = vadd.f32 %v8541, %v8557
      %v8566 = vadd.f32 %v8542, %v8557
      %v8567 = vadd.f32 %v8543, %v8557
      %v8568 = vadd.f32 %v8544, %v8557
      %v8569 = vadd.f32 %v8545, %v8557
      %v8570 = vadd.f32 %v8546, %v8557
      %v8571 = vadd.f32 %v8547, %v8557
      %v8572 = vadd.f32 %v8548, %v8557
      %v8573 = vadd.f32 %v8549, %v8557
      %v8574 = vadd.f32 %v8550, %v8557
      %v8575 = vadd.f32 %v8551, %v8557
      %v8576 = vsel %vm462, %v8559, 0.0
      %8577 = vadd.xlane.f32.xlu0 %v8576
      %v8578 = vpop.xlane.xlu0 %8577
      %v8579 = vsel %vm462, %v8560, 0.0
      %8580 = vadd.xlane.f32.xlu0 %v8579
      %v8581 = vpop.xlane.xlu0 %8580
      %v8582 = vsel %vm462, %v8561, 0.0
      %8583 = vadd.xlane.f32.xlu0 %v8582
      %v8584 = vpop.xlane.xlu0 %8583
      %v8585 = vsel %vm462, %v8562, 0.0
      %8586 = vadd.xlane.f32.xlu0 %v8585
      %v8587 = vpop.xlane.xlu0 %8586
      %v8588 = vsel %vm462, %v8563, 0.0
      %8589 = vadd.xlane.f32.xlu0 %v8588
      %v8590 = vpop.xlane.xlu0 %8589
      %v8591 = vsel %vm462, %v8564, 0.0
      %8592 = vadd.xlane.f32.xlu0 %v8591
      %v8593 = vpop.xlane.xlu0 %8592
      %v8594 = vsel %vm462, %v8565, 0.0
      %8595 = vadd.xlane.f32.xlu0 %v8594
      %v8596 = vpop.xlane.xlu0 %8595
      %v8597 = vsel %vm462, %v8566, 0.0
      %8598 = vadd.xlane.f32.xlu0 %v8597
      %v8599 = vpop.xlane.xlu0 %8598
      %v8600 = vsel %vm462, %v8567, 0.0
      %8601 = vadd.xlane.f32.xlu0 %v8600
      %v8602 = vpop.xlane.xlu0 %8601
      %v8603 = vsel %vm462, %v8568, 0.0
      %8604 = vadd.xlane.f32.xlu0 %v8603
      %v8605 = vpop.xlane.xlu0 %8604
      %v8606 = vsel %vm462, %v8569, 0.0
      %8607 = vadd.xlane.f32.xlu0 %v8606
      %v8608 = vpop.xlane.xlu0 %8607
      %v8609 = vsel %vm462, %v8570, 0.0
      %8610 = vadd.xlane.f32.xlu0 %v8609
      %v8611 = vpop.xlane.xlu0 %8610
      %v8612 = vsel %vm462, %v8571, 0.0
      %8613 = vadd.xlane.f32.xlu0 %v8612
      %v8614 = vpop.xlane.xlu0 %8613
      %v8615 = vsel %vm462, %v8572, 0.0
      %8616 = vadd.xlane.f32.xlu0 %v8615
      %v8617 = vpop.xlane.xlu0 %8616
      %v8618 = vsel %vm462, %v8573, 0.0
      %8619 = vadd.xlane.f32.xlu0 %v8618
      %v8620 = vpop.xlane.xlu0 %8619
      %v8621 = vsel %vm462, %v8574, 0.0
      %8622 = vadd.xlane.f32.xlu0 %v8621
      %v8623 = vpop.xlane.xlu0 %8622
      %v8624 = vsel %vm462, %v8575, 0.0
      %8625 = vadd.xlane.f32.xlu0 %v8624
      %v8626 = vpop.xlane.xlu0 %8625
      %v8627 = vmul.f32 %v8578, %v514
      %v8628 = vmul.f32 %v8581, %v514
      %v8629 = vmul.f32 %v8584, %v514
      %v8630 = vmul.f32 %v8587, %v514
      %v8631 = vmul.f32 %v8590, %v514
      %v8632 = vmul.f32 %v8593, %v514
      %v8633 = vmul.f32 %v8596, %v514
      %v8634 = vmul.f32 %v8599, %v514
      %v8635 = vmul.f32 %v8602, %v514
      %v8636 = vmul.f32 %v8605, %v514
      %v8637 = vmul.f32 %v8608, %v514
      %v8638 = vmul.f32 %v8611, %v514
      %v8639 = vmul.f32 %v8614, %v514
      %v8640 = vmul.f32 %v8617, %v514
      %v8641 = vmul.f32 %v8620, %v514
      %v8642 = vmul.f32 %v8623, %v514
      %v8643 = vmul.f32 %v8626, %v514
      %v8644 = vsub.f32 %v8559, %v8627
      %v8645 = vsub.f32 %v8560, %v8628
      %v8646 = vsub.f32 %v8561, %v8629
      %v8647 = vsub.f32 %v8562, %v8630
      %v8648 = vsub.f32 %v8563, %v8631
      %v8649 = vsub.f32 %v8564, %v8632
      %v8650 = vsub.f32 %v8565, %v8633
      %v8651 = vsub.f32 %v8566, %v8634
      %v8652 = vsub.f32 %v8567, %v8635
      %v8653 = vsub.f32 %v8568, %v8636
      %v8654 = vsub.f32 %v8569, %v8637
      %v8655 = vsub.f32 %v8570, %v8638
      %v8656 = vsub.f32 %v8571, %v8639
      %v8657 = vsub.f32 %v8572, %v8640
      %v8658 = vsub.f32 %v8573, %v8641
      %v8659 = vsub.f32 %v8574, %v8642
      %v8660 = vsub.f32 %v8575, %v8643
      %v8661 = vmul.f32 %v8644, %v8644
      %v8662 = vmul.f32 %v8645, %v8645
      %v8663 = vmul.f32 %v8646, %v8646
      %v8664 = vmul.f32 %v8647, %v8647
      %v8665 = vmul.f32 %v8648, %v8648
      %v8666 = vmul.f32 %v8649, %v8649
      %v8667 = vmul.f32 %v8650, %v8650
      %v8668 = vmul.f32 %v8651, %v8651
      %v8669 = vmul.f32 %v8652, %v8652
      %v8670 = vmul.f32 %v8653, %v8653
      %v8671 = vmul.f32 %v8654, %v8654
      %v8672 = vmul.f32 %v8655, %v8655
      %v8673 = vmul.f32 %v8656, %v8656
      %v8674 = vmul.f32 %v8657, %v8657
      %v8675 = vmul.f32 %v8658, %v8658
      %v8676 = vmul.f32 %v8659, %v8659
      %v8677 = vmul.f32 %v8660, %v8660
      %v8678 = vsel %vm462, %v8661, 0.0
      %8679 = vadd.xlane.f32.xlu0 %v8678
      %v8680 = vpop.xlane.xlu0 %8679
      %v8681 = vsel %vm462, %v8662, 0.0
      %8682 = vadd.xlane.f32.xlu0 %v8681
      %v8683 = vpop.xlane.xlu0 %8682
      %v8684 = vsel %vm462, %v8663, 0.0
      %8685 = vadd.xlane.f32.xlu0 %v8684
      %v8686 = vpop.xlane.xlu0 %8685
      %v8687 = vsel %vm462, %v8664, 0.0
      %8688 = vadd.xlane.f32.xlu0 %v8687
      %v8689 = vpop.xlane.xlu0 %8688
      %v8690 = vsel %vm462, %v8665, 0.0
      %8691 = vadd.xlane.f32.xlu0 %v8690
      %v8692 = vpop.xlane.xlu0 %8691
      %v8693 = vsel %vm462, %v8666, 0.0
      %8694 = vadd.xlane.f32.xlu0 %v8693
      %v8695 = vpop.xlane.xlu0 %8694
      %v8696 = vsel %vm462, %v8667, 0.0
      %8697 = vadd.xlane.f32.xlu0 %v8696
      %v8698 = vpop.xlane.xlu0 %8697
      %v8699 = vsel %vm462, %v8668, 0.0
      %8700 = vadd.xlane.f32.xlu0 %v8699
      %v8701 = vpop.xlane.xlu0 %8700
      %v8702 = vsel %vm462, %v8669, 0.0
      %8703 = vadd.xlane.f32.xlu0 %v8702
      %v8704 = vpop.xlane.xlu0 %8703
      %v8705 = vsel %vm462, %v8670, 0.0
      %8706 = vadd.xlane.f32.xlu0 %v8705
      %v8707 = vpop.xlane.xlu0 %8706
      %v8708 = vsel %vm462, %v8671, 0.0
      %8709 = vadd.xlane.f32.xlu0 %v8708
      %v8710 = vpop.xlane.xlu0 %8709
      %v8711 = vsel %vm462, %v8672, 0.0
      %8712 = vadd.xlane.f32.xlu0 %v8711
      %v8713 = vpop.xlane.xlu0 %8712
      %v8714 = vsel %vm462, %v8673, 0.0
      %8715 = vadd.xlane.f32.xlu0 %v8714
      %v8716 = vpop.xlane.xlu0 %8715
      %v8717 = vsel %vm462, %v8674, 0.0
      %8718 = vadd.xlane.f32.xlu0 %v8717
      %v8719 = vpop.xlane.xlu0 %8718
      %v8720 = vsel %vm462, %v8675, 0.0
      %8721 = vadd.xlane.f32.xlu0 %v8720
      %v8722 = vpop.xlane.xlu0 %8721
      %v8723 = vsel %vm462, %v8676, 0.0
      %8724 = vadd.xlane.f32.xlu0 %v8723
      %v8725 = vpop.xlane.xlu0 %8724
      %v8726 = vsel %vm462, %v8677, 0.0
      %8727 = vadd.xlane.f32.xlu0 %v8726
      %v8728 = vpop.xlane.xlu0 %8727
      %v8729 = vmul.f32 %v8680, %v514
      %v8730 = vmul.f32 %v8683, %v514
      %v8731 = vmul.f32 %v8686, %v514
      %v8732 = vmul.f32 %v8689, %v514
      %v8733 = vmul.f32 %v8692, %v514
      %v8734 = vmul.f32 %v8695, %v514
      %v8735 = vmul.f32 %v8698, %v514
      %v8736 = vmul.f32 %v8701, %v514
      %v8737 = vmul.f32 %v8704, %v514
      %v8738 = vmul.f32 %v8707, %v514
      %v8739 = vmul.f32 %v8710, %v514
      %v8740 = vmul.f32 %v8713, %v514
      %v8741 = vmul.f32 %v8716, %v514
      %v8742 = vmul.f32 %v8719, %v514
      %v8743 = vmul.f32 %v8722, %v514
      %v8744 = vmul.f32 %v8725, %v514
      %v8745 = vmul.f32 %v8728, %v514
      %v8746 = vadd.f32 %v8729, 1e-05
      %v8747 = vadd.f32 %v8730, 1e-05
      %v8748 = vadd.f32 %v8731, 1e-05
      %v8749 = vadd.f32 %v8732, 1e-05
      %v8750 = vadd.f32 %v8733, 1e-05
      %v8751 = vadd.f32 %v8734, 1e-05
      %v8752 = vadd.f32 %v8735, 1e-05
      %v8753 = vadd.f32 %v8736, 1e-05
      %v8754 = vadd.f32 %v8737, 1e-05
      %v8755 = vadd.f32 %v8738, 1e-05
      %v8756 = vadd.f32 %v8739, 1e-05
      %v8757 = vadd.f32 %v8740, 1e-05
      %v8758 = vadd.f32 %v8741, 1e-05
      %v8759 = vadd.f32 %v8742, 1e-05
      %v8760 = vadd.f32 %v8743, 1e-05
      %v8761 = vadd.f32 %v8744, 1e-05
      %v8762 = vadd.f32 %v8745, 1e-05
      %v8763 = vrsqrt.pop %v8746
      %v8764 = vrsqrt.pop %v8747
      %v8765 = vrsqrt.pop %v8748
      %v8766 = vrsqrt.pop %v8749
      %v8767 = vrsqrt.pop %v8750
      %v8768 = vrsqrt.pop %v8751
      %v8769 = vrsqrt.pop %v8752
      %v8770 = vrsqrt.pop %v8753
      %v8771 = vrsqrt.pop %v8754
      %v8772 = vrsqrt.pop %v8755
      %v8773 = vrsqrt.pop %v8756
      %v8774 = vrsqrt.pop %v8757
      %v8775 = vrsqrt.pop %v8758
      %v8776 = vrsqrt.pop %v8759
      %v8777 = vrsqrt.pop %v8760
      %v8778 = vrsqrt.pop %v8761
      %v8779 = vrsqrt.pop %v8762
      %v8780 = vmul.f32 %v8644, %v8763
      %v8781 = vmul.f32 %v8645, %v8764
      %v8782 = vmul.f32 %v8646, %v8765
      %v8783 = vmul.f32 %v8647, %v8766
      %v8784 = vmul.f32 %v8648, %v8767
      %v8785 = vmul.f32 %v8649, %v8768
      %v8786 = vmul.f32 %v8650, %v8769
      %v8787 = vmul.f32 %v8651, %v8770
      %v8788 = vmul.f32 %v8652, %v8771
      %v8789 = vmul.f32 %v8653, %v8772
      %v8790 = vmul.f32 %v8654, %v8773
      %v8791 = vmul.f32 %v8655, %v8774
      %v8792 = vmul.f32 %v8656, %v8775
      %v8793 = vmul.f32 %v8657, %v8776
      %v8794 = vmul.f32 %v8658, %v8777
      %v8795 = vmul.f32 %v8659, %v8778
      %v8796 = vmul.f32 %v8660, %v8779
      %v8797 = vld [vmem:[%s7] sm:$0x1]
      %v8799 = vlaneseq
      %v8800 = vshrl.u32 %v8799, 7
      %v8801 = vsub.s32 0, %v8800
      %v8802 = vrot.slane %v8797, %v8801
      %v8804 = vmul.f32 %v8780, %v8802
      %v8805 = vmul.f32 %v8781, %v8802
      %v8806 = vmul.f32 %v8782, %v8802
      %v8807 = vmul.f32 %v8783, %v8802
      %v8808 = vmul.f32 %v8784, %v8802
      %v8809 = vmul.f32 %v8785, %v8802
      %v8810 = vmul.f32 %v8786, %v8802
      %v8811 = vmul.f32 %v8787, %v8802
      %v8812 = vmul.f32 %v8788, %v8802
      %v8813 = vmul.f32 %v8789, %v8802
      %v8814 = vmul.f32 %v8790, %v8802
      %v8815 = vmul.f32 %v8791, %v8802
      %v8816 = vmul.f32 %v8792, %v8802
      %v8817 = vmul.f32 %v8793, %v8802
      %v8818 = vmul.f32 %v8794, %v8802
      %v8819 = vmul.f32 %v8795, %v8802
      %v8820 = vmul.f32 %v8796, %v8802
      %v8821 = vld [vmem:[%s8] sm:$0x1]
      %v8823 = vlaneseq
      %v8824 = vshrl.u32 %v8823, 7
      %v8825 = vsub.s32 0, %v8824
      %v8826 = vrot.slane %v8821, %v8825
      %v8828 = vadd.f32 %v8804, %v8826
      %v8829 = vadd.f32 %v8805, %v8826
      %v8830 = vadd.f32 %v8806, %v8826
      %v8831 = vadd.f32 %v8807, %v8826
      %v8832 = vadd.f32 %v8808, %v8826
      %v8833 = vadd.f32 %v8809, %v8826
      %v8834 = vadd.f32 %v8810, %v8826
      %v8835 = vadd.f32 %v8811, %v8826
      %v8836 = vadd.f32 %v8812, %v8826
      %v8837 = vadd.f32 %v8813, %v8826
      %v8838 = vadd.f32 %v8814, %v8826
      %v8839 = vadd.f32 %v8815, %v8826
      %v8840 = vadd.f32 %v8816, %v8826
      %v8841 = vadd.f32 %v8817, %v8826
      %v8842 = vadd.f32 %v8818, %v8826
      %v8843 = vadd.f32 %v8819, %v8826
      %v8844 = vadd.f32 %v8820, %v8826
      %v8845 = vpack.c.bf16 %v8829, %v8828
      %v8846 = vpack.c.bf16 %v8831, %v8830
      %v8847 = vpack.c.bf16 %v8833, %v8832
      %v8848 = vpack.c.bf16 %v8835, %v8834
      %v8849 = vpack.c.bf16 %v8837, %v8836
      %v8850 = vpack.c.bf16 %v8839, %v8838
      %v8851 = vpack.c.bf16 %v8841, %v8840
      %v8852 = vpack.c.bf16 %v8843, %v8842
      %v8853 = vpack.c.bf16 %v8844, %v8844
      %v8854 = vld [vmem:[%s9] sm:$0xf]
      %v8855 = vld [vmem:[%s9 + $0x4] sm:$0xf]
      %v8856 = vld [vmem:[%s9 + $0x8] sm:$0xf]
      %v8857 = vld [vmem:[%s9 + $0xc] sm:$0xf]
      %v8858 = vld [vmem:[%s10] sm:$0x1]
      %v8860 = vlaneseq
      %v8861 = vshrl.u32 %v8860, 7
      %v8862 = vsub.s32 0, %v8861
      %v8863 = vrot.slane %v8858, %v8862
      %v8869 = vunpack.c.l.b16 %v8854
      %v8870 = vunpack.c.l.b16 %v8855
      %v8871 = vunpack.c.l.b16 %v8856
      %v8872 = vunpack.c.l.b16 %v8857
      %v8873 = vpack.c.b16 %v8870, %v8869
      %v8874 = vpack.c.b16 %v8872, %v8871
      %v8878 = vsel %vm462, %v8845, 0
      %v8881 = vsel %vm462, %v8846, 0
      %v8884 = vsel %vm462, %v8847, 0
      %v8887 = vsel %vm462, %v8848, 0
      %v8890 = vsel %vm462, %v8849, 0
      %v8893 = vsel %vm462, %v8850, 0
      %v8896 = vsel %vm462, %v8851, 0
      %v8899 = vsel %vm462, %v8852, 0
      %v8902 = vsel %vm462, %v8853, 0
      %8904 = vmatprep.subr.bf16.mxu0 0
      %8905 = vmatpush1.bf16.msra.mxu0 %v8873
      %8906 = vmatprep.subr.bf16.mxu0 0
      %8907 = vmatpush1.bf16.msra.mxu0 %v8874
      %8908 = vmatprep.subr.bf16.mxu0 0
      %8909 = vmatpush1.bf16.msra.mxu0 0
      %8910 = vmatprep.subr.bf16.mxu0 0
      %8911 = vmatpush1.bf16.msra.mxu0 0
      %8912 = vmatprep.subr.bf16.mxu0 0
      %8913 = vmatpush1.bf16.msra.mxu0 0
      %8914 = vmatprep.subr.bf16.mxu0 0
      %8915 = vmatpush1.bf16.msra.mxu0 0
      %8916 = vmatprep.subr.bf16.mxu0 0
      %8917 = vmatpush1.bf16.msra.mxu0 0
      %8918 = vmatprep.subr.bf16.mxu0 0
      %8919 = vmatpush1.bf16.msra.mxu0 0
      %8920 = vmatprep.subr.bf16.mxu0 0
      %8921 = vmatpush1.bf16.msra.mxu0 0
      %8922 = vmatprep.subr.bf16.mxu0 0
      %8923 = vmatpush1.bf16.msra.mxu0 0
      %8924 = vmatprep.subr.bf16.mxu0 0
      %8925 = vmatpush1.bf16.msra.mxu0 0
      %8926 = vmatprep.subr.bf16.mxu0 0
      %8927 = vmatpush1.bf16.msra.mxu0 0
      %8928 = vmatprep.subr.bf16.mxu0 0
      %8929 = vmatpush1.bf16.msra.mxu0 0
      %8930 = vmatprep.subr.bf16.mxu0 0
      %8931 = vmatpush1.bf16.msra.mxu0 0
      %8932 = vmatprep.subr.bf16.mxu0 0
      %8933 = vmatpush1.bf16.msra.mxu0 0
      %8934 = vmatprep.subr.bf16.mxu0 0
      %8935 = vmatpush1.bf16.msra.mxu0 0
      %8936 = vmatprep.mubr.bf16.mxu0 0
      %8937 = vmatmul.mubr.bf16.gmra.mrb[0].mxu0 %v8878
      %v8938 = vpop.f32.mrb[0].mxu0
      %v8939 = vadd.f32 %v8863, %v8938
      %v8940 = vpop.f32.mrb[0].mxu0
      %v8941 = vpop.f32.mrb[0].mxu0
      %v8942 = vadd.f32 %v8863, %v8941
      %v8943 = vpop.f32.mrb[0].mxu0
      %8944 = vmatprep.mubr.bf16.mxu0 0
      %8945 = vmatmul.mubr.bf16.gmra.mrb[0].mxu0 %v8881
      %v8946 = vpop.f32.mrb[0].mxu0
      %v8947 = vadd.f32 %v8863, %v8946
      %v8948 = vpop.f32.mrb[0].mxu0
      %v8949 = vpop.f32.mrb[0].mxu0
      %v8950 = vadd.f32 %v8863, %v8949
      %v8951 = vpop.f32.mrb[0].mxu0
      %8952 = vmatprep.mubr.bf16.mxu0 0
      %8953 = vmatmul.mubr.bf16.gmra.mrb[0].mxu0 %v8884
      %v8954 = vpop.f32.mrb[0].mxu0
      %v8955 = vadd.f32 %v8863, %v8954
      %v8956 = vpop.f32.mrb[0].mxu0
      %v8957 = vpop.f32.mrb[0].mxu0
      %v8958 = vadd.f32 %v8863, %v8957
      %v8959 = vpop.f32.mrb[0].mxu0
      %8960 = vmatprep.mubr.bf16.mxu0 0
      %8961 = vmatmul.mubr.bf16.gmra.mrb[0].mxu0 %v8887
      %v8962 = vpop.f32.mrb[0].mxu0
      %v8963 = vadd.f32 %v8863, %v8962
      %v8964 = vpop.f32.mrb[0].mxu0
      %v8965 = vpop.f32.mrb[0].mxu0
      %v8966 = vadd.f32 %v8863, %v8965
      %v8967 = vpop.f32.mrb[0].mxu0
      %8968 = vmatprep.mubr.bf16.mxu0 0
      %8969 = vmatmul.mubr.bf16.gmra.mrb[0].mxu0 %v8890
      %v8970 = vpop.f32.mrb[0].mxu0
      %v8971 = vadd.f32 %v8863, %v8970
      %v8972 = vpop.f32.mrb[0].mxu0
      %v8973 = vpop.f32.mrb[0].mxu0
      %v8974 = vadd.f32 %v8863, %v8973
      %v8975 = vpop.f32.mrb[0].mxu0
      %8976 = vmatprep.mubr.bf16.mxu0 0
      %8977 = vmatmul.mubr.bf16.gmra.mrb[0].mxu0 %v8893
      %v8978 = vpop.f32.mrb[0].mxu0
      %v8979 = vadd.f32 %v8863, %v8978
      %v8980 = vpop.f32.mrb[0].mxu0
      %v8981 = vpop.f32.mrb[0].mxu0
      %v8982 = vadd.f32 %v8863, %v8981
      %v8983 = vpop.f32.mrb[0].mxu0
      %8984 = vmatprep.mubr.bf16.mxu0 0
      %8985 = vmatmul.mubr.bf16.gmra.mrb[0].mxu0 %v8896
      %v8986 = vpop.f32.mrb[0].mxu0
      %v8987 = vadd.f32 %v8863, %v8986
      %v8988 = vpop.f32.mrb[0].mxu0
      %v8989 = vpop.f32.mrb[0].mxu0
      %v8990 = vadd.f32 %v8863, %v8989
      %v8991 = vpop.f32.mrb[0].mxu0
      %8992 = vmatprep.mubr.bf16.mxu0 0
      %8993 = vmatmul.mubr.bf16.gmra.mrb[0].mxu0 %v8899
      %v8994 = vpop.f32.mrb[0].mxu0
      %v8995 = vadd.f32 %v8863, %v8994
      %v8996 = vpop.f32.mrb[0].mxu0
      %v8997 = vpop.f32.mrb[0].mxu0
      %v8998 = vadd.f32 %v8863, %v8997
      %v8999 = vpop.f32.mrb[0].mxu0
      %9000 = vmatprep.mubr.bf16.mxu0 0
      %9001 = vmatmul.mubr.bf16.gmra.mrb[0].mxu0 %v8902
      %v9002 = vpop.f32.mrb[0].mxu0
      %v9003 = vadd.f32 %v8863, %v9002
      %v9004 = vpop.f32.mrb[0].mxu0
      %v9005 = vpop.f32.mrb[0].mxu0
      %v9006 = vpop.f32.mrb[0].mxu0
      %9007 = vdwg.mxu0
      %v9008 = vmul.f32 %v8939, %v8939
      %v9009 = vmul.f32 %v8942, %v8942
      %v9010 = vmul.f32 %v8947, %v8947
      %v9011 = vmul.f32 %v8950, %v8950
      %v9012 = vmul.f32 %v8955, %v8955
      %v9013 = vmul.f32 %v8958, %v8958
      %v9014 = vmul.f32 %v8963, %v8963
      %v9015 = vmul.f32 %v8966, %v8966
      %v9016 = vmul.f32 %v8971, %v8971
      %v9017 = vmul.f32 %v8974, %v8974
      %v9018 = vmul.f32 %v8979, %v8979
      %v9019 = vmul.f32 %v8982, %v8982
      %v9020 = vmul.f32 %v8987, %v8987
      %v9021 = vmul.f32 %v8990, %v8990
      %v9022 = vmul.f32 %v8995, %v8995
      %v9023 = vmul.f32 %v8998, %v8998
      %v9024 = vmul.f32 %v9003, %v9003
      %v9025 = vmul.f32 %v8939, %v9008
      %v9026 = vmul.f32 %v8942, %v9009
      %v9027 = vmul.f32 %v8947, %v9010
      %v9028 = vmul.f32 %v8950, %v9011
      %v9029 = vmul.f32 %v8955, %v9012
      %v9030 = vmul.f32 %v8958, %v9013
      %v9031 = vmul.f32 %v8963, %v9014
      %v9032 = vmul.f32 %v8966, %v9015
      %v9033 = vmul.f32 %v8971, %v9016
      %v9034 = vmul.f32 %v8974, %v9017
      %v9035 = vmul.f32 %v8979, %v9018
      %v9036 = vmul.f32 %v8982, %v9019
      %v9037 = vmul.f32 %v8987, %v9020
      %v9038 = vmul.f32 %v8990, %v9021
      %v9039 = vmul.f32 %v8995, %v9022
      %v9040 = vmul.f32 %v8998, %v9023
      %v9041 = vmul.f32 %v9003, %v9024
      %v9042 = vmul.f32 %v9025, 0.044715
      %v9043 = vmul.f32 %v9026, 0.044715
      %v9044 = vmul.f32 %v9027, 0.044715
      %v9045 = vmul.f32 %v9028, 0.044715
      %v9046 = vmul.f32 %v9029, 0.044715
      %v9047 = vmul.f32 %v9030, 0.044715
      %v9048 = vmul.f32 %v9031, 0.044715
      %v9049 = vmul.f32 %v9032, 0.044715
      %v9050 = vmul.f32 %v9033, 0.044715
      %v9051 = vmul.f32 %v9034, 0.044715
      %v9052 = vmul.f32 %v9035, 0.044715
      %v9053 = vmul.f32 %v9036, 0.044715
      %v9054 = vmul.f32 %v9037, 0.044715
      %v9055 = vmul.f32 %v9038, 0.044715
      %v9056 = vmul.f32 %v9039, 0.044715
      %v9057 = vmul.f32 %v9040, 0.044715
      %v9058 = vmul.f32 %v9041, 0.044715
      %v9059 = vadd.f32 %v8939, %v9042
      %v9060 = vadd.f32 %v8942, %v9043
      %v9061 = vadd.f32 %v8947, %v9044
      %v9062 = vadd.f32 %v8950, %v9045
      %v9063 = vadd.f32 %v8955, %v9046
      %v9064 = vadd.f32 %v8958, %v9047
      %v9065 = vadd.f32 %v8963, %v9048
      %v9066 = vadd.f32 %v8966, %v9049
      %v9067 = vadd.f32 %v8971, %v9050
      %v9068 = vadd.f32 %v8974, %v9051
      %v9069 = vadd.f32 %v8979, %v9052
      %v9070 = vadd.f32 %v8982, %v9053
      %v9071 = vadd.f32 %v8987, %v9054
      %v9072 = vadd.f32 %v8990, %v9055
      %v9073 = vadd.f32 %v8995, %v9056
      %v9074 = vadd.f32 %v8998, %v9057
      %v9075 = vadd.f32 %v9003, %v9058
      %v9076 = vmul.f32 %v9059, 0.7978846
      %v9077 = vmul.f32 %v9060, 0.7978846
      %v9078 = vmul.f32 %v9061, 0.7978846
      %v9079 = vmul.f32 %v9062, 0.7978846
      %v9080 = vmul.f32 %v9063, 0.7978846
      %v9081 = vmul.f32 %v9064, 0.7978846
      %v9082 = vmul.f32 %v9065, 0.7978846
      %v9083 = vmul.f32 %v9066, 0.7978846
      %v9084 = vmul.f32 %v9067, 0.7978846
      %v9085 = vmul.f32 %v9068, 0.7978846
      %v9086 = vmul.f32 %v9069, 0.7978846
      %v9087 = vmul.f32 %v9070, 0.7978846
      %v9088 = vmul.f32 %v9071, 0.7978846
      %v9089 = vmul.f32 %v9072, 0.7978846
      %v9090 = vmul.f32 %v9073, 0.7978846
      %v9091 = vmul.f32 %v9074, 0.7978846
      %v9092 = vmul.f32 %v9075, 0.7978846
      %v9093 = vtanh.pop %v9076
      %v9094 = vtanh.pop %v9077
      %v9095 = vtanh.pop %v9078
      %v9096 = vtanh.pop %v9079
      %v9097 = vtanh.pop %v9080
      %v9098 = vtanh.pop %v9081
      %v9099 = vtanh.pop %v9082
      %v9100 = vtanh.pop %v9083
      %v9101 = vtanh.pop %v9084
      %v9102 = vtanh.pop %v9085
      %v9103 = vtanh.pop %v9086
      %v9104 = vtanh.pop %v9087
      %v9105 = vtanh.pop %v9088
      %v9106 = vtanh.pop %v9089
      %v9107 = vtanh.pop %v9090
      %v9108 = vtanh.pop %v9091
      %v9109 = vtanh.pop %v9092
      %v9110 = vadd.f32 %v9093, 1.0
      %v9111 = vadd.f32 %v9094, 1.0
      %v9112 = vadd.f32 %v9095, 1.0
      %v9113 = vadd.f32 %v9096, 1.0
      %v9114 = vadd.f32 %v9097, 1.0
      %v9115 = vadd.f32 %v9098, 1.0
      %v9116 = vadd.f32 %v9099, 1.0
      %v9117 = vadd.f32 %v9100, 1.0
      %v9118 = vadd.f32 %v9101, 1.0
      %v9119 = vadd.f32 %v9102, 1.0
      %v9120 = vadd.f32 %v9103, 1.0
      %v9121 = vadd.f32 %v9104, 1.0
      %v9122 = vadd.f32 %v9105, 1.0
      %v9123 = vadd.f32 %v9106, 1.0
      %v9124 = vadd.f32 %v9107, 1.0
      %v9125 = vadd.f32 %v9108, 1.0
      %v9126 = vadd.f32 %v9109, 1.0
      %v9127 = vmul.f32 %v9110, 0.5
      %v9128 = vmul.f32 %v9111, 0.5
      %v9129 = vmul.f32 %v9112, 0.5
      %v9130 = vmul.f32 %v9113, 0.5
      %v9131 = vmul.f32 %v9114, 0.5
      %v9132 = vmul.f32 %v9115, 0.5
      %v9133 = vmul.f32 %v9116, 0.5
      %v9134 = vmul.f32 %v9117, 0.5
      %v9135 = vmul.f32 %v9118, 0.5
      %v9136 = vmul.f32 %v9119, 0.5
      %v9137 = vmul.f32 %v9120, 0.5
      %v9138 = vmul.f32 %v9121, 0.5
      %v9139 = vmul.f32 %v9122, 0.5
      %v9140 = vmul.f32 %v9123, 0.5
      %v9141 = vmul.f32 %v9124, 0.5
      %v9142 = vmul.f32 %v9125, 0.5
      %v9143 = vmul.f32 %v9126, 0.5
      %v9144 = vmul.f32 %v8939, %v9127
      %v9145 = vmul.f32 %v8942, %v9128
      %v9146 = vmul.f32 %v8947, %v9129
      %v9147 = vmul.f32 %v8950, %v9130
      %v9148 = vmul.f32 %v8955, %v9131
      %v9149 = vmul.f32 %v8958, %v9132
      %v9150 = vmul.f32 %v8963, %v9133
      %v9151 = vmul.f32 %v8966, %v9134
      %v9152 = vmul.f32 %v8971, %v9135
      %v9153 = vmul.f32 %v8974, %v9136
      %v9154 = vmul.f32 %v8979, %v9137
      %v9155 = vmul.f32 %v8982, %v9138
      %v9156 = vmul.f32 %v8987, %v9139
      %v9157 = vmul.f32 %v8990, %v9140
      %v9158 = vmul.f32 %v8995, %v9141
      %v9159 = vmul.f32 %v8998, %v9142
      %v9160 = vmul.f32 %v9003, %v9143
      %v9161 = vpack.c.bf16 %v9145, %v9144
      %v9162 = vpack.c.bf16 %v9147, %v9146
      %v9163 = vpack.c.bf16 %v9149, %v9148
      %v9164 = vpack.c.bf16 %v9151, %v9150
      %v9165 = vpack.c.bf16 %v9153, %v9152
      %v9166 = vpack.c.bf16 %v9155, %v9154
      %v9167 = vpack.c.bf16 %v9157, %v9156
      %v9168 = vpack.c.bf16 %v9159, %v9158
      %v9169 = vpack.c.bf16 %v9160, %v9160
      %v9170 = vld [vmem:[%s11] sm:$0xf]
      %v9171 = vld [vmem:[%s11 + $0x4] sm:$0xf]
      %v9172 = vld [vmem:[%s11 + $0x8] sm:$0xf]
      %v9173 = vld [vmem:[%s11 + $0xc] sm:$0xf]
      %v9174 = vld [vmem:[%s11 + $0x10] sm:$0xf]
      %v9175 = vld [vmem:[%s11 + $0x14] sm:$0xf]
      %v9176 = vld [vmem:[%s11 + $0x18] sm:$0xf]
      %v9177 = vld [vmem:[%s11 + $0x1c] sm:$0xf]
      %v9178 = vld [vmem:[%s12] sm:$0x1]
      %v9180 = vlaneseq
      %v9181 = vshrl.u32 %v9180, 7
      %v9182 = vsub.s32 0, %v9181
      %v9183 = vrot.slane %v9178, %v9182
      %v9193 = vunpack.c.l.b16 %v9170
      %v9194 = vunpack.c.l.b16 %v9171
      %v9195 = vunpack.c.l.b16 %v9172
      %v9196 = vunpack.c.l.b16 %v9173
      %v9197 = vunpack.c.l.b16 %v9174
      %v9198 = vunpack.c.l.b16 %v9175
      %v9199 = vunpack.c.l.b16 %v9176
      %v9200 = vunpack.c.l.b16 %v9177
      %v9201 = vpack.c.b16 %v9194, %v9193
      %v9202 = vpack.c.b16 %v9196, %v9195
      %v9203 = vpack.c.b16 %v9198, %v9197
      %v9204 = vpack.c.b16 %v9200, %v9199
      %vm9209 = vcmask 523264
      %v9211 = vsel %vm9209, %v9161, 0
      %v9214 = vsel %vm9209, %v9162, 0
      %v9217 = vsel %vm9209, %v9163, 0
      %v9220 = vsel %vm9209, %v9164, 0
      %v9223 = vsel %vm9209, %v9165, 0
      %v9226 = vsel %vm9209, %v9166, 0
      %v9229 = vsel %vm9209, %v9167, 0
      %v9232 = vsel %vm9209, %v9168, 0
      %v9235 = vsel %vm9209, %v9169, 0
      %9237 = vmatprep.subr.bf16.mxu0 0
      %9238 = vmatpush1.bf16.msra.mxu0 %v9201
      %9239 = vmatprep.subr.bf16.mxu0 0
      %9240 = vmatpush1.bf16.msra.mxu0 %v9202
      %9241 = vmatprep.subr.bf16.mxu0 0
      %9242 = vmatpush1.bf16.msra.mxu0 %v9203
      %9243 = vmatprep.subr.bf16.mxu0 0
      %9244 = vmatpush1.bf16.msra.mxu0 %v9204
      %9245 = vmatprep.subr.bf16.mxu0 0
      %9246 = vmatpush1.bf16.msra.mxu0 0
      %9247 = vmatprep.subr.bf16.mxu0 0
      %9248 = vmatpush1.bf16.msra.mxu0 0
      %9249 = vmatprep.subr.bf16.mxu0 0
      %9250 = vmatpush1.bf16.msra.mxu0 0
      %9251 = vmatprep.subr.bf16.mxu0 0
      %9252 = vmatpush1.bf16.msra.mxu0 0
      %9253 = vmatprep.subr.bf16.mxu0 0
      %9254 = vmatpush1.bf16.msra.mxu0 0
      %9255 = vmatprep.subr.bf16.mxu0 0
      %9256 = vmatpush1.bf16.msra.mxu0 0
      %9257 = vmatprep.subr.bf16.mxu0 0
      %9258 = vmatpush1.bf16.msra.mxu0 0
      %9259 = vmatprep.subr.bf16.mxu0 0
      %9260 = vmatpush1.bf16.msra.mxu0 0
      %9261 = vmatprep.subr.bf16.mxu0 0
      %9262 = vmatpush1.bf16.msra.mxu0 0
      %9263 = vmatprep.subr.bf16.mxu0 0
      %9264 = vmatpush1.bf16.msra.mxu0 0
      %9265 = vmatprep.subr.bf16.mxu0 0
      %9266 = vmatpush1.bf16.msra.mxu0 0
      %9267 = vmatprep.subr.bf16.mxu0 0
      %9268 = vmatpush1.bf16.msra.mxu0 0
      %9269 = vmatprep.mubr.bf16.mxu0 0
      %9270 = vmatmul.mubr.bf16.gmra.mrb[0].mxu0 %v9211
      %v9271 = vpop.f32.mrb[0].mxu0
      %v9272 = vadd.f32 %v9183, %v9271
      %v9273 = vpop.f32.mrb[0].mxu0
      %v9274 = vpop.f32.mrb[0].mxu0
      %v9275 = vadd.f32 %v9183, %v9274
      %v9276 = vpop.f32.mrb[0].mxu0
      %9277 = vmatprep.mubr.bf16.mxu0 0
      %9278 = vmatmul.mubr.bf16.gmra.mrb[0].mxu0 %v9214
      %v9279 = vpop.f32.mrb[0].mxu0
      %v9280 = vadd.f32 %v9183, %v9279
      %v9281 = vpop.f32.mrb[0].mxu0
      %v9282 = vpop.f32.mrb[0].mxu0
      %v9283 = vadd.f32 %v9183, %v9282
      %v9284 = vpop.f32.mrb[0].mxu0
      %9285 = vmatprep.mubr.bf16.mxu0 0
      %9286 = vmatmul.mubr.bf16.gmra.mrb[0].mxu0 %v9217
      %v9287 = vpop.f32.mrb[0].mxu0
      %v9288 = vadd.f32 %v9183, %v9287
      %v9289 = vpop.f32.mrb[0].mxu0
      %v9290 = vpop.f32.mrb[0].mxu0
      %v9291 = vadd.f32 %v9183, %v9290
      %v9292 = vpop.f32.mrb[0].mxu0
      %9293 = vmatprep.mubr.bf16.mxu0 0
      %9294 = vmatmul.mubr.bf16.gmra.mrb[0].mxu0 %v9220
      %v9295 = vpop.f32.mrb[0].mxu0
      %v9296 = vadd.f32 %v9183, %v9295
      %v9297 = vpop.f32.mrb[0].mxu0
      %v9298 = vpop.f32.mrb[0].mxu0
      %v9299 = vadd.f32 %v9183, %v9298
      %v9300 = vpop.f32.mrb[0].mxu0
      %9301 = vmatprep.mubr.bf16.mxu0 0
      %9302 = vmatmul.mubr.bf16.gmra.mrb[0].mxu0 %v9223
      %v9303 = vpop.f32.mrb[0].mxu0
      %v9304 = vadd.f32 %v9183, %v9303
      %v9305 = vpop.f32.mrb[0].mxu0
      %v9306 = vpop.f32.mrb[0].mxu0
      %v9307 = vadd.f32 %v9183, %v9306
      %v9308 = vpop.f32.mrb[0].mxu0
      %9309 = vmatprep.mubr.bf16.mxu0 0
      %9310 = vmatmul.mubr.bf16.gmra.mrb[0].mxu0 %v9226
      %v9311 = vpop.f32.mrb[0].mxu0
      %v9312 = vadd.f32 %v9183, %v9311
      %v9313 = vpop.f32.mrb[0].mxu0
      %v9314 = vpop.f32.mrb[0].mxu0
      %v9315 = vadd.f32 %v9183, %v9314
      %v9316 = vpop.f32.mrb[0].mxu0
      %9317 = vmatprep.mubr.bf16.mxu0 0
      %9318 = vmatmul.mubr.bf16.gmra.mrb[0].mxu0 %v9229
      %v9319 = vpop.f32.mrb[0].mxu0
      %v9320 = vadd.f32 %v9183, %v9319
      %v9321 = vpop.f32.mrb[0].mxu0
      %v9322 = vpop.f32.mrb[0].mxu0
      %v9323 = vadd.f32 %v9183, %v9322
      %v9324 = vpop.f32.mrb[0].mxu0
      %9325 = vmatprep.mubr.bf16.mxu0 0
      %9326 = vmatmul.mubr.bf16.gmra.mrb[0].mxu0 %v9232
      %v9327 = vpop.f32.mrb[0].mxu0
      %v9328 = vadd.f32 %v9183, %v9327
      %v9329 = vpop.f32.mrb[0].mxu0
      %v9330 = vpop.f32.mrb[0].mxu0
      %v9331 = vadd.f32 %v9183, %v9330
      %v9332 = vpop.f32.mrb[0].mxu0
      %9333 = vmatprep.mubr.bf16.mxu0 0
      %9334 = vmatmul.mubr.bf16.gmra.mrb[0].mxu0 %v9235
      %v9335 = vpop.f32.mrb[0].mxu0
      %v9336 = vadd.f32 %v9183, %v9335
      %v9337 = vpop.f32.mrb[0].mxu0
      %v9338 = vpop.f32.mrb[0].mxu0
      %v9339 = vpop.f32.mrb[0].mxu0
      %9340 = vdwg.mxu0
      %v9341 = vadd.f32 %v8559, %v9272
      %v9342 = vadd.f32 %v8560, %v9275
      %v9343 = vadd.f32 %v8561, %v9280
      %v9344 = vadd.f32 %v8562, %v9283
      %v9345 = vadd.f32 %v8563, %v9288
      %v9346 = vadd.f32 %v8564, %v9291
      %v9347 = vadd.f32 %v8565, %v9296
      %v9348 = vadd.f32 %v8566, %v9299
      %v9349 = vadd.f32 %v8567, %v9304
      %v9350 = vadd.f32 %v8568, %v9307
      %v9351 = vadd.f32 %v8569, %v9312
      %v9352 = vadd.f32 %v8570, %v9315
      %v9353 = vadd.f32 %v8571, %v9320
      %v9354 = vadd.f32 %v8572, %v9323
      %v9355 = vadd.f32 %v8573, %v9328
      %v9356 = vadd.f32 %v8574, %v9331
      %v9357 = vadd.f32 %v8575, %v9336
      %9358 = vst.msk [vmem:[%s442] sm:$0xff] %vm462, %v9341
      %9359 = vst.msk [vmem:[%s442 + $0x8] sm:$0xff] %vm462, %v9342
      %9360 = vst.msk [vmem:[%s442 + $0x10] sm:$0xff] %vm462, %v9343
      %9361 = vst.msk [vmem:[%s442 + $0x18] sm:$0xff] %vm462, %v9344
      %9362 = vst.msk [vmem:[%s442 + $0x20] sm:$0xff] %vm462, %v9345
      %9363 = vst.msk [vmem:[%s442 + $0x28] sm:$0xff] %vm462, %v9346
      %9364 = vst.msk [vmem:[%s442 + $0x30] sm:$0xff] %vm462, %v9347
      %9365 = vst.msk [vmem:[%s442 + $0x38] sm:$0xff] %vm462, %v9348
      %9366 = vst.msk [vmem:[%s442 + $0x40] sm:$0xff] %vm462, %v9349
      %9367 = vst.msk [vmem:[%s442 + $0x48] sm:$0xff] %vm462, %v9350
      %9368 = vst.msk [vmem:[%s442 + $0x50] sm:$0xff] %vm462, %v9351
      %9369 = vst.msk [vmem:[%s442 + $0x58] sm:$0xff] %vm462, %v9352
      %9370 = vst.msk [vmem:[%s442 + $0x60] sm:$0xff] %vm462, %v9353
      %9371 = vst.msk [vmem:[%s442 + $0x68] sm:$0xff] %vm462, %v9354
      %9372 = vst.msk [vmem:[%s442 + $0x70] sm:$0xff] %vm462, %v9355
      %9373 = vst.msk [vmem:[%s442 + $0x78] sm:$0xff] %vm462, %v9356
      %9374 = vst.msk [vmem:[%s442 + $0x80] sm:$0xff] %vm462, %v9357
      %s9375 = smul.u32 17, %s24
      %p9376 = scmp.lt.s32.totalorder %s9375, 33
      %s9377 = scalar_select %p9376, %s9375, 33
      %s9378 = smul.addr %s9377, 8
      %s9379 = scalar_lea.vmem %s13, %s9378
      // Predicated region
      $region73: #{vit_forward.5} parent=71 // pred_check
        %p9380 = pneg %p320
      $region74: #{vit_forward.5} parent=71 // pred_check_branch
        %9382 = sbr.rel (%p9380) target = $region76
      $region75: #{vit_forward.5} parent=71 // pred_region
        %s9383 = smul.u32 17, %s24
      $region76: #{vit_forward.5} parent=71 // pred_fallthru
        _
    $region72: #{vit_forward.5} parent=5 // pred_fallthru
      _
    %p9384 = scmp.le.s32.totalorder 2, %s19
    // Predicated region
    $region77: #{vit_forward.5} parent=5 // pred_check
      %p9385 = pneg %p9384
    $region78: #{vit_forward.5} parent=5 // pred_check_branch
      %9387 = sbr.rel (%p9385) target = $region80
    $region79: #{vit_forward.5} parent=5 // pred_region
      %s9388 = ssub.s32 %s19, 2
      // Predicated region
      $region81: #{vit_forward.5} parent=79 // pred_check
        %p9389 = pneg %p326
      $region82: #{vit_forward.5} parent=79 // pred_check_branch
        %9391 = sbr.rel (%p9389) target = $region84
      $region83: #{vit_forward.5} parent=79 // pred_region
        %s9392 = smul.u32 17, %s25
        %p9393 = scmp.lt.s32.totalorder %s9392, 33
        %s9394 = scalar_select %p9393, %s9392, 33
        %s9395 = smul.addr %s9394, 8
        %s9396 = scalar_lea.vmem %s13, %s9395
      $region84: #{vit_forward.5} parent=79 // pred_fallthru
        _
    $region80: #{vit_forward.5} parent=5 // pred_fallthru
      _
  $region6: #{vit_forward.5} parent=0 // loop_footer
    %s23 = sadd.s32 1, %s19
  $region7: #{vit_forward.5} parent=0 // loop_footer_branch
    %18 = sbr.rel target = $region3
  $region8: #{vit_forward.5} parent=0 // loop_exit
    _

</llo_original>
